<compile_context>
chip_gen: v7x
topology: tpu7x:2x2x1
jax: 0.10.0
libtpu: 0.0.40
codegen_flags: <defaults>
</compile_context>

<pallas_src>
import functools
import math

import jax
import jax.numpy as jnp
from jax.experimental import pallas as pl
from jax.experimental.pallas import tpu as pltpu


# ------------------------------ fused kernel --------------------------------

def _fused_encoder_kernel(x_ref, pos_ref, emb_w1_ref, emb_w2_ref, fc_w_ref,
                          gvec_ref, ipw_ref, opw_ref, fw1_ref, fw2_ref,
                          lvec_ref, pool_b_ref, out_ref, *,
                          num_layers, nhead):
    """Entire TransformerEncoder forward for Bt batch elements (grid over B).

    All intermediates live in VMEM/vregs; nothing round-trips HBM.
    Per-layer weights are stacked along a leading L axis and indexed
    statically (ref[li]); all per-layer 1-D vectors arrive packed in lvec_ref
    (L, 8, WV); global vectors in gvec_ref (4, D); pool_b is an SMEM scalar.
    """
    Bt, S, band = x_ref.shape
    D = emb_w1_ref.shape[1]
    F = fw1_ref.shape[2]
    Dh = D // nhead
    M = Bt * S
    scale = 1.0 / math.sqrt(Dh)
    f32 = jnp.float32

    def layer_norm(t, g, b, eps=1e-5):
        mu = jnp.mean(t, axis=-1, keepdims=True)
        var = jnp.mean((t - mu) ** 2, axis=-1, keepdims=True)
        return (t - mu) * jax.lax.rsqrt(var + eps) * g + b

    gv = gvec_ref[...]                    # (4, D)
    emb_b1 = gv[0:1, :]
    emb_b2 = gv[1:2, :]
    fc_b = gv[2:3, :]
    pool_w = gv[3:4, :]

    # ---- embedding MLP + positional encoding (flattened: M = Bt*S rows) ----
    xf = x_ref[...].reshape(M, band)
    h = jnp.dot(xf, emb_w1_ref[...], preferred_element_type=f32) + emb_b1
    h = jnp.maximum(h, 0.0)
    h = jnp.dot(h, emb_w2_ref[...], preferred_element_type=f32) + emb_b2
    h = (h.reshape(Bt, S, D) + pos_ref[0]).reshape(M, D)     # (M, D)

    # ---- num_layers x post-norm TransformerEncoderLayer ----
    for li in range(num_layers):
        lv = lvec_ref[li]                 # (8, WV) packed bias / LN vectors
        ipb = lv[0:1, :3 * D]
        opb = lv[1:2, :D]
        fb1 = lv[2:3, :F]
        fb2 = lv[3:4, :D]
        g1, b1 = lv[4:5, :D], lv[5:6, :D]
        g2, b2 = lv[6:7, :D], lv[7:8, :D]
        ipw = ipw_ref[li]                 # (D, 3D)
        opw = opw_ref[li]                 # (D, D)

        qkv = jnp.dot(h, ipw, preferred_element_type=f32) + ipb   # (M, 3D)
        qkv3 = qkv.reshape(Bt, S, 3 * D)

        # Heads: Bt-batched score/context matmuls; the lane-concat of heads is
        # replaced by accumulating each head through its slice of W_o.
        attn = jnp.zeros((M, D), f32)
        for hh in range(nhead):
            lo = hh * Dh
            qh = qkv3[:, :, lo:lo + Dh]                 # (Bt, S, Dh)
            kh = qkv3[:, :, D + lo:D + lo + Dh]
            vh = qkv3[:, :, 2 * D + lo:2 * D + lo + Dh]
            s = jnp.einsum('bqd,bkd->bqk', qh, kh,
                           preferred_element_type=f32) * scale   # (Bt, S, S)
            mx = jnp.max(s, axis=-1, keepdims=True)
            p = jnp.exp(s - mx)
            p = p * pl.reciprocal(jnp.sum(p, axis=-1, keepdims=True),
                                  approx=True)
            ctx = jnp.einsum('bqk,bkd->bqd', p, vh,
                             preferred_element_type=f32)          # (Bt, S, Dh)
            attn = attn + jnp.dot(ctx.reshape(M, Dh), opw[lo:lo + Dh, :],
                                  preferred_element_type=f32)
        attn = attn + opb

        h1 = layer_norm(h + attn, g1, b1)               # residual folded
        ff = jnp.dot(h1, fw1_ref[li], preferred_element_type=f32) + fb1
        ff = jnp.maximum(ff, 0.0)
        ff = jnp.dot(ff, fw2_ref[li], preferred_element_type=f32) + fb2
        h = layer_norm(h1 + ff, g2, b2)                 # residual folded

    # ---- attention pooling over the sequence + output projection ----
    h3 = h.reshape(Bt, S, D)
    scores = (jnp.sum(h3 * pool_w.reshape(1, 1, D), axis=-1, keepdims=True)
              + pool_b_ref[0])                          # (Bt, S, 1)
    mx = jnp.max(scores, axis=1, keepdims=True)
    p = jnp.exp(scores - mx)
    p = p * pl.reciprocal(jnp.sum(p, axis=1, keepdims=True), approx=True)
    pooled = jnp.sum(p * h3, axis=1)                    # (Bt, D)
    out_ref[0] = (jnp.dot(pooled, fc_w_ref[...], preferred_element_type=f32)
                  + fc_b)                               # (Bt, D) slab store


# ------------------------------- wrapper -------------------------------------

def _pick_bt(B, S):
    """Bt so that M = Bt*S <= 128 and (if possible) grid has >= 2 steps
    (keeps both v7x TensorCores busy); Bt must divide B."""
    cap = max(1, 128 // max(S, 1))
    divisors = [d for d in range(1, B + 1) if B % d == 0]
    cands = [d for d in divisors if d <= cap and B // d >= 2]
    if not cands:
        cands = [d for d in divisors if d <= cap] or [1]
    return max(cands)


def transformer_encoder_forward(x, params, *, nhead):
    B, S, band = x.shape
    D = params["emb_w1"].shape[1]
    F = params["layers"][0]["ff_w1"].shape[1]
    L = len(params["layers"])
    assert D % nhead == 0

    Bt = _pick_bt(B, S)
    n_steps = B // Bt
    WV = max(3 * D, F, D)

    def pad_to(v, w):
        v = v.reshape(-1)
        return jnp.pad(v, (0, w - v.shape[0]))

    # --- consolidated parameters (stacked by kind; vectors packed) ---
    ipw = jnp.stack([l["in_proj_w"] for l in params["layers"]])    # (L, D, 3D)
    opw = jnp.stack([l["out_proj_w"] for l in params["layers"]])   # (L, D, D)
    fw1 = jnp.stack([l["ff_w1"] for l in params["layers"]])        # (L, D, F)
    fw2 = jnp.stack([l["ff_w2"] for l in params["layers"]])        # (L, F, D)
    lvec = jnp.stack([
        jnp.stack([pad_to(l["in_proj_b"], WV), pad_to(l["out_proj_b"], WV),
                   pad_to(l["ff_b1"], WV), pad_to(l["ff_b2"], WV),
                   pad_to(l["ln1_g"], WV), pad_to(l["ln1_b"], WV),
                   pad_to(l["ln2_g"], WV), pad_to(l["ln2_b"], WV)])
        for l in params["layers"]])                                 # (L, 8, WV)
    gvec = jnp.stack([params["emb_b1"], params["emb_b2"],
                      params["fc_b"], params["pool_w"].reshape(-1)])  # (4, D)

    pos = params["pos"][:, :S, :]                                   # (1, S, D)
    pool_b = params["pool_b"].reshape(1)                            # SMEM scalar

    inputs = [x, pos, params["emb_w1"], params["emb_w2"], params["fc_w"],
              gvec, ipw, opw, fw1, fw2, lvec, pool_b]

    def const_spec(a):                    # whole array, not re-DMA'd per step
        zeros = (0,) * a.ndim
        return pl.BlockSpec(a.shape, lambda b, _z=zeros: _z)

    in_specs = [pl.BlockSpec((Bt, S, band), lambda b: (b, 0, 0))]
    in_specs += [const_spec(a) for a in inputs[1:-1]]
    in_specs.append(pl.BlockSpec(memory_space=pltpu.MemorySpace.SMEM))

    out = pl.pallas_call(
        functools.partial(_fused_encoder_kernel, num_layers=L, nhead=nhead),
        grid=(n_steps,),
        in_specs=in_specs,
        out_specs=pl.BlockSpec((1, Bt, D), lambda b: (b, 0, 0)),
        out_shape=jax.ShapeDtypeStruct((n_steps, Bt, D), jnp.float32),
        compiler_params=pltpu.CompilerParams(
            dimension_semantics=("parallel",)),
    )(*inputs)
    return out.reshape(B, D)


# ----------------------------- parameter setup -------------------------------

def init_params(key, band_num, latent_dim, nhead, num_layers, dim_ff,
                max_seq_len):
    def nrm(k, shape, scale=0.05):
        return (scale * jax.random.normal(k, shape)).astype(jnp.float32)

    keys = iter(jax.random.split(key, 16 + 12 * num_layers))
    p = {
        "emb_w1": nrm(next(keys), (band_num, latent_dim)),
        "emb_b1": nrm(next(keys), (latent_dim,)),
        "emb_w2": nrm(next(keys), (latent_dim, latent_dim)),
        "emb_b2": nrm(next(keys), (latent_dim,)),
        "pos": nrm(next(keys), (1, max_seq_len, latent_dim), scale=1.0),
        "pool_w": nrm(next(keys), (latent_dim, 1)),
        "pool_b": nrm(next(keys), (1,)),
        "fc_w": nrm(next(keys), (latent_dim, latent_dim)),
        "fc_b": nrm(next(keys), (latent_dim,)),
    }
    layers = []
    for _ in range(num_layers):
        layers.append({
            "in_proj_w": nrm(next(keys), (latent_dim, 3 * latent_dim)),
            "in_proj_b": nrm(next(keys), (3 * latent_dim,)),
            "out_proj_w": nrm(next(keys), (latent_dim, latent_dim)),
            "out_proj_b": nrm(next(keys), (latent_dim,)),
            "ff_w1": nrm(next(keys), (latent_dim, dim_ff)),
            "ff_b1": nrm(next(keys), (dim_ff,)),
            "ff_w2": nrm(next(keys), (dim_ff, latent_dim)),
            "ff_b2": nrm(next(keys), (latent_dim,)),
            "ln1_g": jnp.ones((latent_dim,), jnp.float32),
            "ln1_b": jnp.zeros((latent_dim,), jnp.float32),
            "ln2_g": jnp.ones((latent_dim,), jnp.float32),
            "ln2_b": jnp.zeros((latent_dim,), jnp.float32),
        })
    p["layers"] = layers
    return p


# --------------------------- pure-JAX reference -------------------------------

def reference_forward(x, params, nhead):
    B, S, _ = x.shape
    D = params["emb_w1"].shape[1]
    Dh = D // nhead
    scale = 1.0 / math.sqrt(Dh)

    def ln(t, g, b, eps=1e-5):
        m = t.mean(-1, keepdims=True)
        v = ((t - m) ** 2).mean(-1, keepdims=True)
        return (t - m) / jnp.sqrt(v + eps) * g + b

    h = jax.nn.relu(x @ params["emb_w1"] + params["emb_b1"])
    h = h @ params["emb_w2"] + params["emb_b2"]
    h = h + params["pos"][:, :S, :]
    for lyr in params["layers"]:
        qkv = h @ lyr["in_proj_w"] + lyr["in_proj_b"]
        q, k, v = jnp.split(qkv, 3, axis=-1)
        qh = q.reshape(B, S, nhead, Dh).transpose(0, 2, 1, 3)
        kh = k.reshape(B, S, nhead, Dh).transpose(0, 2, 1, 3)
        vh = v.reshape(B, S, nhead, Dh).transpose(0, 2, 1, 3)
        s = jnp.einsum("bhqd,bhkd->bhqk", qh, kh) * scale
        p = jax.nn.softmax(s, axis=-1)
        a = jnp.einsum("bhqk,bhkd->bhqd", p, vh)
        a = a.transpose(0, 2, 1, 3).reshape(B, S, D)
        a = a @ lyr["out_proj_w"] + lyr["out_proj_b"]
        h1 = ln(h + a, lyr["ln1_g"], lyr["ln1_b"])
        ff = jax.nn.relu(h1 @ lyr["ff_w1"] + lyr["ff_b1"])
        ff = ff @ lyr["ff_w2"] + lyr["ff_b2"]
        h = ln(h1 + ff, lyr["ln2_g"], lyr["ln2_b"])
    scores = h @ params["pool_w"] + params["pool_b"]
    w = jax.nn.softmax(scores, axis=1)
    pooled = (w * h).sum(axis=1)
    return pooled @ params["fc_w"] + params["fc_b"]


# ---------------------------------- main --------------------------------------

if __name__ == "__main__":
    band_num = 4
    latent_dim = 32
    nhead = 8
    num_encoder_layers = 2
    dim_feedforward = 64
    max_seq_len = 20
    B, S = 4, 8          # B=4 -> Bt=2 per grid step, grid=2 (exercises batching)

    key = jax.random.PRNGKey(0)
    kx, kp = jax.random.split(key)
    x = jax.random.normal(kx, (B, S, band_num), dtype=jnp.float32)
    params = init_params(kp, band_num, latent_dim, nhead, num_encoder_layers,
                         dim_feedforward, max_seq_len)

    fwd = jax.jit(transformer_encoder_forward, static_argnames=("nhead",))
    out = jax.block_until_ready(fwd(x, params, nhead=nhead))

    assert out.shape == (B, latent_dim), out.shape
    assert bool(jnp.all(jnp.isfinite(out)))

    ref = jax.block_until_ready(reference_forward(x, params, nhead))
    err = float(jnp.max(jnp.abs(out - ref)))
    assert err < 1e-2, f"max abs diff vs pure-JAX reference: {err}"

    print("KERNEL_OK")
</pallas_src>

<mosaic_0001>
module attributes {stable_mosaic.version = 11 : i64} {
  func.func @_fused_encoder_kernel(%arg0: i32, %arg1: memref<2x8x4xf32, #tpu.memory_space<vmem>>, %arg2: memref<1x8x32xf32, #tpu.memory_space<vmem>>, %arg3: memref<4x32xf32, #tpu.memory_space<vmem>>, %arg4: memref<32x32xf32, #tpu.memory_space<vmem>>, %arg5: memref<32x32xf32, #tpu.memory_space<vmem>>, %arg6: memref<4x32xf32, #tpu.memory_space<vmem>>, %arg7: memref<2x32x96xf32, #tpu.memory_space<vmem>>, %arg8: memref<2x32x32xf32, #tpu.memory_space<vmem>>, %arg9: memref<2x32x64xf32, #tpu.memory_space<vmem>>, %arg10: memref<2x64x32xf32, #tpu.memory_space<vmem>>, %arg11: memref<2x8x96xf32, #tpu.memory_space<vmem>>, %arg12: memref<1xf32, #tpu.memory_space<smem>>, %arg13: memref<1x2x32xf32, #tpu.memory_space<vmem>>) attributes {dimension_semantics = [#tpu.dimension_semantics<parallel>], iteration_bounds = array<i64: 2>, scalar_prefetch = 0 : i64, scratch_operands = 0 : i64, tpu.core_type = #tpu.core_type<tc>, window_params = [{transform_indices = @transform_0, window_bounds = array<i64: 2, 8, 4>}, {pipeline_mode = #tpu.pipeline_mode<synchronous>, transform_indices = @transform_1, window_bounds = array<i64: 1, 8, 32>}, {pipeline_mode = #tpu.pipeline_mode<synchronous>, transform_indices = @transform_2, window_bounds = array<i64: 4, 32>}, {pipeline_mode = #tpu.pipeline_mode<synchronous>, transform_indices = @transform_3, window_bounds = array<i64: 32, 32>}, {pipeline_mode = #tpu.pipeline_mode<synchronous>, transform_indices = @transform_4, window_bounds = array<i64: 32, 32>}, {pipeline_mode = #tpu.pipeline_mode<synchronous>, transform_indices = @transform_5, window_bounds = array<i64: 4, 32>}, {pipeline_mode = #tpu.pipeline_mode<synchronous>, transform_indices = @transform_6, window_bounds = array<i64: 2, 32, 96>}, {pipeline_mode = #tpu.pipeline_mode<synchronous>, transform_indices = @transform_7, window_bounds = array<i64: 2, 32, 32>}, {pipeline_mode = #tpu.pipeline_mode<synchronous>, transform_indices = @transform_8, window_bounds = array<i64: 2, 32, 64>}, {pipeline_mode = #tpu.pipeline_mode<synchronous>, transform_indices = @transform_9, window_bounds = array<i64: 2, 64, 32>}, {pipeline_mode = #tpu.pipeline_mode<synchronous>, transform_indices = @transform_10, window_bounds = array<i64: 2, 8, 96>}, {transform_indices = @transform_11, window_bounds = array<i64: 1>}, {transform_indices = @transform_12, window_bounds = array<i64: 1, 2, 32>}]} {
    %c0 = arith.constant 0 : index
    %c0_0 = arith.constant 0 : index
    %0 = vector.load %arg6[%c0, %c0_0] : memref<4x32xf32, #tpu.memory_space<vmem>>, vector<4x32xf32>
    %1 = vector.extract_strided_slice %0 {offsets = [0, 0], sizes = [1, 32], strides = [1, 1]} : vector<4x32xf32> to vector<1x32xf32>
    %2 = vector.extract_strided_slice %0 {offsets = [1, 0], sizes = [1, 32], strides = [1, 1]} : vector<4x32xf32> to vector<1x32xf32>
    %3 = vector.extract_strided_slice %0 {offsets = [2, 0], sizes = [1, 32], strides = [1, 1]} : vector<4x32xf32> to vector<1x32xf32>
    %4 = vector.extract_strided_slice %0 {offsets = [3, 0], sizes = [1, 32], strides = [1, 1]} : vector<4x32xf32> to vector<1x32xf32>
    %c0_1 = arith.constant 0 : index
    %c0_2 = arith.constant 0 : index
    %c0_3 = arith.constant 0 : index
    %5 = vector.load %arg1[%c0_1, %c0_2, %c0_3] : memref<2x8x4xf32, #tpu.memory_space<vmem>>, vector<2x8x4xf32>
    %6 = vector.shape_cast %5 : vector<2x8x4xf32> to vector<16x4xf32>
    %c0_4 = arith.constant 0 : index
    %c0_5 = arith.constant 0 : index
    %7 = vector.load %arg3[%c0_4, %c0_5] : memref<4x32xf32, #tpu.memory_space<vmem>>, vector<4x32xf32>
    %cst = arith.constant dense<0.000000e+00> : vector<16x32xf32>
    %8 = tpu.matmul %6, %7, %cst {dimension_numbers = #tpu.dot_dimension_numbers<[1], [0], [0], [1], [0, 0, 1, 1], [], []>} : vector<16x4xf32>, vector<4x32xf32>, vector<16x32xf32> -> vector<16x32xf32>
    %9 = vector.broadcast %1 : vector<1x32xf32> to vector<16x32xf32>
    %10 = arith.addf %8, %9 : vector<16x32xf32>
    %cst_6 = arith.constant 0.000000e+00 : f32
    %11 = vector.broadcast %cst_6 : f32 to vector<16x32xf32>
    %12 = arith.maximumf %10, %11 : vector<16x32xf32>
    %c0_7 = arith.constant 0 : index
    %c0_8 = arith.constant 0 : index
    %13 = vector.load %arg4[%c0_7, %c0_8] : memref<32x32xf32, #tpu.memory_space<vmem>>, vector<32x32xf32>
    %cst_9 = arith.constant dense<0.000000e+00> : vector<16x32xf32>
    %14 = tpu.matmul %12, %13, %cst_9 {dimension_numbers = #tpu.dot_dimension_numbers<[1], [0], [0], [1], [0, 0, 1, 1], [], []>} : vector<16x32xf32>, vector<32x32xf32>, vector<16x32xf32> -> vector<16x32xf32>
    %15 = vector.broadcast %2 : vector<1x32xf32> to vector<16x32xf32>
    %16 = arith.addf %14, %15 : vector<16x32xf32>
    %17 = vector.shape_cast %16 : vector<16x32xf32> to vector<2x8x32xf32>
    %c0_10 = arith.constant 0 : index
    %c0_11 = arith.constant 0 : index
    %c0_12 = arith.constant 0 : index
    %18 = vector.load %arg2[%c0_10, %c0_11, %c0_12] : memref<1x8x32xf32, #tpu.memory_space<vmem>>, vector<1x8x32xf32>
    %19 = vector.shape_cast %18 : vector<1x8x32xf32> to vector<8x32xf32>
    %20 = vector.shape_cast %19 : vector<8x32xf32> to vector<1x8x32xf32>
    %21 = vector.broadcast %20 : vector<1x8x32xf32> to vector<2x8x32xf32>
    %22 = arith.addf %17, %21 : vector<2x8x32xf32>
    %23 = vector.shape_cast %22 : vector<2x8x32xf32> to vector<16x32xf32>
    %c0_13 = arith.constant 0 : index
    %c0_14 = arith.constant 0 : index
    %c0_15 = arith.constant 0 : index
    %24 = vector.load %arg11[%c0_13, %c0_14, %c0_15] : memref<2x8x96xf32, #tpu.memory_space<vmem>>, vector<1x8x96xf32>
    %25 = vector.shape_cast %24 : vector<1x8x96xf32> to vector<8x96xf32>
    %26 = vector.extract_strided_slice %25 {offsets = [0, 0], sizes = [1, 96], strides = [1, 1]} : vector<8x96xf32> to vector<1x96xf32>
    %27 = vector.extract_strided_slice %25 {offsets = [1, 0], sizes = [1, 32], strides = [1, 1]} : vector<8x96xf32> to vector<1x32xf32>
    %28 = vector.extract_strided_slice %25 {offsets = [2, 0], sizes = [1, 64], strides = [1, 1]} : vector<8x96xf32> to vector<1x64xf32>
    %29 = vector.extract_strided_slice %25 {offsets = [3, 0], sizes = [1, 32], strides = [1, 1]} : vector<8x96xf32> to vector<1x32xf32>
    %30 = vector.extract_strided_slice %25 {offsets = [4, 0], sizes = [1, 32], strides = [1, 1]} : vector<8x96xf32> to vector<1x32xf32>
    %31 = vector.extract_strided_slice %25 {offsets = [5, 0], sizes = [1, 32], strides = [1, 1]} : vector<8x96xf32> to vector<1x32xf32>
    %32 = vector.extract_strided_slice %25 {offsets = [6, 0], sizes = [1, 32], strides = [1, 1]} : vector<8x96xf32> to vector<1x32xf32>
    %33 = vector.extract_strided_slice %25 {offsets = [7, 0], sizes = [1, 32], strides = [1, 1]} : vector<8x96xf32> to vector<1x32xf32>
    %c0_16 = arith.constant 0 : index
    %c0_17 = arith.constant 0 : index
    %c0_18 = arith.constant 0 : index
    %34 = vector.load %arg7[%c0_16, %c0_17, %c0_18] : memref<2x32x96xf32, #tpu.memory_space<vmem>>, vector<1x32x96xf32>
    %35 = vector.shape_cast %34 : vector<1x32x96xf32> to vector<32x96xf32>
    %c0_19 = arith.constant 0 : index
    %c0_20 = arith.constant 0 : index
    %c0_21 = arith.constant 0 : index
    %36 = vector.load %arg8[%c0_19, %c0_20, %c0_21] : memref<2x32x32xf32, #tpu.memory_space<vmem>>, vector<1x32x32xf32>
    %37 = vector.shape_cast %36 : vector<1x32x32xf32> to vector<32x32xf32>
    %cst_22 = arith.constant dense<0.000000e+00> : vector<16x96xf32>
    %38 = tpu.matmul %23, %35, %cst_22 {dimension_numbers = #tpu.dot_dimension_numbers<[1], [0], [0], [1], [0, 0, 1, 1], [], []>} : vector<16x32xf32>, vector<32x96xf32>, vector<16x96xf32> -> vector<16x96xf32>
    %39 = vector.broadcast %26 : vector<1x96xf32> to vector<16x96xf32>
    %40 = arith.addf %38, %39 : vector<16x96xf32>
    %41 = vector.shape_cast %40 : vector<16x96xf32> to vector<2x8x96xf32>
    %cst_23 = arith.constant 0.000000e+00 : f32
    %42 = vector.broadcast %cst_23 : f32 to vector<16x32xf32>
    %43 = vector.extract_strided_slice %41 {offsets = [0, 0, 0], sizes = [2, 8, 4], strides = [1, 1, 1]} : vector<2x8x96xf32> to vector<2x8x4xf32>
    %44 = vector.extract_strided_slice %41 {offsets = [0, 0, 32], sizes = [2, 8, 4], strides = [1, 1, 1]} : vector<2x8x96xf32> to vector<2x8x4xf32>
    %45 = vector.extract_strided_slice %41 {offsets = [0, 0, 64], sizes = [2, 8, 4], strides = [1, 1, 1]} : vector<2x8x96xf32> to vector<2x8x4xf32>
    "tpu.trace_start"() <{level = 10 : i32, message = "bqd,bkd->bqk"}> : () -> ()
    %cst_24 = arith.constant dense<0.000000e+00> : vector<2x8x8xf32>
    %46 = tpu.matmul %43, %44, %cst_24 {dimension_numbers = #tpu.dot_dimension_numbers<[2], [2], [1], [1], [0, 0, 0, 1, 1, 1], [0], [0]>} : vector<2x8x4xf32>, vector<2x8x4xf32>, vector<2x8x8xf32> -> vector<2x8x8xf32>
    "tpu.trace_stop"() : () -> ()
    %cst_25 = arith.constant 5.000000e-01 : f32
    %47 = vector.broadcast %cst_25 : f32 to vector<2x8x8xf32>
    %48 = arith.mulf %46, %47 : vector<2x8x8xf32>
    %cst_26 = arith.constant dense<0xFF800000> : vector<2x8xf32>
    %49 = vector.multi_reduction <maximumf>, %48, %cst_26 [2] : vector<2x8x8xf32> to vector<2x8xf32>
    %50 = vector.shape_cast %49 : vector<2x8xf32> to vector<2x8x1xf32>
    %51 = vector.broadcast %50 : vector<2x8x1xf32> to vector<2x8x8xf32>
    %52 = arith.subf %48, %51 : vector<2x8x8xf32>
    %53 = math.exp %52 : vector<2x8x8xf32>
    %cst_27 = arith.constant dense<0.000000e+00> : vector<2x8xf32>
    %54 = vector.multi_reduction <add>, %53, %cst_27 [2] : vector<2x8x8xf32> to vector<2x8xf32>
    %55 = vector.shape_cast %54 : vector<2x8xf32> to vector<2x8x1xf32>
    %56 = tpu.reciprocal %55 {approx = true} : vector<2x8x1xf32> -> vector<2x8x1xf32>
    %57 = vector.broadcast %56 : vector<2x8x1xf32> to vector<2x8x8xf32>
    %58 = arith.mulf %53, %57 : vector<2x8x8xf32>
    "tpu.trace_start"() <{level = 10 : i32, message = "bqk,bkd->bqd"}> : () -> ()
    %cst_28 = arith.constant dense<0.000000e+00> : vector<2x8x4xf32>
    %59 = tpu.matmul %58, %45, %cst_28 {dimension_numbers = #tpu.dot_dimension_numbers<[2], [1], [1], [2], [0, 0, 0, 1, 1, 2], [0], [0]>} : vector<2x8x8xf32>, vector<2x8x4xf32>, vector<2x8x4xf32> -> vector<2x8x4xf32>
    "tpu.trace_stop"() : () -> ()
    %60 = vector.shape_cast %59 : vector<2x8x4xf32> to vector<16x4xf32>
    %61 = vector.extract_strided_slice %37 {offsets = [0, 0], sizes = [4, 32], strides = [1, 1]} : vector<32x32xf32> to vector<4x32xf32>
    %cst_29 = arith.constant dense<0.000000e+00> : vector<16x32xf32>
    %62 = tpu.matmul %60, %61, %cst_29 {dimension_numbers = #tpu.dot_dimension_numbers<[1], [0], [0], [1], [0, 0, 1, 1], [], []>} : vector<16x4xf32>, vector<4x32xf32>, vector<16x32xf32> -> vector<16x32xf32>
    %63 = arith.addf %42, %62 : vector<16x32xf32>
    %64 = vector.extract_strided_slice %41 {offsets = [0, 0, 4], sizes = [2, 8, 4], strides = [1, 1, 1]} : vector<2x8x96xf32> to vector<2x8x4xf32>
    %65 = vector.extract_strided_slice %41 {offsets = [0, 0, 36], sizes = [2, 8, 4], strides = [1, 1, 1]} : vector<2x8x96xf32> to vector<2x8x4xf32>
    %66 = vector.extract_strided_slice %41 {offsets = [0, 0, 68], sizes = [2, 8, 4], strides = [1, 1, 1]} : vector<2x8x96xf32> to vector<2x8x4xf32>
    "tpu.trace_start"() <{level = 10 : i32, message = "bqd,bkd->bqk"}> : () -> ()
    %cst_30 = arith.constant dense<0.000000e+00> : vector<2x8x8xf32>
    %67 = tpu.matmul %64, %65, %cst_30 {dimension_numbers = #tpu.dot_dimension_numbers<[2], [2], [1], [1], [0, 0, 0, 1, 1, 1], [0], [0]>} : vector<2x8x4xf32>, vector<2x8x4xf32>, vector<2x8x8xf32> -> vector<2x8x8xf32>
    "tpu.trace_stop"() : () -> ()
    %cst_31 = arith.constant 5.000000e-01 : f32
    %68 = vector.broadcast %cst_31 : f32 to vector<2x8x8xf32>
    %69 = arith.mulf %67, %68 : vector<2x8x8xf32>
    %cst_32 = arith.constant dense<0xFF800000> : vector<2x8xf32>
    %70 = vector.multi_reduction <maximumf>, %69, %cst_32 [2] : vector<2x8x8xf32> to vector<2x8xf32>
    %71 = vector.shape_cast %70 : vector<2x8xf32> to vector<2x8x1xf32>
    %72 = vector.broadcast %71 : vector<2x8x1xf32> to vector<2x8x8xf32>
    %73 = arith.subf %69, %72 : vector<2x8x8xf32>
    %74 = math.exp %73 : vector<2x8x8xf32>
    %cst_33 = arith.constant dense<0.000000e+00> : vector<2x8xf32>
    %75 = vector.multi_reduction <add>, %74, %cst_33 [2] : vector<2x8x8xf32> to vector<2x8xf32>
    %76 = vector.shape_cast %75 : vector<2x8xf32> to vector<2x8x1xf32>
    %77 = tpu.reciprocal %76 {approx = true} : vector<2x8x1xf32> -> vector<2x8x1xf32>
    %78 = vector.broadcast %77 : vector<2x8x1xf32> to vector<2x8x8xf32>
    %79 = arith.mulf %74, %78 : vector<2x8x8xf32>
    "tpu.trace_start"() <{level = 10 : i32, message = "bqk,bkd->bqd"}> : () -> ()
    %cst_34 = arith.constant dense<0.000000e+00> : vector<2x8x4xf32>
    %80 = tpu.matmul %79, %66, %cst_34 {dimension_numbers = #tpu.dot_dimension_numbers<[2], [1], [1], [2], [0, 0, 0, 1, 1, 2], [0], [0]>} : vector<2x8x8xf32>, vector<2x8x4xf32>, vector<2x8x4xf32> -> vector<2x8x4xf32>
    "tpu.trace_stop"() : () -> ()
    %81 = vector.shape_cast %80 : vector<2x8x4xf32> to vector<16x4xf32>
    %82 = vector.extract_strided_slice %37 {offsets = [4, 0], sizes = [4, 32], strides = [1, 1]} : vector<32x32xf32> to vector<4x32xf32>
    %cst_35 = arith.constant dense<0.000000e+00> : vector<16x32xf32>
    %83 = tpu.matmul %81, %82, %cst_35 {dimension_numbers = #tpu.dot_dimension_numbers<[1], [0], [0], [1], [0, 0, 1, 1], [], []>} : vector<16x4xf32>, vector<4x32xf32>, vector<16x32xf32> -> vector<16x32xf32>
    %84 = arith.addf %63, %83 : vector<16x32xf32>
    %85 = vector.extract_strided_slice %41 {offsets = [0, 0, 8], sizes = [2, 8, 4], strides = [1, 1, 1]} : vector<2x8x96xf32> to vector<2x8x4xf32>
    %86 = vector.extract_strided_slice %41 {offsets = [0, 0, 40], sizes = [2, 8, 4], strides = [1, 1, 1]} : vector<2x8x96xf32> to vector<2x8x4xf32>
    %87 = vector.extract_strided_slice %41 {offsets = [0, 0, 72], sizes = [2, 8, 4], strides = [1, 1, 1]} : vector<2x8x96xf32> to vector<2x8x4xf32>
    "tpu.trace_start"() <{level = 10 : i32, message = "bqd,bkd->bqk"}> : () -> ()
    %cst_36 = arith.constant dense<0.000000e+00> : vector<2x8x8xf32>
    %88 = tpu.matmul %85, %86, %cst_36 {dimension_numbers = #tpu.dot_dimension_numbers<[2], [2], [1], [1], [0, 0, 0, 1, 1, 1], [0], [0]>} : vector<2x8x4xf32>, vector<2x8x4xf32>, vector<2x8x8xf32> -> vector<2x8x8xf32>
    "tpu.trace_stop"() : () -> ()
    %cst_37 = arith.constant 5.000000e-01 : f32
    %89 = vector.broadcast %cst_37 : f32 to vector<2x8x8xf32>
    %90 = arith.mulf %88, %89 : vector<2x8x8xf32>
    %cst_38 = arith.constant dense<0xFF800000> : vector<2x8xf32>
    %91 = vector.multi_reduction <maximumf>, %90, %cst_38 [2] : vector<2x8x8xf32> to vector<2x8xf32>
    %92 = vector.shape_cast %91 : vector<2x8xf32> to vector<2x8x1xf32>
    %93 = vector.broadcast %92 : vector<2x8x1xf32> to vector<2x8x8xf32>
    %94 = arith.subf %90, %93 : vector<2x8x8xf32>
    %95 = math.exp %94 : vector<2x8x8xf32>
    %cst_39 = arith.constant dense<0.000000e+00> : vector<2x8xf32>
    %96 = vector.multi_reduction <add>, %95, %cst_39 [2] : vector<2x8x8xf32> to vector<2x8xf32>
    %97 = vector.shape_cast %96 : vector<2x8xf32> to vector<2x8x1xf32>
    %98 = tpu.reciprocal %97 {approx = true} : vector<2x8x1xf32> -> vector<2x8x1xf32>
    %99 = vector.broadcast %98 : vector<2x8x1xf32> to vector<2x8x8xf32>
    %100 = arith.mulf %95, %99 : vector<2x8x8xf32>
    "tpu.trace_start"() <{level = 10 : i32, message = "bqk,bkd->bqd"}> : () -> ()
    %cst_40 = arith.constant dense<0.000000e+00> : vector<2x8x4xf32>
    %101 = tpu.matmul %100, %87, %cst_40 {dimension_numbers = #tpu.dot_dimension_numbers<[2], [1], [1], [2], [0, 0, 0, 1, 1, 2], [0], [0]>} : vector<2x8x8xf32>, vector<2x8x4xf32>, vector<2x8x4xf32> -> vector<2x8x4xf32>
    "tpu.trace_stop"() : () -> ()
    %102 = vector.shape_cast %101 : vector<2x8x4xf32> to vector<16x4xf32>
    %103 = vector.extract_strided_slice %37 {offsets = [8, 0], sizes = [4, 32], strides = [1, 1]} : vector<32x32xf32> to vector<4x32xf32>
    %cst_41 = arith.constant dense<0.000000e+00> : vector<16x32xf32>
    %104 = tpu.matmul %102, %103, %cst_41 {dimension_numbers = #tpu.dot_dimension_numbers<[1], [0], [0], [1], [0, 0, 1, 1], [], []>} : vector<16x4xf32>, vector<4x32xf32>, vector<16x32xf32> -> vector<16x32xf32>
    %105 = arith.addf %84, %104 : vector<16x32xf32>
    %106 = vector.extract_strided_slice %41 {offsets = [0, 0, 12], sizes = [2, 8, 4], strides = [1, 1, 1]} : vector<2x8x96xf32> to vector<2x8x4xf32>
    %107 = vector.extract_strided_slice %41 {offsets = [0, 0, 44], sizes = [2, 8, 4], strides = [1, 1, 1]} : vector<2x8x96xf32> to vector<2x8x4xf32>
    %108 = vector.extract_strided_slice %41 {offsets = [0, 0, 76], sizes = [2, 8, 4], strides = [1, 1, 1]} : vector<2x8x96xf32> to vector<2x8x4xf32>
    "tpu.trace_start"() <{level = 10 : i32, message = "bqd,bkd->bqk"}> : () -> ()
    %cst_42 = arith.constant dense<0.000000e+00> : vector<2x8x8xf32>
    %109 = tpu.matmul %106, %107, %cst_42 {dimension_numbers = #tpu.dot_dimension_numbers<[2], [2], [1], [1], [0, 0, 0, 1, 1, 1], [0], [0]>} : vector<2x8x4xf32>, vector<2x8x4xf32>, vector<2x8x8xf32> -> vector<2x8x8xf32>
    "tpu.trace_stop"() : () -> ()
    %cst_43 = arith.constant 5.000000e-01 : f32
    %110 = vector.broadcast %cst_43 : f32 to vector<2x8x8xf32>
    %111 = arith.mulf %109, %110 : vector<2x8x8xf32>
    %cst_44 = arith.constant dense<0xFF800000> : vector<2x8xf32>
    %112 = vector.multi_reduction <maximumf>, %111, %cst_44 [2] : vector<2x8x8xf32> to vector<2x8xf32>
    %113 = vector.shape_cast %112 : vector<2x8xf32> to vector<2x8x1xf32>
    %114 = vector.broadcast %113 : vector<2x8x1xf32> to vector<2x8x8xf32>
    %115 = arith.subf %111, %114 : vector<2x8x8xf32>
    %116 = math.exp %115 : vector<2x8x8xf32>
    %cst_45 = arith.constant dense<0.000000e+00> : vector<2x8xf32>
    %117 = vector.multi_reduction <add>, %116, %cst_45 [2] : vector<2x8x8xf32> to vector<2x8xf32>
    %118 = vector.shape_cast %117 : vector<2x8xf32> to vector<2x8x1xf32>
    %119 = tpu.reciprocal %118 {approx = true} : vector<2x8x1xf32> -> vector<2x8x1xf32>
    %120 = vector.broadcast %119 : vector<2x8x1xf32> to vector<2x8x8xf32>
    %121 = arith.mulf %116, %120 : vector<2x8x8xf32>
    "tpu.trace_start"() <{level = 10 : i32, message = "bqk,bkd->bqd"}> : () -> ()
    %cst_46 = arith.constant dense<0.000000e+00> : vector<2x8x4xf32>
    %122 = tpu.matmul %121, %108, %cst_46 {dimension_numbers = #tpu.dot_dimension_numbers<[2], [1], [1], [2], [0, 0, 0, 1, 1, 2], [0], [0]>} : vector<2x8x8xf32>, vector<2x8x4xf32>, vector<2x8x4xf32> -> vector<2x8x4xf32>
    "tpu.trace_stop"() : () -> ()
    %123 = vector.shape_cast %122 : vector<2x8x4xf32> to vector<16x4xf32>
    %124 = vector.extract_strided_slice %37 {offsets = [12, 0], sizes = [4, 32], strides = [1, 1]} : vector<32x32xf32> to vector<4x32xf32>
    %cst_47 = arith.constant dense<0.000000e+00> : vector<16x32xf32>
    %125 = tpu.matmul %123, %124, %cst_47 {dimension_numbers = #tpu.dot_dimension_numbers<[1], [0], [0], [1], [0, 0, 1, 1], [], []>} : vector<16x4xf32>, vector<4x32xf32>, vector<16x32xf32> -> vector<16x32xf32>
    %126 = arith.addf %105, %125 : vector<16x32xf32>
    %127 = vector.extract_strided_slice %41 {offsets = [0, 0, 16], sizes = [2, 8, 4], strides = [1, 1, 1]} : vector<2x8x96xf32> to vector<2x8x4xf32>
    %128 = vector.extract_strided_slice %41 {offsets = [0, 0, 48], sizes = [2, 8, 4], strides = [1, 1, 1]} : vector<2x8x96xf32> to vector<2x8x4xf32>
    %129 = vector.extract_strided_slice %41 {offsets = [0, 0, 80], sizes = [2, 8, 4], strides = [1, 1, 1]} : vector<2x8x96xf32> to vector<2x8x4xf32>
    "tpu.trace_start"() <{level = 10 : i32, message = "bqd,bkd->bqk"}> : () -> ()
    %cst_48 = arith.constant dense<0.000000e+00> : vector<2x8x8xf32>
    %130 = tpu.matmul %127, %128, %cst_48 {dimension_numbers = #tpu.dot_dimension_numbers<[2], [2], [1], [1], [0, 0, 0, 1, 1, 1], [0], [0]>} : vector<2x8x4xf32>, vector<2x8x4xf32>, vector<2x8x8xf32> -> vector<2x8x8xf32>
    "tpu.trace_stop"() : () -> ()
    %cst_49 = arith.constant 5.000000e-01 : f32
    %131 = vector.broadcast %cst_49 : f32 to vector<2x8x8xf32>
    %132 = arith.mulf %130, %131 : vector<2x8x8xf32>
    %cst_50 = arith.constant dense<0xFF800000> : vector<2x8xf32>
    %133 = vector.multi_reduction <maximumf>, %132, %cst_50 [2] : vector<2x8x8xf32> to vector<2x8xf32>
    %134 = vector.shape_cast %133 : vector<2x8xf32> to vector<2x8x1xf32>
    %135 = vector.broadcast %134 : vector<2x8x1xf32> to vector<2x8x8xf32>
    %136 = arith.subf %132, %135 : vector<2x8x8xf32>
    %137 = math.exp %136 : vector<2x8x8xf32>
    %cst_51 = arith.constant dense<0.000000e+00> : vector<2x8xf32>
    %138 = vector.multi_reduction <add>, %137, %cst_51 [2] : vector<2x8x8xf32> to vector<2x8xf32>
    %139 = vector.shape_cast %138 : vector<2x8xf32> to vector<2x8x1xf32>
    %140 = tpu.reciprocal %139 {approx = true} : vector<2x8x1xf32> -> vector<2x8x1xf32>
    %141 = vector.broadcast %140 : vector<2x8x1xf32> to vector<2x8x8xf32>
    %142 = arith.mulf %137, %141 : vector<2x8x8xf32>
    "tpu.trace_start"() <{level = 10 : i32, message = "bqk,bkd->bqd"}> : () -> ()
    %cst_52 = arith.constant dense<0.000000e+00> : vector<2x8x4xf32>
    %143 = tpu.matmul %142, %129, %cst_52 {dimension_numbers = #tpu.dot_dimension_numbers<[2], [1], [1], [2], [0, 0, 0, 1, 1, 2], [0], [0]>} : vector<2x8x8xf32>, vector<2x8x4xf32>, vector<2x8x4xf32> -> vector<2x8x4xf32>
    "tpu.trace_stop"() : () -> ()
    %144 = vector.shape_cast %143 : vector<2x8x4xf32> to vector<16x4xf32>
    %145 = vector.extract_strided_slice %37 {offsets = [16, 0], sizes = [4, 32], strides = [1, 1]} : vector<32x32xf32> to vector<4x32xf32>
    %cst_53 = arith.constant dense<0.000000e+00> : vector<16x32xf32>
    %146 = tpu.matmul %144, %145, %cst_53 {dimension_numbers = #tpu.dot_dimension_numbers<[1], [0], [0], [1], [0, 0, 1, 1], [], []>} : vector<16x4xf32>, vector<4x32xf32>, vector<16x32xf32> -> vector<16x32xf32>
    %147 = arith.addf %126, %146 : vector<16x32xf32>
    %148 = vector.extract_strided_slice %41 {offsets = [0, 0, 20], sizes = [2, 8, 4], strides = [1, 1, 1]} : vector<2x8x96xf32> to vector<2x8x4xf32>
    %149 = vector.extract_strided_slice %41 {offsets = [0, 0, 52], sizes = [2, 8, 4], strides = [1, 1, 1]} : vector<2x8x96xf32> to vector<2x8x4xf32>
    %150 = vector.extract_strided_slice %41 {offsets = [0, 0, 84], sizes = [2, 8, 4], strides = [1, 1, 1]} : vector<2x8x96xf32> to vector<2x8x4xf32>
    "tpu.trace_start"() <{level = 10 : i32, message = "bqd,bkd->bqk"}> : () -> ()
    %cst_54 = arith.constant dense<0.000000e+00> : vector<2x8x8xf32>
    %151 = tpu.matmul %148, %149, %cst_54 {dimension_numbers = #tpu.dot_dimension_numbers<[2], [2], [1], [1], [0, 0, 0, 1, 1, 1], [0], [0]>} : vector<2x8x4xf32>, vector<2x8x4xf32>, vector<2x8x8xf32> -> vector<2x8x8xf32>
    "tpu.trace_stop"() : () -> ()
    %cst_55 = arith.constant 5.000000e-01 : f32
    %152 = vector.broadcast %cst_55 : f32 to vector<2x8x8xf32>
    %153 = arith.mulf %151, %152 : vector<2x8x8xf32>
    %cst_56 = arith.constant dense<0xFF800000> : vector<2x8xf32>
    %154 = vector.multi_reduction <maximumf>, %153, %cst_56 [2] : vector<2x8x8xf32> to vector<2x8xf32>
    %155 = vector.shape_cast %154 : vector<2x8xf32> to vector<2x8x1xf32>
    %156 = vector.broadcast %155 : vector<2x8x1xf32> to vector<2x8x8xf32>
    %157 = arith.subf %153, %156 : vector<2x8x8xf32>
    %158 = math.exp %157 : vector<2x8x8xf32>
    %cst_57 = arith.constant dense<0.000000e+00> : vector<2x8xf32>
    %159 = vector.multi_reduction <add>, %158, %cst_57 [2] : vector<2x8x8xf32> to vector<2x8xf32>
    %160 = vector.shape_cast %159 : vector<2x8xf32> to vector<2x8x1xf32>
    %161 = tpu.reciprocal %160 {approx = true} : vector<2x8x1xf32> -> vector<2x8x1xf32>
    %162 = vector.broadcast %161 : vector<2x8x1xf32> to vector<2x8x8xf32>
    %163 = arith.mulf %158, %162 : vector<2x8x8xf32>
    "tpu.trace_start"() <{level = 10 : i32, message = "bqk,bkd->bqd"}> : () -> ()
    %cst_58 = arith.constant dense<0.000000e+00> : vector<2x8x4xf32>
    %164 = tpu.matmul %163, %150, %cst_58 {dimension_numbers = #tpu.dot_dimension_numbers<[2], [1], [1], [2], [0, 0, 0, 1, 1, 2], [0], [0]>} : vector<2x8x8xf32>, vector<2x8x4xf32>, vector<2x8x4xf32> -> vector<2x8x4xf32>
    "tpu.trace_stop"() : () -> ()
    %165 = vector.shape_cast %164 : vector<2x8x4xf32> to vector<16x4xf32>
    %166 = vector.extract_strided_slice %37 {offsets = [20, 0], sizes = [4, 32], strides = [1, 1]} : vector<32x32xf32> to vector<4x32xf32>
    %cst_59 = arith.constant dense<0.000000e+00> : vector<16x32xf32>
    %167 = tpu.matmul %165, %166, %cst_59 {dimension_numbers = #tpu.dot_dimension_numbers<[1], [0], [0], [1], [0, 0, 1, 1], [], []>} : vector<16x4xf32>, vector<4x32xf32>, vector<16x32xf32> -> vector<16x32xf32>
    %168 = arith.addf %147, %167 : vector<16x32xf32>
    %169 = vector.extract_strided_slice %41 {offsets = [0, 0, 24], sizes = [2, 8, 4], strides = [1, 1, 1]} : vector<2x8x96xf32> to vector<2x8x4xf32>
    %170 = vector.extract_strided_slice %41 {offsets = [0, 0, 56], sizes = [2, 8, 4], strides = [1, 1, 1]} : vector<2x8x96xf32> to vector<2x8x4xf32>
    %171 = vector.extract_strided_slice %41 {offsets = [0, 0, 88], sizes = [2, 8, 4], strides = [1, 1, 1]} : vector<2x8x96xf32> to vector<2x8x4xf32>
    "tpu.trace_start"() <{level = 10 : i32, message = "bqd,bkd->bqk"}> : () -> ()
    %cst_60 = arith.constant dense<0.000000e+00> : vector<2x8x8xf32>
    %172 = tpu.matmul %169, %170, %cst_60 {dimension_numbers = #tpu.dot_dimension_numbers<[2], [2], [1], [1], [0, 0, 0, 1, 1, 1], [0], [0]>} : vector<2x8x4xf32>, vector<2x8x4xf32>, vector<2x8x8xf32> -> vector<2x8x8xf32>
    "tpu.trace_stop"() : () -> ()
    %cst_61 = arith.constant 5.000000e-01 : f32
    %173 = vector.broadcast %cst_61 : f32 to vector<2x8x8xf32>
    %174 = arith.mulf %172, %173 : vector<2x8x8xf32>
    %cst_62 = arith.constant dense<0xFF800000> : vector<2x8xf32>
    %175 = vector.multi_reduction <maximumf>, %174, %cst_62 [2] : vector<2x8x8xf32> to vector<2x8xf32>
    %176 = vector.shape_cast %175 : vector<2x8xf32> to vector<2x8x1xf32>
    %177 = vector.broadcast %176 : vector<2x8x1xf32> to vector<2x8x8xf32>
    %178 = arith.subf %174, %177 : vector<2x8x8xf32>
    %179 = math.exp %178 : vector<2x8x8xf32>
    %cst_63 = arith.constant dense<0.000000e+00> : vector<2x8xf32>
    %180 = vector.multi_reduction <add>, %179, %cst_63 [2] : vector<2x8x8xf32> to vector<2x8xf32>
    %181 = vector.shape_cast %180 : vector<2x8xf32> to vector<2x8x1xf32>
    %182 = tpu.reciprocal %181 {approx = true} : vector<2x8x1xf32> -> vector<2x8x1xf32>
    %183 = vector.broadcast %182 : vector<2x8x1xf32> to vector<2x8x8xf32>
    %184 = arith.mulf %179, %183 : vector<2x8x8xf32>
    "tpu.trace_start"() <{level = 10 : i32, message = "bqk,bkd->bqd"}> : () -> ()
    %cst_64 = arith.constant dense<0.000000e+00> : vector<2x8x4xf32>
    %185 = tpu.matmul %184, %171, %cst_64 {dimension_numbers = #tpu.dot_dimension_numbers<[2], [1], [1], [2], [0, 0, 0, 1, 1, 2], [0], [0]>} : vector<2x8x8xf32>, vector<2x8x4xf32>, vector<2x8x4xf32> -> vector<2x8x4xf32>
    "tpu.trace_stop"() : () -> ()
    %186 = vector.shape_cast %185 : vector<2x8x4xf32> to vector<16x4xf32>
    %187 = vector.extract_strided_slice %37 {offsets = [24, 0], sizes = [4, 32], strides = [1, 1]} : vector<32x32xf32> to vector<4x32xf32>
    %cst_65 = arith.constant dense<0.000000e+00> : vector<16x32xf32>
    %188 = tpu.matmul %186, %187, %cst_65 {dimension_numbers = #tpu.dot_dimension_numbers<[1], [0], [0], [1], [0, 0, 1, 1], [], []>} : vector<16x4xf32>, vector<4x32xf32>, vector<16x32xf32> -> vector<16x32xf32>
    %189 = arith.addf %168, %188 : vector<16x32xf32>
    %190 = vector.extract_strided_slice %41 {offsets = [0, 0, 28], sizes = [2, 8, 4], strides = [1, 1, 1]} : vector<2x8x96xf32> to vector<2x8x4xf32>
    %191 = vector.extract_strided_slice %41 {offsets = [0, 0, 60], sizes = [2, 8, 4], strides = [1, 1, 1]} : vector<2x8x96xf32> to vector<2x8x4xf32>
    %192 = vector.extract_strided_slice %41 {offsets = [0, 0, 92], sizes = [2, 8, 4], strides = [1, 1, 1]} : vector<2x8x96xf32> to vector<2x8x4xf32>
    "tpu.trace_start"() <{level = 10 : i32, message = "bqd,bkd->bqk"}> : () -> ()
    %cst_66 = arith.constant dense<0.000000e+00> : vector<2x8x8xf32>
    %193 = tpu.matmul %190, %191, %cst_66 {dimension_numbers = #tpu.dot_dimension_numbers<[2], [2], [1], [1], [0, 0, 0, 1, 1, 1], [0], [0]>} : vector<2x8x4xf32>, vector<2x8x4xf32>, vector<2x8x8xf32> -> vector<2x8x8xf32>
    "tpu.trace_stop"() : () -> ()
    %cst_67 = arith.constant 5.000000e-01 : f32
    %194 = vector.broadcast %cst_67 : f32 to vector<2x8x8xf32>
    %195 = arith.mulf %193, %194 : vector<2x8x8xf32>
    %cst_68 = arith.constant dense<0xFF800000> : vector<2x8xf32>
    %196 = vector.multi_reduction <maximumf>, %195, %cst_68 [2] : vector<2x8x8xf32> to vector<2x8xf32>
    %197 = vector.shape_cast %196 : vector<2x8xf32> to vector<2x8x1xf32>
    %198 = vector.broadcast %197 : vector<2x8x1xf32> to vector<2x8x8xf32>
    %199 = arith.subf %195, %198 : vector<2x8x8xf32>
    %200 = math.exp %199 : vector<2x8x8xf32>
    %cst_69 = arith.constant dense<0.000000e+00> : vector<2x8xf32>
    %201 = vector.multi_reduction <add>, %200, %cst_69 [2] : vector<2x8x8xf32> to vector<2x8xf32>
    %202 = vector.shape_cast %201 : vector<2x8xf32> to vector<2x8x1xf32>
    %203 = tpu.reciprocal %202 {approx = true} : vector<2x8x1xf32> -> vector<2x8x1xf32>
    %204 = vector.broadcast %203 : vector<2x8x1xf32> to vector<2x8x8xf32>
    %205 = arith.mulf %200, %204 : vector<2x8x8xf32>
    "tpu.trace_start"() <{level = 10 : i32, message = "bqk,bkd->bqd"}> : () -> ()
    %cst_70 = arith.constant dense<0.000000e+00> : vector<2x8x4xf32>
    %206 = tpu.matmul %205, %192, %cst_70 {dimension_numbers = #tpu.dot_dimension_numbers<[2], [1], [1], [2], [0, 0, 0, 1, 1, 2], [0], [0]>} : vector<2x8x8xf32>, vector<2x8x4xf32>, vector<2x8x4xf32> -> vector<2x8x4xf32>
    "tpu.trace_stop"() : () -> ()
    %207 = vector.shape_cast %206 : vector<2x8x4xf32> to vector<16x4xf32>
    %208 = vector.extract_strided_slice %37 {offsets = [28, 0], sizes = [4, 32], strides = [1, 1]} : vector<32x32xf32> to vector<4x32xf32>
    %cst_71 = arith.constant dense<0.000000e+00> : vector<16x32xf32>
    %209 = tpu.matmul %207, %208, %cst_71 {dimension_numbers = #tpu.dot_dimension_numbers<[1], [0], [0], [1], [0, 0, 1, 1], [], []>} : vector<16x4xf32>, vector<4x32xf32>, vector<16x32xf32> -> vector<16x32xf32>
    %210 = arith.addf %189, %209 : vector<16x32xf32>
    %211 = vector.broadcast %27 : vector<1x32xf32> to vector<16x32xf32>
    %212 = arith.addf %210, %211 : vector<16x32xf32>
    %213 = arith.addf %23, %212 : vector<16x32xf32>
    %cst_72 = arith.constant dense<0.000000e+00> : vector<16xf32>
    %214 = vector.multi_reduction <add>, %213, %cst_72 [1] : vector<16x32xf32> to vector<16xf32>
    %215 = vector.shape_cast %214 : vector<16xf32> to vector<16x1xf32>
    %cst_73 = arith.constant 3.200000e+01 : f32
    %216 = vector.broadcast %cst_73 : f32 to vector<16x1xf32>
    %217 = arith.divf %215, %216 : vector<16x1xf32>
    %218 = vector.broadcast %217 : vector<16x1xf32> to vector<16x32xf32>
    %219 = arith.subf %213, %218 : vector<16x32xf32>
    %220 = arith.mulf %219, %219 : vector<16x32xf32>
    %cst_74 = arith.constant dense<0.000000e+00> : vector<16xf32>
    %221 = vector.multi_reduction <add>, %220, %cst_74 [1] : vector<16x32xf32> to vector<16xf32>
    %222 = vector.shape_cast %221 : vector<16xf32> to vector<16x1xf32>
    %cst_75 = arith.constant 3.200000e+01 : f32
    %223 = vector.broadcast %cst_75 : f32 to vector<16x1xf32>
    %224 = arith.divf %222, %223 : vector<16x1xf32>
    %225 = vector.broadcast %217 : vector<16x1xf32> to vector<16x32xf32>
    %226 = arith.subf %213, %225 : vector<16x32xf32>
    %cst_76 = arith.constant 9.99999974E-6 : f32
    %227 = vector.broadcast %cst_76 : f32 to vector<16x1xf32>
    %228 = arith.addf %224, %227 : vector<16x1xf32>
    %229 = math.rsqrt %228 : vector<16x1xf32>
    %230 = vector.broadcast %229 : vector<16x1xf32> to vector<16x32xf32>
    %231 = arith.mulf %226, %230 : vector<16x32xf32>
    %232 = vector.broadcast %30 : vector<1x32xf32> to vector<16x32xf32>
    %233 = arith.mulf %231, %232 : vector<16x32xf32>
    %234 = vector.broadcast %31 : vector<1x32xf32> to vector<16x32xf32>
    %235 = arith.addf %233, %234 : vector<16x32xf32>
    %c0_77 = arith.constant 0 : index
    %c0_78 = arith.constant 0 : index
    %c0_79 = arith.constant 0 : index
    %236 = vector.load %arg9[%c0_77, %c0_78, %c0_79] : memref<2x32x64xf32, #tpu.memory_space<vmem>>, vector<1x32x64xf32>
    %237 = vector.shape_cast %236 : vector<1x32x64xf32> to vector<32x64xf32>
    %cst_80 = arith.constant dense<0.000000e+00> : vector<16x64xf32>
    %238 = tpu.matmul %235, %237, %cst_80 {dimension_numbers = #tpu.dot_dimension_numbers<[1], [0], [0], [1], [0, 0, 1, 1], [], []>} : vector<16x32xf32>, vector<32x64xf32>, vector<16x64xf32> -> vector<16x64xf32>
    %239 = vector.broadcast %28 : vector<1x64xf32> to vector<16x64xf32>
    %240 = arith.addf %238, %239 : vector<16x64xf32>
    %cst_81 = arith.constant 0.000000e+00 : f32
    %241 = vector.broadcast %cst_81 : f32 to vector<16x64xf32>
    %242 = arith.maximumf %240, %241 : vector<16x64xf32>
    %c0_82 = arith.constant 0 : index
    %c0_83 = arith.constant 0 : index
    %c0_84 = arith.constant 0 : index
    %243 = vector.load %arg10[%c0_82, %c0_83, %c0_84] : memref<2x64x32xf32, #tpu.memory_space<vmem>>, vector<1x64x32xf32>
    %244 = vector.shape_cast %243 : vector<1x64x32xf32> to vector<64x32xf32>
    %cst_85 = arith.constant dense<0.000000e+00> : vector<16x32xf32>
    %245 = tpu.matmul %242, %244, %cst_85 {dimension_numbers = #tpu.dot_dimension_numbers<[1], [0], [0], [1], [0, 0, 1, 1], [], []>} : vector<16x64xf32>, vector<64x32xf32>, vector<16x32xf32> -> vector<16x32xf32>
    %246 = vector.broadcast %29 : vector<1x32xf32> to vector<16x32xf32>
    %247 = arith.addf %245, %246 : vector<16x32xf32>
    %248 = arith.addf %235, %247 : vector<16x32xf32>
    %cst_86 = arith.constant dense<0.000000e+00> : vector<16xf32>
    %249 = vector.multi_reduction <add>, %248, %cst_86 [1] : vector<16x32xf32> to vector<16xf32>
    %250 = vector.shape_cast %249 : vector<16xf32> to vector<16x1xf32>
    %cst_87 = arith.constant 3.200000e+01 : f32
    %251 = vector.broadcast %cst_87 : f32 to vector<16x1xf32>
    %252 = arith.divf %250, %251 : vector<16x1xf32>
    %253 = vector.broadcast %252 : vector<16x1xf32> to vector<16x32xf32>
    %254 = arith.subf %248, %253 : vector<16x32xf32>
    %255 = arith.mulf %254, %254 : vector<16x32xf32>
    %cst_88 = arith.constant dense<0.000000e+00> : vector<16xf32>
    %256 = vector.multi_reduction <add>, %255, %cst_88 [1] : vector<16x32xf32> to vector<16xf32>
    %257 = vector.shape_cast %256 : vector<16xf32> to vector<16x1xf32>
    %cst_89 = arith.constant 3.200000e+01 : f32
    %258 = vector.broadcast %cst_89 : f32 to vector<16x1xf32>
    %259 = arith.divf %257, %258 : vector<16x1xf32>
    %260 = vector.broadcast %252 : vector<16x1xf32> to vector<16x32xf32>
    %261 = arith.subf %248, %260 : vector<16x32xf32>
    %cst_90 = arith.constant 9.99999974E-6 : f32
    %262 = vector.broadcast %cst_90 : f32 to vector<16x1xf32>
    %263 = arith.addf %259, %262 : vector<16x1xf32>
    %264 = math.rsqrt %263 : vector<16x1xf32>
    %265 = vector.broadcast %264 : vector<16x1xf32> to vector<16x32xf32>
    %266 = arith.mulf %261, %265 : vector<16x32xf32>
    %267 = vector.broadcast %32 : vector<1x32xf32> to vector<16x32xf32>
    %268 = arith.mulf %266, %267 : vector<16x32xf32>
    %269 = vector.broadcast %33 : vector<1x32xf32> to vector<16x32xf32>
    %270 = arith.addf %268, %269 : vector<16x32xf32>
    %c1 = arith.constant 1 : index
    %c0_91 = arith.constant 0 : index
    %c0_92 = arith.constant 0 : index
    %271 = vector.load %arg11[%c1, %c0_91, %c0_92] : memref<2x8x96xf32, #tpu.memory_space<vmem>>, vector<1x8x96xf32>
    %272 = vector.shape_cast %271 : vector<1x8x96xf32> to vector<8x96xf32>
    %273 = vector.extract_strided_slice %272 {offsets = [0, 0], sizes = [1, 96], strides = [1, 1]} : vector<8x96xf32> to vector<1x96xf32>
    %274 = vector.extract_strided_slice %272 {offsets = [1, 0], sizes = [1, 32], strides = [1, 1]} : vector<8x96xf32> to vector<1x32xf32>
    %275 = vector.extract_strided_slice %272 {offsets = [2, 0], sizes = [1, 64], strides = [1, 1]} : vector<8x96xf32> to vector<1x64xf32>
    %276 = vector.extract_strided_slice %272 {offsets = [3, 0], sizes = [1, 32], strides = [1, 1]} : vector<8x96xf32> to vector<1x32xf32>
    %277 = vector.extract_strided_slice %272 {offsets = [4, 0], sizes = [1, 32], strides = [1, 1]} : vector<8x96xf32> to vector<1x32xf32>
    %278 = vector.extract_strided_slice %272 {offsets = [5, 0], sizes = [1, 32], strides = [1, 1]} : vector<8x96xf32> to vector<1x32xf32>
    %279 = vector.extract_strided_slice %272 {offsets = [6, 0], sizes = [1, 32], strides = [1, 1]} : vector<8x96xf32> to vector<1x32xf32>
    %280 = vector.extract_strided_slice %272 {offsets = [7, 0], sizes = [1, 32], strides = [1, 1]} : vector<8x96xf32> to vector<1x32xf32>
    %c1_93 = arith.constant 1 : index
    %c0_94 = arith.constant 0 : index
    %c0_95 = arith.constant 0 : index
    %281 = vector.load %arg7[%c1_93, %c0_94, %c0_95] : memref<2x32x96xf32, #tpu.memory_space<vmem>>, vector<1x32x96xf32>
    %282 = vector.shape_cast %281 : vector<1x32x96xf32> to vector<32x96xf32>
    %c1_96 = arith.constant 1 : index
    %c0_97 = arith.constant 0 : index
    %c0_98 = arith.constant 0 : index
    %283 = vector.load %arg8[%c1_96, %c0_97, %c0_98] : memref<2x32x32xf32, #tpu.memory_space<vmem>>, vector<1x32x32xf32>
    %284 = vector.shape_cast %283 : vector<1x32x32xf32> to vector<32x32xf32>
    %cst_99 = arith.constant dense<0.000000e+00> : vector<16x96xf32>
    %285 = tpu.matmul %270, %282, %cst_99 {dimension_numbers = #tpu.dot_dimension_numbers<[1], [0], [0], [1], [0, 0, 1, 1], [], []>} : vector<16x32xf32>, vector<32x96xf32>, vector<16x96xf32> -> vector<16x96xf32>
    %286 = vector.broadcast %273 : vector<1x96xf32> to vector<16x96xf32>
    %287 = arith.addf %285, %286 : vector<16x96xf32>
    %288 = vector.shape_cast %287 : vector<16x96xf32> to vector<2x8x96xf32>
    %cst_100 = arith.constant 0.000000e+00 : f32
    %289 = vector.broadcast %cst_100 : f32 to vector<16x32xf32>
    %290 = vector.extract_strided_slice %288 {offsets = [0, 0, 0], sizes = [2, 8, 4], strides = [1, 1, 1]} : vector<2x8x96xf32> to vector<2x8x4xf32>
    %291 = vector.extract_strided_slice %288 {offsets = [0, 0, 32], sizes = [2, 8, 4], strides = [1, 1, 1]} : vector<2x8x96xf32> to vector<2x8x4xf32>
    %292 = vector.extract_strided_slice %288 {offsets = [0, 0, 64], sizes = [2, 8, 4], strides = [1, 1, 1]} : vector<2x8x96xf32> to vector<2x8x4xf32>
    "tpu.trace_start"() <{level = 10 : i32, message = "bqd,bkd->bqk"}> : () -> ()
    %cst_101 = arith.constant dense<0.000000e+00> : vector<2x8x8xf32>
    %293 = tpu.matmul %290, %291, %cst_101 {dimension_numbers = #tpu.dot_dimension_numbers<[2], [2], [1], [1], [0, 0, 0, 1, 1, 1], [0], [0]>} : vector<2x8x4xf32>, vector<2x8x4xf32>, vector<2x8x8xf32> -> vector<2x8x8xf32>
    "tpu.trace_stop"() : () -> ()
    %cst_102 = arith.constant 5.000000e-01 : f32
    %294 = vector.broadcast %cst_102 : f32 to vector<2x8x8xf32>
    %295 = arith.mulf %293, %294 : vector<2x8x8xf32>
    %cst_103 = arith.constant dense<0xFF800000> : vector<2x8xf32>
    %296 = vector.multi_reduction <maximumf>, %295, %cst_103 [2] : vector<2x8x8xf32> to vector<2x8xf32>
    %297 = vector.shape_cast %296 : vector<2x8xf32> to vector<2x8x1xf32>
    %298 = vector.broadcast %297 : vector<2x8x1xf32> to vector<2x8x8xf32>
    %299 = arith.subf %295, %298 : vector<2x8x8xf32>
    %300 = math.exp %299 : vector<2x8x8xf32>
    %cst_104 = arith.constant dense<0.000000e+00> : vector<2x8xf32>
    %301 = vector.multi_reduction <add>, %300, %cst_104 [2] : vector<2x8x8xf32> to vector<2x8xf32>
    %302 = vector.shape_cast %301 : vector<2x8xf32> to vector<2x8x1xf32>
    %303 = tpu.reciprocal %302 {approx = true} : vector<2x8x1xf32> -> vector<2x8x1xf32>
    %304 = vector.broadcast %303 : vector<2x8x1xf32> to vector<2x8x8xf32>
    %305 = arith.mulf %300, %304 : vector<2x8x8xf32>
    "tpu.trace_start"() <{level = 10 : i32, message = "bqk,bkd->bqd"}> : () -> ()
    %cst_105 = arith.constant dense<0.000000e+00> : vector<2x8x4xf32>
    %306 = tpu.matmul %305, %292, %cst_105 {dimension_numbers = #tpu.dot_dimension_numbers<[2], [1], [1], [2], [0, 0, 0, 1, 1, 2], [0], [0]>} : vector<2x8x8xf32>, vector<2x8x4xf32>, vector<2x8x4xf32> -> vector<2x8x4xf32>
    "tpu.trace_stop"() : () -> ()
    %307 = vector.shape_cast %306 : vector<2x8x4xf32> to vector<16x4xf32>
    %308 = vector.extract_strided_slice %284 {offsets = [0, 0], sizes = [4, 32], strides = [1, 1]} : vector<32x32xf32> to vector<4x32xf32>
    %cst_106 = arith.constant dense<0.000000e+00> : vector<16x32xf32>
    %309 = tpu.matmul %307, %308, %cst_106 {dimension_numbers = #tpu.dot_dimension_numbers<[1], [0], [0], [1], [0, 0, 1, 1], [], []>} : vector<16x4xf32>, vector<4x32xf32>, vector<16x32xf32> -> vector<16x32xf32>
    %310 = arith.addf %289, %309 : vector<16x32xf32>
    %311 = vector.extract_strided_slice %288 {offsets = [0, 0, 4], sizes = [2, 8, 4], strides = [1, 1, 1]} : vector<2x8x96xf32> to vector<2x8x4xf32>
    %312 = vector.extract_strided_slice %288 {offsets = [0, 0, 36], sizes = [2, 8, 4], strides = [1, 1, 1]} : vector<2x8x96xf32> to vector<2x8x4xf32>
    %313 = vector.extract_strided_slice %288 {offsets = [0, 0, 68], sizes = [2, 8, 4], strides = [1, 1, 1]} : vector<2x8x96xf32> to vector<2x8x4xf32>
    "tpu.trace_start"() <{level = 10 : i32, message = "bqd,bkd->bqk"}> : () -> ()
    %cst_107 = arith.constant dense<0.000000e+00> : vector<2x8x8xf32>
    %314 = tpu.matmul %311, %312, %cst_107 {dimension_numbers = #tpu.dot_dimension_numbers<[2], [2], [1], [1], [0, 0, 0, 1, 1, 1], [0], [0]>} : vector<2x8x4xf32>, vector<2x8x4xf32>, vector<2x8x8xf32> -> vector<2x8x8xf32>
    "tpu.trace_stop"() : () -> ()
    %cst_108 = arith.constant 5.000000e-01 : f32
    %315 = vector.broadcast %cst_108 : f32 to vector<2x8x8xf32>
    %316 = arith.mulf %314, %315 : vector<2x8x8xf32>
    %cst_109 = arith.constant dense<0xFF800000> : vector<2x8xf32>
    %317 = vector.multi_reduction <maximumf>, %316, %cst_109 [2] : vector<2x8x8xf32> to vector<2x8xf32>
    %318 = vector.shape_cast %317 : vector<2x8xf32> to vector<2x8x1xf32>
    %319 = vector.broadcast %318 : vector<2x8x1xf32> to vector<2x8x8xf32>
    %320 = arith.subf %316, %319 : vector<2x8x8xf32>
    %321 = math.exp %320 : vector<2x8x8xf32>
    %cst_110 = arith.constant dense<0.000000e+00> : vector<2x8xf32>
    %322 = vector.multi_reduction <add>, %321, %cst_110 [2] : vector<2x8x8xf32> to vector<2x8xf32>
    %323 = vector.shape_cast %322 : vector<2x8xf32> to vector<2x8x1xf32>
    %324 = tpu.reciprocal %323 {approx = true} : vector<2x8x1xf32> -> vector<2x8x1xf32>
    %325 = vector.broadcast %324 : vector<2x8x1xf32> to vector<2x8x8xf32>
    %326 = arith.mulf %321, %325 : vector<2x8x8xf32>
    "tpu.trace_start"() <{level = 10 : i32, message = "bqk,bkd->bqd"}> : () -> ()
    %cst_111 = arith.constant dense<0.000000e+00> : vector<2x8x4xf32>
    %327 = tpu.matmul %326, %313, %cst_111 {dimension_numbers = #tpu.dot_dimension_numbers<[2], [1], [1], [2], [0, 0, 0, 1, 1, 2], [0], [0]>} : vector<2x8x8xf32>, vector<2x8x4xf32>, vector<2x8x4xf32> -> vector<2x8x4xf32>
    "tpu.trace_stop"() : () -> ()
    %328 = vector.shape_cast %327 : vector<2x8x4xf32> to vector<16x4xf32>
    %329 = vector.extract_strided_slice %284 {offsets = [4, 0], sizes = [4, 32], strides = [1, 1]} : vector<32x32xf32> to vector<4x32xf32>
    %cst_112 = arith.constant dense<0.000000e+00> : vector<16x32xf32>
    %330 = tpu.matmul %328, %329, %cst_112 {dimension_numbers = #tpu.dot_dimension_numbers<[1], [0], [0], [1], [0, 0, 1, 1], [], []>} : vector<16x4xf32>, vector<4x32xf32>, vector<16x32xf32> -> vector<16x32xf32>
    %331 = arith.addf %310, %330 : vector<16x32xf32>
    %332 = vector.extract_strided_slice %288 {offsets = [0, 0, 8], sizes = [2, 8, 4], strides = [1, 1, 1]} : vector<2x8x96xf32> to vector<2x8x4xf32>
    %333 = vector.extract_strided_slice %288 {offsets = [0, 0, 40], sizes = [2, 8, 4], strides = [1, 1, 1]} : vector<2x8x96xf32> to vector<2x8x4xf32>
    %334 = vector.extract_strided_slice %288 {offsets = [0, 0, 72], sizes = [2, 8, 4], strides = [1, 1, 1]} : vector<2x8x96xf32> to vector<2x8x4xf32>
    "tpu.trace_start"() <{level = 10 : i32, message = "bqd,bkd->bqk"}> : () -> ()
    %cst_113 = arith.constant dense<0.000000e+00> : vector<2x8x8xf32>
    %335 = tpu.matmul %332, %333, %cst_113 {dimension_numbers = #tpu.dot_dimension_numbers<[2], [2], [1], [1], [0, 0, 0, 1, 1, 1], [0], [0]>} : vector<2x8x4xf32>, vector<2x8x4xf32>, vector<2x8x8xf32> -> vector<2x8x8xf32>
    "tpu.trace_stop"() : () -> ()
    %cst_114 = arith.constant 5.000000e-01 : f32
    %336 = vector.broadcast %cst_114 : f32 to vector<2x8x8xf32>
    %337 = arith.mulf %335, %336 : vector<2x8x8xf32>
    %cst_115 = arith.constant dense<0xFF800000> : vector<2x8xf32>
    %338 = vector.multi_reduction <maximumf>, %337, %cst_115 [2] : vector<2x8x8xf32> to vector<2x8xf32>
    %339 = vector.shape_cast %338 : vector<2x8xf32> to vector<2x8x1xf32>
    %340 = vector.broadcast %339 : vector<2x8x1xf32> to vector<2x8x8xf32>
    %341 = arith.subf %337, %340 : vector<2x8x8xf32>
    %342 = math.exp %341 : vector<2x8x8xf32>
    %cst_116 = arith.constant dense<0.000000e+00> : vector<2x8xf32>
    %343 = vector.multi_reduction <add>, %342, %cst_116 [2] : vector<2x8x8xf32> to vector<2x8xf32>
    %344 = vector.shape_cast %343 : vector<2x8xf32> to vector<2x8x1xf32>
    %345 = tpu.reciprocal %344 {approx = true} : vector<2x8x1xf32> -> vector<2x8x1xf32>
    %346 = vector.broadcast %345 : vector<2x8x1xf32> to vector<2x8x8xf32>
    %347 = arith.mulf %342, %346 : vector<2x8x8xf32>
    "tpu.trace_start"() <{level = 10 : i32, message = "bqk,bkd->bqd"}> : () -> ()
    %cst_117 = arith.constant dense<0.000000e+00> : vector<2x8x4xf32>
    %348 = tpu.matmul %347, %334, %cst_117 {dimension_numbers = #tpu.dot_dimension_numbers<[2], [1], [1], [2], [0, 0, 0, 1, 1, 2], [0], [0]>} : vector<2x8x8xf32>, vector<2x8x4xf32>, vector<2x8x4xf32> -> vector<2x8x4xf32>
    "tpu.trace_stop"() : () -> ()
    %349 = vector.shape_cast %348 : vector<2x8x4xf32> to vector<16x4xf32>
    %350 = vector.extract_strided_slice %284 {offsets = [8, 0], sizes = [4, 32], strides = [1, 1]} : vector<32x32xf32> to vector<4x32xf32>
    %cst_118 = arith.constant dense<0.000000e+00> : vector<16x32xf32>
    %351 = tpu.matmul %349, %350, %cst_118 {dimension_numbers = #tpu.dot_dimension_numbers<[1], [0], [0], [1], [0, 0, 1, 1], [], []>} : vector<16x4xf32>, vector<4x32xf32>, vector<16x32xf32> -> vector<16x32xf32>
    %352 = arith.addf %331, %351 : vector<16x32xf32>
    %353 = vector.extract_strided_slice %288 {offsets = [0, 0, 12], sizes = [2, 8, 4], strides = [1, 1, 1]} : vector<2x8x96xf32> to vector<2x8x4xf32>
    %354 = vector.extract_strided_slice %288 {offsets = [0, 0, 44], sizes = [2, 8, 4], strides = [1, 1, 1]} : vector<2x8x96xf32> to vector<2x8x4xf32>
    %355 = vector.extract_strided_slice %288 {offsets = [0, 0, 76], sizes = [2, 8, 4], strides = [1, 1, 1]} : vector<2x8x96xf32> to vector<2x8x4xf32>
    "tpu.trace_start"() <{level = 10 : i32, message = "bqd,bkd->bqk"}> : () -> ()
    %cst_119 = arith.constant dense<0.000000e+00> : vector<2x8x8xf32>
    %356 = tpu.matmul %353, %354, %cst_119 {dimension_numbers = #tpu.dot_dimension_numbers<[2], [2], [1], [1], [0, 0, 0, 1, 1, 1], [0], [0]>} : vector<2x8x4xf32>, vector<2x8x4xf32>, vector<2x8x8xf32> -> vector<2x8x8xf32>
    "tpu.trace_stop"() : () -> ()
    %cst_120 = arith.constant 5.000000e-01 : f32
    %357 = vector.broadcast %cst_120 : f32 to vector<2x8x8xf32>
    %358 = arith.mulf %356, %357 : vector<2x8x8xf32>
    %cst_121 = arith.constant dense<0xFF800000> : vector<2x8xf32>
    %359 = vector.multi_reduction <maximumf>, %358, %cst_121 [2] : vector<2x8x8xf32> to vector<2x8xf32>
    %360 = vector.shape_cast %359 : vector<2x8xf32> to vector<2x8x1xf32>
    %361 = vector.broadcast %360 : vector<2x8x1xf32> to vector<2x8x8xf32>
    %362 = arith.subf %358, %361 : vector<2x8x8xf32>
    %363 = math.exp %362 : vector<2x8x8xf32>
    %cst_122 = arith.constant dense<0.000000e+00> : vector<2x8xf32>
    %364 = vector.multi_reduction <add>, %363, %cst_122 [2] : vector<2x8x8xf32> to vector<2x8xf32>
    %365 = vector.shape_cast %364 : vector<2x8xf32> to vector<2x8x1xf32>
    %366 = tpu.reciprocal %365 {approx = true} : vector<2x8x1xf32> -> vector<2x8x1xf32>
    %367 = vector.broadcast %366 : vector<2x8x1xf32> to vector<2x8x8xf32>
    %368 = arith.mulf %363, %367 : vector<2x8x8xf32>
    "tpu.trace_start"() <{level = 10 : i32, message = "bqk,bkd->bqd"}> : () -> ()
    %cst_123 = arith.constant dense<0.000000e+00> : vector<2x8x4xf32>
    %369 = tpu.matmul %368, %355, %cst_123 {dimension_numbers = #tpu.dot_dimension_numbers<[2], [1], [1], [2], [0, 0, 0, 1, 1, 2], [0], [0]>} : vector<2x8x8xf32>, vector<2x8x4xf32>, vector<2x8x4xf32> -> vector<2x8x4xf32>
    "tpu.trace_stop"() : () -> ()
    %370 = vector.shape_cast %369 : vector<2x8x4xf32> to vector<16x4xf32>
    %371 = vector.extract_strided_slice %284 {offsets = [12, 0], sizes = [4, 32], strides = [1, 1]} : vector<32x32xf32> to vector<4x32xf32>
    %cst_124 = arith.constant dense<0.000000e+00> : vector<16x32xf32>
    %372 = tpu.matmul %370, %371, %cst_124 {dimension_numbers = #tpu.dot_dimension_numbers<[1], [0], [0], [1], [0, 0, 1, 1], [], []>} : vector<16x4xf32>, vector<4x32xf32>, vector<16x32xf32> -> vector<16x32xf32>
    %373 = arith.addf %352, %372 : vector<16x32xf32>
    %374 = vector.extract_strided_slice %288 {offsets = [0, 0, 16], sizes = [2, 8, 4], strides = [1, 1, 1]} : vector<2x8x96xf32> to vector<2x8x4xf32>
    %375 = vector.extract_strided_slice %288 {offsets = [0, 0, 48], sizes = [2, 8, 4], strides = [1, 1, 1]} : vector<2x8x96xf32> to vector<2x8x4xf32>
    %376 = vector.extract_strided_slice %288 {offsets = [0, 0, 80], sizes = [2, 8, 4], strides = [1, 1, 1]} : vector<2x8x96xf32> to vector<2x8x4xf32>
    "tpu.trace_start"() <{level = 10 : i32, message = "bqd,bkd->bqk"}> : () -> ()
    %cst_125 = arith.constant dense<0.000000e+00> : vector<2x8x8xf32>
    %377 = tpu.matmul %374, %375, %cst_125 {dimension_numbers = #tpu.dot_dimension_numbers<[2], [2], [1], [1], [0, 0, 0, 1, 1, 1], [0], [0]>} : vector<2x8x4xf32>, vector<2x8x4xf32>, vector<2x8x8xf32> -> vector<2x8x8xf32>
    "tpu.trace_stop"() : () -> ()
    %cst_126 = arith.constant 5.000000e-01 : f32
    %378 = vector.broadcast %cst_126 : f32 to vector<2x8x8xf32>
    %379 = arith.mulf %377, %378 : vector<2x8x8xf32>
    %cst_127 = arith.constant dense<0xFF800000> : vector<2x8xf32>
    %380 = vector.multi_reduction <maximumf>, %379, %cst_127 [2] : vector<2x8x8xf32> to vector<2x8xf32>
    %381 = vector.shape_cast %380 : vector<2x8xf32> to vector<2x8x1xf32>
    %382 = vector.broadcast %381 : vector<2x8x1xf32> to vector<2x8x8xf32>
    %383 = arith.subf %379, %382 : vector<2x8x8xf32>
    %384 = math.exp %383 : vector<2x8x8xf32>
    %cst_128 = arith.constant dense<0.000000e+00> : vector<2x8xf32>
    %385 = vector.multi_reduction <add>, %384, %cst_128 [2] : vector<2x8x8xf32> to vector<2x8xf32>
    %386 = vector.shape_cast %385 : vector<2x8xf32> to vector<2x8x1xf32>
    %387 = tpu.reciprocal %386 {approx = true} : vector<2x8x1xf32> -> vector<2x8x1xf32>
    %388 = vector.broadcast %387 : vector<2x8x1xf32> to vector<2x8x8xf32>
    %389 = arith.mulf %384, %388 : vector<2x8x8xf32>
    "tpu.trace_start"() <{level = 10 : i32, message = "bqk,bkd->bqd"}> : () -> ()
    %cst_129 = arith.constant dense<0.000000e+00> : vector<2x8x4xf32>
    %390 = tpu.matmul %389, %376, %cst_129 {dimension_numbers = #tpu.dot_dimension_numbers<[2], [1], [1], [2], [0, 0, 0, 1, 1, 2], [0], [0]>} : vector<2x8x8xf32>, vector<2x8x4xf32>, vector<2x8x4xf32> -> vector<2x8x4xf32>
    "tpu.trace_stop"() : () -> ()
    %391 = vector.shape_cast %390 : vector<2x8x4xf32> to vector<16x4xf32>
    %392 = vector.extract_strided_slice %284 {offsets = [16, 0], sizes = [4, 32], strides = [1, 1]} : vector<32x32xf32> to vector<4x32xf32>
    %cst_130 = arith.constant dense<0.000000e+00> : vector<16x32xf32>
    %393 = tpu.matmul %391, %392, %cst_130 {dimension_numbers = #tpu.dot_dimension_numbers<[1], [0], [0], [1], [0, 0, 1, 1], [], []>} : vector<16x4xf32>, vector<4x32xf32>, vector<16x32xf32> -> vector<16x32xf32>
    %394 = arith.addf %373, %393 : vector<16x32xf32>
    %395 = vector.extract_strided_slice %288 {offsets = [0, 0, 20], sizes = [2, 8, 4], strides = [1, 1, 1]} : vector<2x8x96xf32> to vector<2x8x4xf32>
    %396 = vector.extract_strided_slice %288 {offsets = [0, 0, 52], sizes = [2, 8, 4], strides = [1, 1, 1]} : vector<2x8x96xf32> to vector<2x8x4xf32>
    %397 = vector.extract_strided_slice %288 {offsets = [0, 0, 84], sizes = [2, 8, 4], strides = [1, 1, 1]} : vector<2x8x96xf32> to vector<2x8x4xf32>
    "tpu.trace_start"() <{level = 10 : i32, message = "bqd,bkd->bqk"}> : () -> ()
    %cst_131 = arith.constant dense<0.000000e+00> : vector<2x8x8xf32>
    %398 = tpu.matmul %395, %396, %cst_131 {dimension_numbers = #tpu.dot_dimension_numbers<[2], [2], [1], [1], [0, 0, 0, 1, 1, 1], [0], [0]>} : vector<2x8x4xf32>, vector<2x8x4xf32>, vector<2x8x8xf32> -> vector<2x8x8xf32>
    "tpu.trace_stop"() : () -> ()
    %cst_132 = arith.constant 5.000000e-01 : f32
    %399 = vector.broadcast %cst_132 : f32 to vector<2x8x8xf32>
    %400 = arith.mulf %398, %399 : vector<2x8x8xf32>
    %cst_133 = arith.constant dense<0xFF800000> : vector<2x8xf32>
    %401 = vector.multi_reduction <maximumf>, %400, %cst_133 [2] : vector<2x8x8xf32> to vector<2x8xf32>
    %402 = vector.shape_cast %401 : vector<2x8xf32> to vector<2x8x1xf32>
    %403 = vector.broadcast %402 : vector<2x8x1xf32> to vector<2x8x8xf32>
    %404 = arith.subf %400, %403 : vector<2x8x8xf32>
    %405 = math.exp %404 : vector<2x8x8xf32>
    %cst_134 = arith.constant dense<0.000000e+00> : vector<2x8xf32>
    %406 = vector.multi_reduction <add>, %405, %cst_134 [2] : vector<2x8x8xf32> to vector<2x8xf32>
    %407 = vector.shape_cast %406 : vector<2x8xf32> to vector<2x8x1xf32>
    %408 = tpu.reciprocal %407 {approx = true} : vector<2x8x1xf32> -> vector<2x8x1xf32>
    %409 = vector.broadcast %408 : vector<2x8x1xf32> to vector<2x8x8xf32>
    %410 = arith.mulf %405, %409 : vector<2x8x8xf32>
    "tpu.trace_start"() <{level = 10 : i32, message = "bqk,bkd->bqd"}> : () -> ()
    %cst_135 = arith.constant dense<0.000000e+00> : vector<2x8x4xf32>
    %411 = tpu.matmul %410, %397, %cst_135 {dimension_numbers = #tpu.dot_dimension_numbers<[2], [1], [1], [2], [0, 0, 0, 1, 1, 2], [0], [0]>} : vector<2x8x8xf32>, vector<2x8x4xf32>, vector<2x8x4xf32> -> vector<2x8x4xf32>
    "tpu.trace_stop"() : () -> ()
    %412 = vector.shape_cast %411 : vector<2x8x4xf32> to vector<16x4xf32>
    %413 = vector.extract_strided_slice %284 {offsets = [20, 0], sizes = [4, 32], strides = [1, 1]} : vector<32x32xf32> to vector<4x32xf32>
    %cst_136 = arith.constant dense<0.000000e+00> : vector<16x32xf32>
    %414 = tpu.matmul %412, %413, %cst_136 {dimension_numbers = #tpu.dot_dimension_numbers<[1], [0], [0], [1], [0, 0, 1, 1], [], []>} : vector<16x4xf32>, vector<4x32xf32>, vector<16x32xf32> -> vector<16x32xf32>
    %415 = arith.addf %394, %414 : vector<16x32xf32>
    %416 = vector.extract_strided_slice %288 {offsets = [0, 0, 24], sizes = [2, 8, 4], strides = [1, 1, 1]} : vector<2x8x96xf32> to vector<2x8x4xf32>
    %417 = vector.extract_strided_slice %288 {offsets = [0, 0, 56], sizes = [2, 8, 4], strides = [1, 1, 1]} : vector<2x8x96xf32> to vector<2x8x4xf32>
    %418 = vector.extract_strided_slice %288 {offsets = [0, 0, 88], sizes = [2, 8, 4], strides = [1, 1, 1]} : vector<2x8x96xf32> to vector<2x8x4xf32>
    "tpu.trace_start"() <{level = 10 : i32, message = "bqd,bkd->bqk"}> : () -> ()
    %cst_137 = arith.constant dense<0.000000e+00> : vector<2x8x8xf32>
    %419 = tpu.matmul %416, %417, %cst_137 {dimension_numbers = #tpu.dot_dimension_numbers<[2], [2], [1], [1], [0, 0, 0, 1, 1, 1], [0], [0]>} : vector<2x8x4xf32>, vector<2x8x4xf32>, vector<2x8x8xf32> -> vector<2x8x8xf32>
    "tpu.trace_stop"() : () -> ()
    %cst_138 = arith.constant 5.000000e-01 : f32
    %420 = vector.broadcast %cst_138 : f32 to vector<2x8x8xf32>
    %421 = arith.mulf %419, %420 : vector<2x8x8xf32>
    %cst_139 = arith.constant dense<0xFF800000> : vector<2x8xf32>
    %422 = vector.multi_reduction <maximumf>, %421, %cst_139 [2] : vector<2x8x8xf32> to vector<2x8xf32>
    %423 = vector.shape_cast %422 : vector<2x8xf32> to vector<2x8x1xf32>
    %424 = vector.broadcast %423 : vector<2x8x1xf32> to vector<2x8x8xf32>
    %425 = arith.subf %421, %424 : vector<2x8x8xf32>
    %426 = math.exp %425 : vector<2x8x8xf32>
    %cst_140 = arith.constant dense<0.000000e+00> : vector<2x8xf32>
    %427 = vector.multi_reduction <add>, %426, %cst_140 [2] : vector<2x8x8xf32> to vector<2x8xf32>
    %428 = vector.shape_cast %427 : vector<2x8xf32> to vector<2x8x1xf32>
    %429 = tpu.reciprocal %428 {approx = true} : vector<2x8x1xf32> -> vector<2x8x1xf32>
    %430 = vector.broadcast %429 : vector<2x8x1xf32> to vector<2x8x8xf32>
    %431 = arith.mulf %426, %430 : vector<2x8x8xf32>
    "tpu.trace_start"() <{level = 10 : i32, message = "bqk,bkd->bqd"}> : () -> ()
    %cst_141 = arith.constant dense<0.000000e+00> : vector<2x8x4xf32>
    %432 = tpu.matmul %431, %418, %cst_141 {dimension_numbers = #tpu.dot_dimension_numbers<[2], [1], [1], [2], [0, 0, 0, 1, 1, 2], [0], [0]>} : vector<2x8x8xf32>, vector<2x8x4xf32>, vector<2x8x4xf32> -> vector<2x8x4xf32>
    "tpu.trace_stop"() : () -> ()
    %433 = vector.shape_cast %432 : vector<2x8x4xf32> to vector<16x4xf32>
    %434 = vector.extract_strided_slice %284 {offsets = [24, 0], sizes = [4, 32], strides = [1, 1]} : vector<32x32xf32> to vector<4x32xf32>
    %cst_142 = arith.constant dense<0.000000e+00> : vector<16x32xf32>
    %435 = tpu.matmul %433, %434, %cst_142 {dimension_numbers = #tpu.dot_dimension_numbers<[1], [0], [0], [1], [0, 0, 1, 1], [], []>} : vector<16x4xf32>, vector<4x32xf32>, vector<16x32xf32> -> vector<16x32xf32>
    %436 = arith.addf %415, %435 : vector<16x32xf32>
    %437 = vector.extract_strided_slice %288 {offsets = [0, 0, 28], sizes = [2, 8, 4], strides = [1, 1, 1]} : vector<2x8x96xf32> to vector<2x8x4xf32>
    %438 = vector.extract_strided_slice %288 {offsets = [0, 0, 60], sizes = [2, 8, 4], strides = [1, 1, 1]} : vector<2x8x96xf32> to vector<2x8x4xf32>
    %439 = vector.extract_strided_slice %288 {offsets = [0, 0, 92], sizes = [2, 8, 4], strides = [1, 1, 1]} : vector<2x8x96xf32> to vector<2x8x4xf32>
    "tpu.trace_start"() <{level = 10 : i32, message = "bqd,bkd->bqk"}> : () -> ()
    %cst_143 = arith.constant dense<0.000000e+00> : vector<2x8x8xf32>
    %440 = tpu.matmul %437, %438, %cst_143 {dimension_numbers = #tpu.dot_dimension_numbers<[2], [2], [1], [1], [0, 0, 0, 1, 1, 1], [0], [0]>} : vector<2x8x4xf32>, vector<2x8x4xf32>, vector<2x8x8xf32> -> vector<2x8x8xf32>
    "tpu.trace_stop"() : () -> ()
    %cst_144 = arith.constant 5.000000e-01 : f32
    %441 = vector.broadcast %cst_144 : f32 to vector<2x8x8xf32>
    %442 = arith.mulf %440, %441 : vector<2x8x8xf32>
    %cst_145 = arith.constant dense<0xFF800000> : vector<2x8xf32>
    %443 = vector.multi_reduction <maximumf>, %442, %cst_145 [2] : vector<2x8x8xf32> to vector<2x8xf32>
    %444 = vector.shape_cast %443 : vector<2x8xf32> to vector<2x8x1xf32>
    %445 = vector.broadcast %444 : vector<2x8x1xf32> to vector<2x8x8xf32>
    %446 = arith.subf %442, %445 : vector<2x8x8xf32>
    %447 = math.exp %446 : vector<2x8x8xf32>
    %cst_146 = arith.constant dense<0.000000e+00> : vector<2x8xf32>
    %448 = vector.multi_reduction <add>, %447, %cst_146 [2] : vector<2x8x8xf32> to vector<2x8xf32>
    %449 = vector.shape_cast %448 : vector<2x8xf32> to vector<2x8x1xf32>
    %450 = tpu.reciprocal %449 {approx = true} : vector<2x8x1xf32> -> vector<2x8x1xf32>
    %451 = vector.broadcast %450 : vector<2x8x1xf32> to vector<2x8x8xf32>
    %452 = arith.mulf %447, %451 : vector<2x8x8xf32>
    "tpu.trace_start"() <{level = 10 : i32, message = "bqk,bkd->bqd"}> : () -> ()
    %cst_147 = arith.constant dense<0.000000e+00> : vector<2x8x4xf32>
    %453 = tpu.matmul %452, %439, %cst_147 {dimension_numbers = #tpu.dot_dimension_numbers<[2], [1], [1], [2], [0, 0, 0, 1, 1, 2], [0], [0]>} : vector<2x8x8xf32>, vector<2x8x4xf32>, vector<2x8x4xf32> -> vector<2x8x4xf32>
    "tpu.trace_stop"() : () -> ()
    %454 = vector.shape_cast %453 : vector<2x8x4xf32> to vector<16x4xf32>
    %455 = vector.extract_strided_slice %284 {offsets = [28, 0], sizes = [4, 32], strides = [1, 1]} : vector<32x32xf32> to vector<4x32xf32>
    %cst_148 = arith.constant dense<0.000000e+00> : vector<16x32xf32>
    %456 = tpu.matmul %454, %455, %cst_148 {dimension_numbers = #tpu.dot_dimension_numbers<[1], [0], [0], [1], [0, 0, 1, 1], [], []>} : vector<16x4xf32>, vector<4x32xf32>, vector<16x32xf32> -> vector<16x32xf32>
    %457 = arith.addf %436, %456 : vector<16x32xf32>
    %458 = vector.broadcast %274 : vector<1x32xf32> to vector<16x32xf32>
    %459 = arith.addf %457, %458 : vector<16x32xf32>
    %460 = arith.addf %270, %459 : vector<16x32xf32>
    %cst_149 = arith.constant dense<0.000000e+00> : vector<16xf32>
    %461 = vector.multi_reduction <add>, %460, %cst_149 [1] : vector<16x32xf32> to vector<16xf32>
    %462 = vector.shape_cast %461 : vector<16xf32> to vector<16x1xf32>
    %cst_150 = arith.constant 3.200000e+01 : f32
    %463 = vector.broadcast %cst_150 : f32 to vector<16x1xf32>
    %464 = arith.divf %462, %463 : vector<16x1xf32>
    %465 = vector.broadcast %464 : vector<16x1xf32> to vector<16x32xf32>
    %466 = arith.subf %460, %465 : vector<16x32xf32>
    %467 = arith.mulf %466, %466 : vector<16x32xf32>
    %cst_151 = arith.constant dense<0.000000e+00> : vector<16xf32>
    %468 = vector.multi_reduction <add>, %467, %cst_151 [1] : vector<16x32xf32> to vector<16xf32>
    %469 = vector.shape_cast %468 : vector<16xf32> to vector<16x1xf32>
    %cst_152 = arith.constant 3.200000e+01 : f32
    %470 = vector.broadcast %cst_152 : f32 to vector<16x1xf32>
    %471 = arith.divf %469, %470 : vector<16x1xf32>
    %472 = vector.broadcast %464 : vector<16x1xf32> to vector<16x32xf32>
    %473 = arith.subf %460, %472 : vector<16x32xf32>
    %cst_153 = arith.constant 9.99999974E-6 : f32
    %474 = vector.broadcast %cst_153 : f32 to vector<16x1xf32>
    %475 = arith.addf %471, %474 : vector<16x1xf32>
    %476 = math.rsqrt %475 : vector<16x1xf32>
    %477 = vector.broadcast %476 : vector<16x1xf32> to vector<16x32xf32>
    %478 = arith.mulf %473, %477 : vector<16x32xf32>
    %479 = vector.broadcast %277 : vector<1x32xf32> to vector<16x32xf32>
    %480 = arith.mulf %478, %479 : vector<16x32xf32>
    %481 = vector.broadcast %278 : vector<1x32xf32> to vector<16x32xf32>
    %482 = arith.addf %480, %481 : vector<16x32xf32>
    %c1_154 = arith.constant 1 : index
    %c0_155 = arith.constant 0 : index
    %c0_156 = arith.constant 0 : index
    %483 = vector.load %arg9[%c1_154, %c0_155, %c0_156] : memref<2x32x64xf32, #tpu.memory_space<vmem>>, vector<1x32x64xf32>
    %484 = vector.shape_cast %483 : vector<1x32x64xf32> to vector<32x64xf32>
    %cst_157 = arith.constant dense<0.000000e+00> : vector<16x64xf32>
    %485 = tpu.matmul %482, %484, %cst_157 {dimension_numbers = #tpu.dot_dimension_numbers<[1], [0], [0], [1], [0, 0, 1, 1], [], []>} : vector<16x32xf32>, vector<32x64xf32>, vector<16x64xf32> -> vector<16x64xf32>
    %486 = vector.broadcast %275 : vector<1x64xf32> to vector<16x64xf32>
    %487 = arith.addf %485, %486 : vector<16x64xf32>
    %cst_158 = arith.constant 0.000000e+00 : f32
    %488 = vector.broadcast %cst_158 : f32 to vector<16x64xf32>
    %489 = arith.maximumf %487, %488 : vector<16x64xf32>
    %c1_159 = arith.constant 1 : index
    %c0_160 = arith.constant 0 : index
    %c0_161 = arith.constant 0 : index
    %490 = vector.load %arg10[%c1_159, %c0_160, %c0_161] : memref<2x64x32xf32, #tpu.memory_space<vmem>>, vector<1x64x32xf32>
    %491 = vector.shape_cast %490 : vector<1x64x32xf32> to vector<64x32xf32>
    %cst_162 = arith.constant dense<0.000000e+00> : vector<16x32xf32>
    %492 = tpu.matmul %489, %491, %cst_162 {dimension_numbers = #tpu.dot_dimension_numbers<[1], [0], [0], [1], [0, 0, 1, 1], [], []>} : vector<16x64xf32>, vector<64x32xf32>, vector<16x32xf32> -> vector<16x32xf32>
    %493 = vector.broadcast %276 : vector<1x32xf32> to vector<16x32xf32>
    %494 = arith.addf %492, %493 : vector<16x32xf32>
    %495 = arith.addf %482, %494 : vector<16x32xf32>
    %cst_163 = arith.constant dense<0.000000e+00> : vector<16xf32>
    %496 = vector.multi_reduction <add>, %495, %cst_163 [1] : vector<16x32xf32> to vector<16xf32>
    %497 = vector.shape_cast %496 : vector<16xf32> to vector<16x1xf32>
    %cst_164 = arith.constant 3.200000e+01 : f32
    %498 = vector.broadcast %cst_164 : f32 to vector<16x1xf32>
    %499 = arith.divf %497, %498 : vector<16x1xf32>
    %500 = vector.broadcast %499 : vector<16x1xf32> to vector<16x32xf32>
    %501 = arith.subf %495, %500 : vector<16x32xf32>
    %502 = arith.mulf %501, %501 : vector<16x32xf32>
    %cst_165 = arith.constant dense<0.000000e+00> : vector<16xf32>
    %503 = vector.multi_reduction <add>, %502, %cst_165 [1] : vector<16x32xf32> to vector<16xf32>
    %504 = vector.shape_cast %503 : vector<16xf32> to vector<16x1xf32>
    %cst_166 = arith.constant 3.200000e+01 : f32
    %505 = vector.broadcast %cst_166 : f32 to vector<16x1xf32>
    %506 = arith.divf %504, %505 : vector<16x1xf32>
    %507 = vector.broadcast %499 : vector<16x1xf32> to vector<16x32xf32>
    %508 = arith.subf %495, %507 : vector<16x32xf32>
    %cst_167 = arith.constant 9.99999974E-6 : f32
    %509 = vector.broadcast %cst_167 : f32 to vector<16x1xf32>
    %510 = arith.addf %506, %509 : vector<16x1xf32>
    %511 = math.rsqrt %510 : vector<16x1xf32>
    %512 = vector.broadcast %511 : vector<16x1xf32> to vector<16x32xf32>
    %513 = arith.mulf %508, %512 : vector<16x32xf32>
    %514 = vector.broadcast %279 : vector<1x32xf32> to vector<16x32xf32>
    %515 = arith.mulf %513, %514 : vector<16x32xf32>
    %516 = vector.broadcast %280 : vector<1x32xf32> to vector<16x32xf32>
    %517 = arith.addf %515, %516 : vector<16x32xf32>
    %518 = vector.shape_cast %517 : vector<16x32xf32> to vector<2x8x32xf32>
    %519 = vector.shape_cast %4 : vector<1x32xf32> to vector<1x1x32xf32>
    %520 = vector.broadcast %519 : vector<1x1x32xf32> to vector<2x8x32xf32>
    %521 = arith.mulf %518, %520 : vector<2x8x32xf32>
    %cst_168 = arith.constant dense<0.000000e+00> : vector<2x8xf32>
    %522 = vector.multi_reduction <add>, %521, %cst_168 [2] : vector<2x8x32xf32> to vector<2x8xf32>
    %523 = vector.shape_cast %522 : vector<2x8xf32> to vector<2x8x1xf32>
    %c0_169 = arith.constant 0 : index
    %524 = memref.load %arg12[%c0_169] : memref<1xf32, #tpu.memory_space<smem>>
    %525 = vector.broadcast %524 : f32 to vector<2x8x1xf32>
    %526 = arith.addf %523, %525 : vector<2x8x1xf32>
    %cst_170 = arith.constant dense<0xFF800000> : vector<2x1xf32>
    %527 = vector.multi_reduction <maximumf>, %526, %cst_170 [1] : vector<2x8x1xf32> to vector<2x1xf32>
    %528 = vector.shape_cast %527 : vector<2x1xf32> to vector<2x1x1xf32>
    %529 = vector.broadcast %528 : vector<2x1x1xf32> to vector<2x8x1xf32>
    %530 = arith.subf %526, %529 : vector<2x8x1xf32>
    %531 = math.exp %530 : vector<2x8x1xf32>
    %cst_171 = arith.constant dense<0.000000e+00> : vector<2x1xf32>
    %532 = vector.multi_reduction <add>, %531, %cst_171 [1] : vector<2x8x1xf32> to vector<2x1xf32>
    %533 = vector.shape_cast %532 : vector<2x1xf32> to vector<2x1x1xf32>
    %534 = tpu.reciprocal %533 {approx = true} : vector<2x1x1xf32> -> vector<2x1x1xf32>
    %535 = vector.broadcast %534 : vector<2x1x1xf32> to vector<2x8x1xf32>
    %536 = arith.mulf %531, %535 : vector<2x8x1xf32>
    %537 = vector.broadcast %536 : vector<2x8x1xf32> to vector<2x8x32xf32>
    %538 = arith.mulf %537, %518 : vector<2x8x32xf32>
    %cst_172 = arith.constant dense<0.000000e+00> : vector<2x32xf32>
    %539 = vector.multi_reduction <add>, %538, %cst_172 [1] : vector<2x8x32xf32> to vector<2x32xf32>
    %c0_173 = arith.constant 0 : index
    %c0_174 = arith.constant 0 : index
    %540 = vector.load %arg5[%c0_173, %c0_174] : memref<32x32xf32, #tpu.memory_space<vmem>>, vector<32x32xf32>
    %cst_175 = arith.constant dense<0.000000e+00> : vector<2x32xf32>
    %541 = tpu.matmul %539, %540, %cst_175 {dimension_numbers = #tpu.dot_dimension_numbers<[1], [0], [0], [1], [0, 0, 1, 1], [], []>} : vector<2x32xf32>, vector<32x32xf32>, vector<2x32xf32> -> vector<2x32xf32>
    %542 = vector.broadcast %3 : vector<1x32xf32> to vector<2x32xf32>
    %543 = arith.addf %541, %542 : vector<2x32xf32>
    %c0_176 = arith.constant 0 : index
    %c0_177 = arith.constant 0 : index
    %c0_178 = arith.constant 0 : index
    %544 = vector.load %arg13[%c0_176, %c0_177, %c0_178] : memref<1x2x32xf32, #tpu.memory_space<vmem>>, vector<1x2x32xf32>
    %545 = vector.shape_cast %544 : vector<1x2x32xf32> to vector<2x32xf32>
    %546 = vector.shape_cast %543 : vector<2x32xf32> to vector<1x2x32xf32>
    tpu.vector_store %arg13[%c0_176, %c0_177, %c0_178], %546 {strides = array<i32>} : memref<1x2x32xf32, #tpu.memory_space<vmem>>, vector<1x2x32xf32>,
    return
  }
  func.func @transform_0(%arg0: i32) -> (i32, i32, i32) {
    %c0_i32 = arith.constant 0 : i32
    %c0_i32_0 = arith.constant 0 : i32
    %c0_i32_1 = arith.constant 0 : i32
    return %arg0, %c0_i32, %c0_i32_0 : i32, i32, i32
  }
  func.func @transform_1(%arg0: i32) -> (i32, i32, i32) {
    %c0_i32 = arith.constant 0 : i32
    %c0_i32_0 = arith.constant 0 : i32
    %c0_i32_1 = arith.constant 0 : i32
    %c0_i32_2 = arith.constant 0 : i32
    return %c0_i32, %c0_i32_0, %c0_i32_1 : i32, i32, i32
  }
  func.func @transform_2(%arg0: i32) -> (i32, i32) {
    %c0_i32 = arith.constant 0 : i32
    %c0_i32_0 = arith.constant 0 : i32
    %c0_i32_1 = arith.constant 0 : i32
    return %c0_i32, %c0_i32_0 : i32, i32
  }
  func.func @transform_3(%arg0: i32) -> (i32, i32) {
    %c0_i32 = arith.constant 0 : i32
    %c0_i32_0 = arith.constant 0 : i32
    %c0_i32_1 = arith.constant 0 : i32
    return %c0_i32, %c0_i32_0 : i32, i32
  }
  func.func @transform_4(%arg0: i32) -> (i32, i32) {
    %c0_i32 = arith.constant 0 : i32
    %c0_i32_0 = arith.constant 0 : i32
    %c0_i32_1 = arith.constant 0 : i32
    return %c0_i32, %c0_i32_0 : i32, i32
  }
  func.func @transform_5(%arg0: i32) -> (i32, i32) {
    %c0_i32 = arith.constant 0 : i32
    %c0_i32_0 = arith.constant 0 : i32
    %c0_i32_1 = arith.constant 0 : i32
    return %c0_i32, %c0_i32_0 : i32, i32
  }
  func.func @transform_6(%arg0: i32) -> (i32, i32, i32) {
    %c0_i32 = arith.constant 0 : i32
    %c0_i32_0 = arith.constant 0 : i32
    %c0_i32_1 = arith.constant 0 : i32
    %c0_i32_2 = arith.constant 0 : i32
    return %c0_i32, %c0_i32_0, %c0_i32_1 : i32, i32, i32
  }
  func.func @transform_7(%arg0: i32) -> (i32, i32, i32) {
    %c0_i32 = arith.constant 0 : i32
    %c0_i32_0 = arith.constant 0 : i32
    %c0_i32_1 = arith.constant 0 : i32
    %c0_i32_2 = arith.constant 0 : i32
    return %c0_i32, %c0_i32_0, %c0_i32_1 : i32, i32, i32
  }
  func.func @transform_8(%arg0: i32) -> (i32, i32, i32) {
    %c0_i32 = arith.constant 0 : i32
    %c0_i32_0 = arith.constant 0 : i32
    %c0_i32_1 = arith.constant 0 : i32
    %c0_i32_2 = arith.constant 0 : i32
    return %c0_i32, %c0_i32_0, %c0_i32_1 : i32, i32, i32
  }
  func.func @transform_9(%arg0: i32) -> (i32, i32, i32) {
    %c0_i32 = arith.constant 0 : i32
    %c0_i32_0 = arith.constant 0 : i32
    %c0_i32_1 = arith.constant 0 : i32
    %c0_i32_2 = arith.constant 0 : i32
    return %c0_i32, %c0_i32_0, %c0_i32_1 : i32, i32, i32
  }
  func.func @transform_10(%arg0: i32) -> (i32, i32, i32) {
    %c0_i32 = arith.constant 0 : i32
    %c0_i32_0 = arith.constant 0 : i32
    %c0_i32_1 = arith.constant 0 : i32
    %c0_i32_2 = arith.constant 0 : i32
    return %c0_i32, %c0_i32_0, %c0_i32_1 : i32, i32, i32
  }
  func.func @transform_11(%arg0: i32) -> i32 {
    %c0_i32 = arith.constant 0 : i32
    %c0_i32_0 = arith.constant 0 : i32
    return %c0_i32 : i32
  }
  func.func @transform_12(%arg0: i32) -> (i32, i32, i32) {
    %c0_i32 = arith.constant 0 : i32
    %c0_i32_0 = arith.constant 0 : i32
    %c0_i32_1 = arith.constant 0 : i32
    return %arg0, %c0_i32, %c0_i32_0 : i32, i32, i32
  }
}

</mosaic_0001>

<llo_original>
// kernel: transformer_encoder_forward.1
$region0: #{transformer_encoder_forward.1}
  #allocation0 [shape = 'u32[]', space=smem, size = 0x4, offset = 0x4, fixed_abs, tag = 'smem constant byte address 0x4 - core index']
  #allocation1 [shape = 'u32[144,128]{1,0:T(1,128)}', space=vmem, size = 0x12000, scoped, tag = 'internal scratch']
  #allocation2 [shape = 'f32[1]{0:T(128)S(6)}', space=smem, size = 0x200, scoped, tag = 'scoped memory for transformer_encoder_forward.1']
  %s0 = inlined_call_operand.vmem [shape: f32[4,8,4], index: 0, kind: input, shape index: {}]
  %s1 = inlined_call_operand.vmem [shape: f32[1,8,32], index: 1, kind: input, shape index: {}]
  %s2 = inlined_call_operand.vmem [shape: f32[4,32], index: 2, kind: input, shape index: {}]
  %s3 = inlined_call_operand.vmem [shape: f32[32,32], index: 3, kind: input, shape index: {}]
  %s4 = inlined_call_operand.vmem [shape: f32[32,32], index: 4, kind: input, shape index: {}]
  %s5 = inlined_call_operand.vmem [shape: f32[4,32], index: 5, kind: input, shape index: {}]
  %s6 = inlined_call_operand.vmem [shape: f32[2,32,96], index: 6, kind: input, shape index: {}]
  %s7 = inlined_call_operand.vmem [shape: f32[2,32,32], index: 7, kind: input, shape index: {}]
  %s8 = inlined_call_operand.vmem [shape: f32[2,32,64], index: 8, kind: input, shape index: {}]
  %s9 = inlined_call_operand.vmem [shape: f32[2,64,32], index: 9, kind: input, shape index: {}]
  %s10 = inlined_call_operand.vmem [shape: f32[2,8,96], index: 10, kind: input, shape index: {}]
  %s11 = inlined_call_operand.<no memory space> [shape: f32[1], index: 11, kind: input, shape index: {}]
  %s12 = inlined_call_operand.hbm [shape: f32[2,2,32], index: 12, kind: output, shape index: {}]
  %s13 = sld [smem:[#allocation0]]
  $region81: #{transformer_encoder_forward.1} parent=0
    _
  %s15 = ssub.s32 1, %s13
  %s16 = scalar_select 0, %s15, %s13
  %17 = sst [smem:[#allocation2]] %s11
  $region1: #{transformer_encoder_forward.1} parent=0
    #allocation3 [shape = 'u8[2048]{0}', space=vmem, size = 0x800, scoped, tag = 'output window, operand 0']
    #allocation4 [shape = 's32[2]{0}', space=sflag, size = 0x8, scoped, tag = 'scoped memory for transformer_encoder_forward.1']
    %18 = vsyncpa [#allocation4], 0
    %s19 = scalar_lea.sflag [#allocation4], 1
    %20 = vsyncpa %s19, 0
    loop: start=0, step=1, limit=4
    $region2: #{transformer_encoder_forward.1} parent=1 // loop_pre_header
      _
    $region3: #{transformer_encoder_forward.1} parent=1 // loop_header
      %s22 = sphi 0, %s26
      %p23 = scmp.ge.s32.totalorder %s22, 4
      %s32 = sphi 0, %s34
      %s35 = sphi 0, %s32
      %s36 = sphi 0, %s35
      %s52 = sphi 0, %s36
      %s56 = sphi 0, %s56
      %s58 = sphi 0, %s56
      %s59 = sphi 0, %s58
      %s73 = sphi 0, %s59
      %s77 = sphi 0, %s77
      %s79 = sphi 0, %s77
      %s80 = sphi 0, %s79
      %s94 = sphi 0, %s80
      %s98 = sphi 0, %s98
      %s100 = sphi 0, %s98
      %s101 = sphi 0, %s100
      %s115 = sphi 0, %s101
      %s119 = sphi 0, %s119
      %s121 = sphi 0, %s119
      %s122 = sphi 0, %s121
      %s136 = sphi 0, %s122
      %s140 = sphi 0, %s140
      %s142 = sphi 0, %s140
      %s143 = sphi 0, %s142
      %s157 = sphi 0, %s143
      %s161 = sphi 0, %s161
      %s163 = sphi 0, %s161
      %s164 = sphi 0, %s163
      %s178 = sphi 0, %s164
      %s182 = sphi 0, %s182
      %s184 = sphi 0, %s182
      %s185 = sphi 0, %s184
      %s199 = sphi 0, %s185
      %s203 = sphi 0, %s203
      %s205 = sphi 0, %s203
      %s206 = sphi 0, %s205
      %s220 = sphi 0, %s206
      %s224 = sphi 0, %s224
      %s226 = sphi 0, %s224
      %s227 = sphi 0, %s226
      %s241 = sphi 0, %s227
      %s245 = sphi 0, %s245
      %s247 = sphi 0, %s245
      %s248 = sphi 0, %s247
      %s262 = sphi 0, %s248
      %s266 = sphi 0, %s266
      %s268 = sphi 0, %s266
      %s269 = sphi 0, %s268
      %s283 = sphi 0, %s269
      %s289 = sphi 0, %s291
      %s292 = sphi 0, %s289
      %s293 = sphi 0, %s292
      %s309 = sphi 0, %s293
    $region4: #{transformer_encoder_forward.1} parent=1 // loop_header_branch
      %25 = sbr.rel (%p23) target = $region8
    $region5: #{transformer_encoder_forward.1} parent=1 // loop_body
      %s27 = ssub.s32 %s22, 1
      %s28 = ssub.s32 %s22, 2
      %s29 = sadd.s32 %s22, 1
      %s30 = ssub.s32 %s22, %s29
      %p31 = scmp.eq.s32.totalorder %s30, 0
      %s33 = sadd.s32 %s32, 1
      %s34 = scalar_select %p31, %s32, %s33
      %p37 = pneg %p31
      %p38 = scmp.eq.s32.totalorder %s22, 1
      %p39 = por %p37, %p38
      %p40 = scmp.ne.s32.totalorder %s32, %s35
      %p41 = scmp.eq.s32.totalorder %s22, 0
      %p42 = por %p40, %p41
      %p43 = scmp.ne.s32.totalorder %s32, %s35
      %p44 = scmp.eq.s32.totalorder %s27, 1
      %p45 = por %p43, %p44
      %p46 = scmp.ne.s32.totalorder %s35, %s36
      %p47 = scmp.eq.s32.totalorder %s27, 0
      %p48 = por %p46, %p47
      %p49 = scmp.ne.s32.totalorder %s35, %s36
      %p50 = scmp.eq.s32.totalorder %s28, 1
      %p51 = por %p49, %p50
      %p53 = scmp.ne.s32.totalorder %s36, %s52
      %p54 = scmp.eq.s32.totalorder %s28, 0
      %p55 = por %p53, %p54
      %s57 = sadd.s32 %s56, 1
      %p60 = scmp.eq.s32.totalorder %s22, 1
      %p61 = scmp.ne.s32.totalorder %s56, %s58
      %p62 = scmp.eq.s32.totalorder %s22, 0
      %p63 = por %p61, %p62
      %p64 = scmp.ne.s32.totalorder %s56, %s58
      %p65 = scmp.eq.s32.totalorder %s27, 1
      %p66 = por %p64, %p65
      %p67 = scmp.ne.s32.totalorder %s58, %s59
      %p68 = scmp.eq.s32.totalorder %s27, 0
      %p69 = por %p67, %p68
      %p70 = scmp.ne.s32.totalorder %s58, %s59
      %p71 = scmp.eq.s32.totalorder %s28, 1
      %p72 = por %p70, %p71
      %p74 = scmp.ne.s32.totalorder %s59, %s73
      %p75 = scmp.eq.s32.totalorder %s28, 0
      %p76 = por %p74, %p75
      %s78 = sadd.s32 %s77, 1
      %p81 = scmp.eq.s32.totalorder %s22, 1
      %p82 = scmp.ne.s32.totalorder %s77, %s79
      %p83 = scmp.eq.s32.totalorder %s22, 0
      %p84 = por %p82, %p83
      %p85 = scmp.ne.s32.totalorder %s77, %s79
      %p86 = scmp.eq.s32.totalorder %s27, 1
      %p87 = por %p85, %p86
      %p88 = scmp.ne.s32.totalorder %s79, %s80
      %p89 = scmp.eq.s32.totalorder %s27, 0
      %p90 = por %p88, %p89
      %p91 = scmp.ne.s32.totalorder %s79, %s80
      %p92 = scmp.eq.s32.totalorder %s28, 1
      %p93 = por %p91, %p92
      %p95 = scmp.ne.s32.totalorder %s80, %s94
      %p96 = scmp.eq.s32.totalorder %s28, 0
      %p97 = por %p95, %p96
      %s99 = sadd.s32 %s98, 1
      %p102 = scmp.eq.s32.totalorder %s22, 1
      %p103 = scmp.ne.s32.totalorder %s98, %s100
      %p104 = scmp.eq.s32.totalorder %s22, 0
      %p105 = por %p103, %p104
      %p106 = scmp.ne.s32.totalorder %s98, %s100
      %p107 = scmp.eq.s32.totalorder %s27, 1
      %p108 = por %p106, %p107
      %p109 = scmp.ne.s32.totalorder %s100, %s101
      %p110 = scmp.eq.s32.totalorder %s27, 0
      %p111 = por %p109, %p110
      %p112 = scmp.ne.s32.totalorder %s100, %s101
      %p113 = scmp.eq.s32.totalorder %s28, 1
      %p114 = por %p112, %p113
      %p116 = scmp.ne.s32.totalorder %s101, %s115
      %p117 = scmp.eq.s32.totalorder %s28, 0
      %p118 = por %p116, %p117
      %s120 = sadd.s32 %s119, 1
      %p123 = scmp.eq.s32.totalorder %s22, 1
      %p124 = scmp.ne.s32.totalorder %s119, %s121
      %p125 = scmp.eq.s32.totalorder %s22, 0
      %p126 = por %p124, %p125
      %p127 = scmp.ne.s32.totalorder %s119, %s121
      %p128 = scmp.eq.s32.totalorder %s27, 1
      %p129 = por %p127, %p128
      %p130 = scmp.ne.s32.totalorder %s121, %s122
      %p131 = scmp.eq.s32.totalorder %s27, 0
      %p132 = por %p130, %p131
      %p133 = scmp.ne.s32.totalorder %s121, %s122
      %p134 = scmp.eq.s32.totalorder %s28, 1
      %p135 = por %p133, %p134
      %p137 = scmp.ne.s32.totalorder %s122, %s136
      %p138 = scmp.eq.s32.totalorder %s28, 0
      %p139 = por %p137, %p138
      %s141 = sadd.s32 %s140, 1
      %p144 = scmp.eq.s32.totalorder %s22, 1
      %p145 = scmp.ne.s32.totalorder %s140, %s142
      %p146 = scmp.eq.s32.totalorder %s22, 0
      %p147 = por %p145, %p146
      %p148 = scmp.ne.s32.totalorder %s140, %s142
      %p149 = scmp.eq.s32.totalorder %s27, 1
      %p150 = por %p148, %p149
      %p151 = scmp.ne.s32.totalorder %s142, %s143
      %p152 = scmp.eq.s32.totalorder %s27, 0
      %p153 = por %p151, %p152
      %p154 = scmp.ne.s32.totalorder %s142, %s143
      %p155 = scmp.eq.s32.totalorder %s28, 1
      %p156 = por %p154, %p155
      %p158 = scmp.ne.s32.totalorder %s143, %s157
      %p159 = scmp.eq.s32.totalorder %s28, 0
      %p160 = por %p158, %p159
      %s162 = sadd.s32 %s161, 1
      %p165 = scmp.eq.s32.totalorder %s22, 1
      %p166 = scmp.ne.s32.totalorder %s161, %s163
      %p167 = scmp.eq.s32.totalorder %s22, 0
      %p168 = por %p166, %p167
      %p169 = scmp.ne.s32.totalorder %s161, %s163
      %p170 = scmp.eq.s32.totalorder %s27, 1
      %p171 = por %p169, %p170
      %p172 = scmp.ne.s32.totalorder %s163, %s164
      %p173 = scmp.eq.s32.totalorder %s27, 0
      %p174 = por %p172, %p173
      %p175 = scmp.ne.s32.totalorder %s163, %s164
      %p176 = scmp.eq.s32.totalorder %s28, 1
      %p177 = por %p175, %p176
      %p179 = scmp.ne.s32.totalorder %s164, %s178
      %p180 = scmp.eq.s32.totalorder %s28, 0
      %p181 = por %p179, %p180
      %s183 = sadd.s32 %s182, 1
      %p186 = scmp.eq.s32.totalorder %s22, 1
      %p187 = scmp.ne.s32.totalorder %s182, %s184
      %p188 = scmp.eq.s32.totalorder %s22, 0
      %p189 = por %p187, %p188
      %p190 = scmp.ne.s32.totalorder %s182, %s184
      %p191 = scmp.eq.s32.totalorder %s27, 1
      %p192 = por %p190, %p191
      %p193 = scmp.ne.s32.totalorder %s184, %s185
      %p194 = scmp.eq.s32.totalorder %s27, 0
      %p195 = por %p193, %p194
      %p196 = scmp.ne.s32.totalorder %s184, %s185
      %p197 = scmp.eq.s32.totalorder %s28, 1
      %p198 = por %p196, %p197
      %p200 = scmp.ne.s32.totalorder %s185, %s199
      %p201 = scmp.eq.s32.totalorder %s28, 0
      %p202 = por %p200, %p201
      %s204 = sadd.s32 %s203, 1
      %p207 = scmp.eq.s32.totalorder %s22, 1
      %p208 = scmp.ne.s32.totalorder %s203, %s205
      %p209 = scmp.eq.s32.totalorder %s22, 0
      %p210 = por %p208, %p209
      %p211 = scmp.ne.s32.totalorder %s203, %s205
      %p212 = scmp.eq.s32.totalorder %s27, 1
      %p213 = por %p211, %p212
      %p214 = scmp.ne.s32.totalorder %s205, %s206
      %p215 = scmp.eq.s32.totalorder %s27, 0
      %p216 = por %p214, %p215
      %p217 = scmp.ne.s32.totalorder %s205, %s206
      %p218 = scmp.eq.s32.totalorder %s28, 1
      %p219 = por %p217, %p218
      %p221 = scmp.ne.s32.totalorder %s206, %s220
      %p222 = scmp.eq.s32.totalorder %s28, 0
      %p223 = por %p221, %p222
      %s225 = sadd.s32 %s224, 1
      %p228 = scmp.eq.s32.totalorder %s22, 1
      %p229 = scmp.ne.s32.totalorder %s224, %s226
      %p230 = scmp.eq.s32.totalorder %s22, 0
      %p231 = por %p229, %p230
      %p232 = scmp.ne.s32.totalorder %s224, %s226
      %p233 = scmp.eq.s32.totalorder %s27, 1
      %p234 = por %p232, %p233
      %p235 = scmp.ne.s32.totalorder %s226, %s227
      %p236 = scmp.eq.s32.totalorder %s27, 0
      %p237 = por %p235, %p236
      %p238 = scmp.ne.s32.totalorder %s226, %s227
      %p239 = scmp.eq.s32.totalorder %s28, 1
      %p240 = por %p238, %p239
      %p242 = scmp.ne.s32.totalorder %s227, %s241
      %p243 = scmp.eq.s32.totalorder %s28, 0
      %p244 = por %p242, %p243
      %s246 = sadd.s32 %s245, 1
      %p249 = scmp.eq.s32.totalorder %s22, 1
      %p250 = scmp.ne.s32.totalorder %s245, %s247
      %p251 = scmp.eq.s32.totalorder %s22, 0
      %p252 = por %p250, %p251
      %p253 = scmp.ne.s32.totalorder %s245, %s247
      %p254 = scmp.eq.s32.totalorder %s27, 1
      %p255 = por %p253, %p254
      %p256 = scmp.ne.s32.totalorder %s247, %s248
      %p257 = scmp.eq.s32.totalorder %s27, 0
      %p258 = por %p256, %p257
      %p259 = scmp.ne.s32.totalorder %s247, %s248
      %p260 = scmp.eq.s32.totalorder %s28, 1
      %p261 = por %p259, %p260
      %p263 = scmp.ne.s32.totalorder %s248, %s262
      %p264 = scmp.eq.s32.totalorder %s28, 0
      %p265 = por %p263, %p264
      %s267 = sadd.s32 %s266, 1
      %p270 = scmp.eq.s32.totalorder %s22, 1
      %p271 = scmp.ne.s32.totalorder %s266, %s268
      %p272 = scmp.eq.s32.totalorder %s22, 0
      %p273 = por %p271, %p272
      %p274 = scmp.ne.s32.totalorder %s266, %s268
      %p275 = scmp.eq.s32.totalorder %s27, 1
      %p276 = por %p274, %p275
      %p277 = scmp.ne.s32.totalorder %s268, %s269
      %p278 = scmp.eq.s32.totalorder %s27, 0
      %p279 = por %p277, %p278
      %p280 = scmp.ne.s32.totalorder %s268, %s269
      %p281 = scmp.eq.s32.totalorder %s28, 1
      %p282 = por %p280, %p281
      %p284 = scmp.ne.s32.totalorder %s269, %s283
      %p285 = scmp.eq.s32.totalorder %s28, 0
      %p286 = por %p284, %p285
      %s287 = ssub.s32 %s22, %s29
      %p288 = scmp.eq.s32.totalorder %s287, 0
      %s290 = sadd.s32 %s289, 1
      %s291 = scalar_select %p288, %s289, %s290
      %p294 = pneg %p288
      %p295 = scmp.eq.s32.totalorder %s22, 1
      %p296 = por %p294, %p295
      %p297 = scmp.ne.s32.totalorder %s289, %s292
      %p298 = scmp.eq.s32.totalorder %s22, 0
      %p299 = por %p297, %p298
      %p300 = scmp.ne.s32.totalorder %s289, %s292
      %p301 = scmp.eq.s32.totalorder %s27, 1
      %p302 = por %p300, %p301
      %p303 = scmp.ne.s32.totalorder %s292, %s293
      %p304 = scmp.eq.s32.totalorder %s27, 0
      %p305 = por %p303, %p304
      %p306 = scmp.ne.s32.totalorder %s292, %s293
      %p307 = scmp.eq.s32.totalorder %s28, 1
      %p308 = por %p306, %p307
      %p310 = scmp.ne.s32.totalorder %s293, %s309
      %p311 = scmp.eq.s32.totalorder %s28, 0
      %p312 = por %p310, %p311
      %p313 = scmp.le.s32.totalorder 1, %s22
      %p314 = scmp.lt.s32.totalorder %s22, 3
      %p315 = pnand %p313, %p314
      %p316 = pneg %p315
      // Predicated region
      $region9: #{transformer_encoder_forward.1} parent=5 // pred_check
        _
      $region10: #{transformer_encoder_forward.1} parent=5 // pred_check_branch
        %318 = sbr.rel (%p315) target = $region12
      $region11: #{transformer_encoder_forward.1} parent=5 // pred_region
        %s319 = ssub.s32 %s22, 1
        // Predicated region
        $region13: #{transformer_encoder_forward.1} parent=11 // pred_check
          %p320 = pneg %p69
        $region14: #{transformer_encoder_forward.1} parent=11 // pred_check_branch
          %322 = sbr.rel (%p320) target = $region16
        $region15: #{transformer_encoder_forward.1} parent=11 // pred_region
          _
        $region16: #{transformer_encoder_forward.1} parent=11 // pred_fallthru
          _
        // Predicated region
        $region17: #{transformer_encoder_forward.1} parent=11 // pred_check
          %p323 = pneg %p90
        $region18: #{transformer_encoder_forward.1} parent=11 // pred_check_branch
          %325 = sbr.rel (%p323) target = $region20
        $region19: #{transformer_encoder_forward.1} parent=11 // pred_region
          _
        $region20: #{transformer_encoder_forward.1} parent=11 // pred_fallthru
          _
        // Predicated region
        $region21: #{transformer_encoder_forward.1} parent=11 // pred_check
          %p326 = pneg %p111
        $region22: #{transformer_encoder_forward.1} parent=11 // pred_check_branch
          %328 = sbr.rel (%p326) target = $region24
        $region23: #{transformer_encoder_forward.1} parent=11 // pred_region
          _
        $region24: #{transformer_encoder_forward.1} parent=11 // pred_fallthru
          _
        // Predicated region
        $region25: #{transformer_encoder_forward.1} parent=11 // pred_check
          %p329 = pneg %p132
        $region26: #{transformer_encoder_forward.1} parent=11 // pred_check_branch
          %331 = sbr.rel (%p329) target = $region28
        $region27: #{transformer_encoder_forward.1} parent=11 // pred_region
          _
        $region28: #{transformer_encoder_forward.1} parent=11 // pred_fallthru
          _
        // Predicated region
        $region29: #{transformer_encoder_forward.1} parent=11 // pred_check
          %p332 = pneg %p153
        $region30: #{transformer_encoder_forward.1} parent=11 // pred_check_branch
          %334 = sbr.rel (%p332) target = $region32
        $region31: #{transformer_encoder_forward.1} parent=11 // pred_region
          _
        $region32: #{transformer_encoder_forward.1} parent=11 // pred_fallthru
          _
        // Predicated region
        $region33: #{transformer_encoder_forward.1} parent=11 // pred_check
          %p335 = pneg %p174
        $region34: #{transformer_encoder_forward.1} parent=11 // pred_check_branch
          %337 = sbr.rel (%p335) target = $region36
        $region35: #{transformer_encoder_forward.1} parent=11 // pred_region
          _
        $region36: #{transformer_encoder_forward.1} parent=11 // pred_fallthru
          _
        // Predicated region
        $region37: #{transformer_encoder_forward.1} parent=11 // pred_check
          %p338 = pneg %p195
        $region38: #{transformer_encoder_forward.1} parent=11 // pred_check_branch
          %340 = sbr.rel (%p338) target = $region40
        $region39: #{transformer_encoder_forward.1} parent=11 // pred_region
          _
        $region40: #{transformer_encoder_forward.1} parent=11 // pred_fallthru
          _
        // Predicated region
        $region41: #{transformer_encoder_forward.1} parent=11 // pred_check
          %p341 = pneg %p216
        $region42: #{transformer_encoder_forward.1} parent=11 // pred_check_branch
          %343 = sbr.rel (%p341) target = $region44
        $region43: #{transformer_encoder_forward.1} parent=11 // pred_region
          _
        $region44: #{transformer_encoder_forward.1} parent=11 // pred_fallthru
          _
        // Predicated region
        $region45: #{transformer_encoder_forward.1} parent=11 // pred_check
          %p344 = pneg %p237
        $region46: #{transformer_encoder_forward.1} parent=11 // pred_check_branch
          %346 = sbr.rel (%p344) target = $region48
        $region47: #{transformer_encoder_forward.1} parent=11 // pred_region
          _
        $region48: #{transformer_encoder_forward.1} parent=11 // pred_fallthru
          _
        // Predicated region
        $region49: #{transformer_encoder_forward.1} parent=11 // pred_check
          %p347 = pneg %p258
        $region50: #{transformer_encoder_forward.1} parent=11 // pred_check_branch
          %349 = sbr.rel (%p347) target = $region52
        $region51: #{transformer_encoder_forward.1} parent=11 // pred_region
          _
        $region52: #{transformer_encoder_forward.1} parent=11 // pred_fallthru
          _
        // Predicated region
        $region53: #{transformer_encoder_forward.1} parent=11 // pred_check
          %p350 = pneg %p279
        $region54: #{transformer_encoder_forward.1} parent=11 // pred_check_branch
          %352 = sbr.rel (%p350) target = $region56
        $region55: #{transformer_encoder_forward.1} parent=11 // pred_region
          _
        $region56: #{transformer_encoder_forward.1} parent=11 // pred_fallthru
          _
      $region12: #{transformer_encoder_forward.1} parent=5 // pred_fallthru
        _
      %p353 = scmp.lt.s32.totalorder %s22, 2
      // Predicated region
      $region57: #{transformer_encoder_forward.1} parent=5 // pred_check
        %p354 = pneg %p353
      $region58: #{transformer_encoder_forward.1} parent=5 // pred_check_branch
        %356 = sbr.rel (%p354) target = $region60
      $region59: #{transformer_encoder_forward.1} parent=5 // pred_region
        // Predicated region
        $region61: #{transformer_encoder_forward.1} parent=59 // pred_check
          %p357 = pneg %p42
        $region62: #{transformer_encoder_forward.1} parent=59 // pred_check_branch
          %359 = sbr.rel (%p357) target = $region64
        $region63: #{transformer_encoder_forward.1} parent=59 // pred_region
          %s360 = smul.u32 2, %s22
          %p361 = scmp.lt.s32.totalorder %s360, 3
          %s362 = scalar_select %p361, %s360, 3
          %s363 = smul.addr %s362, 8
          %s364 = scalar_lea.vmem %s0, %s363
          %s365 = smul.u32 2, %s22
        $region64: #{transformer_encoder_forward.1} parent=59 // pred_fallthru
          _
      $region60: #{transformer_encoder_forward.1} parent=5 // pred_fallthru
        _
      %p366 = scmp.le.s32.totalorder 1, %s22
      %p367 = scmp.lt.s32.totalorder %s22, 3
      %p368 = pnand %p366, %p367
      %p369 = pneg %p368
      // Predicated region
      $region65: #{transformer_encoder_forward.1} parent=5 // pred_check
        _
      $region66: #{transformer_encoder_forward.1} parent=5 // pred_check_branch
        %371 = sbr.rel (%p368) target = $region68
      $region67: #{transformer_encoder_forward.1} parent=5 // pred_region
        %s372 = ssub.s32 %s22, 1
        %s373 = smul.u32 2, %s27
        %p374 = scmp.lt.s32.totalorder %s373, 3
        %s375 = scalar_select %p374, %s373, 3
        %s376 = smul.addr %s375, 8
        %s377 = scalar_lea.vmem %s0, %s376
        %p378 = pneg %p48
        %p379 = pneg %p45
        %p380 = pneg %p69
        %p381 = pneg %p66
        %p382 = pneg %p90
        %p383 = pneg %p87
        %p384 = pneg %p111
        %p385 = pneg %p108
        %p386 = pneg %p132
        %p387 = pneg %p129
        %p388 = pneg %p153
        %p389 = pneg %p150
        %p390 = pneg %p174
        %p391 = pneg %p171
        %p392 = pneg %p195
        %p393 = pneg %p192
        %p394 = pneg %p216
        %p395 = pneg %p213
        %p396 = pneg %p237
        %p397 = pneg %p234
        %p398 = pneg %p258
        %p399 = pneg %p255
        %p400 = pneg %p279
        %p401 = pneg %p276
        %p402 = pneg %p305
        %p403 = pneg %p302
        %s404 = sand.u32 %s292, 1
        %s405 = scalar_lea.sflag [#allocation4], %s404
        %s406 = sand.u32 %s292, 1
        %s407 = smul.addr %s406, 2
        %s408 = scalar_lea.vmem [#allocation3], %s407
        %s409 = smul.u32 2, %s27
        %p410 = scmp.lt.s32.totalorder %s409, 3
        %s411 = scalar_select %p410, %s409, 3
        %s412 = smul.addr %s411, 8
        %s413 = scalar_lea.vmem %s0, %s412
        %s414 = smul.u32 2, %s27
        %v415 = vld [vmem:[%s5] sm:$0xf]
        %v416 = vld [vmem:[%s413] sm:$0xff]
        %v417 = vld [vmem:[%s413 + $0x8] sm:$0xff]
        %v418 = vld [vmem:[%s2] sm:$0xf]
        %v419 = vlaneseq
        %v420 = vshrl.u32 %v419, 7
        %v421 = vsub.s32 0, %v420
        %v422 = vrot.slane %v415, %v421
        %vm423 = vcmask 31744
        %v425 = vsel %vm423, %v416, 0
        %v428 = vsel %vm423, %v417, 0
        %vm430 = vcmask 1043456
        %v432 = vsel %vm430, %v418, 0
        %434 = vmatprep.subr.mxu0 0.0
        %435 = vmatpush1.msra.mxu0 %v432
        %436 = vmatprep.subr.mxu0 0.0
        %437 = vmatpush1.msra.mxu0 0.0
        %438 = vmatprep.subr.mxu0 0.0
        %439 = vmatpush1.msra.mxu0 0.0
        %440 = vmatprep.subr.mxu0 0.0
        %441 = vmatpush1.msra.mxu0 0.0
        %442 = vmatprep.subr.mxu0 0.0
        %443 = vmatpush1.msra.mxu0 0.0
        %444 = vmatprep.subr.mxu0 0.0
        %445 = vmatpush1.msra.mxu0 0.0
        %446 = vmatprep.subr.mxu0 0.0
        %447 = vmatpush1.msra.mxu0 0.0
        %448 = vmatprep.subr.mxu0 0.0
        %449 = vmatpush1.msra.mxu0 0.0
        %450 = vmatprep.subr.mxu0 0.0
        %451 = vmatpush1.msra.mxu0 0.0
        %452 = vmatprep.subr.mxu0 0.0
        %453 = vmatpush1.msra.mxu0 0.0
        %454 = vmatprep.subr.mxu0 0.0
        %455 = vmatpush1.msra.mxu0 0.0
        %456 = vmatprep.subr.mxu0 0.0
        %457 = vmatpush1.msra.mxu0 0.0
        %458 = vmatprep.subr.mxu0 0.0
        %459 = vmatpush1.msra.mxu0 0.0
        %460 = vmatprep.subr.mxu0 0.0
        %461 = vmatpush1.msra.mxu0 0.0
        %462 = vmatprep.subr.mxu0 0.0
        %463 = vmatpush1.msra.mxu0 0.0
        %464 = vmatprep.subr.mxu0 0.0
        %465 = vmatpush1.msra.mxu0 0.0
        %466 = vmatprep.subr.mxu0 0.0
        %467 = vmatpush1.msra.mxu0 0.0
        %468 = vmatprep.subr.mxu0 0.0
        %469 = vmatpush1.msra.mxu0 0.0
        %470 = vmatprep.subr.mxu0 0.0
        %471 = vmatpush1.msra.mxu0 0.0
        %472 = vmatprep.subr.mxu0 0.0
        %473 = vmatpush1.msra.mxu0 0.0
        %474 = vmatprep.subr.mxu0 0.0
        %475 = vmatpush1.msra.mxu0 0.0
        %476 = vmatprep.subr.mxu0 0.0
        %477 = vmatpush1.msra.mxu0 0.0
        %478 = vmatprep.subr.mxu0 0.0
        %479 = vmatpush1.msra.mxu0 0.0
        %480 = vmatprep.subr.mxu0 0.0
        %481 = vmatpush1.msra.mxu0 0.0
        %482 = vmatprep.subr.mxu0 0.0
        %483 = vmatpush1.msra.mxu0 0.0
        %484 = vmatprep.subr.mxu0 0.0
        %485 = vmatpush1.msra.mxu0 0.0
        %486 = vmatprep.subr.mxu0 0.0
        %487 = vmatpush1.msra.mxu0 0.0
        %488 = vmatprep.subr.mxu0 0.0
        %489 = vmatpush1.msra.mxu0 0.0
        %490 = vmatprep.subr.mxu0 0.0
        %491 = vmatpush1.msra.mxu0 0.0
        %492 = vmatprep.subr.mxu0 0.0
        %493 = vmatpush1.msra.mxu0 0.0
        %494 = vmatprep.subr.mxu0 0.0
        %495 = vmatpush1.msra.mxu0 0.0
        %496 = vmatprep.subr.mxu0 0.0
        %497 = vmatpush1.msra.mxu0 0.0
        %498 = vmatprep.mubr.f32.mxu0 0.0
        %499 = vmatmul.mubr.f32.gmra.mrb[0].mxu0 %v425
        %v500 = vpop.f32.mrb[0].mxu0
        %v501 = vadd.f32 %v422, %v500
        %v502 = vpop.f32.mrb[0].mxu0
        %503 = vmatprep.mubr.f32.mxu0 0.0
        %504 = vmatmul.mubr.f32.gmra.mrb[0].mxu0 %v428
        %v505 = vpop.f32.mrb[0].mxu0
        %v506 = vadd.f32 %v422, %v505
        %v507 = vpop.f32.mrb[0].mxu0
        %508 = vdwg.mxu0
        %v509 = vmax.f32 %v501, 0.0
        %v510 = vmax.f32 %v506, 0.0
        %v511 = vld [vmem:[%s3] sm:$0xff]
        %v512 = vld [vmem:[%s3 + $0x8] sm:$0xff]
        %v513 = vld [vmem:[%s3 + $0x10] sm:$0xff]
        %v514 = vld [vmem:[%s3 + $0x18] sm:$0xff]
        %v515 = vlaneseq
        %v516 = vshrl.u32 %v515, 7
        %v517 = vsub.s32 1, %v516
        %v518 = vrot.slane %v415, %v517
        %vm519 = vcmask 261120
        %v521 = vsel %vm519, %v509, 0
        %v524 = vsel %vm519, %v510, 0
        %526 = vmatprep.subr.mxu0 0.0
        %527 = vmatpush1.msra.mxu0 %v511
        %528 = vmatprep.subr.mxu0 0.0
        %529 = vmatpush1.msra.mxu0 %v512
        %530 = vmatprep.subr.mxu0 0.0
        %531 = vmatpush1.msra.mxu0 %v513
        %532 = vmatprep.subr.mxu0 0.0
        %533 = vmatpush1.msra.mxu0 %v514
        %534 = vmatprep.subr.mxu0 0.0
        %535 = vmatpush1.msra.mxu0 0.0
        %536 = vmatprep.subr.mxu0 0.0
        %537 = vmatpush1.msra.mxu0 0.0
        %538 = vmatprep.subr.mxu0 0.0
        %539 = vmatpush1.msra.mxu0 0.0
        %540 = vmatprep.subr.mxu0 0.0
        %541 = vmatpush1.msra.mxu0 0.0
        %542 = vmatprep.subr.mxu0 0.0
        %543 = vmatpush1.msra.mxu0 0.0
        %544 = vmatprep.subr.mxu0 0.0
        %545 = vmatpush1.msra.mxu0 0.0
        %546 = vmatprep.subr.mxu0 0.0
        %547 = vmatpush1.msra.mxu0 0.0
        %548 = vmatprep.subr.mxu0 0.0
        %549 = vmatpush1.msra.mxu0 0.0
        %550 = vmatprep.subr.mxu0 0.0
        %551 = vmatpush1.msra.mxu0 0.0
        %552 = vmatprep.subr.mxu0 0.0
        %553 = vmatpush1.msra.mxu0 0.0
        %554 = vmatprep.subr.mxu0 0.0
        %555 = vmatpush1.msra.mxu0 0.0
        %556 = vmatprep.subr.mxu0 0.0
        %557 = vmatpush1.msra.mxu0 0.0
        %558 = vmatprep.subr.mxu0 0.0
        %559 = vmatpush1.msra.mxu0 0.0
        %560 = vmatprep.subr.mxu0 0.0
        %561 = vmatpush1.msra.mxu0 0.0
        %562 = vmatprep.subr.mxu0 0.0
        %563 = vmatpush1.msra.mxu0 0.0
        %564 = vmatprep.subr.mxu0 0.0
        %565 = vmatpush1.msra.mxu0 0.0
        %566 = vmatprep.subr.mxu0 0.0
        %567 = vmatpush1.msra.mxu0 0.0
        %568 = vmatprep.subr.mxu0 0.0
        %569 = vmatpush1.msra.mxu0 0.0
        %570 = vmatprep.subr.mxu0 0.0
        %571 = vmatpush1.msra.mxu0 0.0
        %572 = vmatprep.subr.mxu0 0.0
        %573 = vmatpush1.msra.mxu0 0.0
        %574 = vmatprep.subr.mxu0 0.0
        %575 = vmatpush1.msra.mxu0 0.0
        %576 = vmatprep.subr.mxu0 0.0
        %577 = vmatpush1.msra.mxu0 0.0
        %578 = vmatprep.subr.mxu0 0.0
        %579 = vmatpush1.msra.mxu0 0.0
        %580 = vmatprep.subr.mxu0 0.0
        %581 = vmatpush1.msra.mxu0 0.0
        %582 = vmatprep.subr.mxu0 0.0
        %583 = vmatpush1.msra.mxu0 0.0
        %584 = vmatprep.subr.mxu0 0.0
        %585 = vmatpush1.msra.mxu0 0.0
        %586 = vmatprep.subr.mxu0 0.0
        %587 = vmatpush1.msra.mxu0 0.0
        %588 = vmatprep.subr.mxu0 0.0
        %589 = vmatpush1.msra.mxu0 0.0
        %590 = vmatprep.mubr.f32.mxu0 0.0
        %591 = vmatmul.mubr.f32.gmra.mrb[0].mxu0 %v521
        %v592 = vpop.f32.mrb[0].mxu0
        %v593 = vadd.f32 %v518, %v592
        %v594 = vpop.f32.mrb[0].mxu0
        %595 = vmatprep.mubr.f32.mxu0 0.0
        %596 = vmatmul.mubr.f32.gmra.mrb[0].mxu0 %v524
        %v597 = vpop.f32.mrb[0].mxu0
        %v598 = vadd.f32 %v518, %v597
        %v599 = vpop.f32.mrb[0].mxu0
        %600 = vdwg.mxu0
        %v601 = vld [vmem:[%s1] sm:$0xff]
        %v602 = vadd.f32 %v593, %v601
        %v603 = vadd.f32 %v598, %v601
        %v604 = vld [vmem:[%s10] sm:$0xff]
        %v605 = vld [vmem:[%s6] sm:$0xff]
        %v606 = vld [vmem:[%s6 + $0x8] sm:$0xff]
        %v607 = vld [vmem:[%s6 + $0x10] sm:$0xff]
        %v608 = vld [vmem:[%s6 + $0x18] sm:$0xff]
        %v609 = vld [vmem:[%s7] sm:$0xff]
        %v610 = vld [vmem:[%s7 + $0x8] sm:$0xff]
        %v611 = vld [vmem:[%s7 + $0x10] sm:$0xff]
        %v612 = vld [vmem:[%s7 + $0x18] sm:$0xff]
        %v613 = vlaneseq
        %v614 = vshrl.u32 %v613, 7
        %v615 = vsub.s32 0, %v614
        %v616 = vrot.slane %v604, %v615
        %v618 = vsel %vm519, %v602, 0
        %v621 = vsel %vm519, %v603, 0
        %623 = vmatprep.subr.mxu0 0.0
        %624 = vmatpush1.msra.mxu0 %v605
        %625 = vmatprep.subr.mxu0 0.0
        %626 = vmatpush1.msra.mxu0 %v606
        %627 = vmatprep.subr.mxu0 0.0
        %628 = vmatpush1.msra.mxu0 %v607
        %629 = vmatprep.subr.mxu0 0.0
        %630 = vmatpush1.msra.mxu0 %v608
        %631 = vmatprep.subr.mxu0 0.0
        %632 = vmatpush1.msra.mxu0 0.0
        %633 = vmatprep.subr.mxu0 0.0
        %634 = vmatpush1.msra.mxu0 0.0
        %635 = vmatprep.subr.mxu0 0.0
        %636 = vmatpush1.msra.mxu0 0.0
        %637 = vmatprep.subr.mxu0 0.0
        %638 = vmatpush1.msra.mxu0 0.0
        %639 = vmatprep.subr.mxu0 0.0
        %640 = vmatpush1.msra.mxu0 0.0
        %641 = vmatprep.subr.mxu0 0.0
        %642 = vmatpush1.msra.mxu0 0.0
        %643 = vmatprep.subr.mxu0 0.0
        %644 = vmatpush1.msra.mxu0 0.0
        %645 = vmatprep.subr.mxu0 0.0
        %646 = vmatpush1.msra.mxu0 0.0
        %647 = vmatprep.subr.mxu0 0.0
        %648 = vmatpush1.msra.mxu0 0.0
        %649 = vmatprep.subr.mxu0 0.0
        %650 = vmatpush1.msra.mxu0 0.0
        %651 = vmatprep.subr.mxu0 0.0
        %652 = vmatpush1.msra.mxu0 0.0
        %653 = vmatprep.subr.mxu0 0.0
        %654 = vmatpush1.msra.mxu0 0.0
        %655 = vmatprep.subr.mxu0 0.0
        %656 = vmatpush1.msra.mxu0 0.0
        %657 = vmatprep.subr.mxu0 0.0
        %658 = vmatpush1.msra.mxu0 0.0
        %659 = vmatprep.subr.mxu0 0.0
        %660 = vmatpush1.msra.mxu0 0.0
        %661 = vmatprep.subr.mxu0 0.0
        %662 = vmatpush1.msra.mxu0 0.0
        %663 = vmatprep.subr.mxu0 0.0
        %664 = vmatpush1.msra.mxu0 0.0
        %665 = vmatprep.subr.mxu0 0.0
        %666 = vmatpush1.msra.mxu0 0.0
        %667 = vmatprep.subr.mxu0 0.0
        %668 = vmatpush1.msra.mxu0 0.0
        %669 = vmatprep.subr.mxu0 0.0
        %670 = vmatpush1.msra.mxu0 0.0
        %671 = vmatprep.subr.mxu0 0.0
        %672 = vmatpush1.msra.mxu0 0.0
        %673 = vmatprep.subr.mxu0 0.0
        %674 = vmatpush1.msra.mxu0 0.0
        %675 = vmatprep.subr.mxu0 0.0
        %676 = vmatpush1.msra.mxu0 0.0
        %677 = vmatprep.subr.mxu0 0.0
        %678 = vmatpush1.msra.mxu0 0.0
        %679 = vmatprep.subr.mxu0 0.0
        %680 = vmatpush1.msra.mxu0 0.0
        %681 = vmatprep.subr.mxu0 0.0
        %682 = vmatpush1.msra.mxu0 0.0
        %683 = vmatprep.subr.mxu0 0.0
        %684 = vmatpush1.msra.mxu0 0.0
        %685 = vmatprep.subr.mxu0 0.0
        %686 = vmatpush1.msra.mxu0 0.0
        %687 = vmatprep.mubr.f32.mxu0 0.0
        %688 = vmatmul.mubr.f32.gmra.mrb[0].mxu0 %v618
        %v689 = vpop.f32.mrb[0].mxu0
        %v690 = vadd.f32 %v616, %v689
        %v691 = vpop.f32.mrb[0].mxu0
        %692 = vmatprep.mubr.f32.mxu0 0.0
        %693 = vmatmul.mubr.f32.gmra.mrb[0].mxu0 %v621
        %v694 = vpop.f32.mrb[0].mxu0
        %v695 = vadd.f32 %v616, %v694
        %v696 = vpop.f32.mrb[0].mxu0
        %697 = vdwg.mxu0
        %699 = vrot.lane.b32.xlu0 %v690, 96
        %v700 = vpop.permute.xlu0 %699
        %v701 = vsel %vm423, %v690, 0
        %v703 = vsel %vm423, %v700, 0
        %705 = vmatprep.subr.mxu0 0.0
        %706 = vmatpush1.xpose.msra.mxu0 %v703
        %707 = vmatprep.subr.mxu0 0.0
        %708 = vmatpush1.xpose.msra.mxu0 0.0
        %709 = vmatprep.subr.mxu0 0.0
        %710 = vmatpush1.xpose.msra.mxu0 0.0
        %711 = vmatprep.subr.mxu0 0.0
        %712 = vmatpush1.xpose.msra.mxu0 0.0
        %713 = vmatprep.subr.mxu0 0.0
        %714 = vmatpush1.xpose.msra.mxu0 0.0
        %715 = vmatprep.subr.mxu0 0.0
        %716 = vmatpush1.xpose.msra.mxu0 0.0
        %717 = vmatprep.subr.mxu0 0.0
        %718 = vmatpush1.xpose.msra.mxu0 0.0
        %719 = vmatprep.subr.mxu0 0.0
        %720 = vmatpush1.xpose.msra.mxu0 0.0
        %721 = vmatprep.subr.mxu0 0.0
        %722 = vmatpush1.xpose.msra.mxu0 0.0
        %723 = vmatprep.subr.mxu0 0.0
        %724 = vmatpush1.xpose.msra.mxu0 0.0
        %725 = vmatprep.subr.mxu0 0.0
        %726 = vmatpush1.xpose.msra.mxu0 0.0
        %727 = vmatprep.subr.mxu0 0.0
        %728 = vmatpush1.xpose.msra.mxu0 0.0
        %729 = vmatprep.subr.mxu0 0.0
        %730 = vmatpush1.xpose.msra.mxu0 0.0
        %731 = vmatprep.subr.mxu0 0.0
        %732 = vmatpush1.xpose.msra.mxu0 0.0
        %733 = vmatprep.subr.mxu0 0.0
        %734 = vmatpush1.xpose.msra.mxu0 0.0
        %735 = vmatprep.subr.mxu0 0.0
        %736 = vmatpush1.xpose.msra.mxu0 0.0
        %737 = vmatprep.subr.mxu0 0.0
        %738 = vmatpush1.xpose.msra.mxu0 0.0
        %739 = vmatprep.subr.mxu0 0.0
        %740 = vmatpush1.xpose.msra.mxu0 0.0
        %741 = vmatprep.subr.mxu0 0.0
        %742 = vmatpush1.xpose.msra.mxu0 0.0
        %743 = vmatprep.subr.mxu0 0.0
        %744 = vmatpush1.xpose.msra.mxu0 0.0
        %745 = vmatprep.subr.mxu0 0.0
        %746 = vmatpush1.xpose.msra.mxu0 0.0
        %747 = vmatprep.subr.mxu0 0.0
        %748 = vmatpush1.xpose.msra.mxu0 0.0
        %749 = vmatprep.subr.mxu0 0.0
        %750 = vmatpush1.xpose.msra.mxu0 0.0
        %751 = vmatprep.subr.mxu0 0.0
        %752 = vmatpush1.xpose.msra.mxu0 0.0
        %753 = vmatprep.subr.mxu0 0.0
        %754 = vmatpush1.xpose.msra.mxu0 0.0
        %755 = vmatprep.subr.mxu0 0.0
        %756 = vmatpush1.xpose.msra.mxu0 0.0
        %757 = vmatprep.subr.mxu0 0.0
        %758 = vmatpush1.xpose.msra.mxu0 0.0
        %759 = vmatprep.subr.mxu0 0.0
        %760 = vmatpush1.xpose.msra.mxu0 0.0
        %761 = vmatprep.subr.mxu0 0.0
        %762 = vmatpush1.xpose.msra.mxu0 0.0
        %763 = vmatprep.subr.mxu0 0.0
        %764 = vmatpush1.xpose.msra.mxu0 0.0
        %765 = vmatprep.subr.mxu0 0.0
        %766 = vmatpush1.xpose.msra.mxu0 0.0
        %767 = vmatprep.subr.mxu0 0.0
        %768 = vmatpush1.xpose.msra.mxu0 0.0
        %769 = vmatprep.mubr.f32.mxu0 0.0
        %770 = vmatmul.mubr.f32.gmra.mrb[0].mxu0 %v701
        %v771 = vpop.f32.mrb[0].mxu0
        %v772 = vadd.f32 0.0, %v771
        %v773 = vpop.f32.mrb[0].mxu0
        %774 = vdwg.mxu0
        %776 = vrot.lane.b32.xlu0 %v695, 96
        %v777 = vpop.permute.xlu0 %776
        %v778 = vsel %vm423, %v695, 0
        %v780 = vsel %vm423, %v777, 0
        %782 = vmatprep.subr.mxu0 0.0
        %783 = vmatpush1.xpose.msra.mxu0 %v780
        %784 = vmatprep.subr.mxu0 0.0
        %785 = vmatpush1.xpose.msra.mxu0 0.0
        %786 = vmatprep.subr.mxu0 0.0
        %787 = vmatpush1.xpose.msra.mxu0 0.0
        %788 = vmatprep.subr.mxu0 0.0
        %789 = vmatpush1.xpose.msra.mxu0 0.0
        %790 = vmatprep.subr.mxu0 0.0
        %791 = vmatpush1.xpose.msra.mxu0 0.0
        %792 = vmatprep.subr.mxu0 0.0
        %793 = vmatpush1.xpose.msra.mxu0 0.0
        %794 = vmatprep.subr.mxu0 0.0
        %795 = vmatpush1.xpose.msra.mxu0 0.0
        %796 = vmatprep.subr.mxu0 0.0
        %797 = vmatpush1.xpose.msra.mxu0 0.0
        %798 = vmatprep.subr.mxu0 0.0
        %799 = vmatpush1.xpose.msra.mxu0 0.0
        %800 = vmatprep.subr.mxu0 0.0
        %801 = vmatpush1.xpose.msra.mxu0 0.0
        %802 = vmatprep.subr.mxu0 0.0
        %803 = vmatpush1.xpose.msra.mxu0 0.0
        %804 = vmatprep.subr.mxu0 0.0
        %805 = vmatpush1.xpose.msra.mxu0 0.0
        %806 = vmatprep.subr.mxu0 0.0
        %807 = vmatpush1.xpose.msra.mxu0 0.0
        %808 = vmatprep.subr.mxu0 0.0
        %809 = vmatpush1.xpose.msra.mxu0 0.0
        %810 = vmatprep.subr.mxu0 0.0
        %811 = vmatpush1.xpose.msra.mxu0 0.0
        %812 = vmatprep.subr.mxu0 0.0
        %813 = vmatpush1.xpose.msra.mxu0 0.0
        %814 = vmatprep.subr.mxu0 0.0
        %815 = vmatpush1.xpose.msra.mxu0 0.0
        %816 = vmatprep.subr.mxu0 0.0
        %817 = vmatpush1.xpose.msra.mxu0 0.0
        %818 = vmatprep.subr.mxu0 0.0
        %819 = vmatpush1.xpose.msra.mxu0 0.0
        %820 = vmatprep.subr.mxu0 0.0
        %821 = vmatpush1.xpose.msra.mxu0 0.0
        %822 = vmatprep.subr.mxu0 0.0
        %823 = vmatpush1.xpose.msra.mxu0 0.0
        %824 = vmatprep.subr.mxu0 0.0
        %825 = vmatpush1.xpose.msra.mxu0 0.0
        %826 = vmatprep.subr.mxu0 0.0
        %827 = vmatpush1.xpose.msra.mxu0 0.0
        %828 = vmatprep.subr.mxu0 0.0
        %829 = vmatpush1.xpose.msra.mxu0 0.0
        %830 = vmatprep.subr.mxu0 0.0
        %831 = vmatpush1.xpose.msra.mxu0 0.0
        %832 = vmatprep.subr.mxu0 0.0
        %833 = vmatpush1.xpose.msra.mxu0 0.0
        %834 = vmatprep.subr.mxu0 0.0
        %835 = vmatpush1.xpose.msra.mxu0 0.0
        %836 = vmatprep.subr.mxu0 0.0
        %837 = vmatpush1.xpose.msra.mxu0 0.0
        %838 = vmatprep.subr.mxu0 0.0
        %839 = vmatpush1.xpose.msra.mxu0 0.0
        %840 = vmatprep.subr.mxu0 0.0
        %841 = vmatpush1.xpose.msra.mxu0 0.0
        %842 = vmatprep.subr.mxu0 0.0
        %843 = vmatpush1.xpose.msra.mxu0 0.0
        %844 = vmatprep.subr.mxu0 0.0
        %845 = vmatpush1.xpose.msra.mxu0 0.0
        %846 = vmatprep.mubr.f32.mxu0 0.0
        %847 = vmatmul.mubr.f32.gmra.mrb[0].mxu0 %v778
        %v848 = vpop.f32.mrb[0].mxu0
        %v849 = vadd.f32 0.0, %v848
        %v850 = vpop.f32.mrb[0].mxu0
        %851 = vdwg.mxu0
        %v852 = vmul.f32 %v772, 0.5
        %v853 = vmul.f32 %v849, 0.5
        %vm854 = vcmask 64512
        %v855 = vsel %vm854, %v852, -inf
        %856 = vmax.xlane.f32.xlu0 %v855
        %v857 = vpop.xlane.xlu0 %856
        %v858 = vsel %vm854, %v853, -inf
        %859 = vmax.xlane.f32.xlu0 %v858
        %v860 = vpop.xlane.xlu0 %859
        %v861 = vsub.f32 %v852, %v857
        %v862 = vsub.f32 %v853, %v860
        %v863 = vmul.f32 %v861, 1.442695
        %v864 = vpow.pop %v863
        %v865 = vmul.f32 %v862, 1.442695
        %v866 = vpow.pop %v865
        %v867 = vsel %vm854, %v864, 0.0
        %868 = vadd.xlane.f32.xlu0 %v867
        %v869 = vpop.xlane.xlu0 %868
        %v870 = vsel %vm854, %v866, 0.0
        %871 = vadd.xlane.f32.xlu0 %v870
        %v872 = vpop.xlane.xlu0 %871
        %v873 = vrcp.pop %v869
        %v874 = vrcp.pop %v872
        %v875 = vmul.f32 %v864, %v873
        %v876 = vmul.f32 %v866, %v874
        %877 = vrot.lane.b32.xlu0 %v690, 64
        %v878 = vpop.permute.xlu0 %877
        %v881 = vsel %vm854, %v875, 0
        %883 = vmatprep.subr.mxu0 0.0
        %884 = vmatpush1.msra.mxu0 %v878
        %885 = vmatprep.subr.mxu0 0.0
        %886 = vmatpush1.msra.mxu0 0.0
        %887 = vmatprep.subr.mxu0 0.0
        %888 = vmatpush1.msra.mxu0 0.0
        %889 = vmatprep.subr.mxu0 0.0
        %890 = vmatpush1.msra.mxu0 0.0
        %891 = vmatprep.subr.mxu0 0.0
        %892 = vmatpush1.msra.mxu0 0.0
        %893 = vmatprep.subr.mxu0 0.0
        %894 = vmatpush1.msra.mxu0 0.0
        %895 = vmatprep.subr.mxu0 0.0
        %896 = vmatpush1.msra.mxu0 0.0
        %897 = vmatprep.subr.mxu0 0.0
        %898 = vmatpush1.msra.mxu0 0.0
        %899 = vmatprep.subr.mxu0 0.0
        %900 = vmatpush1.msra.mxu0 0.0
        %901 = vmatprep.subr.mxu0 0.0
        %902 = vmatpush1.msra.mxu0 0.0
        %903 = vmatprep.subr.mxu0 0.0
        %904 = vmatpush1.msra.mxu0 0.0
        %905 = vmatprep.subr.mxu0 0.0
        %906 = vmatpush1.msra.mxu0 0.0
        %907 = vmatprep.subr.mxu0 0.0
        %908 = vmatpush1.msra.mxu0 0.0
        %909 = vmatprep.subr.mxu0 0.0
        %910 = vmatpush1.msra.mxu0 0.0
        %911 = vmatprep.subr.mxu0 0.0
        %912 = vmatpush1.msra.mxu0 0.0
        %913 = vmatprep.subr.mxu0 0.0
        %914 = vmatpush1.msra.mxu0 0.0
        %915 = vmatprep.subr.mxu0 0.0
        %916 = vmatpush1.msra.mxu0 0.0
        %917 = vmatprep.subr.mxu0 0.0
        %918 = vmatpush1.msra.mxu0 0.0
        %919 = vmatprep.subr.mxu0 0.0
        %920 = vmatpush1.msra.mxu0 0.0
        %921 = vmatprep.subr.mxu0 0.0
        %922 = vmatpush1.msra.mxu0 0.0
        %923 = vmatprep.subr.mxu0 0.0
        %924 = vmatpush1.msra.mxu0 0.0
        %925 = vmatprep.subr.mxu0 0.0
        %926 = vmatpush1.msra.mxu0 0.0
        %927 = vmatprep.subr.mxu0 0.0
        %928 = vmatpush1.msra.mxu0 0.0
        %929 = vmatprep.subr.mxu0 0.0
        %930 = vmatpush1.msra.mxu0 0.0
        %931 = vmatprep.subr.mxu0 0.0
        %932 = vmatpush1.msra.mxu0 0.0
        %933 = vmatprep.subr.mxu0 0.0
        %934 = vmatpush1.msra.mxu0 0.0
        %935 = vmatprep.subr.mxu0 0.0
        %936 = vmatpush1.msra.mxu0 0.0
        %937 = vmatprep.subr.mxu0 0.0
        %938 = vmatpush1.msra.mxu0 0.0
        %939 = vmatprep.subr.mxu0 0.0
        %940 = vmatpush1.msra.mxu0 0.0
        %941 = vmatprep.subr.mxu0 0.0
        %942 = vmatpush1.msra.mxu0 0.0
        %943 = vmatprep.subr.mxu0 0.0
        %944 = vmatpush1.msra.mxu0 0.0
        %945 = vmatprep.subr.mxu0 0.0
        %946 = vmatpush1.msra.mxu0 0.0
        %947 = vmatprep.mubr.f32.mxu0 0.0
        %948 = vmatmul.mubr.f32.gmra.mrb[0].mxu0 %v881
        %v949 = vpop.f32.mrb[0].mxu0
        %v950 = vadd.f32 0.0, %v949
        %v951 = vpop.f32.mrb[0].mxu0
        %952 = vdwg.mxu0
        %953 = vrot.lane.b32.xlu0 %v695, 64
        %v954 = vpop.permute.xlu0 %953
        %v957 = vsel %vm854, %v876, 0
        %959 = vmatprep.subr.mxu0 0.0
        %960 = vmatpush1.msra.mxu0 %v954
        %961 = vmatprep.subr.mxu0 0.0
        %962 = vmatpush1.msra.mxu0 0.0
        %963 = vmatprep.subr.mxu0 0.0
        %964 = vmatpush1.msra.mxu0 0.0
        %965 = vmatprep.subr.mxu0 0.0
        %966 = vmatpush1.msra.mxu0 0.0
        %967 = vmatprep.subr.mxu0 0.0
        %968 = vmatpush1.msra.mxu0 0.0
        %969 = vmatprep.subr.mxu0 0.0
        %970 = vmatpush1.msra.mxu0 0.0
        %971 = vmatprep.subr.mxu0 0.0
        %972 = vmatpush1.msra.mxu0 0.0
        %973 = vmatprep.subr.mxu0 0.0
        %974 = vmatpush1.msra.mxu0 0.0
        %975 = vmatprep.subr.mxu0 0.0
        %976 = vmatpush1.msra.mxu0 0.0
        %977 = vmatprep.subr.mxu0 0.0
        %978 = vmatpush1.msra.mxu0 0.0
        %979 = vmatprep.subr.mxu0 0.0
        %980 = vmatpush1.msra.mxu0 0.0
        %981 = vmatprep.subr.mxu0 0.0
        %982 = vmatpush1.msra.mxu0 0.0
        %983 = vmatprep.subr.mxu0 0.0
        %984 = vmatpush1.msra.mxu0 0.0
        %985 = vmatprep.subr.mxu0 0.0
        %986 = vmatpush1.msra.mxu0 0.0
        %987 = vmatprep.subr.mxu0 0.0
        %988 = vmatpush1.msra.mxu0 0.0
        %989 = vmatprep.subr.mxu0 0.0
        %990 = vmatpush1.msra.mxu0 0.0
        %991 = vmatprep.subr.mxu0 0.0
        %992 = vmatpush1.msra.mxu0 0.0
        %993 = vmatprep.subr.mxu0 0.0
        %994 = vmatpush1.msra.mxu0 0.0
        %995 = vmatprep.subr.mxu0 0.0
        %996 = vmatpush1.msra.mxu0 0.0
        %997 = vmatprep.subr.mxu0 0.0
        %998 = vmatpush1.msra.mxu0 0.0
        %999 = vmatprep.subr.mxu0 0.0
        %1000 = vmatpush1.msra.mxu0 0.0
        %1001 = vmatprep.subr.mxu0 0.0
        %1002 = vmatpush1.msra.mxu0 0.0
        %1003 = vmatprep.subr.mxu0 0.0
        %1004 = vmatpush1.msra.mxu0 0.0
        %1005 = vmatprep.subr.mxu0 0.0
        %1006 = vmatpush1.msra.mxu0 0.0
        %1007 = vmatprep.subr.mxu0 0.0
        %1008 = vmatpush1.msra.mxu0 0.0
        %1009 = vmatprep.subr.mxu0 0.0
        %1010 = vmatpush1.msra.mxu0 0.0
        %1011 = vmatprep.subr.mxu0 0.0
        %1012 = vmatpush1.msra.mxu0 0.0
        %1013 = vmatprep.subr.mxu0 0.0
        %1014 = vmatpush1.msra.mxu0 0.0
        %1015 = vmatprep.subr.mxu0 0.0
        %1016 = vmatpush1.msra.mxu0 0.0
        %1017 = vmatprep.subr.mxu0 0.0
        %1018 = vmatpush1.msra.mxu0 0.0
        %1019 = vmatprep.subr.mxu0 0.0
        %1020 = vmatpush1.msra.mxu0 0.0
        %1021 = vmatprep.subr.mxu0 0.0
        %1022 = vmatpush1.msra.mxu0 0.0
        %1023 = vmatprep.mubr.f32.mxu0 0.0
        %1024 = vmatmul.mubr.f32.gmra.mrb[0].mxu0 %v957
        %v1025 = vpop.f32.mrb[0].mxu0
        %v1026 = vadd.f32 0.0, %v1025
        %v1027 = vpop.f32.mrb[0].mxu0
        %1028 = vdwg.mxu0
        %1029 = vrot.lane.b32.xlu0 %v690, 124
        %v1030 = vpop.permute.xlu0 %1029
        %1031 = vrot.lane.b32.xlu0 %v690, 92
        %v1032 = vpop.permute.xlu0 %1031
        %v1033 = vsel %vm423, %v1030, 0
        %v1035 = vsel %vm423, %v1032, 0
        %1037 = vmatprep.subr.mxu0 0.0
        %1038 = vmatpush1.xpose.msra.mxu0 %v1035
        %1039 = vmatprep.subr.mxu0 0.0
        %1040 = vmatpush1.xpose.msra.mxu0 0.0
        %1041 = vmatprep.subr.mxu0 0.0
        %1042 = vmatpush1.xpose.msra.mxu0 0.0
        %1043 = vmatprep.subr.mxu0 0.0
        %1044 = vmatpush1.xpose.msra.mxu0 0.0
        %1045 = vmatprep.subr.mxu0 0.0
        %1046 = vmatpush1.xpose.msra.mxu0 0.0
        %1047 = vmatprep.subr.mxu0 0.0
        %1048 = vmatpush1.xpose.msra.mxu0 0.0
        %1049 = vmatprep.subr.mxu0 0.0
        %1050 = vmatpush1.xpose.msra.mxu0 0.0
        %1051 = vmatprep.subr.mxu0 0.0
        %1052 = vmatpush1.xpose.msra.mxu0 0.0
        %1053 = vmatprep.subr.mxu0 0.0
        %1054 = vmatpush1.xpose.msra.mxu0 0.0
        %1055 = vmatprep.subr.mxu0 0.0
        %1056 = vmatpush1.xpose.msra.mxu0 0.0
        %1057 = vmatprep.subr.mxu0 0.0
        %1058 = vmatpush1.xpose.msra.mxu0 0.0
        %1059 = vmatprep.subr.mxu0 0.0
        %1060 = vmatpush1.xpose.msra.mxu0 0.0
        %1061 = vmatprep.subr.mxu0 0.0
        %1062 = vmatpush1.xpose.msra.mxu0 0.0
        %1063 = vmatprep.subr.mxu0 0.0
        %1064 = vmatpush1.xpose.msra.mxu0 0.0
        %1065 = vmatprep.subr.mxu0 0.0
        %1066 = vmatpush1.xpose.msra.mxu0 0.0
        %1067 = vmatprep.subr.mxu0 0.0
        %1068 = vmatpush1.xpose.msra.mxu0 0.0
        %1069 = vmatprep.subr.mxu0 0.0
        %1070 = vmatpush1.xpose.msra.mxu0 0.0
        %1071 = vmatprep.subr.mxu0 0.0
        %1072 = vmatpush1.xpose.msra.mxu0 0.0
        %1073 = vmatprep.subr.mxu0 0.0
        %1074 = vmatpush1.xpose.msra.mxu0 0.0
        %1075 = vmatprep.subr.mxu0 0.0
        %1076 = vmatpush1.xpose.msra.mxu0 0.0
        %1077 = vmatprep.subr.mxu0 0.0
        %1078 = vmatpush1.xpose.msra.mxu0 0.0
        %1079 = vmatprep.subr.mxu0 0.0
        %1080 = vmatpush1.xpose.msra.mxu0 0.0
        %1081 = vmatprep.subr.mxu0 0.0
        %1082 = vmatpush1.xpose.msra.mxu0 0.0
        %1083 = vmatprep.subr.mxu0 0.0
        %1084 = vmatpush1.xpose.msra.mxu0 0.0
        %1085 = vmatprep.subr.mxu0 0.0
        %1086 = vmatpush1.xpose.msra.mxu0 0.0
        %1087 = vmatprep.subr.mxu0 0.0
        %1088 = vmatpush1.xpose.msra.mxu0 0.0
        %1089 = vmatprep.subr.mxu0 0.0
        %1090 = vmatpush1.xpose.msra.mxu0 0.0
        %1091 = vmatprep.subr.mxu0 0.0
        %1092 = vmatpush1.xpose.msra.mxu0 0.0
        %1093 = vmatprep.subr.mxu0 0.0
        %1094 = vmatpush1.xpose.msra.mxu0 0.0
        %1095 = vmatprep.subr.mxu0 0.0
        %1096 = vmatpush1.xpose.msra.mxu0 0.0
        %1097 = vmatprep.subr.mxu0 0.0
        %1098 = vmatpush1.xpose.msra.mxu0 0.0
        %1099 = vmatprep.subr.mxu0 0.0
        %1100 = vmatpush1.xpose.msra.mxu0 0.0
        %1101 = vmatprep.mubr.f32.mxu0 0.0
        %1102 = vmatmul.mubr.f32.gmra.mrb[0].mxu0 %v1033
        %v1103 = vpop.f32.mrb[0].mxu0
        %v1104 = vadd.f32 0.0, %v1103
        %v1105 = vpop.f32.mrb[0].mxu0
        %1106 = vdwg.mxu0
        %1107 = vrot.lane.b32.xlu0 %v695, 124
        %v1108 = vpop.permute.xlu0 %1107
        %1109 = vrot.lane.b32.xlu0 %v695, 92
        %v1110 = vpop.permute.xlu0 %1109
        %v1111 = vsel %vm423, %v1108, 0
        %v1113 = vsel %vm423, %v1110, 0
        %1115 = vmatprep.subr.mxu0 0.0
        %1116 = vmatpush1.xpose.msra.mxu0 %v1113
        %1117 = vmatprep.subr.mxu0 0.0
        %1118 = vmatpush1.xpose.msra.mxu0 0.0
        %1119 = vmatprep.subr.mxu0 0.0
        %1120 = vmatpush1.xpose.msra.mxu0 0.0
        %1121 = vmatprep.subr.mxu0 0.0
        %1122 = vmatpush1.xpose.msra.mxu0 0.0
        %1123 = vmatprep.subr.mxu0 0.0
        %1124 = vmatpush1.xpose.msra.mxu0 0.0
        %1125 = vmatprep.subr.mxu0 0.0
        %1126 = vmatpush1.xpose.msra.mxu0 0.0
        %1127 = vmatprep.subr.mxu0 0.0
        %1128 = vmatpush1.xpose.msra.mxu0 0.0
        %1129 = vmatprep.subr.mxu0 0.0
        %1130 = vmatpush1.xpose.msra.mxu0 0.0
        %1131 = vmatprep.subr.mxu0 0.0
        %1132 = vmatpush1.xpose.msra.mxu0 0.0
        %1133 = vmatprep.subr.mxu0 0.0
        %1134 = vmatpush1.xpose.msra.mxu0 0.0
        %1135 = vmatprep.subr.mxu0 0.0
        %1136 = vmatpush1.xpose.msra.mxu0 0.0
        %1137 = vmatprep.subr.mxu0 0.0
        %1138 = vmatpush1.xpose.msra.mxu0 0.0
        %1139 = vmatprep.subr.mxu0 0.0
        %1140 = vmatpush1.xpose.msra.mxu0 0.0
        %1141 = vmatprep.subr.mxu0 0.0
        %1142 = vmatpush1.xpose.msra.mxu0 0.0
        %1143 = vmatprep.subr.mxu0 0.0
        %1144 = vmatpush1.xpose.msra.mxu0 0.0
        %1145 = vmatprep.subr.mxu0 0.0
        %1146 = vmatpush1.xpose.msra.mxu0 0.0
        %1147 = vmatprep.subr.mxu0 0.0
        %1148 = vmatpush1.xpose.msra.mxu0 0.0
        %1149 = vmatprep.subr.mxu0 0.0
        %1150 = vmatpush1.xpose.msra.mxu0 0.0
        %1151 = vmatprep.subr.mxu0 0.0
        %1152 = vmatpush1.xpose.msra.mxu0 0.0
        %1153 = vmatprep.subr.mxu0 0.0
        %1154 = vmatpush1.xpose.msra.mxu0 0.0
        %1155 = vmatprep.subr.mxu0 0.0
        %1156 = vmatpush1.xpose.msra.mxu0 0.0
        %1157 = vmatprep.subr.mxu0 0.0
        %1158 = vmatpush1.xpose.msra.mxu0 0.0
        %1159 = vmatprep.subr.mxu0 0.0
        %1160 = vmatpush1.xpose.msra.mxu0 0.0
        %1161 = vmatprep.subr.mxu0 0.0
        %1162 = vmatpush1.xpose.msra.mxu0 0.0
        %1163 = vmatprep.subr.mxu0 0.0
        %1164 = vmatpush1.xpose.msra.mxu0 0.0
        %1165 = vmatprep.subr.mxu0 0.0
        %1166 = vmatpush1.xpose.msra.mxu0 0.0
        %1167 = vmatprep.subr.mxu0 0.0
        %1168 = vmatpush1.xpose.msra.mxu0 0.0
        %1169 = vmatprep.subr.mxu0 0.0
        %1170 = vmatpush1.xpose.msra.mxu0 0.0
        %1171 = vmatprep.subr.mxu0 0.0
        %1172 = vmatpush1.xpose.msra.mxu0 0.0
        %1173 = vmatprep.subr.mxu0 0.0
        %1174 = vmatpush1.xpose.msra.mxu0 0.0
        %1175 = vmatprep.subr.mxu0 0.0
        %1176 = vmatpush1.xpose.msra.mxu0 0.0
        %1177 = vmatprep.subr.mxu0 0.0
        %1178 = vmatpush1.xpose.msra.mxu0 0.0
        %1179 = vmatprep.mubr.f32.mxu0 0.0
        %1180 = vmatmul.mubr.f32.gmra.mrb[0].mxu0 %v1111
        %v1181 = vpop.f32.mrb[0].mxu0
        %v1182 = vadd.f32 0.0, %v1181
        %v1183 = vpop.f32.mrb[0].mxu0
        %1184 = vdwg.mxu0
        %v1185 = vmul.f32 %v1104, 0.5
        %v1186 = vmul.f32 %v1182, 0.5
        %v1187 = vsel %vm854, %v1185, -inf
        %1188 = vmax.xlane.f32.xlu0 %v1187
        %v1189 = vpop.xlane.xlu0 %1188
        %v1190 = vsel %vm854, %v1186, -inf
        %1191 = vmax.xlane.f32.xlu0 %v1190
        %v1192 = vpop.xlane.xlu0 %1191
        %v1193 = vsub.f32 %v1185, %v1189
        %v1194 = vsub.f32 %v1186, %v1192
        %v1195 = vmul.f32 %v1193, 1.442695
        %v1196 = vpow.pop %v1195
        %v1197 = vmul.f32 %v1194, 1.442695
        %v1198 = vpow.pop %v1197
        %v1199 = vsel %vm854, %v1196, 0.0
        %1200 = vadd.xlane.f32.xlu0 %v1199
        %v1201 = vpop.xlane.xlu0 %1200
        %v1202 = vsel %vm854, %v1198, 0.0
        %1203 = vadd.xlane.f32.xlu0 %v1202
        %v1204 = vpop.xlane.xlu0 %1203
        %v1205 = vrcp.pop %v1201
        %v1206 = vrcp.pop %v1204
        %v1207 = vmul.f32 %v1196, %v1205
        %v1208 = vmul.f32 %v1198, %v1206
        %1209 = vrot.lane.b32.xlu0 %v690, 60
        %v1210 = vpop.permute.xlu0 %1209
        %v1213 = vsel %vm854, %v1207, 0
        %1215 = vmatprep.subr.mxu0 0.0
        %1216 = vmatpush1.msra.mxu0 %v1210
        %1217 = vmatprep.subr.mxu0 0.0
        %1218 = vmatpush1.msra.mxu0 0.0
        %1219 = vmatprep.subr.mxu0 0.0
        %1220 = vmatpush1.msra.mxu0 0.0
        %1221 = vmatprep.subr.mxu0 0.0
        %1222 = vmatpush1.msra.mxu0 0.0
        %1223 = vmatprep.subr.mxu0 0.0
        %1224 = vmatpush1.msra.mxu0 0.0
        %1225 = vmatprep.subr.mxu0 0.0
        %1226 = vmatpush1.msra.mxu0 0.0
        %1227 = vmatprep.subr.mxu0 0.0
        %1228 = vmatpush1.msra.mxu0 0.0
        %1229 = vmatprep.subr.mxu0 0.0
        %1230 = vmatpush1.msra.mxu0 0.0
        %1231 = vmatprep.subr.mxu0 0.0
        %1232 = vmatpush1.msra.mxu0 0.0
        %1233 = vmatprep.subr.mxu0 0.0
        %1234 = vmatpush1.msra.mxu0 0.0
        %1235 = vmatprep.subr.mxu0 0.0
        %1236 = vmatpush1.msra.mxu0 0.0
        %1237 = vmatprep.subr.mxu0 0.0
        %1238 = vmatpush1.msra.mxu0 0.0
        %1239 = vmatprep.subr.mxu0 0.0
        %1240 = vmatpush1.msra.mxu0 0.0
        %1241 = vmatprep.subr.mxu0 0.0
        %1242 = vmatpush1.msra.mxu0 0.0
        %1243 = vmatprep.subr.mxu0 0.0
        %1244 = vmatpush1.msra.mxu0 0.0
        %1245 = vmatprep.subr.mxu0 0.0
        %1246 = vmatpush1.msra.mxu0 0.0
        %1247 = vmatprep.subr.mxu0 0.0
        %1248 = vmatpush1.msra.mxu0 0.0
        %1249 = vmatprep.subr.mxu0 0.0
        %1250 = vmatpush1.msra.mxu0 0.0
        %1251 = vmatprep.subr.mxu0 0.0
        %1252 = vmatpush1.msra.mxu0 0.0
        %1253 = vmatprep.subr.mxu0 0.0
        %1254 = vmatpush1.msra.mxu0 0.0
        %1255 = vmatprep.subr.mxu0 0.0
        %1256 = vmatpush1.msra.mxu0 0.0
        %1257 = vmatprep.subr.mxu0 0.0
        %1258 = vmatpush1.msra.mxu0 0.0
        %1259 = vmatprep.subr.mxu0 0.0
        %1260 = vmatpush1.msra.mxu0 0.0
        %1261 = vmatprep.subr.mxu0 0.0
        %1262 = vmatpush1.msra.mxu0 0.0
        %1263 = vmatprep.subr.mxu0 0.0
        %1264 = vmatpush1.msra.mxu0 0.0
        %1265 = vmatprep.subr.mxu0 0.0
        %1266 = vmatpush1.msra.mxu0 0.0
        %1267 = vmatprep.subr.mxu0 0.0
        %1268 = vmatpush1.msra.mxu0 0.0
        %1269 = vmatprep.subr.mxu0 0.0
        %1270 = vmatpush1.msra.mxu0 0.0
        %1271 = vmatprep.subr.mxu0 0.0
        %1272 = vmatpush1.msra.mxu0 0.0
        %1273 = vmatprep.subr.mxu0 0.0
        %1274 = vmatpush1.msra.mxu0 0.0
        %1275 = vmatprep.subr.mxu0 0.0
        %1276 = vmatpush1.msra.mxu0 0.0
        %1277 = vmatprep.subr.mxu0 0.0
        %1278 = vmatpush1.msra.mxu0 0.0
        %1279 = vmatprep.mubr.f32.mxu0 0.0
        %1280 = vmatmul.mubr.f32.gmra.mrb[0].mxu0 %v1213
        %v1281 = vpop.f32.mrb[0].mxu0
        %v1282 = vadd.f32 0.0, %v1281
        %v1283 = vpop.f32.mrb[0].mxu0
        %1284 = vdwg.mxu0
        %1285 = vrot.lane.b32.xlu0 %v695, 60
        %v1286 = vpop.permute.xlu0 %1285
        %v1289 = vsel %vm854, %v1208, 0
        %1291 = vmatprep.subr.mxu0 0.0
        %1292 = vmatpush1.msra.mxu0 %v1286
        %1293 = vmatprep.subr.mxu0 0.0
        %1294 = vmatpush1.msra.mxu0 0.0
        %1295 = vmatprep.subr.mxu0 0.0
        %1296 = vmatpush1.msra.mxu0 0.0
        %1297 = vmatprep.subr.mxu0 0.0
        %1298 = vmatpush1.msra.mxu0 0.0
        %1299 = vmatprep.subr.mxu0 0.0
        %1300 = vmatpush1.msra.mxu0 0.0
        %1301 = vmatprep.subr.mxu0 0.0
        %1302 = vmatpush1.msra.mxu0 0.0
        %1303 = vmatprep.subr.mxu0 0.0
        %1304 = vmatpush1.msra.mxu0 0.0
        %1305 = vmatprep.subr.mxu0 0.0
        %1306 = vmatpush1.msra.mxu0 0.0
        %1307 = vmatprep.subr.mxu0 0.0
        %1308 = vmatpush1.msra.mxu0 0.0
        %1309 = vmatprep.subr.mxu0 0.0
        %1310 = vmatpush1.msra.mxu0 0.0
        %1311 = vmatprep.subr.mxu0 0.0
        %1312 = vmatpush1.msra.mxu0 0.0
        %1313 = vmatprep.subr.mxu0 0.0
        %1314 = vmatpush1.msra.mxu0 0.0
        %1315 = vmatprep.subr.mxu0 0.0
        %1316 = vmatpush1.msra.mxu0 0.0
        %1317 = vmatprep.subr.mxu0 0.0
        %1318 = vmatpush1.msra.mxu0 0.0
        %1319 = vmatprep.subr.mxu0 0.0
        %1320 = vmatpush1.msra.mxu0 0.0
        %1321 = vmatprep.subr.mxu0 0.0
        %1322 = vmatpush1.msra.mxu0 0.0
        %1323 = vmatprep.subr.mxu0 0.0
        %1324 = vmatpush1.msra.mxu0 0.0
        %1325 = vmatprep.subr.mxu0 0.0
        %1326 = vmatpush1.msra.mxu0 0.0
        %1327 = vmatprep.subr.mxu0 0.0
        %1328 = vmatpush1.msra.mxu0 0.0
        %1329 = vmatprep.subr.mxu0 0.0
        %1330 = vmatpush1.msra.mxu0 0.0
        %1331 = vmatprep.subr.mxu0 0.0
        %1332 = vmatpush1.msra.mxu0 0.0
        %1333 = vmatprep.subr.mxu0 0.0
        %1334 = vmatpush1.msra.mxu0 0.0
        %1335 = vmatprep.subr.mxu0 0.0
        %1336 = vmatpush1.msra.mxu0 0.0
        %1337 = vmatprep.subr.mxu0 0.0
        %1338 = vmatpush1.msra.mxu0 0.0
        %1339 = vmatprep.subr.mxu0 0.0
        %1340 = vmatpush1.msra.mxu0 0.0
        %1341 = vmatprep.subr.mxu0 0.0
        %1342 = vmatpush1.msra.mxu0 0.0
        %1343 = vmatprep.subr.mxu0 0.0
        %1344 = vmatpush1.msra.mxu0 0.0
        %1345 = vmatprep.subr.mxu0 0.0
        %1346 = vmatpush1.msra.mxu0 0.0
        %1347 = vmatprep.subr.mxu0 0.0
        %1348 = vmatpush1.msra.mxu0 0.0
        %1349 = vmatprep.subr.mxu0 0.0
        %1350 = vmatpush1.msra.mxu0 0.0
        %1351 = vmatprep.subr.mxu0 0.0
        %1352 = vmatpush1.msra.mxu0 0.0
        %1353 = vmatprep.subr.mxu0 0.0
        %1354 = vmatpush1.msra.mxu0 0.0
        %1355 = vmatprep.mubr.f32.mxu0 0.0
        %1356 = vmatmul.mubr.f32.gmra.mrb[0].mxu0 %v1289
        %v1357 = vpop.f32.mrb[0].mxu0
        %v1358 = vadd.f32 0.0, %v1357
        %v1359 = vpop.f32.mrb[0].mxu0
        %1360 = vdwg.mxu0
        %v1362 = vrot.slane %v609, 4
        %v1364 = vsel %vm423, %v1282, 0
        %v1367 = vsel %vm423, %v1358, 0
        %v1369 = vsel %vm430, %v1362, 0
        %1371 = vmatprep.subr.mxu0 0.0
        %1372 = vmatpush1.msra.mxu0 %v1369
        %1373 = vmatprep.subr.mxu0 0.0
        %1374 = vmatpush1.msra.mxu0 0.0
        %1375 = vmatprep.subr.mxu0 0.0
        %1376 = vmatpush1.msra.mxu0 0.0
        %1377 = vmatprep.subr.mxu0 0.0
        %1378 = vmatpush1.msra.mxu0 0.0
        %1379 = vmatprep.subr.mxu0 0.0
        %1380 = vmatpush1.msra.mxu0 0.0
        %1381 = vmatprep.subr.mxu0 0.0
        %1382 = vmatpush1.msra.mxu0 0.0
        %1383 = vmatprep.subr.mxu0 0.0
        %1384 = vmatpush1.msra.mxu0 0.0
        %1385 = vmatprep.subr.mxu0 0.0
        %1386 = vmatpush1.msra.mxu0 0.0
        %1387 = vmatprep.subr.mxu0 0.0
        %1388 = vmatpush1.msra.mxu0 0.0
        %1389 = vmatprep.subr.mxu0 0.0
        %1390 = vmatpush1.msra.mxu0 0.0
        %1391 = vmatprep.subr.mxu0 0.0
        %1392 = vmatpush1.msra.mxu0 0.0
        %1393 = vmatprep.subr.mxu0 0.0
        %1394 = vmatpush1.msra.mxu0 0.0
        %1395 = vmatprep.subr.mxu0 0.0
        %1396 = vmatpush1.msra.mxu0 0.0
        %1397 = vmatprep.subr.mxu0 0.0
        %1398 = vmatpush1.msra.mxu0 0.0
        %1399 = vmatprep.subr.mxu0 0.0
        %1400 = vmatpush1.msra.mxu0 0.0
        %1401 = vmatprep.subr.mxu0 0.0
        %1402 = vmatpush1.msra.mxu0 0.0
        %1403 = vmatprep.subr.mxu0 0.0
        %1404 = vmatpush1.msra.mxu0 0.0
        %1405 = vmatprep.subr.mxu0 0.0
        %1406 = vmatpush1.msra.mxu0 0.0
        %1407 = vmatprep.subr.mxu0 0.0
        %1408 = vmatpush1.msra.mxu0 0.0
        %1409 = vmatprep.subr.mxu0 0.0
        %1410 = vmatpush1.msra.mxu0 0.0
        %1411 = vmatprep.subr.mxu0 0.0
        %1412 = vmatpush1.msra.mxu0 0.0
        %1413 = vmatprep.subr.mxu0 0.0
        %1414 = vmatpush1.msra.mxu0 0.0
        %1415 = vmatprep.subr.mxu0 0.0
        %1416 = vmatpush1.msra.mxu0 0.0
        %1417 = vmatprep.subr.mxu0 0.0
        %1418 = vmatpush1.msra.mxu0 0.0
        %1419 = vmatprep.subr.mxu0 0.0
        %1420 = vmatpush1.msra.mxu0 0.0
        %1421 = vmatprep.subr.mxu0 0.0
        %1422 = vmatpush1.msra.mxu0 0.0
        %1423 = vmatprep.subr.mxu0 0.0
        %1424 = vmatpush1.msra.mxu0 0.0
        %1425 = vmatprep.subr.mxu0 0.0
        %1426 = vmatpush1.msra.mxu0 0.0
        %1427 = vmatprep.subr.mxu0 0.0
        %1428 = vmatpush1.msra.mxu0 0.0
        %1429 = vmatprep.subr.mxu0 0.0
        %1430 = vmatpush1.msra.mxu0 0.0
        %1431 = vmatprep.subr.mxu0 0.0
        %1432 = vmatpush1.msra.mxu0 0.0
        %1433 = vmatprep.subr.mxu0 0.0
        %1434 = vmatpush1.msra.mxu0 0.0
        %1435 = vmatprep.mubr.f32.mxu0 0.0
        %1436 = vmatmul.mubr.f32.gmra.mrb[0].mxu0 %v1364
        %v1437 = vpop.f32.mrb[0].mxu0
        %v1438 = vadd.f32 0.0, %v1437
        %v1439 = vpop.f32.mrb[0].mxu0
        %1440 = vmatprep.mubr.f32.mxu0 0.0
        %1441 = vmatmul.mubr.f32.gmra.mrb[0].mxu0 %v1367
        %v1442 = vpop.f32.mrb[0].mxu0
        %v1443 = vadd.f32 0.0, %v1442
        %v1444 = vpop.f32.mrb[0].mxu0
        %1445 = vdwg.mxu0
        %v1447 = vsel %vm423, %v950, 0
        %v1450 = vsel %vm423, %v1026, 0
        %v1452 = vsel %vm430, %v609, 0
        %1454 = vmatprep.subr.mxu0 0.0
        %1455 = vmatpush1.msra.mxu0 %v1452
        %1456 = vmatprep.subr.mxu0 0.0
        %1457 = vmatpush1.msra.mxu0 0.0
        %1458 = vmatprep.subr.mxu0 0.0
        %1459 = vmatpush1.msra.mxu0 0.0
        %1460 = vmatprep.subr.mxu0 0.0
        %1461 = vmatpush1.msra.mxu0 0.0
        %1462 = vmatprep.subr.mxu0 0.0
        %1463 = vmatpush1.msra.mxu0 0.0
        %1464 = vmatprep.subr.mxu0 0.0
        %1465 = vmatpush1.msra.mxu0 0.0
        %1466 = vmatprep.subr.mxu0 0.0
        %1467 = vmatpush1.msra.mxu0 0.0
        %1468 = vmatprep.subr.mxu0 0.0
        %1469 = vmatpush1.msra.mxu0 0.0
        %1470 = vmatprep.subr.mxu0 0.0
        %1471 = vmatpush1.msra.mxu0 0.0
        %1472 = vmatprep.subr.mxu0 0.0
        %1473 = vmatpush1.msra.mxu0 0.0
        %1474 = vmatprep.subr.mxu0 0.0
        %1475 = vmatpush1.msra.mxu0 0.0
        %1476 = vmatprep.subr.mxu0 0.0
        %1477 = vmatpush1.msra.mxu0 0.0
        %1478 = vmatprep.subr.mxu0 0.0
        %1479 = vmatpush1.msra.mxu0 0.0
        %1480 = vmatprep.subr.mxu0 0.0
        %1481 = vmatpush1.msra.mxu0 0.0
        %1482 = vmatprep.subr.mxu0 0.0
        %1483 = vmatpush1.msra.mxu0 0.0
        %1484 = vmatprep.subr.mxu0 0.0
        %1485 = vmatpush1.msra.mxu0 0.0
        %1486 = vmatprep.subr.mxu0 0.0
        %1487 = vmatpush1.msra.mxu0 0.0
        %1488 = vmatprep.subr.mxu0 0.0
        %1489 = vmatpush1.msra.mxu0 0.0
        %1490 = vmatprep.subr.mxu0 0.0
        %1491 = vmatpush1.msra.mxu0 0.0
        %1492 = vmatprep.subr.mxu0 0.0
        %1493 = vmatpush1.msra.mxu0 0.0
        %1494 = vmatprep.subr.mxu0 0.0
        %1495 = vmatpush1.msra.mxu0 0.0
        %1496 = vmatprep.subr.mxu0 0.0
        %1497 = vmatpush1.msra.mxu0 0.0
        %1498 = vmatprep.subr.mxu0 0.0
        %1499 = vmatpush1.msra.mxu0 0.0
        %1500 = vmatprep.subr.mxu0 0.0
        %1501 = vmatpush1.msra.mxu0 0.0
        %1502 = vmatprep.subr.mxu0 0.0
        %1503 = vmatpush1.msra.mxu0 0.0
        %1504 = vmatprep.subr.mxu0 0.0
        %1505 = vmatpush1.msra.mxu0 0.0
        %1506 = vmatprep.subr.mxu0 0.0
        %1507 = vmatpush1.msra.mxu0 0.0
        %1508 = vmatprep.subr.mxu0 0.0
        %1509 = vmatpush1.msra.mxu0 0.0
        %1510 = vmatprep.subr.mxu0 0.0
        %1511 = vmatpush1.msra.mxu0 0.0
        %1512 = vmatprep.subr.mxu0 0.0
        %1513 = vmatpush1.msra.mxu0 0.0
        %1514 = vmatprep.subr.mxu0 0.0
        %1515 = vmatpush1.msra.mxu0 0.0
        %1516 = vmatprep.subr.mxu0 0.0
        %1517 = vmatpush1.msra.mxu0 0.0
        %1518 = vmatprep.mubr.f32.mxu0 0.0
        %1519 = vmatmul.mubr.f32.gmra.mrb[0].mxu0 %v1447
        %v1520 = vpop.f32.mrb[0].mxu0
        %v1521 = vadd.f32 %v1438, %v1520
        %v1522 = vpop.f32.mrb[0].mxu0
        %1523 = vmatprep.mubr.f32.mxu0 0.0
        %1524 = vmatmul.mubr.f32.gmra.mrb[0].mxu0 %v1450
        %v1525 = vpop.f32.mrb[0].mxu0
        %v1526 = vadd.f32 %v1443, %v1525
        %v1527 = vpop.f32.mrb[0].mxu0
        %1528 = vdwg.mxu0
        %1529 = vrot.lane.b32.xlu0 %v690, 120
        %v1530 = vpop.permute.xlu0 %1529
        %1531 = vrot.lane.b32.xlu0 %v690, 88
        %v1532 = vpop.permute.xlu0 %1531
        %v1533 = vsel %vm423, %v1530, 0
        %v1535 = vsel %vm423, %v1532, 0
        %1537 = vmatprep.subr.mxu0 0.0
        %1538 = vmatpush1.xpose.msra.mxu0 %v1535
        %1539 = vmatprep.subr.mxu0 0.0
        %1540 = vmatpush1.xpose.msra.mxu0 0.0
        %1541 = vmatprep.subr.mxu0 0.0
        %1542 = vmatpush1.xpose.msra.mxu0 0.0
        %1543 = vmatprep.subr.mxu0 0.0
        %1544 = vmatpush1.xpose.msra.mxu0 0.0
        %1545 = vmatprep.subr.mxu0 0.0
        %1546 = vmatpush1.xpose.msra.mxu0 0.0
        %1547 = vmatprep.subr.mxu0 0.0
        %1548 = vmatpush1.xpose.msra.mxu0 0.0
        %1549 = vmatprep.subr.mxu0 0.0
        %1550 = vmatpush1.xpose.msra.mxu0 0.0
        %1551 = vmatprep.subr.mxu0 0.0
        %1552 = vmatpush1.xpose.msra.mxu0 0.0
        %1553 = vmatprep.subr.mxu0 0.0
        %1554 = vmatpush1.xpose.msra.mxu0 0.0
        %1555 = vmatprep.subr.mxu0 0.0
        %1556 = vmatpush1.xpose.msra.mxu0 0.0
        %1557 = vmatprep.subr.mxu0 0.0
        %1558 = vmatpush1.xpose.msra.mxu0 0.0
        %1559 = vmatprep.subr.mxu0 0.0
        %1560 = vmatpush1.xpose.msra.mxu0 0.0
        %1561 = vmatprep.subr.mxu0 0.0
        %1562 = vmatpush1.xpose.msra.mxu0 0.0
        %1563 = vmatprep.subr.mxu0 0.0
        %1564 = vmatpush1.xpose.msra.mxu0 0.0
        %1565 = vmatprep.subr.mxu0 0.0
        %1566 = vmatpush1.xpose.msra.mxu0 0.0
        %1567 = vmatprep.subr.mxu0 0.0
        %1568 = vmatpush1.xpose.msra.mxu0 0.0
        %1569 = vmatprep.subr.mxu0 0.0
        %1570 = vmatpush1.xpose.msra.mxu0 0.0
        %1571 = vmatprep.subr.mxu0 0.0
        %1572 = vmatpush1.xpose.msra.mxu0 0.0
        %1573 = vmatprep.subr.mxu0 0.0
        %1574 = vmatpush1.xpose.msra.mxu0 0.0
        %1575 = vmatprep.subr.mxu0 0.0
        %1576 = vmatpush1.xpose.msra.mxu0 0.0
        %1577 = vmatprep.subr.mxu0 0.0
        %1578 = vmatpush1.xpose.msra.mxu0 0.0
        %1579 = vmatprep.subr.mxu0 0.0
        %1580 = vmatpush1.xpose.msra.mxu0 0.0
        %1581 = vmatprep.subr.mxu0 0.0
        %1582 = vmatpush1.xpose.msra.mxu0 0.0
        %1583 = vmatprep.subr.mxu0 0.0
        %1584 = vmatpush1.xpose.msra.mxu0 0.0
        %1585 = vmatprep.subr.mxu0 0.0
        %1586 = vmatpush1.xpose.msra.mxu0 0.0
        %1587 = vmatprep.subr.mxu0 0.0
        %1588 = vmatpush1.xpose.msra.mxu0 0.0
        %1589 = vmatprep.subr.mxu0 0.0
        %1590 = vmatpush1.xpose.msra.mxu0 0.0
        %1591 = vmatprep.subr.mxu0 0.0
        %1592 = vmatpush1.xpose.msra.mxu0 0.0
        %1593 = vmatprep.subr.mxu0 0.0
        %1594 = vmatpush1.xpose.msra.mxu0 0.0
        %1595 = vmatprep.subr.mxu0 0.0
        %1596 = vmatpush1.xpose.msra.mxu0 0.0
        %1597 = vmatprep.subr.mxu0 0.0
        %1598 = vmatpush1.xpose.msra.mxu0 0.0
        %1599 = vmatprep.subr.mxu0 0.0
        %1600 = vmatpush1.xpose.msra.mxu0 0.0
        %1601 = vmatprep.mubr.f32.mxu0 0.0
        %1602 = vmatmul.mubr.f32.gmra.mrb[0].mxu0 %v1533
        %v1603 = vpop.f32.mrb[0].mxu0
        %v1604 = vadd.f32 0.0, %v1603
        %v1605 = vpop.f32.mrb[0].mxu0
        %1606 = vdwg.mxu0
        %1607 = vrot.lane.b32.xlu0 %v695, 120
        %v1608 = vpop.permute.xlu0 %1607
        %1609 = vrot.lane.b32.xlu0 %v695, 88
        %v1610 = vpop.permute.xlu0 %1609
        %v1611 = vsel %vm423, %v1608, 0
        %v1613 = vsel %vm423, %v1610, 0
        %1615 = vmatprep.subr.mxu0 0.0
        %1616 = vmatpush1.xpose.msra.mxu0 %v1613
        %1617 = vmatprep.subr.mxu0 0.0
        %1618 = vmatpush1.xpose.msra.mxu0 0.0
        %1619 = vmatprep.subr.mxu0 0.0
        %1620 = vmatpush1.xpose.msra.mxu0 0.0
        %1621 = vmatprep.subr.mxu0 0.0
        %1622 = vmatpush1.xpose.msra.mxu0 0.0
        %1623 = vmatprep.subr.mxu0 0.0
        %1624 = vmatpush1.xpose.msra.mxu0 0.0
        %1625 = vmatprep.subr.mxu0 0.0
        %1626 = vmatpush1.xpose.msra.mxu0 0.0
        %1627 = vmatprep.subr.mxu0 0.0
        %1628 = vmatpush1.xpose.msra.mxu0 0.0
        %1629 = vmatprep.subr.mxu0 0.0
        %1630 = vmatpush1.xpose.msra.mxu0 0.0
        %1631 = vmatprep.subr.mxu0 0.0
        %1632 = vmatpush1.xpose.msra.mxu0 0.0
        %1633 = vmatprep.subr.mxu0 0.0
        %1634 = vmatpush1.xpose.msra.mxu0 0.0
        %1635 = vmatprep.subr.mxu0 0.0
        %1636 = vmatpush1.xpose.msra.mxu0 0.0
        %1637 = vmatprep.subr.mxu0 0.0
        %1638 = vmatpush1.xpose.msra.mxu0 0.0
        %1639 = vmatprep.subr.mxu0 0.0
        %1640 = vmatpush1.xpose.msra.mxu0 0.0
        %1641 = vmatprep.subr.mxu0 0.0
        %1642 = vmatpush1.xpose.msra.mxu0 0.0
        %1643 = vmatprep.subr.mxu0 0.0
        %1644 = vmatpush1.xpose.msra.mxu0 0.0
        %1645 = vmatprep.subr.mxu0 0.0
        %1646 = vmatpush1.xpose.msra.mxu0 0.0
        %1647 = vmatprep.subr.mxu0 0.0
        %1648 = vmatpush1.xpose.msra.mxu0 0.0
        %1649 = vmatprep.subr.mxu0 0.0
        %1650 = vmatpush1.xpose.msra.mxu0 0.0
        %1651 = vmatprep.subr.mxu0 0.0
        %1652 = vmatpush1.xpose.msra.mxu0 0.0
        %1653 = vmatprep.subr.mxu0 0.0
        %1654 = vmatpush1.xpose.msra.mxu0 0.0
        %1655 = vmatprep.subr.mxu0 0.0
        %1656 = vmatpush1.xpose.msra.mxu0 0.0
        %1657 = vmatprep.subr.mxu0 0.0
        %1658 = vmatpush1.xpose.msra.mxu0 0.0
        %1659 = vmatprep.subr.mxu0 0.0
        %1660 = vmatpush1.xpose.msra.mxu0 0.0
        %1661 = vmatprep.subr.mxu0 0.0
        %1662 = vmatpush1.xpose.msra.mxu0 0.0
        %1663 = vmatprep.subr.mxu0 0.0
        %1664 = vmatpush1.xpose.msra.mxu0 0.0
        %1665 = vmatprep.subr.mxu0 0.0
        %1666 = vmatpush1.xpose.msra.mxu0 0.0
        %1667 = vmatprep.subr.mxu0 0.0
        %1668 = vmatpush1.xpose.msra.mxu0 0.0
        %1669 = vmatprep.subr.mxu0 0.0
        %1670 = vmatpush1.xpose.msra.mxu0 0.0
        %1671 = vmatprep.subr.mxu0 0.0
        %1672 = vmatpush1.xpose.msra.mxu0 0.0
        %1673 = vmatprep.subr.mxu0 0.0
        %1674 = vmatpush1.xpose.msra.mxu0 0.0
        %1675 = vmatprep.subr.mxu0 0.0
        %1676 = vmatpush1.xpose.msra.mxu0 0.0
        %1677 = vmatprep.subr.mxu0 0.0
        %1678 = vmatpush1.xpose.msra.mxu0 0.0
        %1679 = vmatprep.mubr.f32.mxu0 0.0
        %1680 = vmatmul.mubr.f32.gmra.mrb[0].mxu0 %v1611
        %v1681 = vpop.f32.mrb[0].mxu0
        %v1682 = vadd.f32 0.0, %v1681
        %v1683 = vpop.f32.mrb[0].mxu0
        %1684 = vdwg.mxu0
        %v1685 = vmul.f32 %v1604, 0.5
        %v1686 = vmul.f32 %v1682, 0.5
        %v1687 = vsel %vm854, %v1685, -inf
        %1688 = vmax.xlane.f32.xlu0 %v1687
        %v1689 = vpop.xlane.xlu0 %1688
        %v1690 = vsel %vm854, %v1686, -inf
        %1691 = vmax.xlane.f32.xlu0 %v1690
        %v1692 = vpop.xlane.xlu0 %1691
        %v1693 = vsub.f32 %v1685, %v1689
        %v1694 = vsub.f32 %v1686, %v1692
        %v1695 = vmul.f32 %v1693, 1.442695
        %v1696 = vpow.pop %v1695
        %v1697 = vmul.f32 %v1694, 1.442695
        %v1698 = vpow.pop %v1697
        %v1699 = vsel %vm854, %v1696, 0.0
        %1700 = vadd.xlane.f32.xlu0 %v1699
        %v1701 = vpop.xlane.xlu0 %1700
        %v1702 = vsel %vm854, %v1698, 0.0
        %1703 = vadd.xlane.f32.xlu0 %v1702
        %v1704 = vpop.xlane.xlu0 %1703
        %v1705 = vrcp.pop %v1701
        %v1706 = vrcp.pop %v1704
        %v1707 = vmul.f32 %v1696, %v1705
        %v1708 = vmul.f32 %v1698, %v1706
        %1709 = vrot.lane.b32.xlu0 %v690, 56
        %v1710 = vpop.permute.xlu0 %1709
        %v1713 = vsel %vm854, %v1707, 0
        %1715 = vmatprep.subr.mxu0 0.0
        %1716 = vmatpush1.msra.mxu0 %v1710
        %1717 = vmatprep.subr.mxu0 0.0
        %1718 = vmatpush1.msra.mxu0 0.0
        %1719 = vmatprep.subr.mxu0 0.0
        %1720 = vmatpush1.msra.mxu0 0.0
        %1721 = vmatprep.subr.mxu0 0.0
        %1722 = vmatpush1.msra.mxu0 0.0
        %1723 = vmatprep.subr.mxu0 0.0
        %1724 = vmatpush1.msra.mxu0 0.0
        %1725 = vmatprep.subr.mxu0 0.0
        %1726 = vmatpush1.msra.mxu0 0.0
        %1727 = vmatprep.subr.mxu0 0.0
        %1728 = vmatpush1.msra.mxu0 0.0
        %1729 = vmatprep.subr.mxu0 0.0
        %1730 = vmatpush1.msra.mxu0 0.0
        %1731 = vmatprep.subr.mxu0 0.0
        %1732 = vmatpush1.msra.mxu0 0.0
        %1733 = vmatprep.subr.mxu0 0.0
        %1734 = vmatpush1.msra.mxu0 0.0
        %1735 = vmatprep.subr.mxu0 0.0
        %1736 = vmatpush1.msra.mxu0 0.0
        %1737 = vmatprep.subr.mxu0 0.0
        %1738 = vmatpush1.msra.mxu0 0.0
        %1739 = vmatprep.subr.mxu0 0.0
        %1740 = vmatpush1.msra.mxu0 0.0
        %1741 = vmatprep.subr.mxu0 0.0
        %1742 = vmatpush1.msra.mxu0 0.0
        %1743 = vmatprep.subr.mxu0 0.0
        %1744 = vmatpush1.msra.mxu0 0.0
        %1745 = vmatprep.subr.mxu0 0.0
        %1746 = vmatpush1.msra.mxu0 0.0
        %1747 = vmatprep.subr.mxu0 0.0
        %1748 = vmatpush1.msra.mxu0 0.0
        %1749 = vmatprep.subr.mxu0 0.0
        %1750 = vmatpush1.msra.mxu0 0.0
        %1751 = vmatprep.subr.mxu0 0.0
        %1752 = vmatpush1.msra.mxu0 0.0
        %1753 = vmatprep.subr.mxu0 0.0
        %1754 = vmatpush1.msra.mxu0 0.0
        %1755 = vmatprep.subr.mxu0 0.0
        %1756 = vmatpush1.msra.mxu0 0.0
        %1757 = vmatprep.subr.mxu0 0.0
        %1758 = vmatpush1.msra.mxu0 0.0
        %1759 = vmatprep.subr.mxu0 0.0
        %1760 = vmatpush1.msra.mxu0 0.0
        %1761 = vmatprep.subr.mxu0 0.0
        %1762 = vmatpush1.msra.mxu0 0.0
        %1763 = vmatprep.subr.mxu0 0.0
        %1764 = vmatpush1.msra.mxu0 0.0
        %1765 = vmatprep.subr.mxu0 0.0
        %1766 = vmatpush1.msra.mxu0 0.0
        %1767 = vmatprep.subr.mxu0 0.0
        %1768 = vmatpush1.msra.mxu0 0.0
        %1769 = vmatprep.subr.mxu0 0.0
        %1770 = vmatpush1.msra.mxu0 0.0
        %1771 = vmatprep.subr.mxu0 0.0
        %1772 = vmatpush1.msra.mxu0 0.0
        %1773 = vmatprep.subr.mxu0 0.0
        %1774 = vmatpush1.msra.mxu0 0.0
        %1775 = vmatprep.subr.mxu0 0.0
        %1776 = vmatpush1.msra.mxu0 0.0
        %1777 = vmatprep.subr.mxu0 0.0
        %1778 = vmatpush1.msra.mxu0 0.0
        %1779 = vmatprep.mubr.f32.mxu0 0.0
        %1780 = vmatmul.mubr.f32.gmra.mrb[0].mxu0 %v1713
        %v1781 = vpop.f32.mrb[0].mxu0
        %v1782 = vadd.f32 0.0, %v1781
        %v1783 = vpop.f32.mrb[0].mxu0
        %1784 = vdwg.mxu0
        %1785 = vrot.lane.b32.xlu0 %v695, 56
        %v1786 = vpop.permute.xlu0 %1785
        %v1789 = vsel %vm854, %v1708, 0
        %1791 = vmatprep.subr.mxu0 0.0
        %1792 = vmatpush1.msra.mxu0 %v1786
        %1793 = vmatprep.subr.mxu0 0.0
        %1794 = vmatpush1.msra.mxu0 0.0
        %1795 = vmatprep.subr.mxu0 0.0
        %1796 = vmatpush1.msra.mxu0 0.0
        %1797 = vmatprep.subr.mxu0 0.0
        %1798 = vmatpush1.msra.mxu0 0.0
        %1799 = vmatprep.subr.mxu0 0.0
        %1800 = vmatpush1.msra.mxu0 0.0
        %1801 = vmatprep.subr.mxu0 0.0
        %1802 = vmatpush1.msra.mxu0 0.0
        %1803 = vmatprep.subr.mxu0 0.0
        %1804 = vmatpush1.msra.mxu0 0.0
        %1805 = vmatprep.subr.mxu0 0.0
        %1806 = vmatpush1.msra.mxu0 0.0
        %1807 = vmatprep.subr.mxu0 0.0
        %1808 = vmatpush1.msra.mxu0 0.0
        %1809 = vmatprep.subr.mxu0 0.0
        %1810 = vmatpush1.msra.mxu0 0.0
        %1811 = vmatprep.subr.mxu0 0.0
        %1812 = vmatpush1.msra.mxu0 0.0
        %1813 = vmatprep.subr.mxu0 0.0
        %1814 = vmatpush1.msra.mxu0 0.0
        %1815 = vmatprep.subr.mxu0 0.0
        %1816 = vmatpush1.msra.mxu0 0.0
        %1817 = vmatprep.subr.mxu0 0.0
        %1818 = vmatpush1.msra.mxu0 0.0
        %1819 = vmatprep.subr.mxu0 0.0
        %1820 = vmatpush1.msra.mxu0 0.0
        %1821 = vmatprep.subr.mxu0 0.0
        %1822 = vmatpush1.msra.mxu0 0.0
        %1823 = vmatprep.subr.mxu0 0.0
        %1824 = vmatpush1.msra.mxu0 0.0
        %1825 = vmatprep.subr.mxu0 0.0
        %1826 = vmatpush1.msra.mxu0 0.0
        %1827 = vmatprep.subr.mxu0 0.0
        %1828 = vmatpush1.msra.mxu0 0.0
        %1829 = vmatprep.subr.mxu0 0.0
        %1830 = vmatpush1.msra.mxu0 0.0
        %1831 = vmatprep.subr.mxu0 0.0
        %1832 = vmatpush1.msra.mxu0 0.0
        %1833 = vmatprep.subr.mxu0 0.0
        %1834 = vmatpush1.msra.mxu0 0.0
        %1835 = vmatprep.subr.mxu0 0.0
        %1836 = vmatpush1.msra.mxu0 0.0
        %1837 = vmatprep.subr.mxu0 0.0
        %1838 = vmatpush1.msra.mxu0 0.0
        %1839 = vmatprep.subr.mxu0 0.0
        %1840 = vmatpush1.msra.mxu0 0.0
        %1841 = vmatprep.subr.mxu0 0.0
        %1842 = vmatpush1.msra.mxu0 0.0
        %1843 = vmatprep.subr.mxu0 0.0
        %1844 = vmatpush1.msra.mxu0 0.0
        %1845 = vmatprep.subr.mxu0 0.0
        %1846 = vmatpush1.msra.mxu0 0.0
        %1847 = vmatprep.subr.mxu0 0.0
        %1848 = vmatpush1.msra.mxu0 0.0
        %1849 = vmatprep.subr.mxu0 0.0
        %1850 = vmatpush1.msra.mxu0 0.0
        %1851 = vmatprep.subr.mxu0 0.0
        %1852 = vmatpush1.msra.mxu0 0.0
        %1853 = vmatprep.subr.mxu0 0.0
        %1854 = vmatpush1.msra.mxu0 0.0
        %1855 = vmatprep.mubr.f32.mxu0 0.0
        %1856 = vmatmul.mubr.f32.gmra.mrb[0].mxu0 %v1789
        %v1857 = vpop.f32.mrb[0].mxu0
        %v1858 = vadd.f32 0.0, %v1857
        %v1859 = vpop.f32.mrb[0].mxu0
        %1860 = vdwg.mxu0
        %v1862 = vsel %vm423, %v1782, 0
        %v1865 = vsel %vm423, %v1858, 0
        %v1868 = vsel %vm430, %v610, 0
        %1870 = vmatprep.subr.mxu0 0.0
        %1871 = vmatpush1.msra.mxu0 %v1868
        %1872 = vmatprep.subr.mxu0 0.0
        %1873 = vmatpush1.msra.mxu0 0.0
        %1874 = vmatprep.subr.mxu0 0.0
        %1875 = vmatpush1.msra.mxu0 0.0
        %1876 = vmatprep.subr.mxu0 0.0
        %1877 = vmatpush1.msra.mxu0 0.0
        %1878 = vmatprep.subr.mxu0 0.0
        %1879 = vmatpush1.msra.mxu0 0.0
        %1880 = vmatprep.subr.mxu0 0.0
        %1881 = vmatpush1.msra.mxu0 0.0
        %1882 = vmatprep.subr.mxu0 0.0
        %1883 = vmatpush1.msra.mxu0 0.0
        %1884 = vmatprep.subr.mxu0 0.0
        %1885 = vmatpush1.msra.mxu0 0.0
        %1886 = vmatprep.subr.mxu0 0.0
        %1887 = vmatpush1.msra.mxu0 0.0
        %1888 = vmatprep.subr.mxu0 0.0
        %1889 = vmatpush1.msra.mxu0 0.0
        %1890 = vmatprep.subr.mxu0 0.0
        %1891 = vmatpush1.msra.mxu0 0.0
        %1892 = vmatprep.subr.mxu0 0.0
        %1893 = vmatpush1.msra.mxu0 0.0
        %1894 = vmatprep.subr.mxu0 0.0
        %1895 = vmatpush1.msra.mxu0 0.0
        %1896 = vmatprep.subr.mxu0 0.0
        %1897 = vmatpush1.msra.mxu0 0.0
        %1898 = vmatprep.subr.mxu0 0.0
        %1899 = vmatpush1.msra.mxu0 0.0
        %1900 = vmatprep.subr.mxu0 0.0
        %1901 = vmatpush1.msra.mxu0 0.0
        %1902 = vmatprep.subr.mxu0 0.0
        %1903 = vmatpush1.msra.mxu0 0.0
        %1904 = vmatprep.subr.mxu0 0.0
        %1905 = vmatpush1.msra.mxu0 0.0
        %1906 = vmatprep.subr.mxu0 0.0
        %1907 = vmatpush1.msra.mxu0 0.0
        %1908 = vmatprep.subr.mxu0 0.0
        %1909 = vmatpush1.msra.mxu0 0.0
        %1910 = vmatprep.subr.mxu0 0.0
        %1911 = vmatpush1.msra.mxu0 0.0
        %1912 = vmatprep.subr.mxu0 0.0
        %1913 = vmatpush1.msra.mxu0 0.0
        %1914 = vmatprep.subr.mxu0 0.0
        %1915 = vmatpush1.msra.mxu0 0.0
        %1916 = vmatprep.subr.mxu0 0.0
        %1917 = vmatpush1.msra.mxu0 0.0
        %1918 = vmatprep.subr.mxu0 0.0
        %1919 = vmatpush1.msra.mxu0 0.0
        %1920 = vmatprep.subr.mxu0 0.0
        %1921 = vmatpush1.msra.mxu0 0.0
        %1922 = vmatprep.subr.mxu0 0.0
        %1923 = vmatpush1.msra.mxu0 0.0
        %1924 = vmatprep.subr.mxu0 0.0
        %1925 = vmatpush1.msra.mxu0 0.0
        %1926 = vmatprep.subr.mxu0 0.0
        %1927 = vmatpush1.msra.mxu0 0.0
        %1928 = vmatprep.subr.mxu0 0.0
        %1929 = vmatpush1.msra.mxu0 0.0
        %1930 = vmatprep.subr.mxu0 0.0
        %1931 = vmatpush1.msra.mxu0 0.0
        %1932 = vmatprep.subr.mxu0 0.0
        %1933 = vmatpush1.msra.mxu0 0.0
        %1934 = vmatprep.mubr.f32.mxu0 0.0
        %1935 = vmatmul.mubr.f32.gmra.mrb[0].mxu0 %v1862
        %v1936 = vpop.f32.mrb[0].mxu0
        %v1937 = vadd.f32 0.0, %v1936
        %v1938 = vpop.f32.mrb[0].mxu0
        %1939 = vmatprep.mubr.f32.mxu0 0.0
        %1940 = vmatmul.mubr.f32.gmra.mrb[0].mxu0 %v1865
        %v1941 = vpop.f32.mrb[0].mxu0
        %v1942 = vadd.f32 0.0, %v1941
        %v1943 = vpop.f32.mrb[0].mxu0
        %1944 = vdwg.mxu0
        %v1945 = vadd.f32 %v1521, %v1937
        %v1946 = vadd.f32 %v1526, %v1942
        %1947 = vrot.lane.b32.xlu0 %v690, 116
        %v1948 = vpop.permute.xlu0 %1947
        %1949 = vrot.lane.b32.xlu0 %v690, 84
        %v1950 = vpop.permute.xlu0 %1949
        %v1951 = vsel %vm423, %v1948, 0
        %v1953 = vsel %vm423, %v1950, 0
        %1955 = vmatprep.subr.mxu0 0.0
        %1956 = vmatpush1.xpose.msra.mxu0 %v1953
        %1957 = vmatprep.subr.mxu0 0.0
        %1958 = vmatpush1.xpose.msra.mxu0 0.0
        %1959 = vmatprep.subr.mxu0 0.0
        %1960 = vmatpush1.xpose.msra.mxu0 0.0
        %1961 = vmatprep.subr.mxu0 0.0
        %1962 = vmatpush1.xpose.msra.mxu0 0.0
        %1963 = vmatprep.subr.mxu0 0.0
        %1964 = vmatpush1.xpose.msra.mxu0 0.0
        %1965 = vmatprep.subr.mxu0 0.0
        %1966 = vmatpush1.xpose.msra.mxu0 0.0
        %1967 = vmatprep.subr.mxu0 0.0
        %1968 = vmatpush1.xpose.msra.mxu0 0.0
        %1969 = vmatprep.subr.mxu0 0.0
        %1970 = vmatpush1.xpose.msra.mxu0 0.0
        %1971 = vmatprep.subr.mxu0 0.0
        %1972 = vmatpush1.xpose.msra.mxu0 0.0
        %1973 = vmatprep.subr.mxu0 0.0
        %1974 = vmatpush1.xpose.msra.mxu0 0.0
        %1975 = vmatprep.subr.mxu0 0.0
        %1976 = vmatpush1.xpose.msra.mxu0 0.0
        %1977 = vmatprep.subr.mxu0 0.0
        %1978 = vmatpush1.xpose.msra.mxu0 0.0
        %1979 = vmatprep.subr.mxu0 0.0
        %1980 = vmatpush1.xpose.msra.mxu0 0.0
        %1981 = vmatprep.subr.mxu0 0.0
        %1982 = vmatpush1.xpose.msra.mxu0 0.0
        %1983 = vmatprep.subr.mxu0 0.0
        %1984 = vmatpush1.xpose.msra.mxu0 0.0
        %1985 = vmatprep.subr.mxu0 0.0
        %1986 = vmatpush1.xpose.msra.mxu0 0.0
        %1987 = vmatprep.subr.mxu0 0.0
        %1988 = vmatpush1.xpose.msra.mxu0 0.0
        %1989 = vmatprep.subr.mxu0 0.0
        %1990 = vmatpush1.xpose.msra.mxu0 0.0
        %1991 = vmatprep.subr.mxu0 0.0
        %1992 = vmatpush1.xpose.msra.mxu0 0.0
        %1993 = vmatprep.subr.mxu0 0.0
        %1994 = vmatpush1.xpose.msra.mxu0 0.0
        %1995 = vmatprep.subr.mxu0 0.0
        %1996 = vmatpush1.xpose.msra.mxu0 0.0
        %1997 = vmatprep.subr.mxu0 0.0
        %1998 = vmatpush1.xpose.msra.mxu0 0.0
        %1999 = vmatprep.subr.mxu0 0.0
        %2000 = vmatpush1.xpose.msra.mxu0 0.0
        %2001 = vmatprep.subr.mxu0 0.0
        %2002 = vmatpush1.xpose.msra.mxu0 0.0
        %2003 = vmatprep.subr.mxu0 0.0
        %2004 = vmatpush1.xpose.msra.mxu0 0.0
        %2005 = vmatprep.subr.mxu0 0.0
        %2006 = vmatpush1.xpose.msra.mxu0 0.0
        %2007 = vmatprep.subr.mxu0 0.0
        %2008 = vmatpush1.xpose.msra.mxu0 0.0
        %2009 = vmatprep.subr.mxu0 0.0
        %2010 = vmatpush1.xpose.msra.mxu0 0.0
        %2011 = vmatprep.subr.mxu0 0.0
        %2012 = vmatpush1.xpose.msra.mxu0 0.0
        %2013 = vmatprep.subr.mxu0 0.0
        %2014 = vmatpush1.xpose.msra.mxu0 0.0
        %2015 = vmatprep.subr.mxu0 0.0
        %2016 = vmatpush1.xpose.msra.mxu0 0.0
        %2017 = vmatprep.subr.mxu0 0.0
        %2018 = vmatpush1.xpose.msra.mxu0 0.0
        %2019 = vmatprep.mubr.f32.mxu0 0.0
        %2020 = vmatmul.mubr.f32.gmra.mrb[0].mxu0 %v1951
        %v2021 = vpop.f32.mrb[0].mxu0
        %v2022 = vadd.f32 0.0, %v2021
        %v2023 = vpop.f32.mrb[0].mxu0
        %2024 = vdwg.mxu0
        %2025 = vrot.lane.b32.xlu0 %v695, 116
        %v2026 = vpop.permute.xlu0 %2025
        %2027 = vrot.lane.b32.xlu0 %v695, 84
        %v2028 = vpop.permute.xlu0 %2027
        %v2029 = vsel %vm423, %v2026, 0
        %v2031 = vsel %vm423, %v2028, 0
        %2033 = vmatprep.subr.mxu0 0.0
        %2034 = vmatpush1.xpose.msra.mxu0 %v2031
        %2035 = vmatprep.subr.mxu0 0.0
        %2036 = vmatpush1.xpose.msra.mxu0 0.0
        %2037 = vmatprep.subr.mxu0 0.0
        %2038 = vmatpush1.xpose.msra.mxu0 0.0
        %2039 = vmatprep.subr.mxu0 0.0
        %2040 = vmatpush1.xpose.msra.mxu0 0.0
        %2041 = vmatprep.subr.mxu0 0.0
        %2042 = vmatpush1.xpose.msra.mxu0 0.0
        %2043 = vmatprep.subr.mxu0 0.0
        %2044 = vmatpush1.xpose.msra.mxu0 0.0
        %2045 = vmatprep.subr.mxu0 0.0
        %2046 = vmatpush1.xpose.msra.mxu0 0.0
        %2047 = vmatprep.subr.mxu0 0.0
        %2048 = vmatpush1.xpose.msra.mxu0 0.0
        %2049 = vmatprep.subr.mxu0 0.0
        %2050 = vmatpush1.xpose.msra.mxu0 0.0
        %2051 = vmatprep.subr.mxu0 0.0
        %2052 = vmatpush1.xpose.msra.mxu0 0.0
        %2053 = vmatprep.subr.mxu0 0.0
        %2054 = vmatpush1.xpose.msra.mxu0 0.0
        %2055 = vmatprep.subr.mxu0 0.0
        %2056 = vmatpush1.xpose.msra.mxu0 0.0
        %2057 = vmatprep.subr.mxu0 0.0
        %2058 = vmatpush1.xpose.msra.mxu0 0.0
        %2059 = vmatprep.subr.mxu0 0.0
        %2060 = vmatpush1.xpose.msra.mxu0 0.0
        %2061 = vmatprep.subr.mxu0 0.0
        %2062 = vmatpush1.xpose.msra.mxu0 0.0
        %2063 = vmatprep.subr.mxu0 0.0
        %2064 = vmatpush1.xpose.msra.mxu0 0.0
        %2065 = vmatprep.subr.mxu0 0.0
        %2066 = vmatpush1.xpose.msra.mxu0 0.0
        %2067 = vmatprep.subr.mxu0 0.0
        %2068 = vmatpush1.xpose.msra.mxu0 0.0
        %2069 = vmatprep.subr.mxu0 0.0
        %2070 = vmatpush1.xpose.msra.mxu0 0.0
        %2071 = vmatprep.subr.mxu0 0.0
        %2072 = vmatpush1.xpose.msra.mxu0 0.0
        %2073 = vmatprep.subr.mxu0 0.0
        %2074 = vmatpush1.xpose.msra.mxu0 0.0
        %2075 = vmatprep.subr.mxu0 0.0
        %2076 = vmatpush1.xpose.msra.mxu0 0.0
        %2077 = vmatprep.subr.mxu0 0.0
        %2078 = vmatpush1.xpose.msra.mxu0 0.0
        %2079 = vmatprep.subr.mxu0 0.0
        %2080 = vmatpush1.xpose.msra.mxu0 0.0
        %2081 = vmatprep.subr.mxu0 0.0
        %2082 = vmatpush1.xpose.msra.mxu0 0.0
        %2083 = vmatprep.subr.mxu0 0.0
        %2084 = vmatpush1.xpose.msra.mxu0 0.0
        %2085 = vmatprep.subr.mxu0 0.0
        %2086 = vmatpush1.xpose.msra.mxu0 0.0
        %2087 = vmatprep.subr.mxu0 0.0
        %2088 = vmatpush1.xpose.msra.mxu0 0.0
        %2089 = vmatprep.subr.mxu0 0.0
        %2090 = vmatpush1.xpose.msra.mxu0 0.0
        %2091 = vmatprep.subr.mxu0 0.0
        %2092 = vmatpush1.xpose.msra.mxu0 0.0
        %2093 = vmatprep.subr.mxu0 0.0
        %2094 = vmatpush1.xpose.msra.mxu0 0.0
        %2095 = vmatprep.subr.mxu0 0.0
        %2096 = vmatpush1.xpose.msra.mxu0 0.0
        %2097 = vmatprep.mubr.f32.mxu0 0.0
        %2098 = vmatmul.mubr.f32.gmra.mrb[0].mxu0 %v2029
        %v2099 = vpop.f32.mrb[0].mxu0
        %v2100 = vadd.f32 0.0, %v2099
        %v2101 = vpop.f32.mrb[0].mxu0
        %2102 = vdwg.mxu0
        %v2103 = vmul.f32 %v2022, 0.5
        %v2104 = vmul.f32 %v2100, 0.5
        %v2105 = vsel %vm854, %v2103, -inf
        %2106 = vmax.xlane.f32.xlu0 %v2105
        %v2107 = vpop.xlane.xlu0 %2106
        %v2108 = vsel %vm854, %v2104, -inf
        %2109 = vmax.xlane.f32.xlu0 %v2108
        %v2110 = vpop.xlane.xlu0 %2109
        %v2111 = vsub.f32 %v2103, %v2107
        %v2112 = vsub.f32 %v2104, %v2110
        %v2113 = vmul.f32 %v2111, 1.442695
        %v2114 = vpow.pop %v2113
        %v2115 = vmul.f32 %v2112, 1.442695
        %v2116 = vpow.pop %v2115
        %v2117 = vsel %vm854, %v2114, 0.0
        %2118 = vadd.xlane.f32.xlu0 %v2117
        %v2119 = vpop.xlane.xlu0 %2118
        %v2120 = vsel %vm854, %v2116, 0.0
        %2121 = vadd.xlane.f32.xlu0 %v2120
        %v2122 = vpop.xlane.xlu0 %2121
        %v2123 = vrcp.pop %v2119
        %v2124 = vrcp.pop %v2122
        %v2125 = vmul.f32 %v2114, %v2123
        %v2126 = vmul.f32 %v2116, %v2124
        %2127 = vrot.lane.b32.xlu0 %v690, 52
        %v2128 = vpop.permute.xlu0 %2127
        %v2131 = vsel %vm854, %v2125, 0
        %2133 = vmatprep.subr.mxu0 0.0
        %2134 = vmatpush1.msra.mxu0 %v2128
        %2135 = vmatprep.subr.mxu0 0.0
        %2136 = vmatpush1.msra.mxu0 0.0
        %2137 = vmatprep.subr.mxu0 0.0
        %2138 = vmatpush1.msra.mxu0 0.0
        %2139 = vmatprep.subr.mxu0 0.0
        %2140 = vmatpush1.msra.mxu0 0.0
        %2141 = vmatprep.subr.mxu0 0.0
        %2142 = vmatpush1.msra.mxu0 0.0
        %2143 = vmatprep.subr.mxu0 0.0
        %2144 = vmatpush1.msra.mxu0 0.0
        %2145 = vmatprep.subr.mxu0 0.0
        %2146 = vmatpush1.msra.mxu0 0.0
        %2147 = vmatprep.subr.mxu0 0.0
        %2148 = vmatpush1.msra.mxu0 0.0
        %2149 = vmatprep.subr.mxu0 0.0
        %2150 = vmatpush1.msra.mxu0 0.0
        %2151 = vmatprep.subr.mxu0 0.0
        %2152 = vmatpush1.msra.mxu0 0.0
        %2153 = vmatprep.subr.mxu0 0.0
        %2154 = vmatpush1.msra.mxu0 0.0
        %2155 = vmatprep.subr.mxu0 0.0
        %2156 = vmatpush1.msra.mxu0 0.0
        %2157 = vmatprep.subr.mxu0 0.0
        %2158 = vmatpush1.msra.mxu0 0.0
        %2159 = vmatprep.subr.mxu0 0.0
        %2160 = vmatpush1.msra.mxu0 0.0
        %2161 = vmatprep.subr.mxu0 0.0
        %2162 = vmatpush1.msra.mxu0 0.0
        %2163 = vmatprep.subr.mxu0 0.0
        %2164 = vmatpush1.msra.mxu0 0.0
        %2165 = vmatprep.subr.mxu0 0.0
        %2166 = vmatpush1.msra.mxu0 0.0
        %2167 = vmatprep.subr.mxu0 0.0
        %2168 = vmatpush1.msra.mxu0 0.0
        %2169 = vmatprep.subr.mxu0 0.0
        %2170 = vmatpush1.msra.mxu0 0.0
        %2171 = vmatprep.subr.mxu0 0.0
        %2172 = vmatpush1.msra.mxu0 0.0
        %2173 = vmatprep.subr.mxu0 0.0
        %2174 = vmatpush1.msra.mxu0 0.0
        %2175 = vmatprep.subr.mxu0 0.0
        %2176 = vmatpush1.msra.mxu0 0.0
        %2177 = vmatprep.subr.mxu0 0.0
        %2178 = vmatpush1.msra.mxu0 0.0
        %2179 = vmatprep.subr.mxu0 0.0
        %2180 = vmatpush1.msra.mxu0 0.0
        %2181 = vmatprep.subr.mxu0 0.0
        %2182 = vmatpush1.msra.mxu0 0.0
        %2183 = vmatprep.subr.mxu0 0.0
        %2184 = vmatpush1.msra.mxu0 0.0
        %2185 = vmatprep.subr.mxu0 0.0
        %2186 = vmatpush1.msra.mxu0 0.0
        %2187 = vmatprep.subr.mxu0 0.0
        %2188 = vmatpush1.msra.mxu0 0.0
        %2189 = vmatprep.subr.mxu0 0.0
        %2190 = vmatpush1.msra.mxu0 0.0
        %2191 = vmatprep.subr.mxu0 0.0
        %2192 = vmatpush1.msra.mxu0 0.0
        %2193 = vmatprep.subr.mxu0 0.0
        %2194 = vmatpush1.msra.mxu0 0.0
        %2195 = vmatprep.subr.mxu0 0.0
        %2196 = vmatpush1.msra.mxu0 0.0
        %2197 = vmatprep.mubr.f32.mxu0 0.0
        %2198 = vmatmul.mubr.f32.gmra.mrb[0].mxu0 %v2131
        %v2199 = vpop.f32.mrb[0].mxu0
        %v2200 = vadd.f32 0.0, %v2199
        %v2201 = vpop.f32.mrb[0].mxu0
        %2202 = vdwg.mxu0
        %2203 = vrot.lane.b32.xlu0 %v695, 52
        %v2204 = vpop.permute.xlu0 %2203
        %v2207 = vsel %vm854, %v2126, 0
        %2209 = vmatprep.subr.mxu0 0.0
        %2210 = vmatpush1.msra.mxu0 %v2204
        %2211 = vmatprep.subr.mxu0 0.0
        %2212 = vmatpush1.msra.mxu0 0.0
        %2213 = vmatprep.subr.mxu0 0.0
        %2214 = vmatpush1.msra.mxu0 0.0
        %2215 = vmatprep.subr.mxu0 0.0
        %2216 = vmatpush1.msra.mxu0 0.0
        %2217 = vmatprep.subr.mxu0 0.0
        %2218 = vmatpush1.msra.mxu0 0.0
        %2219 = vmatprep.subr.mxu0 0.0
        %2220 = vmatpush1.msra.mxu0 0.0
        %2221 = vmatprep.subr.mxu0 0.0
        %2222 = vmatpush1.msra.mxu0 0.0
        %2223 = vmatprep.subr.mxu0 0.0
        %2224 = vmatpush1.msra.mxu0 0.0
        %2225 = vmatprep.subr.mxu0 0.0
        %2226 = vmatpush1.msra.mxu0 0.0
        %2227 = vmatprep.subr.mxu0 0.0
        %2228 = vmatpush1.msra.mxu0 0.0
        %2229 = vmatprep.subr.mxu0 0.0
        %2230 = vmatpush1.msra.mxu0 0.0
        %2231 = vmatprep.subr.mxu0 0.0
        %2232 = vmatpush1.msra.mxu0 0.0
        %2233 = vmatprep.subr.mxu0 0.0
        %2234 = vmatpush1.msra.mxu0 0.0
        %2235 = vmatprep.subr.mxu0 0.0
        %2236 = vmatpush1.msra.mxu0 0.0
        %2237 = vmatprep.subr.mxu0 0.0
        %2238 = vmatpush1.msra.mxu0 0.0
        %2239 = vmatprep.subr.mxu0 0.0
        %2240 = vmatpush1.msra.mxu0 0.0
        %2241 = vmatprep.subr.mxu0 0.0
        %2242 = vmatpush1.msra.mxu0 0.0
        %2243 = vmatprep.subr.mxu0 0.0
        %2244 = vmatpush1.msra.mxu0 0.0
        %2245 = vmatprep.subr.mxu0 0.0
        %2246 = vmatpush1.msra.mxu0 0.0
        %2247 = vmatprep.subr.mxu0 0.0
        %2248 = vmatpush1.msra.mxu0 0.0
        %2249 = vmatprep.subr.mxu0 0.0
        %2250 = vmatpush1.msra.mxu0 0.0
        %2251 = vmatprep.subr.mxu0 0.0
        %2252 = vmatpush1.msra.mxu0 0.0
        %2253 = vmatprep.subr.mxu0 0.0
        %2254 = vmatpush1.msra.mxu0 0.0
        %2255 = vmatprep.subr.mxu0 0.0
        %2256 = vmatpush1.msra.mxu0 0.0
        %2257 = vmatprep.subr.mxu0 0.0
        %2258 = vmatpush1.msra.mxu0 0.0
        %2259 = vmatprep.subr.mxu0 0.0
        %2260 = vmatpush1.msra.mxu0 0.0
        %2261 = vmatprep.subr.mxu0 0.0
        %2262 = vmatpush1.msra.mxu0 0.0
        %2263 = vmatprep.subr.mxu0 0.0
        %2264 = vmatpush1.msra.mxu0 0.0
        %2265 = vmatprep.subr.mxu0 0.0
        %2266 = vmatpush1.msra.mxu0 0.0
        %2267 = vmatprep.subr.mxu0 0.0
        %2268 = vmatpush1.msra.mxu0 0.0
        %2269 = vmatprep.subr.mxu0 0.0
        %2270 = vmatpush1.msra.mxu0 0.0
        %2271 = vmatprep.subr.mxu0 0.0
        %2272 = vmatpush1.msra.mxu0 0.0
        %2273 = vmatprep.mubr.f32.mxu0 0.0
        %2274 = vmatmul.mubr.f32.gmra.mrb[0].mxu0 %v2207
        %v2275 = vpop.f32.mrb[0].mxu0
        %v2276 = vadd.f32 0.0, %v2275
        %v2277 = vpop.f32.mrb[0].mxu0
        %2278 = vdwg.mxu0
        %v2279 = vrot.slane %v610, 4
        %v2281 = vsel %vm423, %v2200, 0
        %v2284 = vsel %vm423, %v2276, 0
        %v2286 = vsel %vm430, %v2279, 0
        %2288 = vmatprep.subr.mxu0 0.0
        %2289 = vmatpush1.msra.mxu0 %v2286
        %2290 = vmatprep.subr.mxu0 0.0
        %2291 = vmatpush1.msra.mxu0 0.0
        %2292 = vmatprep.subr.mxu0 0.0
        %2293 = vmatpush1.msra.mxu0 0.0
        %2294 = vmatprep.subr.mxu0 0.0
        %2295 = vmatpush1.msra.mxu0 0.0
        %2296 = vmatprep.subr.mxu0 0.0
        %2297 = vmatpush1.msra.mxu0 0.0
        %2298 = vmatprep.subr.mxu0 0.0
        %2299 = vmatpush1.msra.mxu0 0.0
        %2300 = vmatprep.subr.mxu0 0.0
        %2301 = vmatpush1.msra.mxu0 0.0
        %2302 = vmatprep.subr.mxu0 0.0
        %2303 = vmatpush1.msra.mxu0 0.0
        %2304 = vmatprep.subr.mxu0 0.0
        %2305 = vmatpush1.msra.mxu0 0.0
        %2306 = vmatprep.subr.mxu0 0.0
        %2307 = vmatpush1.msra.mxu0 0.0
        %2308 = vmatprep.subr.mxu0 0.0
        %2309 = vmatpush1.msra.mxu0 0.0
        %2310 = vmatprep.subr.mxu0 0.0
        %2311 = vmatpush1.msra.mxu0 0.0
        %2312 = vmatprep.subr.mxu0 0.0
        %2313 = vmatpush1.msra.mxu0 0.0
        %2314 = vmatprep.subr.mxu0 0.0
        %2315 = vmatpush1.msra.mxu0 0.0
        %2316 = vmatprep.subr.mxu0 0.0
        %2317 = vmatpush1.msra.mxu0 0.0
        %2318 = vmatprep.subr.mxu0 0.0
        %2319 = vmatpush1.msra.mxu0 0.0
        %2320 = vmatprep.subr.mxu0 0.0
        %2321 = vmatpush1.msra.mxu0 0.0
        %2322 = vmatprep.subr.mxu0 0.0
        %2323 = vmatpush1.msra.mxu0 0.0
        %2324 = vmatprep.subr.mxu0 0.0
        %2325 = vmatpush1.msra.mxu0 0.0
        %2326 = vmatprep.subr.mxu0 0.0
        %2327 = vmatpush1.msra.mxu0 0.0
        %2328 = vmatprep.subr.mxu0 0.0
        %2329 = vmatpush1.msra.mxu0 0.0
        %2330 = vmatprep.subr.mxu0 0.0
        %2331 = vmatpush1.msra.mxu0 0.0
        %2332 = vmatprep.subr.mxu0 0.0
        %2333 = vmatpush1.msra.mxu0 0.0
        %2334 = vmatprep.subr.mxu0 0.0
        %2335 = vmatpush1.msra.mxu0 0.0
        %2336 = vmatprep.subr.mxu0 0.0
        %2337 = vmatpush1.msra.mxu0 0.0
        %2338 = vmatprep.subr.mxu0 0.0
        %2339 = vmatpush1.msra.mxu0 0.0
        %2340 = vmatprep.subr.mxu0 0.0
        %2341 = vmatpush1.msra.mxu0 0.0
        %2342 = vmatprep.subr.mxu0 0.0
        %2343 = vmatpush1.msra.mxu0 0.0
        %2344 = vmatprep.subr.mxu0 0.0
        %2345 = vmatpush1.msra.mxu0 0.0
        %2346 = vmatprep.subr.mxu0 0.0
        %2347 = vmatpush1.msra.mxu0 0.0
        %2348 = vmatprep.subr.mxu0 0.0
        %2349 = vmatpush1.msra.mxu0 0.0
        %2350 = vmatprep.subr.mxu0 0.0
        %2351 = vmatpush1.msra.mxu0 0.0
        %2352 = vmatprep.mubr.f32.mxu0 0.0
        %2353 = vmatmul.mubr.f32.gmra.mrb[0].mxu0 %v2281
        %v2354 = vpop.f32.mrb[0].mxu0
        %v2355 = vadd.f32 0.0, %v2354
        %v2356 = vpop.f32.mrb[0].mxu0
        %2357 = vmatprep.mubr.f32.mxu0 0.0
        %2358 = vmatmul.mubr.f32.gmra.mrb[0].mxu0 %v2284
        %v2359 = vpop.f32.mrb[0].mxu0
        %v2360 = vadd.f32 0.0, %v2359
        %v2361 = vpop.f32.mrb[0].mxu0
        %2362 = vdwg.mxu0
        %v2363 = vadd.f32 %v1945, %v2355
        %v2364 = vadd.f32 %v1946, %v2360
        %2365 = vrot.lane.b32.xlu0 %v690, 112
        %v2366 = vpop.permute.xlu0 %2365
        %2367 = vrot.lane.b32.xlu0 %v690, 80
        %v2368 = vpop.permute.xlu0 %2367
        %v2369 = vsel %vm423, %v2366, 0
        %v2371 = vsel %vm423, %v2368, 0
        %2373 = vmatprep.subr.mxu0 0.0
        %2374 = vmatpush1.xpose.msra.mxu0 %v2371
        %2375 = vmatprep.subr.mxu0 0.0
        %2376 = vmatpush1.xpose.msra.mxu0 0.0
        %2377 = vmatprep.subr.mxu0 0.0
        %2378 = vmatpush1.xpose.msra.mxu0 0.0
        %2379 = vmatprep.subr.mxu0 0.0
        %2380 = vmatpush1.xpose.msra.mxu0 0.0
        %2381 = vmatprep.subr.mxu0 0.0
        %2382 = vmatpush1.xpose.msra.mxu0 0.0
        %2383 = vmatprep.subr.mxu0 0.0
        %2384 = vmatpush1.xpose.msra.mxu0 0.0
        %2385 = vmatprep.subr.mxu0 0.0
        %2386 = vmatpush1.xpose.msra.mxu0 0.0
        %2387 = vmatprep.subr.mxu0 0.0
        %2388 = vmatpush1.xpose.msra.mxu0 0.0
        %2389 = vmatprep.subr.mxu0 0.0
        %2390 = vmatpush1.xpose.msra.mxu0 0.0
        %2391 = vmatprep.subr.mxu0 0.0
        %2392 = vmatpush1.xpose.msra.mxu0 0.0
        %2393 = vmatprep.subr.mxu0 0.0
        %2394 = vmatpush1.xpose.msra.mxu0 0.0
        %2395 = vmatprep.subr.mxu0 0.0
        %2396 = vmatpush1.xpose.msra.mxu0 0.0
        %2397 = vmatprep.subr.mxu0 0.0
        %2398 = vmatpush1.xpose.msra.mxu0 0.0
        %2399 = vmatprep.subr.mxu0 0.0
        %2400 = vmatpush1.xpose.msra.mxu0 0.0
        %2401 = vmatprep.subr.mxu0 0.0
        %2402 = vmatpush1.xpose.msra.mxu0 0.0
        %2403 = vmatprep.subr.mxu0 0.0
        %2404 = vmatpush1.xpose.msra.mxu0 0.0
        %2405 = vmatprep.subr.mxu0 0.0
        %2406 = vmatpush1.xpose.msra.mxu0 0.0
        %2407 = vmatprep.subr.mxu0 0.0
        %2408 = vmatpush1.xpose.msra.mxu0 0.0
        %2409 = vmatprep.subr.mxu0 0.0
        %2410 = vmatpush1.xpose.msra.mxu0 0.0
        %2411 = vmatprep.subr.mxu0 0.0
        %2412 = vmatpush1.xpose.msra.mxu0 0.0
        %2413 = vmatprep.subr.mxu0 0.0
        %2414 = vmatpush1.xpose.msra.mxu0 0.0
        %2415 = vmatprep.subr.mxu0 0.0
        %2416 = vmatpush1.xpose.msra.mxu0 0.0
        %2417 = vmatprep.subr.mxu0 0.0
        %2418 = vmatpush1.xpose.msra.mxu0 0.0
        %2419 = vmatprep.subr.mxu0 0.0
        %2420 = vmatpush1.xpose.msra.mxu0 0.0
        %2421 = vmatprep.subr.mxu0 0.0
        %2422 = vmatpush1.xpose.msra.mxu0 0.0
        %2423 = vmatprep.subr.mxu0 0.0
        %2424 = vmatpush1.xpose.msra.mxu0 0.0
        %2425 = vmatprep.subr.mxu0 0.0
        %2426 = vmatpush1.xpose.msra.mxu0 0.0
        %2427 = vmatprep.subr.mxu0 0.0
        %2428 = vmatpush1.xpose.msra.mxu0 0.0
        %2429 = vmatprep.subr.mxu0 0.0
        %2430 = vmatpush1.xpose.msra.mxu0 0.0
        %2431 = vmatprep.subr.mxu0 0.0
        %2432 = vmatpush1.xpose.msra.mxu0 0.0
        %2433 = vmatprep.subr.mxu0 0.0
        %2434 = vmatpush1.xpose.msra.mxu0 0.0
        %2435 = vmatprep.subr.mxu0 0.0
        %2436 = vmatpush1.xpose.msra.mxu0 0.0
        %2437 = vmatprep.mubr.f32.mxu0 0.0
        %2438 = vmatmul.mubr.f32.gmra.mrb[0].mxu0 %v2369
        %v2439 = vpop.f32.mrb[0].mxu0
        %v2440 = vadd.f32 0.0, %v2439
        %v2441 = vpop.f32.mrb[0].mxu0
        %2442 = vdwg.mxu0
        %2443 = vrot.lane.b32.xlu0 %v695, 112
        %v2444 = vpop.permute.xlu0 %2443
        %2445 = vrot.lane.b32.xlu0 %v695, 80
        %v2446 = vpop.permute.xlu0 %2445
        %v2447 = vsel %vm423, %v2444, 0
        %v2449 = vsel %vm423, %v2446, 0
        %2451 = vmatprep.subr.mxu0 0.0
        %2452 = vmatpush1.xpose.msra.mxu0 %v2449
        %2453 = vmatprep.subr.mxu0 0.0
        %2454 = vmatpush1.xpose.msra.mxu0 0.0
        %2455 = vmatprep.subr.mxu0 0.0
        %2456 = vmatpush1.xpose.msra.mxu0 0.0
        %2457 = vmatprep.subr.mxu0 0.0
        %2458 = vmatpush1.xpose.msra.mxu0 0.0
        %2459 = vmatprep.subr.mxu0 0.0
        %2460 = vmatpush1.xpose.msra.mxu0 0.0
        %2461 = vmatprep.subr.mxu0 0.0
        %2462 = vmatpush1.xpose.msra.mxu0 0.0
        %2463 = vmatprep.subr.mxu0 0.0
        %2464 = vmatpush1.xpose.msra.mxu0 0.0
        %2465 = vmatprep.subr.mxu0 0.0
        %2466 = vmatpush1.xpose.msra.mxu0 0.0
        %2467 = vmatprep.subr.mxu0 0.0
        %2468 = vmatpush1.xpose.msra.mxu0 0.0
        %2469 = vmatprep.subr.mxu0 0.0
        %2470 = vmatpush1.xpose.msra.mxu0 0.0
        %2471 = vmatprep.subr.mxu0 0.0
        %2472 = vmatpush1.xpose.msra.mxu0 0.0
        %2473 = vmatprep.subr.mxu0 0.0
        %2474 = vmatpush1.xpose.msra.mxu0 0.0
        %2475 = vmatprep.subr.mxu0 0.0
        %2476 = vmatpush1.xpose.msra.mxu0 0.0
        %2477 = vmatprep.subr.mxu0 0.0
        %2478 = vmatpush1.xpose.msra.mxu0 0.0
        %2479 = vmatprep.subr.mxu0 0.0
        %2480 = vmatpush1.xpose.msra.mxu0 0.0
        %2481 = vmatprep.subr.mxu0 0.0
        %2482 = vmatpush1.xpose.msra.mxu0 0.0
        %2483 = vmatprep.subr.mxu0 0.0
        %2484 = vmatpush1.xpose.msra.mxu0 0.0
        %2485 = vmatprep.subr.mxu0 0.0
        %2486 = vmatpush1.xpose.msra.mxu0 0.0
        %2487 = vmatprep.subr.mxu0 0.0
        %2488 = vmatpush1.xpose.msra.mxu0 0.0
        %2489 = vmatprep.subr.mxu0 0.0
        %2490 = vmatpush1.xpose.msra.mxu0 0.0
        %2491 = vmatprep.subr.mxu0 0.0
        %2492 = vmatpush1.xpose.msra.mxu0 0.0
        %2493 = vmatprep.subr.mxu0 0.0
        %2494 = vmatpush1.xpose.msra.mxu0 0.0
        %2495 = vmatprep.subr.mxu0 0.0
        %2496 = vmatpush1.xpose.msra.mxu0 0.0
        %2497 = vmatprep.subr.mxu0 0.0
        %2498 = vmatpush1.xpose.msra.mxu0 0.0
        %2499 = vmatprep.subr.mxu0 0.0
        %2500 = vmatpush1.xpose.msra.mxu0 0.0
        %2501 = vmatprep.subr.mxu0 0.0
        %2502 = vmatpush1.xpose.msra.mxu0 0.0
        %2503 = vmatprep.subr.mxu0 0.0
        %2504 = vmatpush1.xpose.msra.mxu0 0.0
        %2505 = vmatprep.subr.mxu0 0.0
        %2506 = vmatpush1.xpose.msra.mxu0 0.0
        %2507 = vmatprep.subr.mxu0 0.0
        %2508 = vmatpush1.xpose.msra.mxu0 0.0
        %2509 = vmatprep.subr.mxu0 0.0
        %2510 = vmatpush1.xpose.msra.mxu0 0.0
        %2511 = vmatprep.subr.mxu0 0.0
        %2512 = vmatpush1.xpose.msra.mxu0 0.0
        %2513 = vmatprep.subr.mxu0 0.0
        %2514 = vmatpush1.xpose.msra.mxu0 0.0
        %2515 = vmatprep.mubr.f32.mxu0 0.0
        %2516 = vmatmul.mubr.f32.gmra.mrb[0].mxu0 %v2447
        %v2517 = vpop.f32.mrb[0].mxu0
        %v2518 = vadd.f32 0.0, %v2517
        %v2519 = vpop.f32.mrb[0].mxu0
        %2520 = vdwg.mxu0
        %v2521 = vmul.f32 %v2440, 0.5
        %v2522 = vmul.f32 %v2518, 0.5
        %v2523 = vsel %vm854, %v2521, -inf
        %2524 = vmax.xlane.f32.xlu0 %v2523
        %v2525 = vpop.xlane.xlu0 %2524
        %v2526 = vsel %vm854, %v2522, -inf
        %2527 = vmax.xlane.f32.xlu0 %v2526
        %v2528 = vpop.xlane.xlu0 %2527
        %v2529 = vsub.f32 %v2521, %v2525
        %v2530 = vsub.f32 %v2522, %v2528
        %v2531 = vmul.f32 %v2529, 1.442695
        %v2532 = vpow.pop %v2531
        %v2533 = vmul.f32 %v2530, 1.442695
        %v2534 = vpow.pop %v2533
        %v2535 = vsel %vm854, %v2532, 0.0
        %2536 = vadd.xlane.f32.xlu0 %v2535
        %v2537 = vpop.xlane.xlu0 %2536
        %v2538 = vsel %vm854, %v2534, 0.0
        %2539 = vadd.xlane.f32.xlu0 %v2538
        %v2540 = vpop.xlane.xlu0 %2539
        %v2541 = vrcp.pop %v2537
        %v2542 = vrcp.pop %v2540
        %v2543 = vmul.f32 %v2532, %v2541
        %v2544 = vmul.f32 %v2534, %v2542
        %2545 = vrot.lane.b32.xlu0 %v690, 48
        %v2546 = vpop.permute.xlu0 %2545
        %v2549 = vsel %vm854, %v2543, 0
        %2551 = vmatprep.subr.mxu0 0.0
        %2552 = vmatpush1.msra.mxu0 %v2546
        %2553 = vmatprep.subr.mxu0 0.0
        %2554 = vmatpush1.msra.mxu0 0.0
        %2555 = vmatprep.subr.mxu0 0.0
        %2556 = vmatpush1.msra.mxu0 0.0
        %2557 = vmatprep.subr.mxu0 0.0
        %2558 = vmatpush1.msra.mxu0 0.0
        %2559 = vmatprep.subr.mxu0 0.0
        %2560 = vmatpush1.msra.mxu0 0.0
        %2561 = vmatprep.subr.mxu0 0.0
        %2562 = vmatpush1.msra.mxu0 0.0
        %2563 = vmatprep.subr.mxu0 0.0
        %2564 = vmatpush1.msra.mxu0 0.0
        %2565 = vmatprep.subr.mxu0 0.0
        %2566 = vmatpush1.msra.mxu0 0.0
        %2567 = vmatprep.subr.mxu0 0.0
        %2568 = vmatpush1.msra.mxu0 0.0
        %2569 = vmatprep.subr.mxu0 0.0
        %2570 = vmatpush1.msra.mxu0 0.0
        %2571 = vmatprep.subr.mxu0 0.0
        %2572 = vmatpush1.msra.mxu0 0.0
        %2573 = vmatprep.subr.mxu0 0.0
        %2574 = vmatpush1.msra.mxu0 0.0
        %2575 = vmatprep.subr.mxu0 0.0
        %2576 = vmatpush1.msra.mxu0 0.0
        %2577 = vmatprep.subr.mxu0 0.0
        %2578 = vmatpush1.msra.mxu0 0.0
        %2579 = vmatprep.subr.mxu0 0.0
        %2580 = vmatpush1.msra.mxu0 0.0
        %2581 = vmatprep.subr.mxu0 0.0
        %2582 = vmatpush1.msra.mxu0 0.0
        %2583 = vmatprep.subr.mxu0 0.0
        %2584 = vmatpush1.msra.mxu0 0.0
        %2585 = vmatprep.subr.mxu0 0.0
        %2586 = vmatpush1.msra.mxu0 0.0
        %2587 = vmatprep.subr.mxu0 0.0
        %2588 = vmatpush1.msra.mxu0 0.0
        %2589 = vmatprep.subr.mxu0 0.0
        %2590 = vmatpush1.msra.mxu0 0.0
        %2591 = vmatprep.subr.mxu0 0.0
        %2592 = vmatpush1.msra.mxu0 0.0
        %2593 = vmatprep.subr.mxu0 0.0
        %2594 = vmatpush1.msra.mxu0 0.0
        %2595 = vmatprep.subr.mxu0 0.0
        %2596 = vmatpush1.msra.mxu0 0.0
        %2597 = vmatprep.subr.mxu0 0.0
        %2598 = vmatpush1.msra.mxu0 0.0
        %2599 = vmatprep.subr.mxu0 0.0
        %2600 = vmatpush1.msra.mxu0 0.0
        %2601 = vmatprep.subr.mxu0 0.0
        %2602 = vmatpush1.msra.mxu0 0.0
        %2603 = vmatprep.subr.mxu0 0.0
        %2604 = vmatpush1.msra.mxu0 0.0
        %2605 = vmatprep.subr.mxu0 0.0
        %2606 = vmatpush1.msra.mxu0 0.0
        %2607 = vmatprep.subr.mxu0 0.0
        %2608 = vmatpush1.msra.mxu0 0.0
        %2609 = vmatprep.subr.mxu0 0.0
        %2610 = vmatpush1.msra.mxu0 0.0
        %2611 = vmatprep.subr.mxu0 0.0
        %2612 = vmatpush1.msra.mxu0 0.0
        %2613 = vmatprep.subr.mxu0 0.0
        %2614 = vmatpush1.msra.mxu0 0.0
        %2615 = vmatprep.mubr.f32.mxu0 0.0
        %2616 = vmatmul.mubr.f32.gmra.mrb[0].mxu0 %v2549
        %v2617 = vpop.f32.mrb[0].mxu0
        %v2618 = vadd.f32 0.0, %v2617
        %v2619 = vpop.f32.mrb[0].mxu0
        %2620 = vdwg.mxu0
        %2621 = vrot.lane.b32.xlu0 %v695, 48
        %v2622 = vpop.permute.xlu0 %2621
        %v2625 = vsel %vm854, %v2544, 0
        %2627 = vmatprep.subr.mxu0 0.0
        %2628 = vmatpush1.msra.mxu0 %v2622
        %2629 = vmatprep.subr.mxu0 0.0
        %2630 = vmatpush1.msra.mxu0 0.0
        %2631 = vmatprep.subr.mxu0 0.0
        %2632 = vmatpush1.msra.mxu0 0.0
        %2633 = vmatprep.subr.mxu0 0.0
        %2634 = vmatpush1.msra.mxu0 0.0
        %2635 = vmatprep.subr.mxu0 0.0
        %2636 = vmatpush1.msra.mxu0 0.0
        %2637 = vmatprep.subr.mxu0 0.0
        %2638 = vmatpush1.msra.mxu0 0.0
        %2639 = vmatprep.subr.mxu0 0.0
        %2640 = vmatpush1.msra.mxu0 0.0
        %2641 = vmatprep.subr.mxu0 0.0
        %2642 = vmatpush1.msra.mxu0 0.0
        %2643 = vmatprep.subr.mxu0 0.0
        %2644 = vmatpush1.msra.mxu0 0.0
        %2645 = vmatprep.subr.mxu0 0.0
        %2646 = vmatpush1.msra.mxu0 0.0
        %2647 = vmatprep.subr.mxu0 0.0
        %2648 = vmatpush1.msra.mxu0 0.0
        %2649 = vmatprep.subr.mxu0 0.0
        %2650 = vmatpush1.msra.mxu0 0.0
        %2651 = vmatprep.subr.mxu0 0.0
        %2652 = vmatpush1.msra.mxu0 0.0
        %2653 = vmatprep.subr.mxu0 0.0
        %2654 = vmatpush1.msra.mxu0 0.0
        %2655 = vmatprep.subr.mxu0 0.0
        %2656 = vmatpush1.msra.mxu0 0.0
        %2657 = vmatprep.subr.mxu0 0.0
        %2658 = vmatpush1.msra.mxu0 0.0
        %2659 = vmatprep.subr.mxu0 0.0
        %2660 = vmatpush1.msra.mxu0 0.0
        %2661 = vmatprep.subr.mxu0 0.0
        %2662 = vmatpush1.msra.mxu0 0.0
        %2663 = vmatprep.subr.mxu0 0.0
        %2664 = vmatpush1.msra.mxu0 0.0
        %2665 = vmatprep.subr.mxu0 0.0
        %2666 = vmatpush1.msra.mxu0 0.0
        %2667 = vmatprep.subr.mxu0 0.0
        %2668 = vmatpush1.msra.mxu0 0.0
        %2669 = vmatprep.subr.mxu0 0.0
        %2670 = vmatpush1.msra.mxu0 0.0
        %2671 = vmatprep.subr.mxu0 0.0
        %2672 = vmatpush1.msra.mxu0 0.0
        %2673 = vmatprep.subr.mxu0 0.0
        %2674 = vmatpush1.msra.mxu0 0.0
        %2675 = vmatprep.subr.mxu0 0.0
        %2676 = vmatpush1.msra.mxu0 0.0
        %2677 = vmatprep.subr.mxu0 0.0
        %2678 = vmatpush1.msra.mxu0 0.0
        %2679 = vmatprep.subr.mxu0 0.0
        %2680 = vmatpush1.msra.mxu0 0.0
        %2681 = vmatprep.subr.mxu0 0.0
        %2682 = vmatpush1.msra.mxu0 0.0
        %2683 = vmatprep.subr.mxu0 0.0
        %2684 = vmatpush1.msra.mxu0 0.0
        %2685 = vmatprep.subr.mxu0 0.0
        %2686 = vmatpush1.msra.mxu0 0.0
        %2687 = vmatprep.subr.mxu0 0.0
        %2688 = vmatpush1.msra.mxu0 0.0
        %2689 = vmatprep.subr.mxu0 0.0
        %2690 = vmatpush1.msra.mxu0 0.0
        %2691 = vmatprep.mubr.f32.mxu0 0.0
        %2692 = vmatmul.mubr.f32.gmra.mrb[0].mxu0 %v2625
        %v2693 = vpop.f32.mrb[0].mxu0
        %v2694 = vadd.f32 0.0, %v2693
        %v2695 = vpop.f32.mrb[0].mxu0
        %2696 = vdwg.mxu0
        %v2698 = vsel %vm423, %v2618, 0
        %v2701 = vsel %vm423, %v2694, 0
        %v2704 = vsel %vm430, %v611, 0
        %2706 = vmatprep.subr.mxu0 0.0
        %2707 = vmatpush1.msra.mxu0 %v2704
        %2708 = vmatprep.subr.mxu0 0.0
        %2709 = vmatpush1.msra.mxu0 0.0
        %2710 = vmatprep.subr.mxu0 0.0
        %2711 = vmatpush1.msra.mxu0 0.0
        %2712 = vmatprep.subr.mxu0 0.0
        %2713 = vmatpush1.msra.mxu0 0.0
        %2714 = vmatprep.subr.mxu0 0.0
        %2715 = vmatpush1.msra.mxu0 0.0
        %2716 = vmatprep.subr.mxu0 0.0
        %2717 = vmatpush1.msra.mxu0 0.0
        %2718 = vmatprep.subr.mxu0 0.0
        %2719 = vmatpush1.msra.mxu0 0.0
        %2720 = vmatprep.subr.mxu0 0.0
        %2721 = vmatpush1.msra.mxu0 0.0
        %2722 = vmatprep.subr.mxu0 0.0
        %2723 = vmatpush1.msra.mxu0 0.0
        %2724 = vmatprep.subr.mxu0 0.0
        %2725 = vmatpush1.msra.mxu0 0.0
        %2726 = vmatprep.subr.mxu0 0.0
        %2727 = vmatpush1.msra.mxu0 0.0
        %2728 = vmatprep.subr.mxu0 0.0
        %2729 = vmatpush1.msra.mxu0 0.0
        %2730 = vmatprep.subr.mxu0 0.0
        %2731 = vmatpush1.msra.mxu0 0.0
        %2732 = vmatprep.subr.mxu0 0.0
        %2733 = vmatpush1.msra.mxu0 0.0
        %2734 = vmatprep.subr.mxu0 0.0
        %2735 = vmatpush1.msra.mxu0 0.0
        %2736 = vmatprep.subr.mxu0 0.0
        %2737 = vmatpush1.msra.mxu0 0.0
        %2738 = vmatprep.subr.mxu0 0.0
        %2739 = vmatpush1.msra.mxu0 0.0
        %2740 = vmatprep.subr.mxu0 0.0
        %2741 = vmatpush1.msra.mxu0 0.0
        %2742 = vmatprep.subr.mxu0 0.0
        %2743 = vmatpush1.msra.mxu0 0.0
        %2744 = vmatprep.subr.mxu0 0.0
        %2745 = vmatpush1.msra.mxu0 0.0
        %2746 = vmatprep.subr.mxu0 0.0
        %2747 = vmatpush1.msra.mxu0 0.0
        %2748 = vmatprep.subr.mxu0 0.0
        %2749 = vmatpush1.msra.mxu0 0.0
        %2750 = vmatprep.subr.mxu0 0.0
        %2751 = vmatpush1.msra.mxu0 0.0
        %2752 = vmatprep.subr.mxu0 0.0
        %2753 = vmatpush1.msra.mxu0 0.0
        %2754 = vmatprep.subr.mxu0 0.0
        %2755 = vmatpush1.msra.mxu0 0.0
        %2756 = vmatprep.subr.mxu0 0.0
        %2757 = vmatpush1.msra.mxu0 0.0
        %2758 = vmatprep.subr.mxu0 0.0
        %2759 = vmatpush1.msra.mxu0 0.0
        %2760 = vmatprep.subr.mxu0 0.0
        %2761 = vmatpush1.msra.mxu0 0.0
        %2762 = vmatprep.subr.mxu0 0.0
        %2763 = vmatpush1.msra.mxu0 0.0
        %2764 = vmatprep.subr.mxu0 0.0
        %2765 = vmatpush1.msra.mxu0 0.0
        %2766 = vmatprep.subr.mxu0 0.0
        %2767 = vmatpush1.msra.mxu0 0.0
        %2768 = vmatprep.subr.mxu0 0.0
        %2769 = vmatpush1.msra.mxu0 0.0
        %2770 = vmatprep.mubr.f32.mxu0 0.0
        %2771 = vmatmul.mubr.f32.gmra.mrb[0].mxu0 %v2698
        %v2772 = vpop.f32.mrb[0].mxu0
        %v2773 = vadd.f32 0.0, %v2772
        %v2774 = vpop.f32.mrb[0].mxu0
        %2775 = vmatprep.mubr.f32.mxu0 0.0
        %2776 = vmatmul.mubr.f32.gmra.mrb[0].mxu0 %v2701
        %v2777 = vpop.f32.mrb[0].mxu0
        %v2778 = vadd.f32 0.0, %v2777
        %v2779 = vpop.f32.mrb[0].mxu0
        %2780 = vdwg.mxu0
        %v2781 = vadd.f32 %v2363, %v2773
        %v2782 = vadd.f32 %v2364, %v2778
        %2783 = vrot.lane.b32.xlu0 %v690, 108
        %v2784 = vpop.permute.xlu0 %2783
        %2785 = vrot.lane.b32.xlu0 %v690, 76
        %v2786 = vpop.permute.xlu0 %2785
        %v2787 = vsel %vm423, %v2784, 0
        %v2789 = vsel %vm423, %v2786, 0
        %2791 = vmatprep.subr.mxu0 0.0
        %2792 = vmatpush1.xpose.msra.mxu0 %v2789
        %2793 = vmatprep.subr.mxu0 0.0
        %2794 = vmatpush1.xpose.msra.mxu0 0.0
        %2795 = vmatprep.subr.mxu0 0.0
        %2796 = vmatpush1.xpose.msra.mxu0 0.0
        %2797 = vmatprep.subr.mxu0 0.0
        %2798 = vmatpush1.xpose.msra.mxu0 0.0
        %2799 = vmatprep.subr.mxu0 0.0
        %2800 = vmatpush1.xpose.msra.mxu0 0.0
        %2801 = vmatprep.subr.mxu0 0.0
        %2802 = vmatpush1.xpose.msra.mxu0 0.0
        %2803 = vmatprep.subr.mxu0 0.0
        %2804 = vmatpush1.xpose.msra.mxu0 0.0
        %2805 = vmatprep.subr.mxu0 0.0
        %2806 = vmatpush1.xpose.msra.mxu0 0.0
        %2807 = vmatprep.subr.mxu0 0.0
        %2808 = vmatpush1.xpose.msra.mxu0 0.0
        %2809 = vmatprep.subr.mxu0 0.0
        %2810 = vmatpush1.xpose.msra.mxu0 0.0
        %2811 = vmatprep.subr.mxu0 0.0
        %2812 = vmatpush1.xpose.msra.mxu0 0.0
        %2813 = vmatprep.subr.mxu0 0.0
        %2814 = vmatpush1.xpose.msra.mxu0 0.0
        %2815 = vmatprep.subr.mxu0 0.0
        %2816 = vmatpush1.xpose.msra.mxu0 0.0
        %2817 = vmatprep.subr.mxu0 0.0
        %2818 = vmatpush1.xpose.msra.mxu0 0.0
        %2819 = vmatprep.subr.mxu0 0.0
        %2820 = vmatpush1.xpose.msra.mxu0 0.0
        %2821 = vmatprep.subr.mxu0 0.0
        %2822 = vmatpush1.xpose.msra.mxu0 0.0
        %2823 = vmatprep.subr.mxu0 0.0
        %2824 = vmatpush1.xpose.msra.mxu0 0.0
        %2825 = vmatprep.subr.mxu0 0.0
        %2826 = vmatpush1.xpose.msra.mxu0 0.0
        %2827 = vmatprep.subr.mxu0 0.0
        %2828 = vmatpush1.xpose.msra.mxu0 0.0
        %2829 = vmatprep.subr.mxu0 0.0
        %2830 = vmatpush1.xpose.msra.mxu0 0.0
        %2831 = vmatprep.subr.mxu0 0.0
        %2832 = vmatpush1.xpose.msra.mxu0 0.0
        %2833 = vmatprep.subr.mxu0 0.0
        %2834 = vmatpush1.xpose.msra.mxu0 0.0
        %2835 = vmatprep.subr.mxu0 0.0
        %2836 = vmatpush1.xpose.msra.mxu0 0.0
        %2837 = vmatprep.subr.mxu0 0.0
        %2838 = vmatpush1.xpose.msra.mxu0 0.0
        %2839 = vmatprep.subr.mxu0 0.0
        %2840 = vmatpush1.xpose.msra.mxu0 0.0
        %2841 = vmatprep.subr.mxu0 0.0
        %2842 = vmatpush1.xpose.msra.mxu0 0.0
        %2843 = vmatprep.subr.mxu0 0.0
        %2844 = vmatpush1.xpose.msra.mxu0 0.0
        %2845 = vmatprep.subr.mxu0 0.0
        %2846 = vmatpush1.xpose.msra.mxu0 0.0
        %2847 = vmatprep.subr.mxu0 0.0
        %2848 = vmatpush1.xpose.msra.mxu0 0.0
        %2849 = vmatprep.subr.mxu0 0.0
        %2850 = vmatpush1.xpose.msra.mxu0 0.0
        %2851 = vmatprep.subr.mxu0 0.0
        %2852 = vmatpush1.xpose.msra.mxu0 0.0
        %2853 = vmatprep.subr.mxu0 0.0
        %2854 = vmatpush1.xpose.msra.mxu0 0.0
        %2855 = vmatprep.mubr.f32.mxu0 0.0
        %2856 = vmatmul.mubr.f32.gmra.mrb[0].mxu0 %v2787
        %v2857 = vpop.f32.mrb[0].mxu0
        %v2858 = vadd.f32 0.0, %v2857
        %v2859 = vpop.f32.mrb[0].mxu0
        %2860 = vdwg.mxu0
        %2861 = vrot.lane.b32.xlu0 %v695, 108
        %v2862 = vpop.permute.xlu0 %2861
        %2863 = vrot.lane.b32.xlu0 %v695, 76
        %v2864 = vpop.permute.xlu0 %2863
        %v2865 = vsel %vm423, %v2862, 0
        %v2867 = vsel %vm423, %v2864, 0
        %2869 = vmatprep.subr.mxu0 0.0
        %2870 = vmatpush1.xpose.msra.mxu0 %v2867
        %2871 = vmatprep.subr.mxu0 0.0
        %2872 = vmatpush1.xpose.msra.mxu0 0.0
        %2873 = vmatprep.subr.mxu0 0.0
        %2874 = vmatpush1.xpose.msra.mxu0 0.0
        %2875 = vmatprep.subr.mxu0 0.0
        %2876 = vmatpush1.xpose.msra.mxu0 0.0
        %2877 = vmatprep.subr.mxu0 0.0
        %2878 = vmatpush1.xpose.msra.mxu0 0.0
        %2879 = vmatprep.subr.mxu0 0.0
        %2880 = vmatpush1.xpose.msra.mxu0 0.0
        %2881 = vmatprep.subr.mxu0 0.0
        %2882 = vmatpush1.xpose.msra.mxu0 0.0
        %2883 = vmatprep.subr.mxu0 0.0
        %2884 = vmatpush1.xpose.msra.mxu0 0.0
        %2885 = vmatprep.subr.mxu0 0.0
        %2886 = vmatpush1.xpose.msra.mxu0 0.0
        %2887 = vmatprep.subr.mxu0 0.0
        %2888 = vmatpush1.xpose.msra.mxu0 0.0
        %2889 = vmatprep.subr.mxu0 0.0
        %2890 = vmatpush1.xpose.msra.mxu0 0.0
        %2891 = vmatprep.subr.mxu0 0.0
        %2892 = vmatpush1.xpose.msra.mxu0 0.0
        %2893 = vmatprep.subr.mxu0 0.0
        %2894 = vmatpush1.xpose.msra.mxu0 0.0
        %2895 = vmatprep.subr.mxu0 0.0
        %2896 = vmatpush1.xpose.msra.mxu0 0.0
        %2897 = vmatprep.subr.mxu0 0.0
        %2898 = vmatpush1.xpose.msra.mxu0 0.0
        %2899 = vmatprep.subr.mxu0 0.0
        %2900 = vmatpush1.xpose.msra.mxu0 0.0
        %2901 = vmatprep.subr.mxu0 0.0
        %2902 = vmatpush1.xpose.msra.mxu0 0.0
        %2903 = vmatprep.subr.mxu0 0.0
        %2904 = vmatpush1.xpose.msra.mxu0 0.0
        %2905 = vmatprep.subr.mxu0 0.0
        %2906 = vmatpush1.xpose.msra.mxu0 0.0
        %2907 = vmatprep.subr.mxu0 0.0
        %2908 = vmatpush1.xpose.msra.mxu0 0.0
        %2909 = vmatprep.subr.mxu0 0.0
        %2910 = vmatpush1.xpose.msra.mxu0 0.0
        %2911 = vmatprep.subr.mxu0 0.0
        %2912 = vmatpush1.xpose.msra.mxu0 0.0
        %2913 = vmatprep.subr.mxu0 0.0
        %2914 = vmatpush1.xpose.msra.mxu0 0.0
        %2915 = vmatprep.subr.mxu0 0.0
        %2916 = vmatpush1.xpose.msra.mxu0 0.0
        %2917 = vmatprep.subr.mxu0 0.0
        %2918 = vmatpush1.xpose.msra.mxu0 0.0
        %2919 = vmatprep.subr.mxu0 0.0
        %2920 = vmatpush1.xpose.msra.mxu0 0.0
        %2921 = vmatprep.subr.mxu0 0.0
        %2922 = vmatpush1.xpose.msra.mxu0 0.0
        %2923 = vmatprep.subr.mxu0 0.0
        %2924 = vmatpush1.xpose.msra.mxu0 0.0
        %2925 = vmatprep.subr.mxu0 0.0
        %2926 = vmatpush1.xpose.msra.mxu0 0.0
        %2927 = vmatprep.subr.mxu0 0.0
        %2928 = vmatpush1.xpose.msra.mxu0 0.0
        %2929 = vmatprep.subr.mxu0 0.0
        %2930 = vmatpush1.xpose.msra.mxu0 0.0
        %2931 = vmatprep.subr.mxu0 0.0
        %2932 = vmatpush1.xpose.msra.mxu0 0.0
        %2933 = vmatprep.mubr.f32.mxu0 0.0
        %2934 = vmatmul.mubr.f32.gmra.mrb[0].mxu0 %v2865
        %v2935 = vpop.f32.mrb[0].mxu0
        %v2936 = vadd.f32 0.0, %v2935
        %v2937 = vpop.f32.mrb[0].mxu0
        %2938 = vdwg.mxu0
        %v2939 = vmul.f32 %v2858, 0.5
        %v2940 = vmul.f32 %v2936, 0.5
        %v2941 = vsel %vm854, %v2939, -inf
        %2942 = vmax.xlane.f32.xlu0 %v2941
        %v2943 = vpop.xlane.xlu0 %2942
        %v2944 = vsel %vm854, %v2940, -inf
        %2945 = vmax.xlane.f32.xlu0 %v2944
        %v2946 = vpop.xlane.xlu0 %2945
        %v2947 = vsub.f32 %v2939, %v2943
        %v2948 = vsub.f32 %v2940, %v2946
        %v2949 = vmul.f32 %v2947, 1.442695
        %v2950 = vpow.pop %v2949
        %v2951 = vmul.f32 %v2948, 1.442695
        %v2952 = vpow.pop %v2951
        %v2953 = vsel %vm854, %v2950, 0.0
        %2954 = vadd.xlane.f32.xlu0 %v2953
        %v2955 = vpop.xlane.xlu0 %2954
        %v2956 = vsel %vm854, %v2952, 0.0
        %2957 = vadd.xlane.f32.xlu0 %v2956
        %v2958 = vpop.xlane.xlu0 %2957
        %v2959 = vrcp.pop %v2955
        %v2960 = vrcp.pop %v2958
        %v2961 = vmul.f32 %v2950, %v2959
        %v2962 = vmul.f32 %v2952, %v2960
        %2963 = vrot.lane.b32.xlu0 %v690, 44
        %v2964 = vpop.permute.xlu0 %2963
        %v2967 = vsel %vm854, %v2961, 0
        %2969 = vmatprep.subr.mxu0 0.0
        %2970 = vmatpush1.msra.mxu0 %v2964
        %2971 = vmatprep.subr.mxu0 0.0
        %2972 = vmatpush1.msra.mxu0 0.0
        %2973 = vmatprep.subr.mxu0 0.0
        %2974 = vmatpush1.msra.mxu0 0.0
        %2975 = vmatprep.subr.mxu0 0.0
        %2976 = vmatpush1.msra.mxu0 0.0
        %2977 = vmatprep.subr.mxu0 0.0
        %2978 = vmatpush1.msra.mxu0 0.0
        %2979 = vmatprep.subr.mxu0 0.0
        %2980 = vmatpush1.msra.mxu0 0.0
        %2981 = vmatprep.subr.mxu0 0.0
        %2982 = vmatpush1.msra.mxu0 0.0
        %2983 = vmatprep.subr.mxu0 0.0
        %2984 = vmatpush1.msra.mxu0 0.0
        %2985 = vmatprep.subr.mxu0 0.0
        %2986 = vmatpush1.msra.mxu0 0.0
        %2987 = vmatprep.subr.mxu0 0.0
        %2988 = vmatpush1.msra.mxu0 0.0
        %2989 = vmatprep.subr.mxu0 0.0
        %2990 = vmatpush1.msra.mxu0 0.0
        %2991 = vmatprep.subr.mxu0 0.0
        %2992 = vmatpush1.msra.mxu0 0.0
        %2993 = vmatprep.subr.mxu0 0.0
        %2994 = vmatpush1.msra.mxu0 0.0
        %2995 = vmatprep.subr.mxu0 0.0
        %2996 = vmatpush1.msra.mxu0 0.0
        %2997 = vmatprep.subr.mxu0 0.0
        %2998 = vmatpush1.msra.mxu0 0.0
        %2999 = vmatprep.subr.mxu0 0.0
        %3000 = vmatpush1.msra.mxu0 0.0
        %3001 = vmatprep.subr.mxu0 0.0
        %3002 = vmatpush1.msra.mxu0 0.0
        %3003 = vmatprep.subr.mxu0 0.0
        %3004 = vmatpush1.msra.mxu0 0.0
        %3005 = vmatprep.subr.mxu0 0.0
        %3006 = vmatpush1.msra.mxu0 0.0
        %3007 = vmatprep.subr.mxu0 0.0
        %3008 = vmatpush1.msra.mxu0 0.0
        %3009 = vmatprep.subr.mxu0 0.0
        %3010 = vmatpush1.msra.mxu0 0.0
        %3011 = vmatprep.subr.mxu0 0.0
        %3012 = vmatpush1.msra.mxu0 0.0
        %3013 = vmatprep.subr.mxu0 0.0
        %3014 = vmatpush1.msra.mxu0 0.0
        %3015 = vmatprep.subr.mxu0 0.0
        %3016 = vmatpush1.msra.mxu0 0.0
        %3017 = vmatprep.subr.mxu0 0.0
        %3018 = vmatpush1.msra.mxu0 0.0
        %3019 = vmatprep.subr.mxu0 0.0
        %3020 = vmatpush1.msra.mxu0 0.0
        %3021 = vmatprep.subr.mxu0 0.0
        %3022 = vmatpush1.msra.mxu0 0.0
        %3023 = vmatprep.subr.mxu0 0.0
        %3024 = vmatpush1.msra.mxu0 0.0
        %3025 = vmatprep.subr.mxu0 0.0
        %3026 = vmatpush1.msra.mxu0 0.0
        %3027 = vmatprep.subr.mxu0 0.0
        %3028 = vmatpush1.msra.mxu0 0.0
        %3029 = vmatprep.subr.mxu0 0.0
        %3030 = vmatpush1.msra.mxu0 0.0
        %3031 = vmatprep.subr.mxu0 0.0
        %3032 = vmatpush1.msra.mxu0 0.0
        %3033 = vmatprep.mubr.f32.mxu0 0.0
        %3034 = vmatmul.mubr.f32.gmra.mrb[0].mxu0 %v2967
        %v3035 = vpop.f32.mrb[0].mxu0
        %v3036 = vadd.f32 0.0, %v3035
        %v3037 = vpop.f32.mrb[0].mxu0
        %3038 = vdwg.mxu0
        %3039 = vrot.lane.b32.xlu0 %v695, 44
        %v3040 = vpop.permute.xlu0 %3039
        %v3043 = vsel %vm854, %v2962, 0
        %3045 = vmatprep.subr.mxu0 0.0
        %3046 = vmatpush1.msra.mxu0 %v3040
        %3047 = vmatprep.subr.mxu0 0.0
        %3048 = vmatpush1.msra.mxu0 0.0
        %3049 = vmatprep.subr.mxu0 0.0
        %3050 = vmatpush1.msra.mxu0 0.0
        %3051 = vmatprep.subr.mxu0 0.0
        %3052 = vmatpush1.msra.mxu0 0.0
        %3053 = vmatprep.subr.mxu0 0.0
        %3054 = vmatpush1.msra.mxu0 0.0
        %3055 = vmatprep.subr.mxu0 0.0
        %3056 = vmatpush1.msra.mxu0 0.0
        %3057 = vmatprep.subr.mxu0 0.0
        %3058 = vmatpush1.msra.mxu0 0.0
        %3059 = vmatprep.subr.mxu0 0.0
        %3060 = vmatpush1.msra.mxu0 0.0
        %3061 = vmatprep.subr.mxu0 0.0
        %3062 = vmatpush1.msra.mxu0 0.0
        %3063 = vmatprep.subr.mxu0 0.0
        %3064 = vmatpush1.msra.mxu0 0.0
        %3065 = vmatprep.subr.mxu0 0.0
        %3066 = vmatpush1.msra.mxu0 0.0
        %3067 = vmatprep.subr.mxu0 0.0
        %3068 = vmatpush1.msra.mxu0 0.0
        %3069 = vmatprep.subr.mxu0 0.0
        %3070 = vmatpush1.msra.mxu0 0.0
        %3071 = vmatprep.subr.mxu0 0.0
        %3072 = vmatpush1.msra.mxu0 0.0
        %3073 = vmatprep.subr.mxu0 0.0
        %3074 = vmatpush1.msra.mxu0 0.0
        %3075 = vmatprep.subr.mxu0 0.0
        %3076 = vmatpush1.msra.mxu0 0.0
        %3077 = vmatprep.subr.mxu0 0.0
        %3078 = vmatpush1.msra.mxu0 0.0
        %3079 = vmatprep.subr.mxu0 0.0
        %3080 = vmatpush1.msra.mxu0 0.0
        %3081 = vmatprep.subr.mxu0 0.0
        %3082 = vmatpush1.msra.mxu0 0.0
        %3083 = vmatprep.subr.mxu0 0.0
        %3084 = vmatpush1.msra.mxu0 0.0
        %3085 = vmatprep.subr.mxu0 0.0
        %3086 = vmatpush1.msra.mxu0 0.0
        %3087 = vmatprep.subr.mxu0 0.0
        %3088 = vmatpush1.msra.mxu0 0.0
        %3089 = vmatprep.subr.mxu0 0.0
        %3090 = vmatpush1.msra.mxu0 0.0
        %3091 = vmatprep.subr.mxu0 0.0
        %3092 = vmatpush1.msra.mxu0 0.0
        %3093 = vmatprep.subr.mxu0 0.0
        %3094 = vmatpush1.msra.mxu0 0.0
        %3095 = vmatprep.subr.mxu0 0.0
        %3096 = vmatpush1.msra.mxu0 0.0
        %3097 = vmatprep.subr.mxu0 0.0
        %3098 = vmatpush1.msra.mxu0 0.0
        %3099 = vmatprep.subr.mxu0 0.0
        %3100 = vmatpush1.msra.mxu0 0.0
        %3101 = vmatprep.subr.mxu0 0.0
        %3102 = vmatpush1.msra.mxu0 0.0
        %3103 = vmatprep.subr.mxu0 0.0
        %3104 = vmatpush1.msra.mxu0 0.0
        %3105 = vmatprep.subr.mxu0 0.0
        %3106 = vmatpush1.msra.mxu0 0.0
        %3107 = vmatprep.subr.mxu0 0.0
        %3108 = vmatpush1.msra.mxu0 0.0
        %3109 = vmatprep.mubr.f32.mxu0 0.0
        %3110 = vmatmul.mubr.f32.gmra.mrb[0].mxu0 %v3043
        %v3111 = vpop.f32.mrb[0].mxu0
        %v3112 = vadd.f32 0.0, %v3111
        %v3113 = vpop.f32.mrb[0].mxu0
        %3114 = vdwg.mxu0
        %v3115 = vrot.slane %v611, 4
        %v3117 = vsel %vm423, %v3036, 0
        %v3120 = vsel %vm423, %v3112, 0
        %v3122 = vsel %vm430, %v3115, 0
        %3124 = vmatprep.subr.mxu0 0.0
        %3125 = vmatpush1.msra.mxu0 %v3122
        %3126 = vmatprep.subr.mxu0 0.0
        %3127 = vmatpush1.msra.mxu0 0.0
        %3128 = vmatprep.subr.mxu0 0.0
        %3129 = vmatpush1.msra.mxu0 0.0
        %3130 = vmatprep.subr.mxu0 0.0
        %3131 = vmatpush1.msra.mxu0 0.0
        %3132 = vmatprep.subr.mxu0 0.0
        %3133 = vmatpush1.msra.mxu0 0.0
        %3134 = vmatprep.subr.mxu0 0.0
        %3135 = vmatpush1.msra.mxu0 0.0
        %3136 = vmatprep.subr.mxu0 0.0
        %3137 = vmatpush1.msra.mxu0 0.0
        %3138 = vmatprep.subr.mxu0 0.0
        %3139 = vmatpush1.msra.mxu0 0.0
        %3140 = vmatprep.subr.mxu0 0.0
        %3141 = vmatpush1.msra.mxu0 0.0
        %3142 = vmatprep.subr.mxu0 0.0
        %3143 = vmatpush1.msra.mxu0 0.0
        %3144 = vmatprep.subr.mxu0 0.0
        %3145 = vmatpush1.msra.mxu0 0.0
        %3146 = vmatprep.subr.mxu0 0.0
        %3147 = vmatpush1.msra.mxu0 0.0
        %3148 = vmatprep.subr.mxu0 0.0
        %3149 = vmatpush1.msra.mxu0 0.0
        %3150 = vmatprep.subr.mxu0 0.0
        %3151 = vmatpush1.msra.mxu0 0.0
        %3152 = vmatprep.subr.mxu0 0.0
        %3153 = vmatpush1.msra.mxu0 0.0
        %3154 = vmatprep.subr.mxu0 0.0
        %3155 = vmatpush1.msra.mxu0 0.0
        %3156 = vmatprep.subr.mxu0 0.0
        %3157 = vmatpush1.msra.mxu0 0.0
        %3158 = vmatprep.subr.mxu0 0.0
        %3159 = vmatpush1.msra.mxu0 0.0
        %3160 = vmatprep.subr.mxu0 0.0
        %3161 = vmatpush1.msra.mxu0 0.0
        %3162 = vmatprep.subr.mxu0 0.0
        %3163 = vmatpush1.msra.mxu0 0.0
        %3164 = vmatprep.subr.mxu0 0.0
        %3165 = vmatpush1.msra.mxu0 0.0
        %3166 = vmatprep.subr.mxu0 0.0
        %3167 = vmatpush1.msra.mxu0 0.0
        %3168 = vmatprep.subr.mxu0 0.0
        %3169 = vmatpush1.msra.mxu0 0.0
        %3170 = vmatprep.subr.mxu0 0.0
        %3171 = vmatpush1.msra.mxu0 0.0
        %3172 = vmatprep.subr.mxu0 0.0
        %3173 = vmatpush1.msra.mxu0 0.0
        %3174 = vmatprep.subr.mxu0 0.0
        %3175 = vmatpush1.msra.mxu0 0.0
        %3176 = vmatprep.subr.mxu0 0.0
        %3177 = vmatpush1.msra.mxu0 0.0
        %3178 = vmatprep.subr.mxu0 0.0
        %3179 = vmatpush1.msra.mxu0 0.0
        %3180 = vmatprep.subr.mxu0 0.0
        %3181 = vmatpush1.msra.mxu0 0.0
        %3182 = vmatprep.subr.mxu0 0.0
        %3183 = vmatpush1.msra.mxu0 0.0
        %3184 = vmatprep.subr.mxu0 0.0
        %3185 = vmatpush1.msra.mxu0 0.0
        %3186 = vmatprep.subr.mxu0 0.0
        %3187 = vmatpush1.msra.mxu0 0.0
        %3188 = vmatprep.mubr.f32.mxu0 0.0
        %3189 = vmatmul.mubr.f32.gmra.mrb[0].mxu0 %v3117
        %v3190 = vpop.f32.mrb[0].mxu0
        %v3191 = vadd.f32 0.0, %v3190
        %v3192 = vpop.f32.mrb[0].mxu0
        %3193 = vmatprep.mubr.f32.mxu0 0.0
        %3194 = vmatmul.mubr.f32.gmra.mrb[0].mxu0 %v3120
        %v3195 = vpop.f32.mrb[0].mxu0
        %v3196 = vadd.f32 0.0, %v3195
        %v3197 = vpop.f32.mrb[0].mxu0
        %3198 = vdwg.mxu0
        %v3199 = vadd.f32 %v2781, %v3191
        %v3200 = vadd.f32 %v2782, %v3196
        %3201 = vrot.lane.b32.xlu0 %v690, 104
        %v3202 = vpop.permute.xlu0 %3201
        %3203 = vrot.lane.b32.xlu0 %v690, 72
        %v3204 = vpop.permute.xlu0 %3203
        %v3205 = vsel %vm423, %v3202, 0
        %v3207 = vsel %vm423, %v3204, 0
        %3209 = vmatprep.subr.mxu0 0.0
        %3210 = vmatpush1.xpose.msra.mxu0 %v3207
        %3211 = vmatprep.subr.mxu0 0.0
        %3212 = vmatpush1.xpose.msra.mxu0 0.0
        %3213 = vmatprep.subr.mxu0 0.0
        %3214 = vmatpush1.xpose.msra.mxu0 0.0
        %3215 = vmatprep.subr.mxu0 0.0
        %3216 = vmatpush1.xpose.msra.mxu0 0.0
        %3217 = vmatprep.subr.mxu0 0.0
        %3218 = vmatpush1.xpose.msra.mxu0 0.0
        %3219 = vmatprep.subr.mxu0 0.0
        %3220 = vmatpush1.xpose.msra.mxu0 0.0
        %3221 = vmatprep.subr.mxu0 0.0
        %3222 = vmatpush1.xpose.msra.mxu0 0.0
        %3223 = vmatprep.subr.mxu0 0.0
        %3224 = vmatpush1.xpose.msra.mxu0 0.0
        %3225 = vmatprep.subr.mxu0 0.0
        %3226 = vmatpush1.xpose.msra.mxu0 0.0
        %3227 = vmatprep.subr.mxu0 0.0
        %3228 = vmatpush1.xpose.msra.mxu0 0.0
        %3229 = vmatprep.subr.mxu0 0.0
        %3230 = vmatpush1.xpose.msra.mxu0 0.0
        %3231 = vmatprep.subr.mxu0 0.0
        %3232 = vmatpush1.xpose.msra.mxu0 0.0
        %3233 = vmatprep.subr.mxu0 0.0
        %3234 = vmatpush1.xpose.msra.mxu0 0.0
        %3235 = vmatprep.subr.mxu0 0.0
        %3236 = vmatpush1.xpose.msra.mxu0 0.0
        %3237 = vmatprep.subr.mxu0 0.0
        %3238 = vmatpush1.xpose.msra.mxu0 0.0
        %3239 = vmatprep.subr.mxu0 0.0
        %3240 = vmatpush1.xpose.msra.mxu0 0.0
        %3241 = vmatprep.subr.mxu0 0.0
        %3242 = vmatpush1.xpose.msra.mxu0 0.0
        %3243 = vmatprep.subr.mxu0 0.0
        %3244 = vmatpush1.xpose.msra.mxu0 0.0
        %3245 = vmatprep.subr.mxu0 0.0
        %3246 = vmatpush1.xpose.msra.mxu0 0.0
        %3247 = vmatprep.subr.mxu0 0.0
        %3248 = vmatpush1.xpose.msra.mxu0 0.0
        %3249 = vmatprep.subr.mxu0 0.0
        %3250 = vmatpush1.xpose.msra.mxu0 0.0
        %3251 = vmatprep.subr.mxu0 0.0
        %3252 = vmatpush1.xpose.msra.mxu0 0.0
        %3253 = vmatprep.subr.mxu0 0.0
        %3254 = vmatpush1.xpose.msra.mxu0 0.0
        %3255 = vmatprep.subr.mxu0 0.0
        %3256 = vmatpush1.xpose.msra.mxu0 0.0
        %3257 = vmatprep.subr.mxu0 0.0
        %3258 = vmatpush1.xpose.msra.mxu0 0.0
        %3259 = vmatprep.subr.mxu0 0.0
        %3260 = vmatpush1.xpose.msra.mxu0 0.0
        %3261 = vmatprep.subr.mxu0 0.0
        %3262 = vmatpush1.xpose.msra.mxu0 0.0
        %3263 = vmatprep.subr.mxu0 0.0
        %3264 = vmatpush1.xpose.msra.mxu0 0.0
        %3265 = vmatprep.subr.mxu0 0.0
        %3266 = vmatpush1.xpose.msra.mxu0 0.0
        %3267 = vmatprep.subr.mxu0 0.0
        %3268 = vmatpush1.xpose.msra.mxu0 0.0
        %3269 = vmatprep.subr.mxu0 0.0
        %3270 = vmatpush1.xpose.msra.mxu0 0.0
        %3271 = vmatprep.subr.mxu0 0.0
        %3272 = vmatpush1.xpose.msra.mxu0 0.0
        %3273 = vmatprep.mubr.f32.mxu0 0.0
        %3274 = vmatmul.mubr.f32.gmra.mrb[0].mxu0 %v3205
        %v3275 = vpop.f32.mrb[0].mxu0
        %v3276 = vadd.f32 0.0, %v3275
        %v3277 = vpop.f32.mrb[0].mxu0
        %3278 = vdwg.mxu0
        %3279 = vrot.lane.b32.xlu0 %v695, 104
        %v3280 = vpop.permute.xlu0 %3279
        %3281 = vrot.lane.b32.xlu0 %v695, 72
        %v3282 = vpop.permute.xlu0 %3281
        %v3283 = vsel %vm423, %v3280, 0
        %v3285 = vsel %vm423, %v3282, 0
        %3287 = vmatprep.subr.mxu0 0.0
        %3288 = vmatpush1.xpose.msra.mxu0 %v3285
        %3289 = vmatprep.subr.mxu0 0.0
        %3290 = vmatpush1.xpose.msra.mxu0 0.0
        %3291 = vmatprep.subr.mxu0 0.0
        %3292 = vmatpush1.xpose.msra.mxu0 0.0
        %3293 = vmatprep.subr.mxu0 0.0
        %3294 = vmatpush1.xpose.msra.mxu0 0.0
        %3295 = vmatprep.subr.mxu0 0.0
        %3296 = vmatpush1.xpose.msra.mxu0 0.0
        %3297 = vmatprep.subr.mxu0 0.0
        %3298 = vmatpush1.xpose.msra.mxu0 0.0
        %3299 = vmatprep.subr.mxu0 0.0
        %3300 = vmatpush1.xpose.msra.mxu0 0.0
        %3301 = vmatprep.subr.mxu0 0.0
        %3302 = vmatpush1.xpose.msra.mxu0 0.0
        %3303 = vmatprep.subr.mxu0 0.0
        %3304 = vmatpush1.xpose.msra.mxu0 0.0
        %3305 = vmatprep.subr.mxu0 0.0
        %3306 = vmatpush1.xpose.msra.mxu0 0.0
        %3307 = vmatprep.subr.mxu0 0.0
        %3308 = vmatpush1.xpose.msra.mxu0 0.0
        %3309 = vmatprep.subr.mxu0 0.0
        %3310 = vmatpush1.xpose.msra.mxu0 0.0
        %3311 = vmatprep.subr.mxu0 0.0
        %3312 = vmatpush1.xpose.msra.mxu0 0.0
        %3313 = vmatprep.subr.mxu0 0.0
        %3314 = vmatpush1.xpose.msra.mxu0 0.0
        %3315 = vmatprep.subr.mxu0 0.0
        %3316 = vmatpush1.xpose.msra.mxu0 0.0
        %3317 = vmatprep.subr.mxu0 0.0
        %3318 = vmatpush1.xpose.msra.mxu0 0.0
        %3319 = vmatprep.subr.mxu0 0.0
        %3320 = vmatpush1.xpose.msra.mxu0 0.0
        %3321 = vmatprep.subr.mxu0 0.0
        %3322 = vmatpush1.xpose.msra.mxu0 0.0
        %3323 = vmatprep.subr.mxu0 0.0
        %3324 = vmatpush1.xpose.msra.mxu0 0.0
        %3325 = vmatprep.subr.mxu0 0.0
        %3326 = vmatpush1.xpose.msra.mxu0 0.0
        %3327 = vmatprep.subr.mxu0 0.0
        %3328 = vmatpush1.xpose.msra.mxu0 0.0
        %3329 = vmatprep.subr.mxu0 0.0
        %3330 = vmatpush1.xpose.msra.mxu0 0.0
        %3331 = vmatprep.subr.mxu0 0.0
        %3332 = vmatpush1.xpose.msra.mxu0 0.0
        %3333 = vmatprep.subr.mxu0 0.0
        %3334 = vmatpush1.xpose.msra.mxu0 0.0
        %3335 = vmatprep.subr.mxu0 0.0
        %3336 = vmatpush1.xpose.msra.mxu0 0.0
        %3337 = vmatprep.subr.mxu0 0.0
        %3338 = vmatpush1.xpose.msra.mxu0 0.0
        %3339 = vmatprep.subr.mxu0 0.0
        %3340 = vmatpush1.xpose.msra.mxu0 0.0
        %3341 = vmatprep.subr.mxu0 0.0
        %3342 = vmatpush1.xpose.msra.mxu0 0.0
        %3343 = vmatprep.subr.mxu0 0.0
        %3344 = vmatpush1.xpose.msra.mxu0 0.0
        %3345 = vmatprep.subr.mxu0 0.0
        %3346 = vmatpush1.xpose.msra.mxu0 0.0
        %3347 = vmatprep.subr.mxu0 0.0
        %3348 = vmatpush1.xpose.msra.mxu0 0.0
        %3349 = vmatprep.subr.mxu0 0.0
        %3350 = vmatpush1.xpose.msra.mxu0 0.0
        %3351 = vmatprep.mubr.f32.mxu0 0.0
        %3352 = vmatmul.mubr.f32.gmra.mrb[0].mxu0 %v3283
        %v3353 = vpop.f32.mrb[0].mxu0
        %v3354 = vadd.f32 0.0, %v3353
        %v3355 = vpop.f32.mrb[0].mxu0
        %3356 = vdwg.mxu0
        %v3357 = vmul.f32 %v3276, 0.5
        %v3358 = vmul.f32 %v3354, 0.5
        %v3359 = vsel %vm854, %v3357, -inf
        %3360 = vmax.xlane.f32.xlu0 %v3359
        %v3361 = vpop.xlane.xlu0 %3360
        %v3362 = vsel %vm854, %v3358, -inf
        %3363 = vmax.xlane.f32.xlu0 %v3362
        %v3364 = vpop.xlane.xlu0 %3363
        %v3365 = vsub.f32 %v3357, %v3361
        %v3366 = vsub.f32 %v3358, %v3364
        %v3367 = vmul.f32 %v3365, 1.442695
        %v3368 = vpow.pop %v3367
        %v3369 = vmul.f32 %v3366, 1.442695
        %v3370 = vpow.pop %v3369
        %v3371 = vsel %vm854, %v3368, 0.0
        %3372 = vadd.xlane.f32.xlu0 %v3371
        %v3373 = vpop.xlane.xlu0 %3372
        %v3374 = vsel %vm854, %v3370, 0.0
        %3375 = vadd.xlane.f32.xlu0 %v3374
        %v3376 = vpop.xlane.xlu0 %3375
        %v3377 = vrcp.pop %v3373
        %v3378 = vrcp.pop %v3376
        %v3379 = vmul.f32 %v3368, %v3377
        %v3380 = vmul.f32 %v3370, %v3378
        %3381 = vrot.lane.b32.xlu0 %v690, 40
        %v3382 = vpop.permute.xlu0 %3381
        %v3385 = vsel %vm854, %v3379, 0
        %3387 = vmatprep.subr.mxu0 0.0
        %3388 = vmatpush1.msra.mxu0 %v3382
        %3389 = vmatprep.subr.mxu0 0.0
        %3390 = vmatpush1.msra.mxu0 0.0
        %3391 = vmatprep.subr.mxu0 0.0
        %3392 = vmatpush1.msra.mxu0 0.0
        %3393 = vmatprep.subr.mxu0 0.0
        %3394 = vmatpush1.msra.mxu0 0.0
        %3395 = vmatprep.subr.mxu0 0.0
        %3396 = vmatpush1.msra.mxu0 0.0
        %3397 = vmatprep.subr.mxu0 0.0
        %3398 = vmatpush1.msra.mxu0 0.0
        %3399 = vmatprep.subr.mxu0 0.0
        %3400 = vmatpush1.msra.mxu0 0.0
        %3401 = vmatprep.subr.mxu0 0.0
        %3402 = vmatpush1.msra.mxu0 0.0
        %3403 = vmatprep.subr.mxu0 0.0
        %3404 = vmatpush1.msra.mxu0 0.0
        %3405 = vmatprep.subr.mxu0 0.0
        %3406 = vmatpush1.msra.mxu0 0.0
        %3407 = vmatprep.subr.mxu0 0.0
        %3408 = vmatpush1.msra.mxu0 0.0
        %3409 = vmatprep.subr.mxu0 0.0
        %3410 = vmatpush1.msra.mxu0 0.0
        %3411 = vmatprep.subr.mxu0 0.0
        %3412 = vmatpush1.msra.mxu0 0.0
        %3413 = vmatprep.subr.mxu0 0.0
        %3414 = vmatpush1.msra.mxu0 0.0
        %3415 = vmatprep.subr.mxu0 0.0
        %3416 = vmatpush1.msra.mxu0 0.0
        %3417 = vmatprep.subr.mxu0 0.0
        %3418 = vmatpush1.msra.mxu0 0.0
        %3419 = vmatprep.subr.mxu0 0.0
        %3420 = vmatpush1.msra.mxu0 0.0
        %3421 = vmatprep.subr.mxu0 0.0
        %3422 = vmatpush1.msra.mxu0 0.0
        %3423 = vmatprep.subr.mxu0 0.0
        %3424 = vmatpush1.msra.mxu0 0.0
        %3425 = vmatprep.subr.mxu0 0.0
        %3426 = vmatpush1.msra.mxu0 0.0
        %3427 = vmatprep.subr.mxu0 0.0
        %3428 = vmatpush1.msra.mxu0 0.0
        %3429 = vmatprep.subr.mxu0 0.0
        %3430 = vmatpush1.msra.mxu0 0.0
        %3431 = vmatprep.subr.mxu0 0.0
        %3432 = vmatpush1.msra.mxu0 0.0
        %3433 = vmatprep.subr.mxu0 0.0
        %3434 = vmatpush1.msra.mxu0 0.0
        %3435 = vmatprep.subr.mxu0 0.0
        %3436 = vmatpush1.msra.mxu0 0.0
        %3437 = vmatprep.subr.mxu0 0.0
        %3438 = vmatpush1.msra.mxu0 0.0
        %3439 = vmatprep.subr.mxu0 0.0
        %3440 = vmatpush1.msra.mxu0 0.0
        %3441 = vmatprep.subr.mxu0 0.0
        %3442 = vmatpush1.msra.mxu0 0.0
        %3443 = vmatprep.subr.mxu0 0.0
        %3444 = vmatpush1.msra.mxu0 0.0
        %3445 = vmatprep.subr.mxu0 0.0
        %3446 = vmatpush1.msra.mxu0 0.0
        %3447 = vmatprep.subr.mxu0 0.0
        %3448 = vmatpush1.msra.mxu0 0.0
        %3449 = vmatprep.subr.mxu0 0.0
        %3450 = vmatpush1.msra.mxu0 0.0
        %3451 = vmatprep.mubr.f32.mxu0 0.0
        %3452 = vmatmul.mubr.f32.gmra.mrb[0].mxu0 %v3385
        %v3453 = vpop.f32.mrb[0].mxu0
        %v3454 = vadd.f32 0.0, %v3453
        %v3455 = vpop.f32.mrb[0].mxu0
        %3456 = vdwg.mxu0
        %3457 = vrot.lane.b32.xlu0 %v695, 40
        %v3458 = vpop.permute.xlu0 %3457
        %v3461 = vsel %vm854, %v3380, 0
        %3463 = vmatprep.subr.mxu0 0.0
        %3464 = vmatpush1.msra.mxu0 %v3458
        %3465 = vmatprep.subr.mxu0 0.0
        %3466 = vmatpush1.msra.mxu0 0.0
        %3467 = vmatprep.subr.mxu0 0.0
        %3468 = vmatpush1.msra.mxu0 0.0
        %3469 = vmatprep.subr.mxu0 0.0
        %3470 = vmatpush1.msra.mxu0 0.0
        %3471 = vmatprep.subr.mxu0 0.0
        %3472 = vmatpush1.msra.mxu0 0.0
        %3473 = vmatprep.subr.mxu0 0.0
        %3474 = vmatpush1.msra.mxu0 0.0
        %3475 = vmatprep.subr.mxu0 0.0
        %3476 = vmatpush1.msra.mxu0 0.0
        %3477 = vmatprep.subr.mxu0 0.0
        %3478 = vmatpush1.msra.mxu0 0.0
        %3479 = vmatprep.subr.mxu0 0.0
        %3480 = vmatpush1.msra.mxu0 0.0
        %3481 = vmatprep.subr.mxu0 0.0
        %3482 = vmatpush1.msra.mxu0 0.0
        %3483 = vmatprep.subr.mxu0 0.0
        %3484 = vmatpush1.msra.mxu0 0.0
        %3485 = vmatprep.subr.mxu0 0.0
        %3486 = vmatpush1.msra.mxu0 0.0
        %3487 = vmatprep.subr.mxu0 0.0
        %3488 = vmatpush1.msra.mxu0 0.0
        %3489 = vmatprep.subr.mxu0 0.0
        %3490 = vmatpush1.msra.mxu0 0.0
        %3491 = vmatprep.subr.mxu0 0.0
        %3492 = vmatpush1.msra.mxu0 0.0
        %3493 = vmatprep.subr.mxu0 0.0
        %3494 = vmatpush1.msra.mxu0 0.0
        %3495 = vmatprep.subr.mxu0 0.0
        %3496 = vmatpush1.msra.mxu0 0.0
        %3497 = vmatprep.subr.mxu0 0.0
        %3498 = vmatpush1.msra.mxu0 0.0
        %3499 = vmatprep.subr.mxu0 0.0
        %3500 = vmatpush1.msra.mxu0 0.0
        %3501 = vmatprep.subr.mxu0 0.0
        %3502 = vmatpush1.msra.mxu0 0.0
        %3503 = vmatprep.subr.mxu0 0.0
        %3504 = vmatpush1.msra.mxu0 0.0
        %3505 = vmatprep.subr.mxu0 0.0
        %3506 = vmatpush1.msra.mxu0 0.0
        %3507 = vmatprep.subr.mxu0 0.0
        %3508 = vmatpush1.msra.mxu0 0.0
        %3509 = vmatprep.subr.mxu0 0.0
        %3510 = vmatpush1.msra.mxu0 0.0
        %3511 = vmatprep.subr.mxu0 0.0
        %3512 = vmatpush1.msra.mxu0 0.0
        %3513 = vmatprep.subr.mxu0 0.0
        %3514 = vmatpush1.msra.mxu0 0.0
        %3515 = vmatprep.subr.mxu0 0.0
        %3516 = vmatpush1.msra.mxu0 0.0
        %3517 = vmatprep.subr.mxu0 0.0
        %3518 = vmatpush1.msra.mxu0 0.0
        %3519 = vmatprep.subr.mxu0 0.0
        %3520 = vmatpush1.msra.mxu0 0.0
        %3521 = vmatprep.subr.mxu0 0.0
        %3522 = vmatpush1.msra.mxu0 0.0
        %3523 = vmatprep.subr.mxu0 0.0
        %3524 = vmatpush1.msra.mxu0 0.0
        %3525 = vmatprep.subr.mxu0 0.0
        %3526 = vmatpush1.msra.mxu0 0.0
        %3527 = vmatprep.mubr.f32.mxu0 0.0
        %3528 = vmatmul.mubr.f32.gmra.mrb[0].mxu0 %v3461
        %v3529 = vpop.f32.mrb[0].mxu0
        %v3530 = vadd.f32 0.0, %v3529
        %v3531 = vpop.f32.mrb[0].mxu0
        %3532 = vdwg.mxu0
        %v3534 = vsel %vm423, %v3454, 0
        %v3537 = vsel %vm423, %v3530, 0
        %v3540 = vsel %vm430, %v612, 0
        %3542 = vmatprep.subr.mxu0 0.0
        %3543 = vmatpush1.msra.mxu0 %v3540
        %3544 = vmatprep.subr.mxu0 0.0
        %3545 = vmatpush1.msra.mxu0 0.0
        %3546 = vmatprep.subr.mxu0 0.0
        %3547 = vmatpush1.msra.mxu0 0.0
        %3548 = vmatprep.subr.mxu0 0.0
        %3549 = vmatpush1.msra.mxu0 0.0
        %3550 = vmatprep.subr.mxu0 0.0
        %3551 = vmatpush1.msra.mxu0 0.0
        %3552 = vmatprep.subr.mxu0 0.0
        %3553 = vmatpush1.msra.mxu0 0.0
        %3554 = vmatprep.subr.mxu0 0.0
        %3555 = vmatpush1.msra.mxu0 0.0
        %3556 = vmatprep.subr.mxu0 0.0
        %3557 = vmatpush1.msra.mxu0 0.0
        %3558 = vmatprep.subr.mxu0 0.0
        %3559 = vmatpush1.msra.mxu0 0.0
        %3560 = vmatprep.subr.mxu0 0.0
        %3561 = vmatpush1.msra.mxu0 0.0
        %3562 = vmatprep.subr.mxu0 0.0
        %3563 = vmatpush1.msra.mxu0 0.0
        %3564 = vmatprep.subr.mxu0 0.0
        %3565 = vmatpush1.msra.mxu0 0.0
        %3566 = vmatprep.subr.mxu0 0.0
        %3567 = vmatpush1.msra.mxu0 0.0
        %3568 = vmatprep.subr.mxu0 0.0
        %3569 = vmatpush1.msra.mxu0 0.0
        %3570 = vmatprep.subr.mxu0 0.0
        %3571 = vmatpush1.msra.mxu0 0.0
        %3572 = vmatprep.subr.mxu0 0.0
        %3573 = vmatpush1.msra.mxu0 0.0
        %3574 = vmatprep.subr.mxu0 0.0
        %3575 = vmatpush1.msra.mxu0 0.0
        %3576 = vmatprep.subr.mxu0 0.0
        %3577 = vmatpush1.msra.mxu0 0.0
        %3578 = vmatprep.subr.mxu0 0.0
        %3579 = vmatpush1.msra.mxu0 0.0
        %3580 = vmatprep.subr.mxu0 0.0
        %3581 = vmatpush1.msra.mxu0 0.0
        %3582 = vmatprep.subr.mxu0 0.0
        %3583 = vmatpush1.msra.mxu0 0.0
        %3584 = vmatprep.subr.mxu0 0.0
        %3585 = vmatpush1.msra.mxu0 0.0
        %3586 = vmatprep.subr.mxu0 0.0
        %3587 = vmatpush1.msra.mxu0 0.0
        %3588 = vmatprep.subr.mxu0 0.0
        %3589 = vmatpush1.msra.mxu0 0.0
        %3590 = vmatprep.subr.mxu0 0.0
        %3591 = vmatpush1.msra.mxu0 0.0
        %3592 = vmatprep.subr.mxu0 0.0
        %3593 = vmatpush1.msra.mxu0 0.0
        %3594 = vmatprep.subr.mxu0 0.0
        %3595 = vmatpush1.msra.mxu0 0.0
        %3596 = vmatprep.subr.mxu0 0.0
        %3597 = vmatpush1.msra.mxu0 0.0
        %3598 = vmatprep.subr.mxu0 0.0
        %3599 = vmatpush1.msra.mxu0 0.0
        %3600 = vmatprep.subr.mxu0 0.0
        %3601 = vmatpush1.msra.mxu0 0.0
        %3602 = vmatprep.subr.mxu0 0.0
        %3603 = vmatpush1.msra.mxu0 0.0
        %3604 = vmatprep.subr.mxu0 0.0
        %3605 = vmatpush1.msra.mxu0 0.0
        %3606 = vmatprep.mubr.f32.mxu0 0.0
        %3607 = vmatmul.mubr.f32.gmra.mrb[0].mxu0 %v3534
        %v3608 = vpop.f32.mrb[0].mxu0
        %v3609 = vadd.f32 0.0, %v3608
        %v3610 = vpop.f32.mrb[0].mxu0
        %3611 = vmatprep.mubr.f32.mxu0 0.0
        %3612 = vmatmul.mubr.f32.gmra.mrb[0].mxu0 %v3537
        %v3613 = vpop.f32.mrb[0].mxu0
        %v3614 = vadd.f32 0.0, %v3613
        %v3615 = vpop.f32.mrb[0].mxu0
        %3616 = vdwg.mxu0
        %v3617 = vadd.f32 %v3199, %v3609
        %v3618 = vadd.f32 %v3200, %v3614
        %3619 = vrot.lane.b32.xlu0 %v690, 100
        %v3620 = vpop.permute.xlu0 %3619
        %3621 = vrot.lane.b32.xlu0 %v690, 68
        %v3622 = vpop.permute.xlu0 %3621
        %v3623 = vsel %vm423, %v3620, 0
        %v3625 = vsel %vm423, %v3622, 0
        %3627 = vmatprep.subr.mxu0 0.0
        %3628 = vmatpush1.xpose.msra.mxu0 %v3625
        %3629 = vmatprep.subr.mxu0 0.0
        %3630 = vmatpush1.xpose.msra.mxu0 0.0
        %3631 = vmatprep.subr.mxu0 0.0
        %3632 = vmatpush1.xpose.msra.mxu0 0.0
        %3633 = vmatprep.subr.mxu0 0.0
        %3634 = vmatpush1.xpose.msra.mxu0 0.0
        %3635 = vmatprep.subr.mxu0 0.0
        %3636 = vmatpush1.xpose.msra.mxu0 0.0
        %3637 = vmatprep.subr.mxu0 0.0
        %3638 = vmatpush1.xpose.msra.mxu0 0.0
        %3639 = vmatprep.subr.mxu0 0.0
        %3640 = vmatpush1.xpose.msra.mxu0 0.0
        %3641 = vmatprep.subr.mxu0 0.0
        %3642 = vmatpush1.xpose.msra.mxu0 0.0
        %3643 = vmatprep.subr.mxu0 0.0
        %3644 = vmatpush1.xpose.msra.mxu0 0.0
        %3645 = vmatprep.subr.mxu0 0.0
        %3646 = vmatpush1.xpose.msra.mxu0 0.0
        %3647 = vmatprep.subr.mxu0 0.0
        %3648 = vmatpush1.xpose.msra.mxu0 0.0
        %3649 = vmatprep.subr.mxu0 0.0
        %3650 = vmatpush1.xpose.msra.mxu0 0.0
        %3651 = vmatprep.subr.mxu0 0.0
        %3652 = vmatpush1.xpose.msra.mxu0 0.0
        %3653 = vmatprep.subr.mxu0 0.0
        %3654 = vmatpush1.xpose.msra.mxu0 0.0
        %3655 = vmatprep.subr.mxu0 0.0
        %3656 = vmatpush1.xpose.msra.mxu0 0.0
        %3657 = vmatprep.subr.mxu0 0.0
        %3658 = vmatpush1.xpose.msra.mxu0 0.0
        %3659 = vmatprep.subr.mxu0 0.0
        %3660 = vmatpush1.xpose.msra.mxu0 0.0
        %3661 = vmatprep.subr.mxu0 0.0
        %3662 = vmatpush1.xpose.msra.mxu0 0.0
        %3663 = vmatprep.subr.mxu0 0.0
        %3664 = vmatpush1.xpose.msra.mxu0 0.0
        %3665 = vmatprep.subr.mxu0 0.0
        %3666 = vmatpush1.xpose.msra.mxu0 0.0
        %3667 = vmatprep.subr.mxu0 0.0
        %3668 = vmatpush1.xpose.msra.mxu0 0.0
        %3669 = vmatprep.subr.mxu0 0.0
        %3670 = vmatpush1.xpose.msra.mxu0 0.0
        %3671 = vmatprep.subr.mxu0 0.0
        %3672 = vmatpush1.xpose.msra.mxu0 0.0
        %3673 = vmatprep.subr.mxu0 0.0
        %3674 = vmatpush1.xpose.msra.mxu0 0.0
        %3675 = vmatprep.subr.mxu0 0.0
        %3676 = vmatpush1.xpose.msra.mxu0 0.0
        %3677 = vmatprep.subr.mxu0 0.0
        %3678 = vmatpush1.xpose.msra.mxu0 0.0
        %3679 = vmatprep.subr.mxu0 0.0
        %3680 = vmatpush1.xpose.msra.mxu0 0.0
        %3681 = vmatprep.subr.mxu0 0.0
        %3682 = vmatpush1.xpose.msra.mxu0 0.0
        %3683 = vmatprep.subr.mxu0 0.0
        %3684 = vmatpush1.xpose.msra.mxu0 0.0
        %3685 = vmatprep.subr.mxu0 0.0
        %3686 = vmatpush1.xpose.msra.mxu0 0.0
        %3687 = vmatprep.subr.mxu0 0.0
        %3688 = vmatpush1.xpose.msra.mxu0 0.0
        %3689 = vmatprep.subr.mxu0 0.0
        %3690 = vmatpush1.xpose.msra.mxu0 0.0
        %3691 = vmatprep.mubr.f32.mxu0 0.0
        %3692 = vmatmul.mubr.f32.gmra.mrb[0].mxu0 %v3623
        %v3693 = vpop.f32.mrb[0].mxu0
        %v3694 = vadd.f32 0.0, %v3693
        %v3695 = vpop.f32.mrb[0].mxu0
        %3696 = vdwg.mxu0
        %3697 = vrot.lane.b32.xlu0 %v695, 100
        %v3698 = vpop.permute.xlu0 %3697
        %3699 = vrot.lane.b32.xlu0 %v695, 68
        %v3700 = vpop.permute.xlu0 %3699
        %v3701 = vsel %vm423, %v3698, 0
        %v3703 = vsel %vm423, %v3700, 0
        %3705 = vmatprep.subr.mxu0 0.0
        %3706 = vmatpush1.xpose.msra.mxu0 %v3703
        %3707 = vmatprep.subr.mxu0 0.0
        %3708 = vmatpush1.xpose.msra.mxu0 0.0
        %3709 = vmatprep.subr.mxu0 0.0
        %3710 = vmatpush1.xpose.msra.mxu0 0.0
        %3711 = vmatprep.subr.mxu0 0.0
        %3712 = vmatpush1.xpose.msra.mxu0 0.0
        %3713 = vmatprep.subr.mxu0 0.0
        %3714 = vmatpush1.xpose.msra.mxu0 0.0
        %3715 = vmatprep.subr.mxu0 0.0
        %3716 = vmatpush1.xpose.msra.mxu0 0.0
        %3717 = vmatprep.subr.mxu0 0.0
        %3718 = vmatpush1.xpose.msra.mxu0 0.0
        %3719 = vmatprep.subr.mxu0 0.0
        %3720 = vmatpush1.xpose.msra.mxu0 0.0
        %3721 = vmatprep.subr.mxu0 0.0
        %3722 = vmatpush1.xpose.msra.mxu0 0.0
        %3723 = vmatprep.subr.mxu0 0.0
        %3724 = vmatpush1.xpose.msra.mxu0 0.0
        %3725 = vmatprep.subr.mxu0 0.0
        %3726 = vmatpush1.xpose.msra.mxu0 0.0
        %3727 = vmatprep.subr.mxu0 0.0
        %3728 = vmatpush1.xpose.msra.mxu0 0.0
        %3729 = vmatprep.subr.mxu0 0.0
        %3730 = vmatpush1.xpose.msra.mxu0 0.0
        %3731 = vmatprep.subr.mxu0 0.0
        %3732 = vmatpush1.xpose.msra.mxu0 0.0
        %3733 = vmatprep.subr.mxu0 0.0
        %3734 = vmatpush1.xpose.msra.mxu0 0.0
        %3735 = vmatprep.subr.mxu0 0.0
        %3736 = vmatpush1.xpose.msra.mxu0 0.0
        %3737 = vmatprep.subr.mxu0 0.0
        %3738 = vmatpush1.xpose.msra.mxu0 0.0
        %3739 = vmatprep.subr.mxu0 0.0
        %3740 = vmatpush1.xpose.msra.mxu0 0.0
        %3741 = vmatprep.subr.mxu0 0.0
        %3742 = vmatpush1.xpose.msra.mxu0 0.0
        %3743 = vmatprep.subr.mxu0 0.0
        %3744 = vmatpush1.xpose.msra.mxu0 0.0
        %3745 = vmatprep.subr.mxu0 0.0
        %3746 = vmatpush1.xpose.msra.mxu0 0.0
        %3747 = vmatprep.subr.mxu0 0.0
        %3748 = vmatpush1.xpose.msra.mxu0 0.0
        %3749 = vmatprep.subr.mxu0 0.0
        %3750 = vmatpush1.xpose.msra.mxu0 0.0
        %3751 = vmatprep.subr.mxu0 0.0
        %3752 = vmatpush1.xpose.msra.mxu0 0.0
        %3753 = vmatprep.subr.mxu0 0.0
        %3754 = vmatpush1.xpose.msra.mxu0 0.0
        %3755 = vmatprep.subr.mxu0 0.0
        %3756 = vmatpush1.xpose.msra.mxu0 0.0
        %3757 = vmatprep.subr.mxu0 0.0
        %3758 = vmatpush1.xpose.msra.mxu0 0.0
        %3759 = vmatprep.subr.mxu0 0.0
        %3760 = vmatpush1.xpose.msra.mxu0 0.0
        %3761 = vmatprep.subr.mxu0 0.0
        %3762 = vmatpush1.xpose.msra.mxu0 0.0
        %3763 = vmatprep.subr.mxu0 0.0
        %3764 = vmatpush1.xpose.msra.mxu0 0.0
        %3765 = vmatprep.subr.mxu0 0.0
        %3766 = vmatpush1.xpose.msra.mxu0 0.0
        %3767 = vmatprep.subr.mxu0 0.0
        %3768 = vmatpush1.xpose.msra.mxu0 0.0
        %3769 = vmatprep.mubr.f32.mxu0 0.0
        %3770 = vmatmul.mubr.f32.gmra.mrb[0].mxu0 %v3701
        %v3771 = vpop.f32.mrb[0].mxu0
        %v3772 = vadd.f32 0.0, %v3771
        %v3773 = vpop.f32.mrb[0].mxu0
        %3774 = vdwg.mxu0
        %v3775 = vmul.f32 %v3694, 0.5
        %v3776 = vmul.f32 %v3772, 0.5
        %v3777 = vsel %vm854, %v3775, -inf
        %3778 = vmax.xlane.f32.xlu0 %v3777
        %v3779 = vpop.xlane.xlu0 %3778
        %v3780 = vsel %vm854, %v3776, -inf
        %3781 = vmax.xlane.f32.xlu0 %v3780
        %v3782 = vpop.xlane.xlu0 %3781
        %v3783 = vsub.f32 %v3775, %v3779
        %v3784 = vsub.f32 %v3776, %v3782
        %v3785 = vmul.f32 %v3783, 1.442695
        %v3786 = vpow.pop %v3785
        %v3787 = vmul.f32 %v3784, 1.442695
        %v3788 = vpow.pop %v3787
        %v3789 = vsel %vm854, %v3786, 0.0
        %3790 = vadd.xlane.f32.xlu0 %v3789
        %v3791 = vpop.xlane.xlu0 %3790
        %v3792 = vsel %vm854, %v3788, 0.0
        %3793 = vadd.xlane.f32.xlu0 %v3792
        %v3794 = vpop.xlane.xlu0 %3793
        %v3795 = vrcp.pop %v3791
        %v3796 = vrcp.pop %v3794
        %v3797 = vmul.f32 %v3786, %v3795
        %v3798 = vmul.f32 %v3788, %v3796
        %3799 = vrot.lane.b32.xlu0 %v690, 36
        %v3800 = vpop.permute.xlu0 %3799
        %v3803 = vsel %vm854, %v3797, 0
        %3805 = vmatprep.subr.mxu0 0.0
        %3806 = vmatpush1.msra.mxu0 %v3800
        %3807 = vmatprep.subr.mxu0 0.0
        %3808 = vmatpush1.msra.mxu0 0.0
        %3809 = vmatprep.subr.mxu0 0.0
        %3810 = vmatpush1.msra.mxu0 0.0
        %3811 = vmatprep.subr.mxu0 0.0
        %3812 = vmatpush1.msra.mxu0 0.0
        %3813 = vmatprep.subr.mxu0 0.0
        %3814 = vmatpush1.msra.mxu0 0.0
        %3815 = vmatprep.subr.mxu0 0.0
        %3816 = vmatpush1.msra.mxu0 0.0
        %3817 = vmatprep.subr.mxu0 0.0
        %3818 = vmatpush1.msra.mxu0 0.0
        %3819 = vmatprep.subr.mxu0 0.0
        %3820 = vmatpush1.msra.mxu0 0.0
        %3821 = vmatprep.subr.mxu0 0.0
        %3822 = vmatpush1.msra.mxu0 0.0
        %3823 = vmatprep.subr.mxu0 0.0
        %3824 = vmatpush1.msra.mxu0 0.0
        %3825 = vmatprep.subr.mxu0 0.0
        %3826 = vmatpush1.msra.mxu0 0.0
        %3827 = vmatprep.subr.mxu0 0.0
        %3828 = vmatpush1.msra.mxu0 0.0
        %3829 = vmatprep.subr.mxu0 0.0
        %3830 = vmatpush1.msra.mxu0 0.0
        %3831 = vmatprep.subr.mxu0 0.0
        %3832 = vmatpush1.msra.mxu0 0.0
        %3833 = vmatprep.subr.mxu0 0.0
        %3834 = vmatpush1.msra.mxu0 0.0
        %3835 = vmatprep.subr.mxu0 0.0
        %3836 = vmatpush1.msra.mxu0 0.0
        %3837 = vmatprep.subr.mxu0 0.0
        %3838 = vmatpush1.msra.mxu0 0.0
        %3839 = vmatprep.subr.mxu0 0.0
        %3840 = vmatpush1.msra.mxu0 0.0
        %3841 = vmatprep.subr.mxu0 0.0
        %3842 = vmatpush1.msra.mxu0 0.0
        %3843 = vmatprep.subr.mxu0 0.0
        %3844 = vmatpush1.msra.mxu0 0.0
        %3845 = vmatprep.subr.mxu0 0.0
        %3846 = vmatpush1.msra.mxu0 0.0
        %3847 = vmatprep.subr.mxu0 0.0
        %3848 = vmatpush1.msra.mxu0 0.0
        %3849 = vmatprep.subr.mxu0 0.0
        %3850 = vmatpush1.msra.mxu0 0.0
        %3851 = vmatprep.subr.mxu0 0.0
        %3852 = vmatpush1.msra.mxu0 0.0
        %3853 = vmatprep.subr.mxu0 0.0
        %3854 = vmatpush1.msra.mxu0 0.0
        %3855 = vmatprep.subr.mxu0 0.0
        %3856 = vmatpush1.msra.mxu0 0.0
        %3857 = vmatprep.subr.mxu0 0.0
        %3858 = vmatpush1.msra.mxu0 0.0
        %3859 = vmatprep.subr.mxu0 0.0
        %3860 = vmatpush1.msra.mxu0 0.0
        %3861 = vmatprep.subr.mxu0 0.0
        %3862 = vmatpush1.msra.mxu0 0.0
        %3863 = vmatprep.subr.mxu0 0.0
        %3864 = vmatpush1.msra.mxu0 0.0
        %3865 = vmatprep.subr.mxu0 0.0
        %3866 = vmatpush1.msra.mxu0 0.0
        %3867 = vmatprep.subr.mxu0 0.0
        %3868 = vmatpush1.msra.mxu0 0.0
        %3869 = vmatprep.mubr.f32.mxu0 0.0
        %3870 = vmatmul.mubr.f32.gmra.mrb[0].mxu0 %v3803
        %v3871 = vpop.f32.mrb[0].mxu0
        %v3872 = vadd.f32 0.0, %v3871
        %v3873 = vpop.f32.mrb[0].mxu0
        %3874 = vdwg.mxu0
        %3875 = vrot.lane.b32.xlu0 %v695, 36
        %v3876 = vpop.permute.xlu0 %3875
        %v3879 = vsel %vm854, %v3798, 0
        %3881 = vmatprep.subr.mxu0 0.0
        %3882 = vmatpush1.msra.mxu0 %v3876
        %3883 = vmatprep.subr.mxu0 0.0
        %3884 = vmatpush1.msra.mxu0 0.0
        %3885 = vmatprep.subr.mxu0 0.0
        %3886 = vmatpush1.msra.mxu0 0.0
        %3887 = vmatprep.subr.mxu0 0.0
        %3888 = vmatpush1.msra.mxu0 0.0
        %3889 = vmatprep.subr.mxu0 0.0
        %3890 = vmatpush1.msra.mxu0 0.0
        %3891 = vmatprep.subr.mxu0 0.0
        %3892 = vmatpush1.msra.mxu0 0.0
        %3893 = vmatprep.subr.mxu0 0.0
        %3894 = vmatpush1.msra.mxu0 0.0
        %3895 = vmatprep.subr.mxu0 0.0
        %3896 = vmatpush1.msra.mxu0 0.0
        %3897 = vmatprep.subr.mxu0 0.0
        %3898 = vmatpush1.msra.mxu0 0.0
        %3899 = vmatprep.subr.mxu0 0.0
        %3900 = vmatpush1.msra.mxu0 0.0
        %3901 = vmatprep.subr.mxu0 0.0
        %3902 = vmatpush1.msra.mxu0 0.0
        %3903 = vmatprep.subr.mxu0 0.0
        %3904 = vmatpush1.msra.mxu0 0.0
        %3905 = vmatprep.subr.mxu0 0.0
        %3906 = vmatpush1.msra.mxu0 0.0
        %3907 = vmatprep.subr.mxu0 0.0
        %3908 = vmatpush1.msra.mxu0 0.0
        %3909 = vmatprep.subr.mxu0 0.0
        %3910 = vmatpush1.msra.mxu0 0.0
        %3911 = vmatprep.subr.mxu0 0.0
        %3912 = vmatpush1.msra.mxu0 0.0
        %3913 = vmatprep.subr.mxu0 0.0
        %3914 = vmatpush1.msra.mxu0 0.0
        %3915 = vmatprep.subr.mxu0 0.0
        %3916 = vmatpush1.msra.mxu0 0.0
        %3917 = vmatprep.subr.mxu0 0.0
        %3918 = vmatpush1.msra.mxu0 0.0
        %3919 = vmatprep.subr.mxu0 0.0
        %3920 = vmatpush1.msra.mxu0 0.0
        %3921 = vmatprep.subr.mxu0 0.0
        %3922 = vmatpush1.msra.mxu0 0.0
        %3923 = vmatprep.subr.mxu0 0.0
        %3924 = vmatpush1.msra.mxu0 0.0
        %3925 = vmatprep.subr.mxu0 0.0
        %3926 = vmatpush1.msra.mxu0 0.0
        %3927 = vmatprep.subr.mxu0 0.0
        %3928 = vmatpush1.msra.mxu0 0.0
        %3929 = vmatprep.subr.mxu0 0.0
        %3930 = vmatpush1.msra.mxu0 0.0
        %3931 = vmatprep.subr.mxu0 0.0
        %3932 = vmatpush1.msra.mxu0 0.0
        %3933 = vmatprep.subr.mxu0 0.0
        %3934 = vmatpush1.msra.mxu0 0.0
        %3935 = vmatprep.subr.mxu0 0.0
        %3936 = vmatpush1.msra.mxu0 0.0
        %3937 = vmatprep.subr.mxu0 0.0
        %3938 = vmatpush1.msra.mxu0 0.0
        %3939 = vmatprep.subr.mxu0 0.0
        %3940 = vmatpush1.msra.mxu0 0.0
        %3941 = vmatprep.subr.mxu0 0.0
        %3942 = vmatpush1.msra.mxu0 0.0
        %3943 = vmatprep.subr.mxu0 0.0
        %3944 = vmatpush1.msra.mxu0 0.0
        %3945 = vmatprep.mubr.f32.mxu0 0.0
        %3946 = vmatmul.mubr.f32.gmra.mrb[0].mxu0 %v3879
        %v3947 = vpop.f32.mrb[0].mxu0
        %v3948 = vadd.f32 0.0, %v3947
        %v3949 = vpop.f32.mrb[0].mxu0
        %3950 = vdwg.mxu0
        %v3951 = vrot.slane %v612, 4
        %v3953 = vsel %vm423, %v3872, 0
        %v3956 = vsel %vm423, %v3948, 0
        %v3958 = vsel %vm430, %v3951, 0
        %3960 = vmatprep.subr.mxu0 0.0
        %3961 = vmatpush1.msra.mxu0 %v3958
        %3962 = vmatprep.subr.mxu0 0.0
        %3963 = vmatpush1.msra.mxu0 0.0
        %3964 = vmatprep.subr.mxu0 0.0
        %3965 = vmatpush1.msra.mxu0 0.0
        %3966 = vmatprep.subr.mxu0 0.0
        %3967 = vmatpush1.msra.mxu0 0.0
        %3968 = vmatprep.subr.mxu0 0.0
        %3969 = vmatpush1.msra.mxu0 0.0
        %3970 = vmatprep.subr.mxu0 0.0
        %3971 = vmatpush1.msra.mxu0 0.0
        %3972 = vmatprep.subr.mxu0 0.0
        %3973 = vmatpush1.msra.mxu0 0.0
        %3974 = vmatprep.subr.mxu0 0.0
        %3975 = vmatpush1.msra.mxu0 0.0
        %3976 = vmatprep.subr.mxu0 0.0
        %3977 = vmatpush1.msra.mxu0 0.0
        %3978 = vmatprep.subr.mxu0 0.0
        %3979 = vmatpush1.msra.mxu0 0.0
        %3980 = vmatprep.subr.mxu0 0.0
        %3981 = vmatpush1.msra.mxu0 0.0
        %3982 = vmatprep.subr.mxu0 0.0
        %3983 = vmatpush1.msra.mxu0 0.0
        %3984 = vmatprep.subr.mxu0 0.0
        %3985 = vmatpush1.msra.mxu0 0.0
        %3986 = vmatprep.subr.mxu0 0.0
        %3987 = vmatpush1.msra.mxu0 0.0
        %3988 = vmatprep.subr.mxu0 0.0
        %3989 = vmatpush1.msra.mxu0 0.0
        %3990 = vmatprep.subr.mxu0 0.0
        %3991 = vmatpush1.msra.mxu0 0.0
        %3992 = vmatprep.subr.mxu0 0.0
        %3993 = vmatpush1.msra.mxu0 0.0
        %3994 = vmatprep.subr.mxu0 0.0
        %3995 = vmatpush1.msra.mxu0 0.0
        %3996 = vmatprep.subr.mxu0 0.0
        %3997 = vmatpush1.msra.mxu0 0.0
        %3998 = vmatprep.subr.mxu0 0.0
        %3999 = vmatpush1.msra.mxu0 0.0
        %4000 = vmatprep.subr.mxu0 0.0
        %4001 = vmatpush1.msra.mxu0 0.0
        %4002 = vmatprep.subr.mxu0 0.0
        %4003 = vmatpush1.msra.mxu0 0.0
        %4004 = vmatprep.subr.mxu0 0.0
        %4005 = vmatpush1.msra.mxu0 0.0
        %4006 = vmatprep.subr.mxu0 0.0
        %4007 = vmatpush1.msra.mxu0 0.0
        %4008 = vmatprep.subr.mxu0 0.0
        %4009 = vmatpush1.msra.mxu0 0.0
        %4010 = vmatprep.subr.mxu0 0.0
        %4011 = vmatpush1.msra.mxu0 0.0
        %4012 = vmatprep.subr.mxu0 0.0
        %4013 = vmatpush1.msra.mxu0 0.0
        %4014 = vmatprep.subr.mxu0 0.0
        %4015 = vmatpush1.msra.mxu0 0.0
        %4016 = vmatprep.subr.mxu0 0.0
        %4017 = vmatpush1.msra.mxu0 0.0
        %4018 = vmatprep.subr.mxu0 0.0
        %4019 = vmatpush1.msra.mxu0 0.0
        %4020 = vmatprep.subr.mxu0 0.0
        %4021 = vmatpush1.msra.mxu0 0.0
        %4022 = vmatprep.subr.mxu0 0.0
        %4023 = vmatpush1.msra.mxu0 0.0
        %4024 = vmatprep.mubr.f32.mxu0 0.0
        %4025 = vmatmul.mubr.f32.gmra.mrb[0].mxu0 %v3953
        %v4026 = vpop.f32.mrb[0].mxu0
        %v4027 = vadd.f32 0.0, %v4026
        %v4028 = vpop.f32.mrb[0].mxu0
        %4029 = vmatprep.mubr.f32.mxu0 0.0
        %4030 = vmatmul.mubr.f32.gmra.mrb[0].mxu0 %v3956
        %v4031 = vpop.f32.mrb[0].mxu0
        %v4032 = vadd.f32 0.0, %v4031
        %v4033 = vpop.f32.mrb[0].mxu0
        %4034 = vdwg.mxu0
        %v4035 = vadd.f32 %v3617, %v4027
        %v4036 = vadd.f32 %v3618, %v4032
        %v4037 = vlaneseq
        %v4038 = vshrl.u32 %v4037, 7
        %v4039 = vsub.s32 1, %v4038
        %v4040 = vrot.slane %v604, %v4039
        %v4041 = vadd.f32 %v4035, %v4040
        %v4042 = vadd.f32 %v4036, %v4040
        %v4043 = vadd.f32 %v602, %v4041
        %v4044 = vadd.f32 %v603, %v4042
        %v4045 = vsel %vm519, %v4043, 0.0
        %4046 = vadd.xlane.f32.xlu0 %v4045
        %v4047 = vpop.xlane.xlu0 %4046
        %v4048 = vsel %vm519, %v4044, 0.0
        %4049 = vadd.xlane.f32.xlu0 %v4048
        %v4050 = vpop.xlane.xlu0 %4049
        %v4051 = vrcp.pop 32.0
        %v4052 = vmul.f32 %v4047, %v4051
        %v4053 = vmul.f32 %v4050, %v4051
        %v4054 = vsub.f32 %v4043, %v4052
        %v4055 = vsub.f32 %v4044, %v4053
        %v4056 = vmul.f32 %v4054, %v4054
        %v4057 = vmul.f32 %v4055, %v4055
        %v4058 = vsel %vm519, %v4056, 0.0
        %4059 = vadd.xlane.f32.xlu0 %v4058
        %v4060 = vpop.xlane.xlu0 %4059
        %v4061 = vsel %vm519, %v4057, 0.0
        %4062 = vadd.xlane.f32.xlu0 %v4061
        %v4063 = vpop.xlane.xlu0 %4062
        %v4064 = vmul.f32 %v4060, %v4051
        %v4065 = vmul.f32 %v4063, %v4051
        %v4066 = vadd.f32 %v4064, 1e-05
        %v4067 = vadd.f32 %v4065, 1e-05
        %v4068 = vrsqrt.pop %v4066
        %v4069 = vrsqrt.pop %v4067
        %v4070 = vmul.f32 %v4054, %v4068
        %v4071 = vmul.f32 %v4055, %v4069
        %v4072 = vlaneseq
        %v4073 = vshrl.u32 %v4072, 7
        %v4074 = vsub.s32 4, %v4073
        %v4075 = vrot.slane %v604, %v4074
        %v4076 = vmul.f32 %v4070, %v4075
        %v4077 = vmul.f32 %v4071, %v4075
        %v4078 = vlaneseq
        %v4079 = vshrl.u32 %v4078, 7
        %v4080 = vsub.s32 5, %v4079
        %v4081 = vrot.slane %v604, %v4080
        %v4082 = vadd.f32 %v4076, %v4081
        %v4083 = vadd.f32 %v4077, %v4081
        %v4084 = vld [vmem:[%s8] sm:$0xff]
        %v4085 = vld [vmem:[%s8 + $0x8] sm:$0xff]
        %v4086 = vld [vmem:[%s8 + $0x10] sm:$0xff]
        %v4087 = vld [vmem:[%s8 + $0x18] sm:$0xff]
        %v4088 = vlaneseq
        %v4089 = vshrl.u32 %v4088, 7
        %v4090 = vsub.s32 2, %v4089
        %v4091 = vrot.slane %v604, %v4090
        %v4093 = vsel %vm519, %v4082, 0
        %v4096 = vsel %vm519, %v4083, 0
        %4098 = vmatprep.subr.mxu0 0.0
        %4099 = vmatpush1.msra.mxu0 %v4084
        %4100 = vmatprep.subr.mxu0 0.0
        %4101 = vmatpush1.msra.mxu0 %v4085
        %4102 = vmatprep.subr.mxu0 0.0
        %4103 = vmatpush1.msra.mxu0 %v4086
        %4104 = vmatprep.subr.mxu0 0.0
        %4105 = vmatpush1.msra.mxu0 %v4087
        %4106 = vmatprep.subr.mxu0 0.0
        %4107 = vmatpush1.msra.mxu0 0.0
        %4108 = vmatprep.subr.mxu0 0.0
        %4109 = vmatpush1.msra.mxu0 0.0
        %4110 = vmatprep.subr.mxu0 0.0
        %4111 = vmatpush1.msra.mxu0 0.0
        %4112 = vmatprep.subr.mxu0 0.0
        %4113 = vmatpush1.msra.mxu0 0.0
        %4114 = vmatprep.subr.mxu0 0.0
        %4115 = vmatpush1.msra.mxu0 0.0
        %4116 = vmatprep.subr.mxu0 0.0
        %4117 = vmatpush1.msra.mxu0 0.0
        %4118 = vmatprep.subr.mxu0 0.0
        %4119 = vmatpush1.msra.mxu0 0.0
        %4120 = vmatprep.subr.mxu0 0.0
        %4121 = vmatpush1.msra.mxu0 0.0
        %4122 = vmatprep.subr.mxu0 0.0
        %4123 = vmatpush1.msra.mxu0 0.0
        %4124 = vmatprep.subr.mxu0 0.0
        %4125 = vmatpush1.msra.mxu0 0.0
        %4126 = vmatprep.subr.mxu0 0.0
        %4127 = vmatpush1.msra.mxu0 0.0
        %4128 = vmatprep.subr.mxu0 0.0
        %4129 = vmatpush1.msra.mxu0 0.0
        %4130 = vmatprep.subr.mxu0 0.0
        %4131 = vmatpush1.msra.mxu0 0.0
        %4132 = vmatprep.subr.mxu0 0.0
        %4133 = vmatpush1.msra.mxu0 0.0
        %4134 = vmatprep.subr.mxu0 0.0
        %4135 = vmatpush1.msra.mxu0 0.0
        %4136 = vmatprep.subr.mxu0 0.0
        %4137 = vmatpush1.msra.mxu0 0.0
        %4138 = vmatprep.subr.mxu0 0.0
        %4139 = vmatpush1.msra.mxu0 0.0
        %4140 = vmatprep.subr.mxu0 0.0
        %4141 = vmatpush1.msra.mxu0 0.0
        %4142 = vmatprep.subr.mxu0 0.0
        %4143 = vmatpush1.msra.mxu0 0.0
        %4144 = vmatprep.subr.mxu0 0.0
        %4145 = vmatpush1.msra.mxu0 0.0
        %4146 = vmatprep.subr.mxu0 0.0
        %4147 = vmatpush1.msra.mxu0 0.0
        %4148 = vmatprep.subr.mxu0 0.0
        %4149 = vmatpush1.msra.mxu0 0.0
        %4150 = vmatprep.subr.mxu0 0.0
        %4151 = vmatpush1.msra.mxu0 0.0
        %4152 = vmatprep.subr.mxu0 0.0
        %4153 = vmatpush1.msra.mxu0 0.0
        %4154 = vmatprep.subr.mxu0 0.0
        %4155 = vmatpush1.msra.mxu0 0.0
        %4156 = vmatprep.subr.mxu0 0.0
        %4157 = vmatpush1.msra.mxu0 0.0
        %4158 = vmatprep.subr.mxu0 0.0
        %4159 = vmatpush1.msra.mxu0 0.0
        %4160 = vmatprep.subr.mxu0 0.0
        %4161 = vmatpush1.msra.mxu0 0.0
        %4162 = vmatprep.mubr.f32.mxu0 0.0
        %4163 = vmatmul.mubr.f32.gmra.mrb[0].mxu0 %v4093
        %v4164 = vpop.f32.mrb[0].mxu0
        %v4165 = vadd.f32 %v4091, %v4164
        %v4166 = vpop.f32.mrb[0].mxu0
        %4167 = vmatprep.mubr.f32.mxu0 0.0
        %4168 = vmatmul.mubr.f32.gmra.mrb[0].mxu0 %v4096
        %v4169 = vpop.f32.mrb[0].mxu0
        %v4170 = vadd.f32 %v4091, %v4169
        %v4171 = vpop.f32.mrb[0].mxu0
        %4172 = vdwg.mxu0
        %v4173 = vmax.f32 %v4165, 0.0
        %v4174 = vmax.f32 %v4170, 0.0
        %v4175 = vld [vmem:[%s9] sm:$0xff]
        %v4176 = vld [vmem:[%s9 + $0x8] sm:$0xff]
        %v4177 = vld [vmem:[%s9 + $0x10] sm:$0xff]
        %v4178 = vld [vmem:[%s9 + $0x18] sm:$0xff]
        %v4179 = vld [vmem:[%s9 + $0x20] sm:$0xff]
        %v4180 = vld [vmem:[%s9 + $0x28] sm:$0xff]
        %v4181 = vld [vmem:[%s9 + $0x30] sm:$0xff]
        %v4182 = vld [vmem:[%s9 + $0x38] sm:$0xff]
        %v4183 = vlaneseq
        %v4184 = vshrl.u32 %v4183, 7
        %v4185 = vsub.s32 3, %v4184
        %v4186 = vrot.slane %v604, %v4185
        %vm4187 = vcmask 523264
        %v4189 = vsel %vm4187, %v4173, 0
        %v4192 = vsel %vm4187, %v4174, 0
        %4194 = vmatprep.subr.mxu0 0.0
        %4195 = vmatpush1.msra.mxu0 %v4175
        %4196 = vmatprep.subr.mxu0 0.0
        %4197 = vmatpush1.msra.mxu0 %v4176
        %4198 = vmatprep.subr.mxu0 0.0
        %4199 = vmatpush1.msra.mxu0 %v4177
        %4200 = vmatprep.subr.mxu0 0.0
        %4201 = vmatpush1.msra.mxu0 %v4178
        %4202 = vmatprep.subr.mxu0 0.0
        %4203 = vmatpush1.msra.mxu0 %v4179
        %4204 = vmatprep.subr.mxu0 0.0
        %4205 = vmatpush1.msra.mxu0 %v4180
        %4206 = vmatprep.subr.mxu0 0.0
        %4207 = vmatpush1.msra.mxu0 %v4181
        %4208 = vmatprep.subr.mxu0 0.0
        %4209 = vmatpush1.msra.mxu0 %v4182
        %4210 = vmatprep.subr.mxu0 0.0
        %4211 = vmatpush1.msra.mxu0 0.0
        %4212 = vmatprep.subr.mxu0 0.0
        %4213 = vmatpush1.msra.mxu0 0.0
        %4214 = vmatprep.subr.mxu0 0.0
        %4215 = vmatpush1.msra.mxu0 0.0
        %4216 = vmatprep.subr.mxu0 0.0
        %4217 = vmatpush1.msra.mxu0 0.0
        %4218 = vmatprep.subr.mxu0 0.0
        %4219 = vmatpush1.msra.mxu0 0.0
        %4220 = vmatprep.subr.mxu0 0.0
        %4221 = vmatpush1.msra.mxu0 0.0
        %4222 = vmatprep.subr.mxu0 0.0
        %4223 = vmatpush1.msra.mxu0 0.0
        %4224 = vmatprep.subr.mxu0 0.0
        %4225 = vmatpush1.msra.mxu0 0.0
        %4226 = vmatprep.subr.mxu0 0.0
        %4227 = vmatpush1.msra.mxu0 0.0
        %4228 = vmatprep.subr.mxu0 0.0
        %4229 = vmatpush1.msra.mxu0 0.0
        %4230 = vmatprep.subr.mxu0 0.0
        %4231 = vmatpush1.msra.mxu0 0.0
        %4232 = vmatprep.subr.mxu0 0.0
        %4233 = vmatpush1.msra.mxu0 0.0
        %4234 = vmatprep.subr.mxu0 0.0
        %4235 = vmatpush1.msra.mxu0 0.0
        %4236 = vmatprep.subr.mxu0 0.0
        %4237 = vmatpush1.msra.mxu0 0.0
        %4238 = vmatprep.subr.mxu0 0.0
        %4239 = vmatpush1.msra.mxu0 0.0
        %4240 = vmatprep.subr.mxu0 0.0
        %4241 = vmatpush1.msra.mxu0 0.0
        %4242 = vmatprep.subr.mxu0 0.0
        %4243 = vmatpush1.msra.mxu0 0.0
        %4244 = vmatprep.subr.mxu0 0.0
        %4245 = vmatpush1.msra.mxu0 0.0
        %4246 = vmatprep.subr.mxu0 0.0
        %4247 = vmatpush1.msra.mxu0 0.0
        %4248 = vmatprep.subr.mxu0 0.0
        %4249 = vmatpush1.msra.mxu0 0.0
        %4250 = vmatprep.subr.mxu0 0.0
        %4251 = vmatpush1.msra.mxu0 0.0
        %4252 = vmatprep.subr.mxu0 0.0
        %4253 = vmatpush1.msra.mxu0 0.0
        %4254 = vmatprep.subr.mxu0 0.0
        %4255 = vmatpush1.msra.mxu0 0.0
        %4256 = vmatprep.subr.mxu0 0.0
        %4257 = vmatpush1.msra.mxu0 0.0
        %4258 = vmatprep.mubr.f32.mxu0 0.0
        %4259 = vmatmul.mubr.f32.gmra.mrb[0].mxu0 %v4189
        %v4260 = vpop.f32.mrb[0].mxu0
        %v4261 = vadd.f32 %v4186, %v4260
        %v4262 = vpop.f32.mrb[0].mxu0
        %4263 = vmatprep.mubr.f32.mxu0 0.0
        %4264 = vmatmul.mubr.f32.gmra.mrb[0].mxu0 %v4192
        %v4265 = vpop.f32.mrb[0].mxu0
        %v4266 = vadd.f32 %v4186, %v4265
        %v4267 = vpop.f32.mrb[0].mxu0
        %4268 = vdwg.mxu0
        %v4269 = vadd.f32 %v4082, %v4261
        %v4270 = vadd.f32 %v4083, %v4266
        %v4271 = vsel %vm519, %v4269, 0.0
        %4272 = vadd.xlane.f32.xlu0 %v4271
        %v4273 = vpop.xlane.xlu0 %4272
        %v4274 = vsel %vm519, %v4270, 0.0
        %4275 = vadd.xlane.f32.xlu0 %v4274
        %v4276 = vpop.xlane.xlu0 %4275
        %v4277 = vmul.f32 %v4273, %v4051
        %v4278 = vmul.f32 %v4276, %v4051
        %v4279 = vsub.f32 %v4269, %v4277
        %v4280 = vsub.f32 %v4270, %v4278
        %v4281 = vmul.f32 %v4279, %v4279
        %v4282 = vmul.f32 %v4280, %v4280
        %v4283 = vsel %vm519, %v4281, 0.0
        %4284 = vadd.xlane.f32.xlu0 %v4283
        %v4285 = vpop.xlane.xlu0 %4284
        %v4286 = vsel %vm519, %v4282, 0.0
        %4287 = vadd.xlane.f32.xlu0 %v4286
        %v4288 = vpop.xlane.xlu0 %4287
        %v4289 = vmul.f32 %v4285, %v4051
        %v4290 = vmul.f32 %v4288, %v4051
        %v4291 = vadd.f32 %v4289, 1e-05
        %v4292 = vadd.f32 %v4290, 1e-05
        %v4293 = vrsqrt.pop %v4291
        %v4294 = vrsqrt.pop %v4292
        %v4295 = vmul.f32 %v4279, %v4293
        %v4296 = vmul.f32 %v4280, %v4294
        %v4297 = vlaneseq
        %v4298 = vshrl.u32 %v4297, 7
        %v4299 = vsub.s32 6, %v4298
        %v4300 = vrot.slane %v604, %v4299
        %v4301 = vmul.f32 %v4295, %v4300
        %v4302 = vmul.f32 %v4296, %v4300
        %v4303 = vlaneseq
        %v4304 = vshrl.u32 %v4303, 7
        %v4305 = vsub.s32 7, %v4304
        %v4306 = vrot.slane %v604, %v4305
        %v4307 = vadd.f32 %v4301, %v4306
        %v4308 = vadd.f32 %v4302, %v4306
        %s4309 = scalar_lea.vmem %s10, 8
        %v4310 = vld [vmem:[%s4309] sm:$0xff]
        %s4311 = scalar_lea.vmem %s6, 32
        %v4312 = vld [vmem:[%s4311] sm:$0xff]
        %v4313 = vld [vmem:[%s4311 + $0x8] sm:$0xff]
        %v4314 = vld [vmem:[%s4311 + $0x10] sm:$0xff]
        %v4315 = vld [vmem:[%s4311 + $0x18] sm:$0xff]
        %s4316 = scalar_lea.vmem %s7, 32
        %v4317 = vld [vmem:[%s4316] sm:$0xff]
        %v4318 = vld [vmem:[%s4316 + $0x8] sm:$0xff]
        %v4319 = vld [vmem:[%s4316 + $0x10] sm:$0xff]
        %v4320 = vld [vmem:[%s4316 + $0x18] sm:$0xff]
        %v4321 = vlaneseq
        %v4322 = vshrl.u32 %v4321, 7
        %v4323 = vsub.s32 0, %v4322
        %v4324 = vrot.slane %v4310, %v4323
        %v4326 = vsel %vm519, %v4307, 0
        %v4329 = vsel %vm519, %v4308, 0
        %4331 = vmatprep.subr.mxu0 0.0
        %4332 = vmatpush1.msra.mxu0 %v4312
        %4333 = vmatprep.subr.mxu0 0.0
        %4334 = vmatpush1.msra.mxu0 %v4313
        %4335 = vmatprep.subr.mxu0 0.0
        %4336 = vmatpush1.msra.mxu0 %v4314
        %4337 = vmatprep.subr.mxu0 0.0
        %4338 = vmatpush1.msra.mxu0 %v4315
        %4339 = vmatprep.subr.mxu0 0.0
        %4340 = vmatpush1.msra.mxu0 0.0
        %4341 = vmatprep.subr.mxu0 0.0
        %4342 = vmatpush1.msra.mxu0 0.0
        %4343 = vmatprep.subr.mxu0 0.0
        %4344 = vmatpush1.msra.mxu0 0.0
        %4345 = vmatprep.subr.mxu0 0.0
        %4346 = vmatpush1.msra.mxu0 0.0
        %4347 = vmatprep.subr.mxu0 0.0
        %4348 = vmatpush1.msra.mxu0 0.0
        %4349 = vmatprep.subr.mxu0 0.0
        %4350 = vmatpush1.msra.mxu0 0.0
        %4351 = vmatprep.subr.mxu0 0.0
        %4352 = vmatpush1.msra.mxu0 0.0
        %4353 = vmatprep.subr.mxu0 0.0
        %4354 = vmatpush1.msra.mxu0 0.0
        %4355 = vmatprep.subr.mxu0 0.0
        %4356 = vmatpush1.msra.mxu0 0.0
        %4357 = vmatprep.subr.mxu0 0.0
        %4358 = vmatpush1.msra.mxu0 0.0
        %4359 = vmatprep.subr.mxu0 0.0
        %4360 = vmatpush1.msra.mxu0 0.0
        %4361 = vmatprep.subr.mxu0 0.0
        %4362 = vmatpush1.msra.mxu0 0.0
        %4363 = vmatprep.subr.mxu0 0.0
        %4364 = vmatpush1.msra.mxu0 0.0
        %4365 = vmatprep.subr.mxu0 0.0
        %4366 = vmatpush1.msra.mxu0 0.0
        %4367 = vmatprep.subr.mxu0 0.0
        %4368 = vmatpush1.msra.mxu0 0.0
        %4369 = vmatprep.subr.mxu0 0.0
        %4370 = vmatpush1.msra.mxu0 0.0
        %4371 = vmatprep.subr.mxu0 0.0
        %4372 = vmatpush1.msra.mxu0 0.0
        %4373 = vmatprep.subr.mxu0 0.0
        %4374 = vmatpush1.msra.mxu0 0.0
        %4375 = vmatprep.subr.mxu0 0.0
        %4376 = vmatpush1.msra.mxu0 0.0
        %4377 = vmatprep.subr.mxu0 0.0
        %4378 = vmatpush1.msra.mxu0 0.0
        %4379 = vmatprep.subr.mxu0 0.0
        %4380 = vmatpush1.msra.mxu0 0.0
        %4381 = vmatprep.subr.mxu0 0.0
        %4382 = vmatpush1.msra.mxu0 0.0
        %4383 = vmatprep.subr.mxu0 0.0
        %4384 = vmatpush1.msra.mxu0 0.0
        %4385 = vmatprep.subr.mxu0 0.0
        %4386 = vmatpush1.msra.mxu0 0.0
        %4387 = vmatprep.subr.mxu0 0.0
        %4388 = vmatpush1.msra.mxu0 0.0
        %4389 = vmatprep.subr.mxu0 0.0
        %4390 = vmatpush1.msra.mxu0 0.0
        %4391 = vmatprep.subr.mxu0 0.0
        %4392 = vmatpush1.msra.mxu0 0.0
        %4393 = vmatprep.subr.mxu0 0.0
        %4394 = vmatpush1.msra.mxu0 0.0
        %4395 = vmatprep.mubr.f32.mxu0 0.0
        %4396 = vmatmul.mubr.f32.gmra.mrb[0].mxu0 %v4326
        %v4397 = vpop.f32.mrb[0].mxu0
        %v4398 = vadd.f32 %v4324, %v4397
        %v4399 = vpop.f32.mrb[0].mxu0
        %4400 = vmatprep.mubr.f32.mxu0 0.0
        %4401 = vmatmul.mubr.f32.gmra.mrb[0].mxu0 %v4329
        %v4402 = vpop.f32.mrb[0].mxu0
        %v4403 = vadd.f32 %v4324, %v4402
        %v4404 = vpop.f32.mrb[0].mxu0
        %4405 = vdwg.mxu0
        %4407 = vrot.lane.b32.xlu0 %v4398, 96
        %v4408 = vpop.permute.xlu0 %4407
        %v4409 = vsel %vm423, %v4398, 0
        %v4411 = vsel %vm423, %v4408, 0
        %4413 = vmatprep.subr.mxu0 0.0
        %4414 = vmatpush1.xpose.msra.mxu0 %v4411
        %4415 = vmatprep.subr.mxu0 0.0
        %4416 = vmatpush1.xpose.msra.mxu0 0.0
        %4417 = vmatprep.subr.mxu0 0.0
        %4418 = vmatpush1.xpose.msra.mxu0 0.0
        %4419 = vmatprep.subr.mxu0 0.0
        %4420 = vmatpush1.xpose.msra.mxu0 0.0
        %4421 = vmatprep.subr.mxu0 0.0
        %4422 = vmatpush1.xpose.msra.mxu0 0.0
        %4423 = vmatprep.subr.mxu0 0.0
        %4424 = vmatpush1.xpose.msra.mxu0 0.0
        %4425 = vmatprep.subr.mxu0 0.0
        %4426 = vmatpush1.xpose.msra.mxu0 0.0
        %4427 = vmatprep.subr.mxu0 0.0
        %4428 = vmatpush1.xpose.msra.mxu0 0.0
        %4429 = vmatprep.subr.mxu0 0.0
        %4430 = vmatpush1.xpose.msra.mxu0 0.0
        %4431 = vmatprep.subr.mxu0 0.0
        %4432 = vmatpush1.xpose.msra.mxu0 0.0
        %4433 = vmatprep.subr.mxu0 0.0
        %4434 = vmatpush1.xpose.msra.mxu0 0.0
        %4435 = vmatprep.subr.mxu0 0.0
        %4436 = vmatpush1.xpose.msra.mxu0 0.0
        %4437 = vmatprep.subr.mxu0 0.0
        %4438 = vmatpush1.xpose.msra.mxu0 0.0
        %4439 = vmatprep.subr.mxu0 0.0
        %4440 = vmatpush1.xpose.msra.mxu0 0.0
        %4441 = vmatprep.subr.mxu0 0.0
        %4442 = vmatpush1.xpose.msra.mxu0 0.0
        %4443 = vmatprep.subr.mxu0 0.0
        %4444 = vmatpush1.xpose.msra.mxu0 0.0
        %4445 = vmatprep.subr.mxu0 0.0
        %4446 = vmatpush1.xpose.msra.mxu0 0.0
        %4447 = vmatprep.subr.mxu0 0.0
        %4448 = vmatpush1.xpose.msra.mxu0 0.0
        %4449 = vmatprep.subr.mxu0 0.0
        %4450 = vmatpush1.xpose.msra.mxu0 0.0
        %4451 = vmatprep.subr.mxu0 0.0
        %4452 = vmatpush1.xpose.msra.mxu0 0.0
        %4453 = vmatprep.subr.mxu0 0.0
        %4454 = vmatpush1.xpose.msra.mxu0 0.0
        %4455 = vmatprep.subr.mxu0 0.0
        %4456 = vmatpush1.xpose.msra.mxu0 0.0
        %4457 = vmatprep.subr.mxu0 0.0
        %4458 = vmatpush1.xpose.msra.mxu0 0.0
        %4459 = vmatprep.subr.mxu0 0.0
        %4460 = vmatpush1.xpose.msra.mxu0 0.0
        %4461 = vmatprep.subr.mxu0 0.0
        %4462 = vmatpush1.xpose.msra.mxu0 0.0
        %4463 = vmatprep.subr.mxu0 0.0
        %4464 = vmatpush1.xpose.msra.mxu0 0.0
        %4465 = vmatprep.subr.mxu0 0.0
        %4466 = vmatpush1.xpose.msra.mxu0 0.0
        %4467 = vmatprep.subr.mxu0 0.0
        %4468 = vmatpush1.xpose.msra.mxu0 0.0
        %4469 = vmatprep.subr.mxu0 0.0
        %4470 = vmatpush1.xpose.msra.mxu0 0.0
        %4471 = vmatprep.subr.mxu0 0.0
        %4472 = vmatpush1.xpose.msra.mxu0 0.0
        %4473 = vmatprep.subr.mxu0 0.0
        %4474 = vmatpush1.xpose.msra.mxu0 0.0
        %4475 = vmatprep.subr.mxu0 0.0
        %4476 = vmatpush1.xpose.msra.mxu0 0.0
        %4477 = vmatprep.mubr.f32.mxu0 0.0
        %4478 = vmatmul.mubr.f32.gmra.mrb[0].mxu0 %v4409
        %v4479 = vpop.f32.mrb[0].mxu0
        %v4480 = vadd.f32 0.0, %v4479
        %v4481 = vpop.f32.mrb[0].mxu0
        %4482 = vdwg.mxu0
        %4484 = vrot.lane.b32.xlu0 %v4403, 96
        %v4485 = vpop.permute.xlu0 %4484
        %v4486 = vsel %vm423, %v4403, 0
        %v4488 = vsel %vm423, %v4485, 0
        %4490 = vmatprep.subr.mxu0 0.0
        %4491 = vmatpush1.xpose.msra.mxu0 %v4488
        %4492 = vmatprep.subr.mxu0 0.0
        %4493 = vmatpush1.xpose.msra.mxu0 0.0
        %4494 = vmatprep.subr.mxu0 0.0
        %4495 = vmatpush1.xpose.msra.mxu0 0.0
        %4496 = vmatprep.subr.mxu0 0.0
        %4497 = vmatpush1.xpose.msra.mxu0 0.0
        %4498 = vmatprep.subr.mxu0 0.0
        %4499 = vmatpush1.xpose.msra.mxu0 0.0
        %4500 = vmatprep.subr.mxu0 0.0
        %4501 = vmatpush1.xpose.msra.mxu0 0.0
        %4502 = vmatprep.subr.mxu0 0.0
        %4503 = vmatpush1.xpose.msra.mxu0 0.0
        %4504 = vmatprep.subr.mxu0 0.0
        %4505 = vmatpush1.xpose.msra.mxu0 0.0
        %4506 = vmatprep.subr.mxu0 0.0
        %4507 = vmatpush1.xpose.msra.mxu0 0.0
        %4508 = vmatprep.subr.mxu0 0.0
        %4509 = vmatpush1.xpose.msra.mxu0 0.0
        %4510 = vmatprep.subr.mxu0 0.0
        %4511 = vmatpush1.xpose.msra.mxu0 0.0
        %4512 = vmatprep.subr.mxu0 0.0
        %4513 = vmatpush1.xpose.msra.mxu0 0.0
        %4514 = vmatprep.subr.mxu0 0.0
        %4515 = vmatpush1.xpose.msra.mxu0 0.0
        %4516 = vmatprep.subr.mxu0 0.0
        %4517 = vmatpush1.xpose.msra.mxu0 0.0
        %4518 = vmatprep.subr.mxu0 0.0
        %4519 = vmatpush1.xpose.msra.mxu0 0.0
        %4520 = vmatprep.subr.mxu0 0.0
        %4521 = vmatpush1.xpose.msra.mxu0 0.0
        %4522 = vmatprep.subr.mxu0 0.0
        %4523 = vmatpush1.xpose.msra.mxu0 0.0
        %4524 = vmatprep.subr.mxu0 0.0
        %4525 = vmatpush1.xpose.msra.mxu0 0.0
        %4526 = vmatprep.subr.mxu0 0.0
        %4527 = vmatpush1.xpose.msra.mxu0 0.0
        %4528 = vmatprep.subr.mxu0 0.0
        %4529 = vmatpush1.xpose.msra.mxu0 0.0
        %4530 = vmatprep.subr.mxu0 0.0
        %4531 = vmatpush1.xpose.msra.mxu0 0.0
        %4532 = vmatprep.subr.mxu0 0.0
        %4533 = vmatpush1.xpose.msra.mxu0 0.0
        %4534 = vmatprep.subr.mxu0 0.0
        %4535 = vmatpush1.xpose.msra.mxu0 0.0
        %4536 = vmatprep.subr.mxu0 0.0
        %4537 = vmatpush1.xpose.msra.mxu0 0.0
        %4538 = vmatprep.subr.mxu0 0.0
        %4539 = vmatpush1.xpose.msra.mxu0 0.0
        %4540 = vmatprep.subr.mxu0 0.0
        %4541 = vmatpush1.xpose.msra.mxu0 0.0
        %4542 = vmatprep.subr.mxu0 0.0
        %4543 = vmatpush1.xpose.msra.mxu0 0.0
        %4544 = vmatprep.subr.mxu0 0.0
        %4545 = vmatpush1.xpose.msra.mxu0 0.0
        %4546 = vmatprep.subr.mxu0 0.0
        %4547 = vmatpush1.xpose.msra.mxu0 0.0
        %4548 = vmatprep.subr.mxu0 0.0
        %4549 = vmatpush1.xpose.msra.mxu0 0.0
        %4550 = vmatprep.subr.mxu0 0.0
        %4551 = vmatpush1.xpose.msra.mxu0 0.0
        %4552 = vmatprep.subr.mxu0 0.0
        %4553 = vmatpush1.xpose.msra.mxu0 0.0
        %4554 = vmatprep.mubr.f32.mxu0 0.0
        %4555 = vmatmul.mubr.f32.gmra.mrb[0].mxu0 %v4486
        %v4556 = vpop.f32.mrb[0].mxu0
        %v4557 = vadd.f32 0.0, %v4556
        %v4558 = vpop.f32.mrb[0].mxu0
        %4559 = vdwg.mxu0
        %v4560 = vmul.f32 %v4480, 0.5
        %v4561 = vmul.f32 %v4557, 0.5
        %v4562 = vsel %vm854, %v4560, -inf
        %4563 = vmax.xlane.f32.xlu0 %v4562
        %v4564 = vpop.xlane.xlu0 %4563
        %v4565 = vsel %vm854, %v4561, -inf
        %4566 = vmax.xlane.f32.xlu0 %v4565
        %v4567 = vpop.xlane.xlu0 %4566
        %v4568 = vsub.f32 %v4560, %v4564
        %v4569 = vsub.f32 %v4561, %v4567
        %v4570 = vmul.f32 %v4568, 1.442695
        %v4571 = vpow.pop %v4570
        %v4572 = vmul.f32 %v4569, 1.442695
        %v4573 = vpow.pop %v4572
        %v4574 = vsel %vm854, %v4571, 0.0
        %4575 = vadd.xlane.f32.xlu0 %v4574
        %v4576 = vpop.xlane.xlu0 %4575
        %v4577 = vsel %vm854, %v4573, 0.0
        %4578 = vadd.xlane.f32.xlu0 %v4577
        %v4579 = vpop.xlane.xlu0 %4578
        %v4580 = vrcp.pop %v4576
        %v4581 = vrcp.pop %v4579
        %v4582 = vmul.f32 %v4571, %v4580
        %v4583 = vmul.f32 %v4573, %v4581
        %4584 = vrot.lane.b32.xlu0 %v4398, 64
        %v4585 = vpop.permute.xlu0 %4584
        %v4588 = vsel %vm854, %v4582, 0
        %4590 = vmatprep.subr.mxu0 0.0
        %4591 = vmatpush1.msra.mxu0 %v4585
        %4592 = vmatprep.subr.mxu0 0.0
        %4593 = vmatpush1.msra.mxu0 0.0
        %4594 = vmatprep.subr.mxu0 0.0
        %4595 = vmatpush1.msra.mxu0 0.0
        %4596 = vmatprep.subr.mxu0 0.0
        %4597 = vmatpush1.msra.mxu0 0.0
        %4598 = vmatprep.subr.mxu0 0.0
        %4599 = vmatpush1.msra.mxu0 0.0
        %4600 = vmatprep.subr.mxu0 0.0
        %4601 = vmatpush1.msra.mxu0 0.0
        %4602 = vmatprep.subr.mxu0 0.0
        %4603 = vmatpush1.msra.mxu0 0.0
        %4604 = vmatprep.subr.mxu0 0.0
        %4605 = vmatpush1.msra.mxu0 0.0
        %4606 = vmatprep.subr.mxu0 0.0
        %4607 = vmatpush1.msra.mxu0 0.0
        %4608 = vmatprep.subr.mxu0 0.0
        %4609 = vmatpush1.msra.mxu0 0.0
        %4610 = vmatprep.subr.mxu0 0.0
        %4611 = vmatpush1.msra.mxu0 0.0
        %4612 = vmatprep.subr.mxu0 0.0
        %4613 = vmatpush1.msra.mxu0 0.0
        %4614 = vmatprep.subr.mxu0 0.0
        %4615 = vmatpush1.msra.mxu0 0.0
        %4616 = vmatprep.subr.mxu0 0.0
        %4617 = vmatpush1.msra.mxu0 0.0
        %4618 = vmatprep.subr.mxu0 0.0
        %4619 = vmatpush1.msra.mxu0 0.0
        %4620 = vmatprep.subr.mxu0 0.0
        %4621 = vmatpush1.msra.mxu0 0.0
        %4622 = vmatprep.subr.mxu0 0.0
        %4623 = vmatpush1.msra.mxu0 0.0
        %4624 = vmatprep.subr.mxu0 0.0
        %4625 = vmatpush1.msra.mxu0 0.0
        %4626 = vmatprep.subr.mxu0 0.0
        %4627 = vmatpush1.msra.mxu0 0.0
        %4628 = vmatprep.subr.mxu0 0.0
        %4629 = vmatpush1.msra.mxu0 0.0
        %4630 = vmatprep.subr.mxu0 0.0
        %4631 = vmatpush1.msra.mxu0 0.0
        %4632 = vmatprep.subr.mxu0 0.0
        %4633 = vmatpush1.msra.mxu0 0.0
        %4634 = vmatprep.subr.mxu0 0.0
        %4635 = vmatpush1.msra.mxu0 0.0
        %4636 = vmatprep.subr.mxu0 0.0
        %4637 = vmatpush1.msra.mxu0 0.0
        %4638 = vmatprep.subr.mxu0 0.0
        %4639 = vmatpush1.msra.mxu0 0.0
        %4640 = vmatprep.subr.mxu0 0.0
        %4641 = vmatpush1.msra.mxu0 0.0
        %4642 = vmatprep.subr.mxu0 0.0
        %4643 = vmatpush1.msra.mxu0 0.0
        %4644 = vmatprep.subr.mxu0 0.0
        %4645 = vmatpush1.msra.mxu0 0.0
        %4646 = vmatprep.subr.mxu0 0.0
        %4647 = vmatpush1.msra.mxu0 0.0
        %4648 = vmatprep.subr.mxu0 0.0
        %4649 = vmatpush1.msra.mxu0 0.0
        %4650 = vmatprep.subr.mxu0 0.0
        %4651 = vmatpush1.msra.mxu0 0.0
        %4652 = vmatprep.subr.mxu0 0.0
        %4653 = vmatpush1.msra.mxu0 0.0
        %4654 = vmatprep.mubr.f32.mxu0 0.0
        %4655 = vmatmul.mubr.f32.gmra.mrb[0].mxu0 %v4588
        %v4656 = vpop.f32.mrb[0].mxu0
        %v4657 = vadd.f32 0.0, %v4656
        %v4658 = vpop.f32.mrb[0].mxu0
        %4659 = vdwg.mxu0
        %4660 = vrot.lane.b32.xlu0 %v4403, 64
        %v4661 = vpop.permute.xlu0 %4660
        %v4664 = vsel %vm854, %v4583, 0
        %4666 = vmatprep.subr.mxu0 0.0
        %4667 = vmatpush1.msra.mxu0 %v4661
        %4668 = vmatprep.subr.mxu0 0.0
        %4669 = vmatpush1.msra.mxu0 0.0
        %4670 = vmatprep.subr.mxu0 0.0
        %4671 = vmatpush1.msra.mxu0 0.0
        %4672 = vmatprep.subr.mxu0 0.0
        %4673 = vmatpush1.msra.mxu0 0.0
        %4674 = vmatprep.subr.mxu0 0.0
        %4675 = vmatpush1.msra.mxu0 0.0
        %4676 = vmatprep.subr.mxu0 0.0
        %4677 = vmatpush1.msra.mxu0 0.0
        %4678 = vmatprep.subr.mxu0 0.0
        %4679 = vmatpush1.msra.mxu0 0.0
        %4680 = vmatprep.subr.mxu0 0.0
        %4681 = vmatpush1.msra.mxu0 0.0
        %4682 = vmatprep.subr.mxu0 0.0
        %4683 = vmatpush1.msra.mxu0 0.0
        %4684 = vmatprep.subr.mxu0 0.0
        %4685 = vmatpush1.msra.mxu0 0.0
        %4686 = vmatprep.subr.mxu0 0.0
        %4687 = vmatpush1.msra.mxu0 0.0
        %4688 = vmatprep.subr.mxu0 0.0
        %4689 = vmatpush1.msra.mxu0 0.0
        %4690 = vmatprep.subr.mxu0 0.0
        %4691 = vmatpush1.msra.mxu0 0.0
        %4692 = vmatprep.subr.mxu0 0.0
        %4693 = vmatpush1.msra.mxu0 0.0
        %4694 = vmatprep.subr.mxu0 0.0
        %4695 = vmatpush1.msra.mxu0 0.0
        %4696 = vmatprep.subr.mxu0 0.0
        %4697 = vmatpush1.msra.mxu0 0.0
        %4698 = vmatprep.subr.mxu0 0.0
        %4699 = vmatpush1.msra.mxu0 0.0
        %4700 = vmatprep.subr.mxu0 0.0
        %4701 = vmatpush1.msra.mxu0 0.0
        %4702 = vmatprep.subr.mxu0 0.0
        %4703 = vmatpush1.msra.mxu0 0.0
        %4704 = vmatprep.subr.mxu0 0.0
        %4705 = vmatpush1.msra.mxu0 0.0
        %4706 = vmatprep.subr.mxu0 0.0
        %4707 = vmatpush1.msra.mxu0 0.0
        %4708 = vmatprep.subr.mxu0 0.0
        %4709 = vmatpush1.msra.mxu0 0.0
        %4710 = vmatprep.subr.mxu0 0.0
        %4711 = vmatpush1.msra.mxu0 0.0
        %4712 = vmatprep.subr.mxu0 0.0
        %4713 = vmatpush1.msra.mxu0 0.0
        %4714 = vmatprep.subr.mxu0 0.0
        %4715 = vmatpush1.msra.mxu0 0.0
        %4716 = vmatprep.subr.mxu0 0.0
        %4717 = vmatpush1.msra.mxu0 0.0
        %4718 = vmatprep.subr.mxu0 0.0
        %4719 = vmatpush1.msra.mxu0 0.0
        %4720 = vmatprep.subr.mxu0 0.0
        %4721 = vmatpush1.msra.mxu0 0.0
        %4722 = vmatprep.subr.mxu0 0.0
        %4723 = vmatpush1.msra.mxu0 0.0
        %4724 = vmatprep.subr.mxu0 0.0
        %4725 = vmatpush1.msra.mxu0 0.0
        %4726 = vmatprep.subr.mxu0 0.0
        %4727 = vmatpush1.msra.mxu0 0.0
        %4728 = vmatprep.subr.mxu0 0.0
        %4729 = vmatpush1.msra.mxu0 0.0
        %4730 = vmatprep.mubr.f32.mxu0 0.0
        %4731 = vmatmul.mubr.f32.gmra.mrb[0].mxu0 %v4664
        %v4732 = vpop.f32.mrb[0].mxu0
        %v4733 = vadd.f32 0.0, %v4732
        %v4734 = vpop.f32.mrb[0].mxu0
        %4735 = vdwg.mxu0
        %4736 = vrot.lane.b32.xlu0 %v4398, 124
        %v4737 = vpop.permute.xlu0 %4736
        %4738 = vrot.lane.b32.xlu0 %v4398, 92
        %v4739 = vpop.permute.xlu0 %4738
        %v4740 = vsel %vm423, %v4737, 0
        %v4742 = vsel %vm423, %v4739, 0
        %4744 = vmatprep.subr.mxu0 0.0
        %4745 = vmatpush1.xpose.msra.mxu0 %v4742
        %4746 = vmatprep.subr.mxu0 0.0
        %4747 = vmatpush1.xpose.msra.mxu0 0.0
        %4748 = vmatprep.subr.mxu0 0.0
        %4749 = vmatpush1.xpose.msra.mxu0 0.0
        %4750 = vmatprep.subr.mxu0 0.0
        %4751 = vmatpush1.xpose.msra.mxu0 0.0
        %4752 = vmatprep.subr.mxu0 0.0
        %4753 = vmatpush1.xpose.msra.mxu0 0.0
        %4754 = vmatprep.subr.mxu0 0.0
        %4755 = vmatpush1.xpose.msra.mxu0 0.0
        %4756 = vmatprep.subr.mxu0 0.0
        %4757 = vmatpush1.xpose.msra.mxu0 0.0
        %4758 = vmatprep.subr.mxu0 0.0
        %4759 = vmatpush1.xpose.msra.mxu0 0.0
        %4760 = vmatprep.subr.mxu0 0.0
        %4761 = vmatpush1.xpose.msra.mxu0 0.0
        %4762 = vmatprep.subr.mxu0 0.0
        %4763 = vmatpush1.xpose.msra.mxu0 0.0
        %4764 = vmatprep.subr.mxu0 0.0
        %4765 = vmatpush1.xpose.msra.mxu0 0.0
        %4766 = vmatprep.subr.mxu0 0.0
        %4767 = vmatpush1.xpose.msra.mxu0 0.0
        %4768 = vmatprep.subr.mxu0 0.0
        %4769 = vmatpush1.xpose.msra.mxu0 0.0
        %4770 = vmatprep.subr.mxu0 0.0
        %4771 = vmatpush1.xpose.msra.mxu0 0.0
        %4772 = vmatprep.subr.mxu0 0.0
        %4773 = vmatpush1.xpose.msra.mxu0 0.0
        %4774 = vmatprep.subr.mxu0 0.0
        %4775 = vmatpush1.xpose.msra.mxu0 0.0
        %4776 = vmatprep.subr.mxu0 0.0
        %4777 = vmatpush1.xpose.msra.mxu0 0.0
        %4778 = vmatprep.subr.mxu0 0.0
        %4779 = vmatpush1.xpose.msra.mxu0 0.0
        %4780 = vmatprep.subr.mxu0 0.0
        %4781 = vmatpush1.xpose.msra.mxu0 0.0
        %4782 = vmatprep.subr.mxu0 0.0
        %4783 = vmatpush1.xpose.msra.mxu0 0.0
        %4784 = vmatprep.subr.mxu0 0.0
        %4785 = vmatpush1.xpose.msra.mxu0 0.0
        %4786 = vmatprep.subr.mxu0 0.0
        %4787 = vmatpush1.xpose.msra.mxu0 0.0
        %4788 = vmatprep.subr.mxu0 0.0
        %4789 = vmatpush1.xpose.msra.mxu0 0.0
        %4790 = vmatprep.subr.mxu0 0.0
        %4791 = vmatpush1.xpose.msra.mxu0 0.0
        %4792 = vmatprep.subr.mxu0 0.0
        %4793 = vmatpush1.xpose.msra.mxu0 0.0
        %4794 = vmatprep.subr.mxu0 0.0
        %4795 = vmatpush1.xpose.msra.mxu0 0.0
        %4796 = vmatprep.subr.mxu0 0.0
        %4797 = vmatpush1.xpose.msra.mxu0 0.0
        %4798 = vmatprep.subr.mxu0 0.0
        %4799 = vmatpush1.xpose.msra.mxu0 0.0
        %4800 = vmatprep.subr.mxu0 0.0
        %4801 = vmatpush1.xpose.msra.mxu0 0.0
        %4802 = vmatprep.subr.mxu0 0.0
        %4803 = vmatpush1.xpose.msra.mxu0 0.0
        %4804 = vmatprep.subr.mxu0 0.0
        %4805 = vmatpush1.xpose.msra.mxu0 0.0
        %4806 = vmatprep.subr.mxu0 0.0
        %4807 = vmatpush1.xpose.msra.mxu0 0.0
        %4808 = vmatprep.mubr.f32.mxu0 0.0
        %4809 = vmatmul.mubr.f32.gmra.mrb[0].mxu0 %v4740
        %v4810 = vpop.f32.mrb[0].mxu0
        %v4811 = vadd.f32 0.0, %v4810
        %v4812 = vpop.f32.mrb[0].mxu0
        %4813 = vdwg.mxu0
        %4814 = vrot.lane.b32.xlu0 %v4403, 124
        %v4815 = vpop.permute.xlu0 %4814
        %4816 = vrot.lane.b32.xlu0 %v4403, 92
        %v4817 = vpop.permute.xlu0 %4816
        %v4818 = vsel %vm423, %v4815, 0
        %v4820 = vsel %vm423, %v4817, 0
        %4822 = vmatprep.subr.mxu0 0.0
        %4823 = vmatpush1.xpose.msra.mxu0 %v4820
        %4824 = vmatprep.subr.mxu0 0.0
        %4825 = vmatpush1.xpose.msra.mxu0 0.0
        %4826 = vmatprep.subr.mxu0 0.0
        %4827 = vmatpush1.xpose.msra.mxu0 0.0
        %4828 = vmatprep.subr.mxu0 0.0
        %4829 = vmatpush1.xpose.msra.mxu0 0.0
        %4830 = vmatprep.subr.mxu0 0.0
        %4831 = vmatpush1.xpose.msra.mxu0 0.0
        %4832 = vmatprep.subr.mxu0 0.0
        %4833 = vmatpush1.xpose.msra.mxu0 0.0
        %4834 = vmatprep.subr.mxu0 0.0
        %4835 = vmatpush1.xpose.msra.mxu0 0.0
        %4836 = vmatprep.subr.mxu0 0.0
        %4837 = vmatpush1.xpose.msra.mxu0 0.0
        %4838 = vmatprep.subr.mxu0 0.0
        %4839 = vmatpush1.xpose.msra.mxu0 0.0
        %4840 = vmatprep.subr.mxu0 0.0
        %4841 = vmatpush1.xpose.msra.mxu0 0.0
        %4842 = vmatprep.subr.mxu0 0.0
        %4843 = vmatpush1.xpose.msra.mxu0 0.0
        %4844 = vmatprep.subr.mxu0 0.0
        %4845 = vmatpush1.xpose.msra.mxu0 0.0
        %4846 = vmatprep.subr.mxu0 0.0
        %4847 = vmatpush1.xpose.msra.mxu0 0.0
        %4848 = vmatprep.subr.mxu0 0.0
        %4849 = vmatpush1.xpose.msra.mxu0 0.0
        %4850 = vmatprep.subr.mxu0 0.0
        %4851 = vmatpush1.xpose.msra.mxu0 0.0
        %4852 = vmatprep.subr.mxu0 0.0
        %4853 = vmatpush1.xpose.msra.mxu0 0.0
        %4854 = vmatprep.subr.mxu0 0.0
        %4855 = vmatpush1.xpose.msra.mxu0 0.0
        %4856 = vmatprep.subr.mxu0 0.0
        %4857 = vmatpush1.xpose.msra.mxu0 0.0
        %4858 = vmatprep.subr.mxu0 0.0
        %4859 = vmatpush1.xpose.msra.mxu0 0.0
        %4860 = vmatprep.subr.mxu0 0.0
        %4861 = vmatpush1.xpose.msra.mxu0 0.0
        %4862 = vmatprep.subr.mxu0 0.0
        %4863 = vmatpush1.xpose.msra.mxu0 0.0
        %4864 = vmatprep.subr.mxu0 0.0
        %4865 = vmatpush1.xpose.msra.mxu0 0.0
        %4866 = vmatprep.subr.mxu0 0.0
        %4867 = vmatpush1.xpose.msra.mxu0 0.0
        %4868 = vmatprep.subr.mxu0 0.0
        %4869 = vmatpush1.xpose.msra.mxu0 0.0
        %4870 = vmatprep.subr.mxu0 0.0
        %4871 = vmatpush1.xpose.msra.mxu0 0.0
        %4872 = vmatprep.subr.mxu0 0.0
        %4873 = vmatpush1.xpose.msra.mxu0 0.0
        %4874 = vmatprep.subr.mxu0 0.0
        %4875 = vmatpush1.xpose.msra.mxu0 0.0
        %4876 = vmatprep.subr.mxu0 0.0
        %4877 = vmatpush1.xpose.msra.mxu0 0.0
        %4878 = vmatprep.subr.mxu0 0.0
        %4879 = vmatpush1.xpose.msra.mxu0 0.0
        %4880 = vmatprep.subr.mxu0 0.0
        %4881 = vmatpush1.xpose.msra.mxu0 0.0
        %4882 = vmatprep.subr.mxu0 0.0
        %4883 = vmatpush1.xpose.msra.mxu0 0.0
        %4884 = vmatprep.subr.mxu0 0.0
        %4885 = vmatpush1.xpose.msra.mxu0 0.0
        %4886 = vmatprep.mubr.f32.mxu0 0.0
        %4887 = vmatmul.mubr.f32.gmra.mrb[0].mxu0 %v4818
        %v4888 = vpop.f32.mrb[0].mxu0
        %v4889 = vadd.f32 0.0, %v4888
        %v4890 = vpop.f32.mrb[0].mxu0
        %4891 = vdwg.mxu0
        %v4892 = vmul.f32 %v4811, 0.5
        %v4893 = vmul.f32 %v4889, 0.5
        %v4894 = vsel %vm854, %v4892, -inf
        %4895 = vmax.xlane.f32.xlu0 %v4894
        %v4896 = vpop.xlane.xlu0 %4895
        %v4897 = vsel %vm854, %v4893, -inf
        %4898 = vmax.xlane.f32.xlu0 %v4897
        %v4899 = vpop.xlane.xlu0 %4898
        %v4900 = vsub.f32 %v4892, %v4896
        %v4901 = vsub.f32 %v4893, %v4899
        %v4902 = vmul.f32 %v4900, 1.442695
        %v4903 = vpow.pop %v4902
        %v4904 = vmul.f32 %v4901, 1.442695
        %v4905 = vpow.pop %v4904
        %v4906 = vsel %vm854, %v4903, 0.0
        %4907 = vadd.xlane.f32.xlu0 %v4906
        %v4908 = vpop.xlane.xlu0 %4907
        %v4909 = vsel %vm854, %v4905, 0.0
        %4910 = vadd.xlane.f32.xlu0 %v4909
        %v4911 = vpop.xlane.xlu0 %4910
        %v4912 = vrcp.pop %v4908
        %v4913 = vrcp.pop %v4911
        %v4914 = vmul.f32 %v4903, %v4912
        %v4915 = vmul.f32 %v4905, %v4913
        %4916 = vrot.lane.b32.xlu0 %v4398, 60
        %v4917 = vpop.permute.xlu0 %4916
        %v4920 = vsel %vm854, %v4914, 0
        %4922 = vmatprep.subr.mxu0 0.0
        %4923 = vmatpush1.msra.mxu0 %v4917
        %4924 = vmatprep.subr.mxu0 0.0
        %4925 = vmatpush1.msra.mxu0 0.0
        %4926 = vmatprep.subr.mxu0 0.0
        %4927 = vmatpush1.msra.mxu0 0.0
        %4928 = vmatprep.subr.mxu0 0.0
        %4929 = vmatpush1.msra.mxu0 0.0
        %4930 = vmatprep.subr.mxu0 0.0
        %4931 = vmatpush1.msra.mxu0 0.0
        %4932 = vmatprep.subr.mxu0 0.0
        %4933 = vmatpush1.msra.mxu0 0.0
        %4934 = vmatprep.subr.mxu0 0.0
        %4935 = vmatpush1.msra.mxu0 0.0
        %4936 = vmatprep.subr.mxu0 0.0
        %4937 = vmatpush1.msra.mxu0 0.0
        %4938 = vmatprep.subr.mxu0 0.0
        %4939 = vmatpush1.msra.mxu0 0.0
        %4940 = vmatprep.subr.mxu0 0.0
        %4941 = vmatpush1.msra.mxu0 0.0
        %4942 = vmatprep.subr.mxu0 0.0
        %4943 = vmatpush1.msra.mxu0 0.0
        %4944 = vmatprep.subr.mxu0 0.0
        %4945 = vmatpush1.msra.mxu0 0.0
        %4946 = vmatprep.subr.mxu0 0.0
        %4947 = vmatpush1.msra.mxu0 0.0
        %4948 = vmatprep.subr.mxu0 0.0
        %4949 = vmatpush1.msra.mxu0 0.0
        %4950 = vmatprep.subr.mxu0 0.0
        %4951 = vmatpush1.msra.mxu0 0.0
        %4952 = vmatprep.subr.mxu0 0.0
        %4953 = vmatpush1.msra.mxu0 0.0
        %4954 = vmatprep.subr.mxu0 0.0
        %4955 = vmatpush1.msra.mxu0 0.0
        %4956 = vmatprep.subr.mxu0 0.0
        %4957 = vmatpush1.msra.mxu0 0.0
        %4958 = vmatprep.subr.mxu0 0.0
        %4959 = vmatpush1.msra.mxu0 0.0
        %4960 = vmatprep.subr.mxu0 0.0
        %4961 = vmatpush1.msra.mxu0 0.0
        %4962 = vmatprep.subr.mxu0 0.0
        %4963 = vmatpush1.msra.mxu0 0.0
        %4964 = vmatprep.subr.mxu0 0.0
        %4965 = vmatpush1.msra.mxu0 0.0
        %4966 = vmatprep.subr.mxu0 0.0
        %4967 = vmatpush1.msra.mxu0 0.0
        %4968 = vmatprep.subr.mxu0 0.0
        %4969 = vmatpush1.msra.mxu0 0.0
        %4970 = vmatprep.subr.mxu0 0.0
        %4971 = vmatpush1.msra.mxu0 0.0
        %4972 = vmatprep.subr.mxu0 0.0
        %4973 = vmatpush1.msra.mxu0 0.0
        %4974 = vmatprep.subr.mxu0 0.0
        %4975 = vmatpush1.msra.mxu0 0.0
        %4976 = vmatprep.subr.mxu0 0.0
        %4977 = vmatpush1.msra.mxu0 0.0
        %4978 = vmatprep.subr.mxu0 0.0
        %4979 = vmatpush1.msra.mxu0 0.0
        %4980 = vmatprep.subr.mxu0 0.0
        %4981 = vmatpush1.msra.mxu0 0.0
        %4982 = vmatprep.subr.mxu0 0.0
        %4983 = vmatpush1.msra.mxu0 0.0
        %4984 = vmatprep.subr.mxu0 0.0
        %4985 = vmatpush1.msra.mxu0 0.0
        %4986 = vmatprep.mubr.f32.mxu0 0.0
        %4987 = vmatmul.mubr.f32.gmra.mrb[0].mxu0 %v4920
        %v4988 = vpop.f32.mrb[0].mxu0
        %v4989 = vadd.f32 0.0, %v4988
        %v4990 = vpop.f32.mrb[0].mxu0
        %4991 = vdwg.mxu0
        %4992 = vrot.lane.b32.xlu0 %v4403, 60
        %v4993 = vpop.permute.xlu0 %4992
        %v4996 = vsel %vm854, %v4915, 0
        %4998 = vmatprep.subr.mxu0 0.0
        %4999 = vmatpush1.msra.mxu0 %v4993
        %5000 = vmatprep.subr.mxu0 0.0
        %5001 = vmatpush1.msra.mxu0 0.0
        %5002 = vmatprep.subr.mxu0 0.0
        %5003 = vmatpush1.msra.mxu0 0.0
        %5004 = vmatprep.subr.mxu0 0.0
        %5005 = vmatpush1.msra.mxu0 0.0
        %5006 = vmatprep.subr.mxu0 0.0
        %5007 = vmatpush1.msra.mxu0 0.0
        %5008 = vmatprep.subr.mxu0 0.0
        %5009 = vmatpush1.msra.mxu0 0.0
        %5010 = vmatprep.subr.mxu0 0.0
        %5011 = vmatpush1.msra.mxu0 0.0
        %5012 = vmatprep.subr.mxu0 0.0
        %5013 = vmatpush1.msra.mxu0 0.0
        %5014 = vmatprep.subr.mxu0 0.0
        %5015 = vmatpush1.msra.mxu0 0.0
        %5016 = vmatprep.subr.mxu0 0.0
        %5017 = vmatpush1.msra.mxu0 0.0
        %5018 = vmatprep.subr.mxu0 0.0
        %5019 = vmatpush1.msra.mxu0 0.0
        %5020 = vmatprep.subr.mxu0 0.0
        %5021 = vmatpush1.msra.mxu0 0.0
        %5022 = vmatprep.subr.mxu0 0.0
        %5023 = vmatpush1.msra.mxu0 0.0
        %5024 = vmatprep.subr.mxu0 0.0
        %5025 = vmatpush1.msra.mxu0 0.0
        %5026 = vmatprep.subr.mxu0 0.0
        %5027 = vmatpush1.msra.mxu0 0.0
        %5028 = vmatprep.subr.mxu0 0.0
        %5029 = vmatpush1.msra.mxu0 0.0
        %5030 = vmatprep.subr.mxu0 0.0
        %5031 = vmatpush1.msra.mxu0 0.0
        %5032 = vmatprep.subr.mxu0 0.0
        %5033 = vmatpush1.msra.mxu0 0.0
        %5034 = vmatprep.subr.mxu0 0.0
        %5035 = vmatpush1.msra.mxu0 0.0
        %5036 = vmatprep.subr.mxu0 0.0
        %5037 = vmatpush1.msra.mxu0 0.0
        %5038 = vmatprep.subr.mxu0 0.0
        %5039 = vmatpush1.msra.mxu0 0.0
        %5040 = vmatprep.subr.mxu0 0.0
        %5041 = vmatpush1.msra.mxu0 0.0
        %5042 = vmatprep.subr.mxu0 0.0
        %5043 = vmatpush1.msra.mxu0 0.0
        %5044 = vmatprep.subr.mxu0 0.0
        %5045 = vmatpush1.msra.mxu0 0.0
        %5046 = vmatprep.subr.mxu0 0.0
        %5047 = vmatpush1.msra.mxu0 0.0
        %5048 = vmatprep.subr.mxu0 0.0
        %5049 = vmatpush1.msra.mxu0 0.0
        %5050 = vmatprep.subr.mxu0 0.0
        %5051 = vmatpush1.msra.mxu0 0.0
        %5052 = vmatprep.subr.mxu0 0.0
        %5053 = vmatpush1.msra.mxu0 0.0
        %5054 = vmatprep.subr.mxu0 0.0
        %5055 = vmatpush1.msra.mxu0 0.0
        %5056 = vmatprep.subr.mxu0 0.0
        %5057 = vmatpush1.msra.mxu0 0.0
        %5058 = vmatprep.subr.mxu0 0.0
        %5059 = vmatpush1.msra.mxu0 0.0
        %5060 = vmatprep.subr.mxu0 0.0
        %5061 = vmatpush1.msra.mxu0 0.0
        %5062 = vmatprep.mubr.f32.mxu0 0.0
        %5063 = vmatmul.mubr.f32.gmra.mrb[0].mxu0 %v4996
        %v5064 = vpop.f32.mrb[0].mxu0
        %v5065 = vadd.f32 0.0, %v5064
        %v5066 = vpop.f32.mrb[0].mxu0
        %5067 = vdwg.mxu0
        %v5069 = vrot.slane %v4317, 4
        %v5071 = vsel %vm423, %v4989, 0
        %v5074 = vsel %vm423, %v5065, 0
        %v5076 = vsel %vm430, %v5069, 0
        %5078 = vmatprep.subr.mxu0 0.0
        %5079 = vmatpush1.msra.mxu0 %v5076
        %5080 = vmatprep.subr.mxu0 0.0
        %5081 = vmatpush1.msra.mxu0 0.0
        %5082 = vmatprep.subr.mxu0 0.0
        %5083 = vmatpush1.msra.mxu0 0.0
        %5084 = vmatprep.subr.mxu0 0.0
        %5085 = vmatpush1.msra.mxu0 0.0
        %5086 = vmatprep.subr.mxu0 0.0
        %5087 = vmatpush1.msra.mxu0 0.0
        %5088 = vmatprep.subr.mxu0 0.0
        %5089 = vmatpush1.msra.mxu0 0.0
        %5090 = vmatprep.subr.mxu0 0.0
        %5091 = vmatpush1.msra.mxu0 0.0
        %5092 = vmatprep.subr.mxu0 0.0
        %5093 = vmatpush1.msra.mxu0 0.0
        %5094 = vmatprep.subr.mxu0 0.0
        %5095 = vmatpush1.msra.mxu0 0.0
        %5096 = vmatprep.subr.mxu0 0.0
        %5097 = vmatpush1.msra.mxu0 0.0
        %5098 = vmatprep.subr.mxu0 0.0
        %5099 = vmatpush1.msra.mxu0 0.0
        %5100 = vmatprep.subr.mxu0 0.0
        %5101 = vmatpush1.msra.mxu0 0.0
        %5102 = vmatprep.subr.mxu0 0.0
        %5103 = vmatpush1.msra.mxu0 0.0
        %5104 = vmatprep.subr.mxu0 0.0
        %5105 = vmatpush1.msra.mxu0 0.0
        %5106 = vmatprep.subr.mxu0 0.0
        %5107 = vmatpush1.msra.mxu0 0.0
        %5108 = vmatprep.subr.mxu0 0.0
        %5109 = vmatpush1.msra.mxu0 0.0
        %5110 = vmatprep.subr.mxu0 0.0
        %5111 = vmatpush1.msra.mxu0 0.0
        %5112 = vmatprep.subr.mxu0 0.0
        %5113 = vmatpush1.msra.mxu0 0.0
        %5114 = vmatprep.subr.mxu0 0.0
        %5115 = vmatpush1.msra.mxu0 0.0
        %5116 = vmatprep.subr.mxu0 0.0
        %5117 = vmatpush1.msra.mxu0 0.0
        %5118 = vmatprep.subr.mxu0 0.0
        %5119 = vmatpush1.msra.mxu0 0.0
        %5120 = vmatprep.subr.mxu0 0.0
        %5121 = vmatpush1.msra.mxu0 0.0
        %5122 = vmatprep.subr.mxu0 0.0
        %5123 = vmatpush1.msra.mxu0 0.0
        %5124 = vmatprep.subr.mxu0 0.0
        %5125 = vmatpush1.msra.mxu0 0.0
        %5126 = vmatprep.subr.mxu0 0.0
        %5127 = vmatpush1.msra.mxu0 0.0
        %5128 = vmatprep.subr.mxu0 0.0
        %5129 = vmatpush1.msra.mxu0 0.0
        %5130 = vmatprep.subr.mxu0 0.0
        %5131 = vmatpush1.msra.mxu0 0.0
        %5132 = vmatprep.subr.mxu0 0.0
        %5133 = vmatpush1.msra.mxu0 0.0
        %5134 = vmatprep.subr.mxu0 0.0
        %5135 = vmatpush1.msra.mxu0 0.0
        %5136 = vmatprep.subr.mxu0 0.0
        %5137 = vmatpush1.msra.mxu0 0.0
        %5138 = vmatprep.subr.mxu0 0.0
        %5139 = vmatpush1.msra.mxu0 0.0
        %5140 = vmatprep.subr.mxu0 0.0
        %5141 = vmatpush1.msra.mxu0 0.0
        %5142 = vmatprep.mubr.f32.mxu0 0.0
        %5143 = vmatmul.mubr.f32.gmra.mrb[0].mxu0 %v5071
        %v5144 = vpop.f32.mrb[0].mxu0
        %v5145 = vadd.f32 0.0, %v5144
        %v5146 = vpop.f32.mrb[0].mxu0
        %5147 = vmatprep.mubr.f32.mxu0 0.0
        %5148 = vmatmul.mubr.f32.gmra.mrb[0].mxu0 %v5074
        %v5149 = vpop.f32.mrb[0].mxu0
        %v5150 = vadd.f32 0.0, %v5149
        %v5151 = vpop.f32.mrb[0].mxu0
        %5152 = vdwg.mxu0
        %v5154 = vsel %vm423, %v4657, 0
        %v5157 = vsel %vm423, %v4733, 0
        %v5159 = vsel %vm430, %v4317, 0
        %5161 = vmatprep.subr.mxu0 0.0
        %5162 = vmatpush1.msra.mxu0 %v5159
        %5163 = vmatprep.subr.mxu0 0.0
        %5164 = vmatpush1.msra.mxu0 0.0
        %5165 = vmatprep.subr.mxu0 0.0
        %5166 = vmatpush1.msra.mxu0 0.0
        %5167 = vmatprep.subr.mxu0 0.0
        %5168 = vmatpush1.msra.mxu0 0.0
        %5169 = vmatprep.subr.mxu0 0.0
        %5170 = vmatpush1.msra.mxu0 0.0
        %5171 = vmatprep.subr.mxu0 0.0
        %5172 = vmatpush1.msra.mxu0 0.0
        %5173 = vmatprep.subr.mxu0 0.0
        %5174 = vmatpush1.msra.mxu0 0.0
        %5175 = vmatprep.subr.mxu0 0.0
        %5176 = vmatpush1.msra.mxu0 0.0
        %5177 = vmatprep.subr.mxu0 0.0
        %5178 = vmatpush1.msra.mxu0 0.0
        %5179 = vmatprep.subr.mxu0 0.0
        %5180 = vmatpush1.msra.mxu0 0.0
        %5181 = vmatprep.subr.mxu0 0.0
        %5182 = vmatpush1.msra.mxu0 0.0
        %5183 = vmatprep.subr.mxu0 0.0
        %5184 = vmatpush1.msra.mxu0 0.0
        %5185 = vmatprep.subr.mxu0 0.0
        %5186 = vmatpush1.msra.mxu0 0.0
        %5187 = vmatprep.subr.mxu0 0.0
        %5188 = vmatpush1.msra.mxu0 0.0
        %5189 = vmatprep.subr.mxu0 0.0
        %5190 = vmatpush1.msra.mxu0 0.0
        %5191 = vmatprep.subr.mxu0 0.0
        %5192 = vmatpush1.msra.mxu0 0.0
        %5193 = vmatprep.subr.mxu0 0.0
        %5194 = vmatpush1.msra.mxu0 0.0
        %5195 = vmatprep.subr.mxu0 0.0
        %5196 = vmatpush1.msra.mxu0 0.0
        %5197 = vmatprep.subr.mxu0 0.0
        %5198 = vmatpush1.msra.mxu0 0.0
        %5199 = vmatprep.subr.mxu0 0.0
        %5200 = vmatpush1.msra.mxu0 0.0
        %5201 = vmatprep.subr.mxu0 0.0
        %5202 = vmatpush1.msra.mxu0 0.0
        %5203 = vmatprep.subr.mxu0 0.0
        %5204 = vmatpush1.msra.mxu0 0.0
        %5205 = vmatprep.subr.mxu0 0.0
        %5206 = vmatpush1.msra.mxu0 0.0
        %5207 = vmatprep.subr.mxu0 0.0
        %5208 = vmatpush1.msra.mxu0 0.0
        %5209 = vmatprep.subr.mxu0 0.0
        %5210 = vmatpush1.msra.mxu0 0.0
        %5211 = vmatprep.subr.mxu0 0.0
        %5212 = vmatpush1.msra.mxu0 0.0
        %5213 = vmatprep.subr.mxu0 0.0
        %5214 = vmatpush1.msra.mxu0 0.0
        %5215 = vmatprep.subr.mxu0 0.0
        %5216 = vmatpush1.msra.mxu0 0.0
        %5217 = vmatprep.subr.mxu0 0.0
        %5218 = vmatpush1.msra.mxu0 0.0
        %5219 = vmatprep.subr.mxu0 0.0
        %5220 = vmatpush1.msra.mxu0 0.0
        %5221 = vmatprep.subr.mxu0 0.0
        %5222 = vmatpush1.msra.mxu0 0.0
        %5223 = vmatprep.subr.mxu0 0.0
        %5224 = vmatpush1.msra.mxu0 0.0
        %5225 = vmatprep.mubr.f32.mxu0 0.0
        %5226 = vmatmul.mubr.f32.gmra.mrb[0].mxu0 %v5154
        %v5227 = vpop.f32.mrb[0].mxu0
        %v5228 = vadd.f32 %v5145, %v5227
        %v5229 = vpop.f32.mrb[0].mxu0
        %5230 = vmatprep.mubr.f32.mxu0 0.0
        %5231 = vmatmul.mubr.f32.gmra.mrb[0].mxu0 %v5157
        %v5232 = vpop.f32.mrb[0].mxu0
        %v5233 = vadd.f32 %v5150, %v5232
        %v5234 = vpop.f32.mrb[0].mxu0
        %5235 = vdwg.mxu0
        %5236 = vrot.lane.b32.xlu0 %v4398, 120
        %v5237 = vpop.permute.xlu0 %5236
        %5238 = vrot.lane.b32.xlu0 %v4398, 88
        %v5239 = vpop.permute.xlu0 %5238
        %v5240 = vsel %vm423, %v5237, 0
        %v5242 = vsel %vm423, %v5239, 0
        %5244 = vmatprep.subr.mxu0 0.0
        %5245 = vmatpush1.xpose.msra.mxu0 %v5242
        %5246 = vmatprep.subr.mxu0 0.0
        %5247 = vmatpush1.xpose.msra.mxu0 0.0
        %5248 = vmatprep.subr.mxu0 0.0
        %5249 = vmatpush1.xpose.msra.mxu0 0.0
        %5250 = vmatprep.subr.mxu0 0.0
        %5251 = vmatpush1.xpose.msra.mxu0 0.0
        %5252 = vmatprep.subr.mxu0 0.0
        %5253 = vmatpush1.xpose.msra.mxu0 0.0
        %5254 = vmatprep.subr.mxu0 0.0
        %5255 = vmatpush1.xpose.msra.mxu0 0.0
        %5256 = vmatprep.subr.mxu0 0.0
        %5257 = vmatpush1.xpose.msra.mxu0 0.0
        %5258 = vmatprep.subr.mxu0 0.0
        %5259 = vmatpush1.xpose.msra.mxu0 0.0
        %5260 = vmatprep.subr.mxu0 0.0
        %5261 = vmatpush1.xpose.msra.mxu0 0.0
        %5262 = vmatprep.subr.mxu0 0.0
        %5263 = vmatpush1.xpose.msra.mxu0 0.0
        %5264 = vmatprep.subr.mxu0 0.0
        %5265 = vmatpush1.xpose.msra.mxu0 0.0
        %5266 = vmatprep.subr.mxu0 0.0
        %5267 = vmatpush1.xpose.msra.mxu0 0.0
        %5268 = vmatprep.subr.mxu0 0.0
        %5269 = vmatpush1.xpose.msra.mxu0 0.0
        %5270 = vmatprep.subr.mxu0 0.0
        %5271 = vmatpush1.xpose.msra.mxu0 0.0
        %5272 = vmatprep.subr.mxu0 0.0
        %5273 = vmatpush1.xpose.msra.mxu0 0.0
        %5274 = vmatprep.subr.mxu0 0.0
        %5275 = vmatpush1.xpose.msra.mxu0 0.0
        %5276 = vmatprep.subr.mxu0 0.0
        %5277 = vmatpush1.xpose.msra.mxu0 0.0
        %5278 = vmatprep.subr.mxu0 0.0
        %5279 = vmatpush1.xpose.msra.mxu0 0.0
        %5280 = vmatprep.subr.mxu0 0.0
        %5281 = vmatpush1.xpose.msra.mxu0 0.0
        %5282 = vmatprep.subr.mxu0 0.0
        %5283 = vmatpush1.xpose.msra.mxu0 0.0
        %5284 = vmatprep.subr.mxu0 0.0
        %5285 = vmatpush1.xpose.msra.mxu0 0.0
        %5286 = vmatprep.subr.mxu0 0.0
        %5287 = vmatpush1.xpose.msra.mxu0 0.0
        %5288 = vmatprep.subr.mxu0 0.0
        %5289 = vmatpush1.xpose.msra.mxu0 0.0
        %5290 = vmatprep.subr.mxu0 0.0
        %5291 = vmatpush1.xpose.msra.mxu0 0.0
        %5292 = vmatprep.subr.mxu0 0.0
        %5293 = vmatpush1.xpose.msra.mxu0 0.0
        %5294 = vmatprep.subr.mxu0 0.0
        %5295 = vmatpush1.xpose.msra.mxu0 0.0
        %5296 = vmatprep.subr.mxu0 0.0
        %5297 = vmatpush1.xpose.msra.mxu0 0.0
        %5298 = vmatprep.subr.mxu0 0.0
        %5299 = vmatpush1.xpose.msra.mxu0 0.0
        %5300 = vmatprep.subr.mxu0 0.0
        %5301 = vmatpush1.xpose.msra.mxu0 0.0
        %5302 = vmatprep.subr.mxu0 0.0
        %5303 = vmatpush1.xpose.msra.mxu0 0.0
        %5304 = vmatprep.subr.mxu0 0.0
        %5305 = vmatpush1.xpose.msra.mxu0 0.0
        %5306 = vmatprep.subr.mxu0 0.0
        %5307 = vmatpush1.xpose.msra.mxu0 0.0
        %5308 = vmatprep.mubr.f32.mxu0 0.0
        %5309 = vmatmul.mubr.f32.gmra.mrb[0].mxu0 %v5240
        %v5310 = vpop.f32.mrb[0].mxu0
        %v5311 = vadd.f32 0.0, %v5310
        %v5312 = vpop.f32.mrb[0].mxu0
        %5313 = vdwg.mxu0
        %5314 = vrot.lane.b32.xlu0 %v4403, 120
        %v5315 = vpop.permute.xlu0 %5314
        %5316 = vrot.lane.b32.xlu0 %v4403, 88
        %v5317 = vpop.permute.xlu0 %5316
        %v5318 = vsel %vm423, %v5315, 0
        %v5320 = vsel %vm423, %v5317, 0
        %5322 = vmatprep.subr.mxu0 0.0
        %5323 = vmatpush1.xpose.msra.mxu0 %v5320
        %5324 = vmatprep.subr.mxu0 0.0
        %5325 = vmatpush1.xpose.msra.mxu0 0.0
        %5326 = vmatprep.subr.mxu0 0.0
        %5327 = vmatpush1.xpose.msra.mxu0 0.0
        %5328 = vmatprep.subr.mxu0 0.0
        %5329 = vmatpush1.xpose.msra.mxu0 0.0
        %5330 = vmatprep.subr.mxu0 0.0
        %5331 = vmatpush1.xpose.msra.mxu0 0.0
        %5332 = vmatprep.subr.mxu0 0.0
        %5333 = vmatpush1.xpose.msra.mxu0 0.0
        %5334 = vmatprep.subr.mxu0 0.0
        %5335 = vmatpush1.xpose.msra.mxu0 0.0
        %5336 = vmatprep.subr.mxu0 0.0
        %5337 = vmatpush1.xpose.msra.mxu0 0.0
        %5338 = vmatprep.subr.mxu0 0.0
        %5339 = vmatpush1.xpose.msra.mxu0 0.0
        %5340 = vmatprep.subr.mxu0 0.0
        %5341 = vmatpush1.xpose.msra.mxu0 0.0
        %5342 = vmatprep.subr.mxu0 0.0
        %5343 = vmatpush1.xpose.msra.mxu0 0.0
        %5344 = vmatprep.subr.mxu0 0.0
        %5345 = vmatpush1.xpose.msra.mxu0 0.0
        %5346 = vmatprep.subr.mxu0 0.0
        %5347 = vmatpush1.xpose.msra.mxu0 0.0
        %5348 = vmatprep.subr.mxu0 0.0
        %5349 = vmatpush1.xpose.msra.mxu0 0.0
        %5350 = vmatprep.subr.mxu0 0.0
        %5351 = vmatpush1.xpose.msra.mxu0 0.0
        %5352 = vmatprep.subr.mxu0 0.0
        %5353 = vmatpush1.xpose.msra.mxu0 0.0
        %5354 = vmatprep.subr.mxu0 0.0
        %5355 = vmatpush1.xpose.msra.mxu0 0.0
        %5356 = vmatprep.subr.mxu0 0.0
        %5357 = vmatpush1.xpose.msra.mxu0 0.0
        %5358 = vmatprep.subr.mxu0 0.0
        %5359 = vmatpush1.xpose.msra.mxu0 0.0
        %5360 = vmatprep.subr.mxu0 0.0
        %5361 = vmatpush1.xpose.msra.mxu0 0.0
        %5362 = vmatprep.subr.mxu0 0.0
        %5363 = vmatpush1.xpose.msra.mxu0 0.0
        %5364 = vmatprep.subr.mxu0 0.0
        %5365 = vmatpush1.xpose.msra.mxu0 0.0
        %5366 = vmatprep.subr.mxu0 0.0
        %5367 = vmatpush1.xpose.msra.mxu0 0.0
        %5368 = vmatprep.subr.mxu0 0.0
        %5369 = vmatpush1.xpose.msra.mxu0 0.0
        %5370 = vmatprep.subr.mxu0 0.0
        %5371 = vmatpush1.xpose.msra.mxu0 0.0
        %5372 = vmatprep.subr.mxu0 0.0
        %5373 = vmatpush1.xpose.msra.mxu0 0.0
        %5374 = vmatprep.subr.mxu0 0.0
        %5375 = vmatpush1.xpose.msra.mxu0 0.0
        %5376 = vmatprep.subr.mxu0 0.0
        %5377 = vmatpush1.xpose.msra.mxu0 0.0
        %5378 = vmatprep.subr.mxu0 0.0
        %5379 = vmatpush1.xpose.msra.mxu0 0.0
        %5380 = vmatprep.subr.mxu0 0.0
        %5381 = vmatpush1.xpose.msra.mxu0 0.0
        %5382 = vmatprep.subr.mxu0 0.0
        %5383 = vmatpush1.xpose.msra.mxu0 0.0
        %5384 = vmatprep.subr.mxu0 0.0
        %5385 = vmatpush1.xpose.msra.mxu0 0.0
        %5386 = vmatprep.mubr.f32.mxu0 0.0
        %5387 = vmatmul.mubr.f32.gmra.mrb[0].mxu0 %v5318
        %v5388 = vpop.f32.mrb[0].mxu0
        %v5389 = vadd.f32 0.0, %v5388
        %v5390 = vpop.f32.mrb[0].mxu0
        %5391 = vdwg.mxu0
        %v5392 = vmul.f32 %v5311, 0.5
        %v5393 = vmul.f32 %v5389, 0.5
        %v5394 = vsel %vm854, %v5392, -inf
        %5395 = vmax.xlane.f32.xlu0 %v5394
        %v5396 = vpop.xlane.xlu0 %5395
        %v5397 = vsel %vm854, %v5393, -inf
        %5398 = vmax.xlane.f32.xlu0 %v5397
        %v5399 = vpop.xlane.xlu0 %5398
        %v5400 = vsub.f32 %v5392, %v5396
        %v5401 = vsub.f32 %v5393, %v5399
        %v5402 = vmul.f32 %v5400, 1.442695
        %v5403 = vpow.pop %v5402
        %v5404 = vmul.f32 %v5401, 1.442695
        %v5405 = vpow.pop %v5404
        %v5406 = vsel %vm854, %v5403, 0.0
        %5407 = vadd.xlane.f32.xlu0 %v5406
        %v5408 = vpop.xlane.xlu0 %5407
        %v5409 = vsel %vm854, %v5405, 0.0
        %5410 = vadd.xlane.f32.xlu0 %v5409
        %v5411 = vpop.xlane.xlu0 %5410
        %v5412 = vrcp.pop %v5408
        %v5413 = vrcp.pop %v5411
        %v5414 = vmul.f32 %v5403, %v5412
        %v5415 = vmul.f32 %v5405, %v5413
        %5416 = vrot.lane.b32.xlu0 %v4398, 56
        %v5417 = vpop.permute.xlu0 %5416
        %v5420 = vsel %vm854, %v5414, 0
        %5422 = vmatprep.subr.mxu0 0.0
        %5423 = vmatpush1.msra.mxu0 %v5417
        %5424 = vmatprep.subr.mxu0 0.0
        %5425 = vmatpush1.msra.mxu0 0.0
        %5426 = vmatprep.subr.mxu0 0.0
        %5427 = vmatpush1.msra.mxu0 0.0
        %5428 = vmatprep.subr.mxu0 0.0
        %5429 = vmatpush1.msra.mxu0 0.0
        %5430 = vmatprep.subr.mxu0 0.0
        %5431 = vmatpush1.msra.mxu0 0.0
        %5432 = vmatprep.subr.mxu0 0.0
        %5433 = vmatpush1.msra.mxu0 0.0
        %5434 = vmatprep.subr.mxu0 0.0
        %5435 = vmatpush1.msra.mxu0 0.0
        %5436 = vmatprep.subr.mxu0 0.0
        %5437 = vmatpush1.msra.mxu0 0.0
        %5438 = vmatprep.subr.mxu0 0.0
        %5439 = vmatpush1.msra.mxu0 0.0
        %5440 = vmatprep.subr.mxu0 0.0
        %5441 = vmatpush1.msra.mxu0 0.0
        %5442 = vmatprep.subr.mxu0 0.0
        %5443 = vmatpush1.msra.mxu0 0.0
        %5444 = vmatprep.subr.mxu0 0.0
        %5445 = vmatpush1.msra.mxu0 0.0
        %5446 = vmatprep.subr.mxu0 0.0
        %5447 = vmatpush1.msra.mxu0 0.0
        %5448 = vmatprep.subr.mxu0 0.0
        %5449 = vmatpush1.msra.mxu0 0.0
        %5450 = vmatprep.subr.mxu0 0.0
        %5451 = vmatpush1.msra.mxu0 0.0
        %5452 = vmatprep.subr.mxu0 0.0
        %5453 = vmatpush1.msra.mxu0 0.0
        %5454 = vmatprep.subr.mxu0 0.0
        %5455 = vmatpush1.msra.mxu0 0.0
        %5456 = vmatprep.subr.mxu0 0.0
        %5457 = vmatpush1.msra.mxu0 0.0
        %5458 = vmatprep.subr.mxu0 0.0
        %5459 = vmatpush1.msra.mxu0 0.0
        %5460 = vmatprep.subr.mxu0 0.0
        %5461 = vmatpush1.msra.mxu0 0.0
        %5462 = vmatprep.subr.mxu0 0.0
        %5463 = vmatpush1.msra.mxu0 0.0
        %5464 = vmatprep.subr.mxu0 0.0
        %5465 = vmatpush1.msra.mxu0 0.0
        %5466 = vmatprep.subr.mxu0 0.0
        %5467 = vmatpush1.msra.mxu0 0.0
        %5468 = vmatprep.subr.mxu0 0.0
        %5469 = vmatpush1.msra.mxu0 0.0
        %5470 = vmatprep.subr.mxu0 0.0
        %5471 = vmatpush1.msra.mxu0 0.0
        %5472 = vmatprep.subr.mxu0 0.0
        %5473 = vmatpush1.msra.mxu0 0.0
        %5474 = vmatprep.subr.mxu0 0.0
        %5475 = vmatpush1.msra.mxu0 0.0
        %5476 = vmatprep.subr.mxu0 0.0
        %5477 = vmatpush1.msra.mxu0 0.0
        %5478 = vmatprep.subr.mxu0 0.0
        %5479 = vmatpush1.msra.mxu0 0.0
        %5480 = vmatprep.subr.mxu0 0.0
        %5481 = vmatpush1.msra.mxu0 0.0
        %5482 = vmatprep.subr.mxu0 0.0
        %5483 = vmatpush1.msra.mxu0 0.0
        %5484 = vmatprep.subr.mxu0 0.0
        %5485 = vmatpush1.msra.mxu0 0.0
        %5486 = vmatprep.mubr.f32.mxu0 0.0
        %5487 = vmatmul.mubr.f32.gmra.mrb[0].mxu0 %v5420
        %v5488 = vpop.f32.mrb[0].mxu0
        %v5489 = vadd.f32 0.0, %v5488
        %v5490 = vpop.f32.mrb[0].mxu0
        %5491 = vdwg.mxu0
        %5492 = vrot.lane.b32.xlu0 %v4403, 56
        %v5493 = vpop.permute.xlu0 %5492
        %v5496 = vsel %vm854, %v5415, 0
        %5498 = vmatprep.subr.mxu0 0.0
        %5499 = vmatpush1.msra.mxu0 %v5493
        %5500 = vmatprep.subr.mxu0 0.0
        %5501 = vmatpush1.msra.mxu0 0.0
        %5502 = vmatprep.subr.mxu0 0.0
        %5503 = vmatpush1.msra.mxu0 0.0
        %5504 = vmatprep.subr.mxu0 0.0
        %5505 = vmatpush1.msra.mxu0 0.0
        %5506 = vmatprep.subr.mxu0 0.0
        %5507 = vmatpush1.msra.mxu0 0.0
        %5508 = vmatprep.subr.mxu0 0.0
        %5509 = vmatpush1.msra.mxu0 0.0
        %5510 = vmatprep.subr.mxu0 0.0
        %5511 = vmatpush1.msra.mxu0 0.0
        %5512 = vmatprep.subr.mxu0 0.0
        %5513 = vmatpush1.msra.mxu0 0.0
        %5514 = vmatprep.subr.mxu0 0.0
        %5515 = vmatpush1.msra.mxu0 0.0
        %5516 = vmatprep.subr.mxu0 0.0
        %5517 = vmatpush1.msra.mxu0 0.0
        %5518 = vmatprep.subr.mxu0 0.0
        %5519 = vmatpush1.msra.mxu0 0.0
        %5520 = vmatprep.subr.mxu0 0.0
        %5521 = vmatpush1.msra.mxu0 0.0
        %5522 = vmatprep.subr.mxu0 0.0
        %5523 = vmatpush1.msra.mxu0 0.0
        %5524 = vmatprep.subr.mxu0 0.0
        %5525 = vmatpush1.msra.mxu0 0.0
        %5526 = vmatprep.subr.mxu0 0.0
        %5527 = vmatpush1.msra.mxu0 0.0
        %5528 = vmatprep.subr.mxu0 0.0
        %5529 = vmatpush1.msra.mxu0 0.0
        %5530 = vmatprep.subr.mxu0 0.0
        %5531 = vmatpush1.msra.mxu0 0.0
        %5532 = vmatprep.subr.mxu0 0.0
        %5533 = vmatpush1.msra.mxu0 0.0
        %5534 = vmatprep.subr.mxu0 0.0
        %5535 = vmatpush1.msra.mxu0 0.0
        %5536 = vmatprep.subr.mxu0 0.0
        %5537 = vmatpush1.msra.mxu0 0.0
        %5538 = vmatprep.subr.mxu0 0.0
        %5539 = vmatpush1.msra.mxu0 0.0
        %5540 = vmatprep.subr.mxu0 0.0
        %5541 = vmatpush1.msra.mxu0 0.0
        %5542 = vmatprep.subr.mxu0 0.0
        %5543 = vmatpush1.msra.mxu0 0.0
        %5544 = vmatprep.subr.mxu0 0.0
        %5545 = vmatpush1.msra.mxu0 0.0
        %5546 = vmatprep.subr.mxu0 0.0
        %5547 = vmatpush1.msra.mxu0 0.0
        %5548 = vmatprep.subr.mxu0 0.0
        %5549 = vmatpush1.msra.mxu0 0.0
        %5550 = vmatprep.subr.mxu0 0.0
        %5551 = vmatpush1.msra.mxu0 0.0
        %5552 = vmatprep.subr.mxu0 0.0
        %5553 = vmatpush1.msra.mxu0 0.0
        %5554 = vmatprep.subr.mxu0 0.0
        %5555 = vmatpush1.msra.mxu0 0.0
        %5556 = vmatprep.subr.mxu0 0.0
        %5557 = vmatpush1.msra.mxu0 0.0
        %5558 = vmatprep.subr.mxu0 0.0
        %5559 = vmatpush1.msra.mxu0 0.0
        %5560 = vmatprep.subr.mxu0 0.0
        %5561 = vmatpush1.msra.mxu0 0.0
        %5562 = vmatprep.mubr.f32.mxu0 0.0
        %5563 = vmatmul.mubr.f32.gmra.mrb[0].mxu0 %v5496
        %v5564 = vpop.f32.mrb[0].mxu0
        %v5565 = vadd.f32 0.0, %v5564
        %v5566 = vpop.f32.mrb[0].mxu0
        %5567 = vdwg.mxu0
        %v5569 = vsel %vm423, %v5489, 0
        %v5572 = vsel %vm423, %v5565, 0
        %v5575 = vsel %vm430, %v4318, 0
        %5577 = vmatprep.subr.mxu0 0.0
        %5578 = vmatpush1.msra.mxu0 %v5575
        %5579 = vmatprep.subr.mxu0 0.0
        %5580 = vmatpush1.msra.mxu0 0.0
        %5581 = vmatprep.subr.mxu0 0.0
        %5582 = vmatpush1.msra.mxu0 0.0
        %5583 = vmatprep.subr.mxu0 0.0
        %5584 = vmatpush1.msra.mxu0 0.0
        %5585 = vmatprep.subr.mxu0 0.0
        %5586 = vmatpush1.msra.mxu0 0.0
        %5587 = vmatprep.subr.mxu0 0.0
        %5588 = vmatpush1.msra.mxu0 0.0
        %5589 = vmatprep.subr.mxu0 0.0
        %5590 = vmatpush1.msra.mxu0 0.0
        %5591 = vmatprep.subr.mxu0 0.0
        %5592 = vmatpush1.msra.mxu0 0.0
        %5593 = vmatprep.subr.mxu0 0.0
        %5594 = vmatpush1.msra.mxu0 0.0
        %5595 = vmatprep.subr.mxu0 0.0
        %5596 = vmatpush1.msra.mxu0 0.0
        %5597 = vmatprep.subr.mxu0 0.0
        %5598 = vmatpush1.msra.mxu0 0.0
        %5599 = vmatprep.subr.mxu0 0.0
        %5600 = vmatpush1.msra.mxu0 0.0
        %5601 = vmatprep.subr.mxu0 0.0
        %5602 = vmatpush1.msra.mxu0 0.0
        %5603 = vmatprep.subr.mxu0 0.0
        %5604 = vmatpush1.msra.mxu0 0.0
        %5605 = vmatprep.subr.mxu0 0.0
        %5606 = vmatpush1.msra.mxu0 0.0
        %5607 = vmatprep.subr.mxu0 0.0
        %5608 = vmatpush1.msra.mxu0 0.0
        %5609 = vmatprep.subr.mxu0 0.0
        %5610 = vmatpush1.msra.mxu0 0.0
        %5611 = vmatprep.subr.mxu0 0.0
        %5612 = vmatpush1.msra.mxu0 0.0
        %5613 = vmatprep.subr.mxu0 0.0
        %5614 = vmatpush1.msra.mxu0 0.0
        %5615 = vmatprep.subr.mxu0 0.0
        %5616 = vmatpush1.msra.mxu0 0.0
        %5617 = vmatprep.subr.mxu0 0.0
        %5618 = vmatpush1.msra.mxu0 0.0
        %5619 = vmatprep.subr.mxu0 0.0
        %5620 = vmatpush1.msra.mxu0 0.0
        %5621 = vmatprep.subr.mxu0 0.0
        %5622 = vmatpush1.msra.mxu0 0.0
        %5623 = vmatprep.subr.mxu0 0.0
        %5624 = vmatpush1.msra.mxu0 0.0
        %5625 = vmatprep.subr.mxu0 0.0
        %5626 = vmatpush1.msra.mxu0 0.0
        %5627 = vmatprep.subr.mxu0 0.0
        %5628 = vmatpush1.msra.mxu0 0.0
        %5629 = vmatprep.subr.mxu0 0.0
        %5630 = vmatpush1.msra.mxu0 0.0
        %5631 = vmatprep.subr.mxu0 0.0
        %5632 = vmatpush1.msra.mxu0 0.0
        %5633 = vmatprep.subr.mxu0 0.0
        %5634 = vmatpush1.msra.mxu0 0.0
        %5635 = vmatprep.subr.mxu0 0.0
        %5636 = vmatpush1.msra.mxu0 0.0
        %5637 = vmatprep.subr.mxu0 0.0
        %5638 = vmatpush1.msra.mxu0 0.0
        %5639 = vmatprep.subr.mxu0 0.0
        %5640 = vmatpush1.msra.mxu0 0.0
        %5641 = vmatprep.mubr.f32.mxu0 0.0
        %5642 = vmatmul.mubr.f32.gmra.mrb[0].mxu0 %v5569
        %v5643 = vpop.f32.mrb[0].mxu0
        %v5644 = vadd.f32 0.0, %v5643
        %v5645 = vpop.f32.mrb[0].mxu0
        %5646 = vmatprep.mubr.f32.mxu0 0.0
        %5647 = vmatmul.mubr.f32.gmra.mrb[0].mxu0 %v5572
        %v5648 = vpop.f32.mrb[0].mxu0
        %v5649 = vadd.f32 0.0, %v5648
        %v5650 = vpop.f32.mrb[0].mxu0
        %5651 = vdwg.mxu0
        %v5652 = vadd.f32 %v5228, %v5644
        %v5653 = vadd.f32 %v5233, %v5649
        %5654 = vrot.lane.b32.xlu0 %v4398, 116
        %v5655 = vpop.permute.xlu0 %5654
        %5656 = vrot.lane.b32.xlu0 %v4398, 84
        %v5657 = vpop.permute.xlu0 %5656
        %v5658 = vsel %vm423, %v5655, 0
        %v5660 = vsel %vm423, %v5657, 0
        %5662 = vmatprep.subr.mxu0 0.0
        %5663 = vmatpush1.xpose.msra.mxu0 %v5660
        %5664 = vmatprep.subr.mxu0 0.0
        %5665 = vmatpush1.xpose.msra.mxu0 0.0
        %5666 = vmatprep.subr.mxu0 0.0
        %5667 = vmatpush1.xpose.msra.mxu0 0.0
        %5668 = vmatprep.subr.mxu0 0.0
        %5669 = vmatpush1.xpose.msra.mxu0 0.0
        %5670 = vmatprep.subr.mxu0 0.0
        %5671 = vmatpush1.xpose.msra.mxu0 0.0
        %5672 = vmatprep.subr.mxu0 0.0
        %5673 = vmatpush1.xpose.msra.mxu0 0.0
        %5674 = vmatprep.subr.mxu0 0.0
        %5675 = vmatpush1.xpose.msra.mxu0 0.0
        %5676 = vmatprep.subr.mxu0 0.0
        %5677 = vmatpush1.xpose.msra.mxu0 0.0
        %5678 = vmatprep.subr.mxu0 0.0
        %5679 = vmatpush1.xpose.msra.mxu0 0.0
        %5680 = vmatprep.subr.mxu0 0.0
        %5681 = vmatpush1.xpose.msra.mxu0 0.0
        %5682 = vmatprep.subr.mxu0 0.0
        %5683 = vmatpush1.xpose.msra.mxu0 0.0
        %5684 = vmatprep.subr.mxu0 0.0
        %5685 = vmatpush1.xpose.msra.mxu0 0.0
        %5686 = vmatprep.subr.mxu0 0.0
        %5687 = vmatpush1.xpose.msra.mxu0 0.0
        %5688 = vmatprep.subr.mxu0 0.0
        %5689 = vmatpush1.xpose.msra.mxu0 0.0
        %5690 = vmatprep.subr.mxu0 0.0
        %5691 = vmatpush1.xpose.msra.mxu0 0.0
        %5692 = vmatprep.subr.mxu0 0.0
        %5693 = vmatpush1.xpose.msra.mxu0 0.0
        %5694 = vmatprep.subr.mxu0 0.0
        %5695 = vmatpush1.xpose.msra.mxu0 0.0
        %5696 = vmatprep.subr.mxu0 0.0
        %5697 = vmatpush1.xpose.msra.mxu0 0.0
        %5698 = vmatprep.subr.mxu0 0.0
        %5699 = vmatpush1.xpose.msra.mxu0 0.0
        %5700 = vmatprep.subr.mxu0 0.0
        %5701 = vmatpush1.xpose.msra.mxu0 0.0
        %5702 = vmatprep.subr.mxu0 0.0
        %5703 = vmatpush1.xpose.msra.mxu0 0.0
        %5704 = vmatprep.subr.mxu0 0.0
        %5705 = vmatpush1.xpose.msra.mxu0 0.0
        %5706 = vmatprep.subr.mxu0 0.0
        %5707 = vmatpush1.xpose.msra.mxu0 0.0
        %5708 = vmatprep.subr.mxu0 0.0
        %5709 = vmatpush1.xpose.msra.mxu0 0.0
        %5710 = vmatprep.subr.mxu0 0.0
        %5711 = vmatpush1.xpose.msra.mxu0 0.0
        %5712 = vmatprep.subr.mxu0 0.0
        %5713 = vmatpush1.xpose.msra.mxu0 0.0
        %5714 = vmatprep.subr.mxu0 0.0
        %5715 = vmatpush1.xpose.msra.mxu0 0.0
        %5716 = vmatprep.subr.mxu0 0.0
        %5717 = vmatpush1.xpose.msra.mxu0 0.0
        %5718 = vmatprep.subr.mxu0 0.0
        %5719 = vmatpush1.xpose.msra.mxu0 0.0
        %5720 = vmatprep.subr.mxu0 0.0
        %5721 = vmatpush1.xpose.msra.mxu0 0.0
        %5722 = vmatprep.subr.mxu0 0.0
        %5723 = vmatpush1.xpose.msra.mxu0 0.0
        %5724 = vmatprep.subr.mxu0 0.0
        %5725 = vmatpush1.xpose.msra.mxu0 0.0
        %5726 = vmatprep.mubr.f32.mxu0 0.0
        %5727 = vmatmul.mubr.f32.gmra.mrb[0].mxu0 %v5658
        %v5728 = vpop.f32.mrb[0].mxu0
        %v5729 = vadd.f32 0.0, %v5728
        %v5730 = vpop.f32.mrb[0].mxu0
        %5731 = vdwg.mxu0
        %5732 = vrot.lane.b32.xlu0 %v4403, 116
        %v5733 = vpop.permute.xlu0 %5732
        %5734 = vrot.lane.b32.xlu0 %v4403, 84
        %v5735 = vpop.permute.xlu0 %5734
        %v5736 = vsel %vm423, %v5733, 0
        %v5738 = vsel %vm423, %v5735, 0
        %5740 = vmatprep.subr.mxu0 0.0
        %5741 = vmatpush1.xpose.msra.mxu0 %v5738
        %5742 = vmatprep.subr.mxu0 0.0
        %5743 = vmatpush1.xpose.msra.mxu0 0.0
        %5744 = vmatprep.subr.mxu0 0.0
        %5745 = vmatpush1.xpose.msra.mxu0 0.0
        %5746 = vmatprep.subr.mxu0 0.0
        %5747 = vmatpush1.xpose.msra.mxu0 0.0
        %5748 = vmatprep.subr.mxu0 0.0
        %5749 = vmatpush1.xpose.msra.mxu0 0.0
        %5750 = vmatprep.subr.mxu0 0.0
        %5751 = vmatpush1.xpose.msra.mxu0 0.0
        %5752 = vmatprep.subr.mxu0 0.0
        %5753 = vmatpush1.xpose.msra.mxu0 0.0
        %5754 = vmatprep.subr.mxu0 0.0
        %5755 = vmatpush1.xpose.msra.mxu0 0.0
        %5756 = vmatprep.subr.mxu0 0.0
        %5757 = vmatpush1.xpose.msra.mxu0 0.0
        %5758 = vmatprep.subr.mxu0 0.0
        %5759 = vmatpush1.xpose.msra.mxu0 0.0
        %5760 = vmatprep.subr.mxu0 0.0
        %5761 = vmatpush1.xpose.msra.mxu0 0.0
        %5762 = vmatprep.subr.mxu0 0.0
        %5763 = vmatpush1.xpose.msra.mxu0 0.0
        %5764 = vmatprep.subr.mxu0 0.0
        %5765 = vmatpush1.xpose.msra.mxu0 0.0
        %5766 = vmatprep.subr.mxu0 0.0
        %5767 = vmatpush1.xpose.msra.mxu0 0.0
        %5768 = vmatprep.subr.mxu0 0.0
        %5769 = vmatpush1.xpose.msra.mxu0 0.0
        %5770 = vmatprep.subr.mxu0 0.0
        %5771 = vmatpush1.xpose.msra.mxu0 0.0
        %5772 = vmatprep.subr.mxu0 0.0
        %5773 = vmatpush1.xpose.msra.mxu0 0.0
        %5774 = vmatprep.subr.mxu0 0.0
        %5775 = vmatpush1.xpose.msra.mxu0 0.0
        %5776 = vmatprep.subr.mxu0 0.0
        %5777 = vmatpush1.xpose.msra.mxu0 0.0
        %5778 = vmatprep.subr.mxu0 0.0
        %5779 = vmatpush1.xpose.msra.mxu0 0.0
        %5780 = vmatprep.subr.mxu0 0.0
        %5781 = vmatpush1.xpose.msra.mxu0 0.0
        %5782 = vmatprep.subr.mxu0 0.0
        %5783 = vmatpush1.xpose.msra.mxu0 0.0
        %5784 = vmatprep.subr.mxu0 0.0
        %5785 = vmatpush1.xpose.msra.mxu0 0.0
        %5786 = vmatprep.subr.mxu0 0.0
        %5787 = vmatpush1.xpose.msra.mxu0 0.0
        %5788 = vmatprep.subr.mxu0 0.0
        %5789 = vmatpush1.xpose.msra.mxu0 0.0
        %5790 = vmatprep.subr.mxu0 0.0
        %5791 = vmatpush1.xpose.msra.mxu0 0.0
        %5792 = vmatprep.subr.mxu0 0.0
        %5793 = vmatpush1.xpose.msra.mxu0 0.0
        %5794 = vmatprep.subr.mxu0 0.0
        %5795 = vmatpush1.xpose.msra.mxu0 0.0
        %5796 = vmatprep.subr.mxu0 0.0
        %5797 = vmatpush1.xpose.msra.mxu0 0.0
        %5798 = vmatprep.subr.mxu0 0.0
        %5799 = vmatpush1.xpose.msra.mxu0 0.0
        %5800 = vmatprep.subr.mxu0 0.0
        %5801 = vmatpush1.xpose.msra.mxu0 0.0
        %5802 = vmatprep.subr.mxu0 0.0
        %5803 = vmatpush1.xpose.msra.mxu0 0.0
        %5804 = vmatprep.mubr.f32.mxu0 0.0
        %5805 = vmatmul.mubr.f32.gmra.mrb[0].mxu0 %v5736
        %v5806 = vpop.f32.mrb[0].mxu0
        %v5807 = vadd.f32 0.0, %v5806
        %v5808 = vpop.f32.mrb[0].mxu0
        %5809 = vdwg.mxu0
        %v5810 = vmul.f32 %v5729, 0.5
        %v5811 = vmul.f32 %v5807, 0.5
        %v5812 = vsel %vm854, %v5810, -inf
        %5813 = vmax.xlane.f32.xlu0 %v5812
        %v5814 = vpop.xlane.xlu0 %5813
        %v5815 = vsel %vm854, %v5811, -inf
        %5816 = vmax.xlane.f32.xlu0 %v5815
        %v5817 = vpop.xlane.xlu0 %5816
        %v5818 = vsub.f32 %v5810, %v5814
        %v5819 = vsub.f32 %v5811, %v5817
        %v5820 = vmul.f32 %v5818, 1.442695
        %v5821 = vpow.pop %v5820
        %v5822 = vmul.f32 %v5819, 1.442695
        %v5823 = vpow.pop %v5822
        %v5824 = vsel %vm854, %v5821, 0.0
        %5825 = vadd.xlane.f32.xlu0 %v5824
        %v5826 = vpop.xlane.xlu0 %5825
        %v5827 = vsel %vm854, %v5823, 0.0
        %5828 = vadd.xlane.f32.xlu0 %v5827
        %v5829 = vpop.xlane.xlu0 %5828
        %v5830 = vrcp.pop %v5826
        %v5831 = vrcp.pop %v5829
        %v5832 = vmul.f32 %v5821, %v5830
        %v5833 = vmul.f32 %v5823, %v5831
        %5834 = vrot.lane.b32.xlu0 %v4398, 52
        %v5835 = vpop.permute.xlu0 %5834
        %v5838 = vsel %vm854, %v5832, 0
        %5840 = vmatprep.subr.mxu0 0.0
        %5841 = vmatpush1.msra.mxu0 %v5835
        %5842 = vmatprep.subr.mxu0 0.0
        %5843 = vmatpush1.msra.mxu0 0.0
        %5844 = vmatprep.subr.mxu0 0.0
        %5845 = vmatpush1.msra.mxu0 0.0
        %5846 = vmatprep.subr.mxu0 0.0
        %5847 = vmatpush1.msra.mxu0 0.0
        %5848 = vmatprep.subr.mxu0 0.0
        %5849 = vmatpush1.msra.mxu0 0.0
        %5850 = vmatprep.subr.mxu0 0.0
        %5851 = vmatpush1.msra.mxu0 0.0
        %5852 = vmatprep.subr.mxu0 0.0
        %5853 = vmatpush1.msra.mxu0 0.0
        %5854 = vmatprep.subr.mxu0 0.0
        %5855 = vmatpush1.msra.mxu0 0.0
        %5856 = vmatprep.subr.mxu0 0.0
        %5857 = vmatpush1.msra.mxu0 0.0
        %5858 = vmatprep.subr.mxu0 0.0
        %5859 = vmatpush1.msra.mxu0 0.0
        %5860 = vmatprep.subr.mxu0 0.0
        %5861 = vmatpush1.msra.mxu0 0.0
        %5862 = vmatprep.subr.mxu0 0.0
        %5863 = vmatpush1.msra.mxu0 0.0
        %5864 = vmatprep.subr.mxu0 0.0
        %5865 = vmatpush1.msra.mxu0 0.0
        %5866 = vmatprep.subr.mxu0 0.0
        %5867 = vmatpush1.msra.mxu0 0.0
        %5868 = vmatprep.subr.mxu0 0.0
        %5869 = vmatpush1.msra.mxu0 0.0
        %5870 = vmatprep.subr.mxu0 0.0
        %5871 = vmatpush1.msra.mxu0 0.0
        %5872 = vmatprep.subr.mxu0 0.0
        %5873 = vmatpush1.msra.mxu0 0.0
        %5874 = vmatprep.subr.mxu0 0.0
        %5875 = vmatpush1.msra.mxu0 0.0
        %5876 = vmatprep.subr.mxu0 0.0
        %5877 = vmatpush1.msra.mxu0 0.0
        %5878 = vmatprep.subr.mxu0 0.0
        %5879 = vmatpush1.msra.mxu0 0.0
        %5880 = vmatprep.subr.mxu0 0.0
        %5881 = vmatpush1.msra.mxu0 0.0
        %5882 = vmatprep.subr.mxu0 0.0
        %5883 = vmatpush1.msra.mxu0 0.0
        %5884 = vmatprep.subr.mxu0 0.0
        %5885 = vmatpush1.msra.mxu0 0.0
        %5886 = vmatprep.subr.mxu0 0.0
        %5887 = vmatpush1.msra.mxu0 0.0
        %5888 = vmatprep.subr.mxu0 0.0
        %5889 = vmatpush1.msra.mxu0 0.0
        %5890 = vmatprep.subr.mxu0 0.0
        %5891 = vmatpush1.msra.mxu0 0.0
        %5892 = vmatprep.subr.mxu0 0.0
        %5893 = vmatpush1.msra.mxu0 0.0
        %5894 = vmatprep.subr.mxu0 0.0
        %5895 = vmatpush1.msra.mxu0 0.0
        %5896 = vmatprep.subr.mxu0 0.0
        %5897 = vmatpush1.msra.mxu0 0.0
        %5898 = vmatprep.subr.mxu0 0.0
        %5899 = vmatpush1.msra.mxu0 0.0
        %5900 = vmatprep.subr.mxu0 0.0
        %5901 = vmatpush1.msra.mxu0 0.0
        %5902 = vmatprep.subr.mxu0 0.0
        %5903 = vmatpush1.msra.mxu0 0.0
        %5904 = vmatprep.mubr.f32.mxu0 0.0
        %5905 = vmatmul.mubr.f32.gmra.mrb[0].mxu0 %v5838
        %v5906 = vpop.f32.mrb[0].mxu0
        %v5907 = vadd.f32 0.0, %v5906
        %v5908 = vpop.f32.mrb[0].mxu0
        %5909 = vdwg.mxu0
        %5910 = vrot.lane.b32.xlu0 %v4403, 52
        %v5911 = vpop.permute.xlu0 %5910
        %v5914 = vsel %vm854, %v5833, 0
        %5916 = vmatprep.subr.mxu0 0.0
        %5917 = vmatpush1.msra.mxu0 %v5911
        %5918 = vmatprep.subr.mxu0 0.0
        %5919 = vmatpush1.msra.mxu0 0.0
        %5920 = vmatprep.subr.mxu0 0.0
        %5921 = vmatpush1.msra.mxu0 0.0
        %5922 = vmatprep.subr.mxu0 0.0
        %5923 = vmatpush1.msra.mxu0 0.0
        %5924 = vmatprep.subr.mxu0 0.0
        %5925 = vmatpush1.msra.mxu0 0.0
        %5926 = vmatprep.subr.mxu0 0.0
        %5927 = vmatpush1.msra.mxu0 0.0
        %5928 = vmatprep.subr.mxu0 0.0
        %5929 = vmatpush1.msra.mxu0 0.0
        %5930 = vmatprep.subr.mxu0 0.0
        %5931 = vmatpush1.msra.mxu0 0.0
        %5932 = vmatprep.subr.mxu0 0.0
        %5933 = vmatpush1.msra.mxu0 0.0
        %5934 = vmatprep.subr.mxu0 0.0
        %5935 = vmatpush1.msra.mxu0 0.0
        %5936 = vmatprep.subr.mxu0 0.0
        %5937 = vmatpush1.msra.mxu0 0.0
        %5938 = vmatprep.subr.mxu0 0.0
        %5939 = vmatpush1.msra.mxu0 0.0
        %5940 = vmatprep.subr.mxu0 0.0
        %5941 = vmatpush1.msra.mxu0 0.0
        %5942 = vmatprep.subr.mxu0 0.0
        %5943 = vmatpush1.msra.mxu0 0.0
        %5944 = vmatprep.subr.mxu0 0.0
        %5945 = vmatpush1.msra.mxu0 0.0
        %5946 = vmatprep.subr.mxu0 0.0
        %5947 = vmatpush1.msra.mxu0 0.0
        %5948 = vmatprep.subr.mxu0 0.0
        %5949 = vmatpush1.msra.mxu0 0.0
        %5950 = vmatprep.subr.mxu0 0.0
        %5951 = vmatpush1.msra.mxu0 0.0
        %5952 = vmatprep.subr.mxu0 0.0
        %5953 = vmatpush1.msra.mxu0 0.0
        %5954 = vmatprep.subr.mxu0 0.0
        %5955 = vmatpush1.msra.mxu0 0.0
        %5956 = vmatprep.subr.mxu0 0.0
        %5957 = vmatpush1.msra.mxu0 0.0
        %5958 = vmatprep.subr.mxu0 0.0
        %5959 = vmatpush1.msra.mxu0 0.0
        %5960 = vmatprep.subr.mxu0 0.0
        %5961 = vmatpush1.msra.mxu0 0.0
        %5962 = vmatprep.subr.mxu0 0.0
        %5963 = vmatpush1.msra.mxu0 0.0
        %5964 = vmatprep.subr.mxu0 0.0
        %5965 = vmatpush1.msra.mxu0 0.0
        %5966 = vmatprep.subr.mxu0 0.0
        %5967 = vmatpush1.msra.mxu0 0.0
        %5968 = vmatprep.subr.mxu0 0.0
        %5969 = vmatpush1.msra.mxu0 0.0
        %5970 = vmatprep.subr.mxu0 0.0
        %5971 = vmatpush1.msra.mxu0 0.0
        %5972 = vmatprep.subr.mxu0 0.0
        %5973 = vmatpush1.msra.mxu0 0.0
        %5974 = vmatprep.subr.mxu0 0.0
        %5975 = vmatpush1.msra.mxu0 0.0
        %5976 = vmatprep.subr.mxu0 0.0
        %5977 = vmatpush1.msra.mxu0 0.0
        %5978 = vmatprep.subr.mxu0 0.0
        %5979 = vmatpush1.msra.mxu0 0.0
        %5980 = vmatprep.mubr.f32.mxu0 0.0
        %5981 = vmatmul.mubr.f32.gmra.mrb[0].mxu0 %v5914
        %v5982 = vpop.f32.mrb[0].mxu0
        %v5983 = vadd.f32 0.0, %v5982
        %v5984 = vpop.f32.mrb[0].mxu0
        %5985 = vdwg.mxu0
        %v5986 = vrot.slane %v4318, 4
        %v5988 = vsel %vm423, %v5907, 0
        %v5991 = vsel %vm423, %v5983, 0
        %v5993 = vsel %vm430, %v5986, 0
        %5995 = vmatprep.subr.mxu0 0.0
        %5996 = vmatpush1.msra.mxu0 %v5993
        %5997 = vmatprep.subr.mxu0 0.0
        %5998 = vmatpush1.msra.mxu0 0.0
        %5999 = vmatprep.subr.mxu0 0.0
        %6000 = vmatpush1.msra.mxu0 0.0
        %6001 = vmatprep.subr.mxu0 0.0
        %6002 = vmatpush1.msra.mxu0 0.0
        %6003 = vmatprep.subr.mxu0 0.0
        %6004 = vmatpush1.msra.mxu0 0.0
        %6005 = vmatprep.subr.mxu0 0.0
        %6006 = vmatpush1.msra.mxu0 0.0
        %6007 = vmatprep.subr.mxu0 0.0
        %6008 = vmatpush1.msra.mxu0 0.0
        %6009 = vmatprep.subr.mxu0 0.0
        %6010 = vmatpush1.msra.mxu0 0.0
        %6011 = vmatprep.subr.mxu0 0.0
        %6012 = vmatpush1.msra.mxu0 0.0
        %6013 = vmatprep.subr.mxu0 0.0
        %6014 = vmatpush1.msra.mxu0 0.0
        %6015 = vmatprep.subr.mxu0 0.0
        %6016 = vmatpush1.msra.mxu0 0.0
        %6017 = vmatprep.subr.mxu0 0.0
        %6018 = vmatpush1.msra.mxu0 0.0
        %6019 = vmatprep.subr.mxu0 0.0
        %6020 = vmatpush1.msra.mxu0 0.0
        %6021 = vmatprep.subr.mxu0 0.0
        %6022 = vmatpush1.msra.mxu0 0.0
        %6023 = vmatprep.subr.mxu0 0.0
        %6024 = vmatpush1.msra.mxu0 0.0
        %6025 = vmatprep.subr.mxu0 0.0
        %6026 = vmatpush1.msra.mxu0 0.0
        %6027 = vmatprep.subr.mxu0 0.0
        %6028 = vmatpush1.msra.mxu0 0.0
        %6029 = vmatprep.subr.mxu0 0.0
        %6030 = vmatpush1.msra.mxu0 0.0
        %6031 = vmatprep.subr.mxu0 0.0
        %6032 = vmatpush1.msra.mxu0 0.0
        %6033 = vmatprep.subr.mxu0 0.0
        %6034 = vmatpush1.msra.mxu0 0.0
        %6035 = vmatprep.subr.mxu0 0.0
        %6036 = vmatpush1.msra.mxu0 0.0
        %6037 = vmatprep.subr.mxu0 0.0
        %6038 = vmatpush1.msra.mxu0 0.0
        %6039 = vmatprep.subr.mxu0 0.0
        %6040 = vmatpush1.msra.mxu0 0.0
        %6041 = vmatprep.subr.mxu0 0.0
        %6042 = vmatpush1.msra.mxu0 0.0
        %6043 = vmatprep.subr.mxu0 0.0
        %6044 = vmatpush1.msra.mxu0 0.0
        %6045 = vmatprep.subr.mxu0 0.0
        %6046 = vmatpush1.msra.mxu0 0.0
        %6047 = vmatprep.subr.mxu0 0.0
        %6048 = vmatpush1.msra.mxu0 0.0
        %6049 = vmatprep.subr.mxu0 0.0
        %6050 = vmatpush1.msra.mxu0 0.0
        %6051 = vmatprep.subr.mxu0 0.0
        %6052 = vmatpush1.msra.mxu0 0.0
        %6053 = vmatprep.subr.mxu0 0.0
        %6054 = vmatpush1.msra.mxu0 0.0
        %6055 = vmatprep.subr.mxu0 0.0
        %6056 = vmatpush1.msra.mxu0 0.0
        %6057 = vmatprep.subr.mxu0 0.0
        %6058 = vmatpush1.msra.mxu0 0.0
        %6059 = vmatprep.mubr.f32.mxu0 0.0
        %6060 = vmatmul.mubr.f32.gmra.mrb[0].mxu0 %v5988
        %v6061 = vpop.f32.mrb[0].mxu0
        %v6062 = vadd.f32 0.0, %v6061
        %v6063 = vpop.f32.mrb[0].mxu0
        %6064 = vmatprep.mubr.f32.mxu0 0.0
        %6065 = vmatmul.mubr.f32.gmra.mrb[0].mxu0 %v5991
        %v6066 = vpop.f32.mrb[0].mxu0
        %v6067 = vadd.f32 0.0, %v6066
        %v6068 = vpop.f32.mrb[0].mxu0
        %6069 = vdwg.mxu0
        %v6070 = vadd.f32 %v5652, %v6062
        %v6071 = vadd.f32 %v5653, %v6067
        %6072 = vrot.lane.b32.xlu0 %v4398, 112
        %v6073 = vpop.permute.xlu0 %6072
        %6074 = vrot.lane.b32.xlu0 %v4398, 80
        %v6075 = vpop.permute.xlu0 %6074
        %v6076 = vsel %vm423, %v6073, 0
        %v6078 = vsel %vm423, %v6075, 0
        %6080 = vmatprep.subr.mxu0 0.0
        %6081 = vmatpush1.xpose.msra.mxu0 %v6078
        %6082 = vmatprep.subr.mxu0 0.0
        %6083 = vmatpush1.xpose.msra.mxu0 0.0
        %6084 = vmatprep.subr.mxu0 0.0
        %6085 = vmatpush1.xpose.msra.mxu0 0.0
        %6086 = vmatprep.subr.mxu0 0.0
        %6087 = vmatpush1.xpose.msra.mxu0 0.0
        %6088 = vmatprep.subr.mxu0 0.0
        %6089 = vmatpush1.xpose.msra.mxu0 0.0
        %6090 = vmatprep.subr.mxu0 0.0
        %6091 = vmatpush1.xpose.msra.mxu0 0.0
        %6092 = vmatprep.subr.mxu0 0.0
        %6093 = vmatpush1.xpose.msra.mxu0 0.0
        %6094 = vmatprep.subr.mxu0 0.0
        %6095 = vmatpush1.xpose.msra.mxu0 0.0
        %6096 = vmatprep.subr.mxu0 0.0
        %6097 = vmatpush1.xpose.msra.mxu0 0.0
        %6098 = vmatprep.subr.mxu0 0.0
        %6099 = vmatpush1.xpose.msra.mxu0 0.0
        %6100 = vmatprep.subr.mxu0 0.0
        %6101 = vmatpush1.xpose.msra.mxu0 0.0
        %6102 = vmatprep.subr.mxu0 0.0
        %6103 = vmatpush1.xpose.msra.mxu0 0.0
        %6104 = vmatprep.subr.mxu0 0.0
        %6105 = vmatpush1.xpose.msra.mxu0 0.0
        %6106 = vmatprep.subr.mxu0 0.0
        %6107 = vmatpush1.xpose.msra.mxu0 0.0
        %6108 = vmatprep.subr.mxu0 0.0
        %6109 = vmatpush1.xpose.msra.mxu0 0.0
        %6110 = vmatprep.subr.mxu0 0.0
        %6111 = vmatpush1.xpose.msra.mxu0 0.0
        %6112 = vmatprep.subr.mxu0 0.0
        %6113 = vmatpush1.xpose.msra.mxu0 0.0
        %6114 = vmatprep.subr.mxu0 0.0
        %6115 = vmatpush1.xpose.msra.mxu0 0.0
        %6116 = vmatprep.subr.mxu0 0.0
        %6117 = vmatpush1.xpose.msra.mxu0 0.0
        %6118 = vmatprep.subr.mxu0 0.0
        %6119 = vmatpush1.xpose.msra.mxu0 0.0
        %6120 = vmatprep.subr.mxu0 0.0
        %6121 = vmatpush1.xpose.msra.mxu0 0.0
        %6122 = vmatprep.subr.mxu0 0.0
        %6123 = vmatpush1.xpose.msra.mxu0 0.0
        %6124 = vmatprep.subr.mxu0 0.0
        %6125 = vmatpush1.xpose.msra.mxu0 0.0
        %6126 = vmatprep.subr.mxu0 0.0
        %6127 = vmatpush1.xpose.msra.mxu0 0.0
        %6128 = vmatprep.subr.mxu0 0.0
        %6129 = vmatpush1.xpose.msra.mxu0 0.0
        %6130 = vmatprep.subr.mxu0 0.0
        %6131 = vmatpush1.xpose.msra.mxu0 0.0
        %6132 = vmatprep.subr.mxu0 0.0
        %6133 = vmatpush1.xpose.msra.mxu0 0.0
        %6134 = vmatprep.subr.mxu0 0.0
        %6135 = vmatpush1.xpose.msra.mxu0 0.0
        %6136 = vmatprep.subr.mxu0 0.0
        %6137 = vmatpush1.xpose.msra.mxu0 0.0
        %6138 = vmatprep.subr.mxu0 0.0
        %6139 = vmatpush1.xpose.msra.mxu0 0.0
        %6140 = vmatprep.subr.mxu0 0.0
        %6141 = vmatpush1.xpose.msra.mxu0 0.0
        %6142 = vmatprep.subr.mxu0 0.0
        %6143 = vmatpush1.xpose.msra.mxu0 0.0
        %6144 = vmatprep.mubr.f32.mxu0 0.0
        %6145 = vmatmul.mubr.f32.gmra.mrb[0].mxu0 %v6076
        %v6146 = vpop.f32.mrb[0].mxu0
        %v6147 = vadd.f32 0.0, %v6146
        %v6148 = vpop.f32.mrb[0].mxu0
        %6149 = vdwg.mxu0
        %6150 = vrot.lane.b32.xlu0 %v4403, 112
        %v6151 = vpop.permute.xlu0 %6150
        %6152 = vrot.lane.b32.xlu0 %v4403, 80
        %v6153 = vpop.permute.xlu0 %6152
        %v6154 = vsel %vm423, %v6151, 0
        %v6156 = vsel %vm423, %v6153, 0
        %6158 = vmatprep.subr.mxu0 0.0
        %6159 = vmatpush1.xpose.msra.mxu0 %v6156
        %6160 = vmatprep.subr.mxu0 0.0
        %6161 = vmatpush1.xpose.msra.mxu0 0.0
        %6162 = vmatprep.subr.mxu0 0.0
        %6163 = vmatpush1.xpose.msra.mxu0 0.0
        %6164 = vmatprep.subr.mxu0 0.0
        %6165 = vmatpush1.xpose.msra.mxu0 0.0
        %6166 = vmatprep.subr.mxu0 0.0
        %6167 = vmatpush1.xpose.msra.mxu0 0.0
        %6168 = vmatprep.subr.mxu0 0.0
        %6169 = vmatpush1.xpose.msra.mxu0 0.0
        %6170 = vmatprep.subr.mxu0 0.0
        %6171 = vmatpush1.xpose.msra.mxu0 0.0
        %6172 = vmatprep.subr.mxu0 0.0
        %6173 = vmatpush1.xpose.msra.mxu0 0.0
        %6174 = vmatprep.subr.mxu0 0.0
        %6175 = vmatpush1.xpose.msra.mxu0 0.0
        %6176 = vmatprep.subr.mxu0 0.0
        %6177 = vmatpush1.xpose.msra.mxu0 0.0
        %6178 = vmatprep.subr.mxu0 0.0
        %6179 = vmatpush1.xpose.msra.mxu0 0.0
        %6180 = vmatprep.subr.mxu0 0.0
        %6181 = vmatpush1.xpose.msra.mxu0 0.0
        %6182 = vmatprep.subr.mxu0 0.0
        %6183 = vmatpush1.xpose.msra.mxu0 0.0
        %6184 = vmatprep.subr.mxu0 0.0
        %6185 = vmatpush1.xpose.msra.mxu0 0.0
        %6186 = vmatprep.subr.mxu0 0.0
        %6187 = vmatpush1.xpose.msra.mxu0 0.0
        %6188 = vmatprep.subr.mxu0 0.0
        %6189 = vmatpush1.xpose.msra.mxu0 0.0
        %6190 = vmatprep.subr.mxu0 0.0
        %6191 = vmatpush1.xpose.msra.mxu0 0.0
        %6192 = vmatprep.subr.mxu0 0.0
        %6193 = vmatpush1.xpose.msra.mxu0 0.0
        %6194 = vmatprep.subr.mxu0 0.0
        %6195 = vmatpush1.xpose.msra.mxu0 0.0
        %6196 = vmatprep.subr.mxu0 0.0
        %6197 = vmatpush1.xpose.msra.mxu0 0.0
        %6198 = vmatprep.subr.mxu0 0.0
        %6199 = vmatpush1.xpose.msra.mxu0 0.0
        %6200 = vmatprep.subr.mxu0 0.0
        %6201 = vmatpush1.xpose.msra.mxu0 0.0
        %6202 = vmatprep.subr.mxu0 0.0
        %6203 = vmatpush1.xpose.msra.mxu0 0.0
        %6204 = vmatprep.subr.mxu0 0.0
        %6205 = vmatpush1.xpose.msra.mxu0 0.0
        %6206 = vmatprep.subr.mxu0 0.0
        %6207 = vmatpush1.xpose.msra.mxu0 0.0
        %6208 = vmatprep.subr.mxu0 0.0
        %6209 = vmatpush1.xpose.msra.mxu0 0.0
        %6210 = vmatprep.subr.mxu0 0.0
        %6211 = vmatpush1.xpose.msra.mxu0 0.0
        %6212 = vmatprep.subr.mxu0 0.0
        %6213 = vmatpush1.xpose.msra.mxu0 0.0
        %6214 = vmatprep.subr.mxu0 0.0
        %6215 = vmatpush1.xpose.msra.mxu0 0.0
        %6216 = vmatprep.subr.mxu0 0.0
        %6217 = vmatpush1.xpose.msra.mxu0 0.0
        %6218 = vmatprep.subr.mxu0 0.0
        %6219 = vmatpush1.xpose.msra.mxu0 0.0
        %6220 = vmatprep.subr.mxu0 0.0
        %6221 = vmatpush1.xpose.msra.mxu0 0.0
        %6222 = vmatprep.mubr.f32.mxu0 0.0
        %6223 = vmatmul.mubr.f32.gmra.mrb[0].mxu0 %v6154
        %v6224 = vpop.f32.mrb[0].mxu0
        %v6225 = vadd.f32 0.0, %v6224
        %v6226 = vpop.f32.mrb[0].mxu0
        %6227 = vdwg.mxu0
        %v6228 = vmul.f32 %v6147, 0.5
        %v6229 = vmul.f32 %v6225, 0.5
        %v6230 = vsel %vm854, %v6228, -inf
        %6231 = vmax.xlane.f32.xlu0 %v6230
        %v6232 = vpop.xlane.xlu0 %6231
        %v6233 = vsel %vm854, %v6229, -inf
        %6234 = vmax.xlane.f32.xlu0 %v6233
        %v6235 = vpop.xlane.xlu0 %6234
        %v6236 = vsub.f32 %v6228, %v6232
        %v6237 = vsub.f32 %v6229, %v6235
        %v6238 = vmul.f32 %v6236, 1.442695
        %v6239 = vpow.pop %v6238
        %v6240 = vmul.f32 %v6237, 1.442695
        %v6241 = vpow.pop %v6240
        %v6242 = vsel %vm854, %v6239, 0.0
        %6243 = vadd.xlane.f32.xlu0 %v6242
        %v6244 = vpop.xlane.xlu0 %6243
        %v6245 = vsel %vm854, %v6241, 0.0
        %6246 = vadd.xlane.f32.xlu0 %v6245
        %v6247 = vpop.xlane.xlu0 %6246
        %v6248 = vrcp.pop %v6244
        %v6249 = vrcp.pop %v6247
        %v6250 = vmul.f32 %v6239, %v6248
        %v6251 = vmul.f32 %v6241, %v6249
        %6252 = vrot.lane.b32.xlu0 %v4398, 48
        %v6253 = vpop.permute.xlu0 %6252
        %v6256 = vsel %vm854, %v6250, 0
        %6258 = vmatprep.subr.mxu0 0.0
        %6259 = vmatpush1.msra.mxu0 %v6253
        %6260 = vmatprep.subr.mxu0 0.0
        %6261 = vmatpush1.msra.mxu0 0.0
        %6262 = vmatprep.subr.mxu0 0.0
        %6263 = vmatpush1.msra.mxu0 0.0
        %6264 = vmatprep.subr.mxu0 0.0
        %6265 = vmatpush1.msra.mxu0 0.0
        %6266 = vmatprep.subr.mxu0 0.0
        %6267 = vmatpush1.msra.mxu0 0.0
        %6268 = vmatprep.subr.mxu0 0.0
        %6269 = vmatpush1.msra.mxu0 0.0
        %6270 = vmatprep.subr.mxu0 0.0
        %6271 = vmatpush1.msra.mxu0 0.0
        %6272 = vmatprep.subr.mxu0 0.0
        %6273 = vmatpush1.msra.mxu0 0.0
        %6274 = vmatprep.subr.mxu0 0.0
        %6275 = vmatpush1.msra.mxu0 0.0
        %6276 = vmatprep.subr.mxu0 0.0
        %6277 = vmatpush1.msra.mxu0 0.0
        %6278 = vmatprep.subr.mxu0 0.0
        %6279 = vmatpush1.msra.mxu0 0.0
        %6280 = vmatprep.subr.mxu0 0.0
        %6281 = vmatpush1.msra.mxu0 0.0
        %6282 = vmatprep.subr.mxu0 0.0
        %6283 = vmatpush1.msra.mxu0 0.0
        %6284 = vmatprep.subr.mxu0 0.0
        %6285 = vmatpush1.msra.mxu0 0.0
        %6286 = vmatprep.subr.mxu0 0.0
        %6287 = vmatpush1.msra.mxu0 0.0
        %6288 = vmatprep.subr.mxu0 0.0
        %6289 = vmatpush1.msra.mxu0 0.0
        %6290 = vmatprep.subr.mxu0 0.0
        %6291 = vmatpush1.msra.mxu0 0.0
        %6292 = vmatprep.subr.mxu0 0.0
        %6293 = vmatpush1.msra.mxu0 0.0
        %6294 = vmatprep.subr.mxu0 0.0
        %6295 = vmatpush1.msra.mxu0 0.0
        %6296 = vmatprep.subr.mxu0 0.0
        %6297 = vmatpush1.msra.mxu0 0.0
        %6298 = vmatprep.subr.mxu0 0.0
        %6299 = vmatpush1.msra.mxu0 0.0
        %6300 = vmatprep.subr.mxu0 0.0
        %6301 = vmatpush1.msra.mxu0 0.0
        %6302 = vmatprep.subr.mxu0 0.0
        %6303 = vmatpush1.msra.mxu0 0.0
        %6304 = vmatprep.subr.mxu0 0.0
        %6305 = vmatpush1.msra.mxu0 0.0
        %6306 = vmatprep.subr.mxu0 0.0
        %6307 = vmatpush1.msra.mxu0 0.0
        %6308 = vmatprep.subr.mxu0 0.0
        %6309 = vmatpush1.msra.mxu0 0.0
        %6310 = vmatprep.subr.mxu0 0.0
        %6311 = vmatpush1.msra.mxu0 0.0
        %6312 = vmatprep.subr.mxu0 0.0
        %6313 = vmatpush1.msra.mxu0 0.0
        %6314 = vmatprep.subr.mxu0 0.0
        %6315 = vmatpush1.msra.mxu0 0.0
        %6316 = vmatprep.subr.mxu0 0.0
        %6317 = vmatpush1.msra.mxu0 0.0
        %6318 = vmatprep.subr.mxu0 0.0
        %6319 = vmatpush1.msra.mxu0 0.0
        %6320 = vmatprep.subr.mxu0 0.0
        %6321 = vmatpush1.msra.mxu0 0.0
        %6322 = vmatprep.mubr.f32.mxu0 0.0
        %6323 = vmatmul.mubr.f32.gmra.mrb[0].mxu0 %v6256
        %v6324 = vpop.f32.mrb[0].mxu0
        %v6325 = vadd.f32 0.0, %v6324
        %v6326 = vpop.f32.mrb[0].mxu0
        %6327 = vdwg.mxu0
        %6328 = vrot.lane.b32.xlu0 %v4403, 48
        %v6329 = vpop.permute.xlu0 %6328
        %v6332 = vsel %vm854, %v6251, 0
        %6334 = vmatprep.subr.mxu0 0.0
        %6335 = vmatpush1.msra.mxu0 %v6329
        %6336 = vmatprep.subr.mxu0 0.0
        %6337 = vmatpush1.msra.mxu0 0.0
        %6338 = vmatprep.subr.mxu0 0.0
        %6339 = vmatpush1.msra.mxu0 0.0
        %6340 = vmatprep.subr.mxu0 0.0
        %6341 = vmatpush1.msra.mxu0 0.0
        %6342 = vmatprep.subr.mxu0 0.0
        %6343 = vmatpush1.msra.mxu0 0.0
        %6344 = vmatprep.subr.mxu0 0.0
        %6345 = vmatpush1.msra.mxu0 0.0
        %6346 = vmatprep.subr.mxu0 0.0
        %6347 = vmatpush1.msra.mxu0 0.0
        %6348 = vmatprep.subr.mxu0 0.0
        %6349 = vmatpush1.msra.mxu0 0.0
        %6350 = vmatprep.subr.mxu0 0.0
        %6351 = vmatpush1.msra.mxu0 0.0
        %6352 = vmatprep.subr.mxu0 0.0
        %6353 = vmatpush1.msra.mxu0 0.0
        %6354 = vmatprep.subr.mxu0 0.0
        %6355 = vmatpush1.msra.mxu0 0.0
        %6356 = vmatprep.subr.mxu0 0.0
        %6357 = vmatpush1.msra.mxu0 0.0
        %6358 = vmatprep.subr.mxu0 0.0
        %6359 = vmatpush1.msra.mxu0 0.0
        %6360 = vmatprep.subr.mxu0 0.0
        %6361 = vmatpush1.msra.mxu0 0.0
        %6362 = vmatprep.subr.mxu0 0.0
        %6363 = vmatpush1.msra.mxu0 0.0
        %6364 = vmatprep.subr.mxu0 0.0
        %6365 = vmatpush1.msra.mxu0 0.0
        %6366 = vmatprep.subr.mxu0 0.0
        %6367 = vmatpush1.msra.mxu0 0.0
        %6368 = vmatprep.subr.mxu0 0.0
        %6369 = vmatpush1.msra.mxu0 0.0
        %6370 = vmatprep.subr.mxu0 0.0
        %6371 = vmatpush1.msra.mxu0 0.0
        %6372 = vmatprep.subr.mxu0 0.0
        %6373 = vmatpush1.msra.mxu0 0.0
        %6374 = vmatprep.subr.mxu0 0.0
        %6375 = vmatpush1.msra.mxu0 0.0
        %6376 = vmatprep.subr.mxu0 0.0
        %6377 = vmatpush1.msra.mxu0 0.0
        %6378 = vmatprep.subr.mxu0 0.0
        %6379 = vmatpush1.msra.mxu0 0.0
        %6380 = vmatprep.subr.mxu0 0.0
        %6381 = vmatpush1.msra.mxu0 0.0
        %6382 = vmatprep.subr.mxu0 0.0
        %6383 = vmatpush1.msra.mxu0 0.0
        %6384 = vmatprep.subr.mxu0 0.0
        %6385 = vmatpush1.msra.mxu0 0.0
        %6386 = vmatprep.subr.mxu0 0.0
        %6387 = vmatpush1.msra.mxu0 0.0
        %6388 = vmatprep.subr.mxu0 0.0
        %6389 = vmatpush1.msra.mxu0 0.0
        %6390 = vmatprep.subr.mxu0 0.0
        %6391 = vmatpush1.msra.mxu0 0.0
        %6392 = vmatprep.subr.mxu0 0.0
        %6393 = vmatpush1.msra.mxu0 0.0
        %6394 = vmatprep.subr.mxu0 0.0
        %6395 = vmatpush1.msra.mxu0 0.0
        %6396 = vmatprep.subr.mxu0 0.0
        %6397 = vmatpush1.msra.mxu0 0.0
        %6398 = vmatprep.mubr.f32.mxu0 0.0
        %6399 = vmatmul.mubr.f32.gmra.mrb[0].mxu0 %v6332
        %v6400 = vpop.f32.mrb[0].mxu0
        %v6401 = vadd.f32 0.0, %v6400
        %v6402 = vpop.f32.mrb[0].mxu0
        %6403 = vdwg.mxu0
        %v6405 = vsel %vm423, %v6325, 0
        %v6408 = vsel %vm423, %v6401, 0
        %v6411 = vsel %vm430, %v4319, 0
        %6413 = vmatprep.subr.mxu0 0.0
        %6414 = vmatpush1.msra.mxu0 %v6411
        %6415 = vmatprep.subr.mxu0 0.0
        %6416 = vmatpush1.msra.mxu0 0.0
        %6417 = vmatprep.subr.mxu0 0.0
        %6418 = vmatpush1.msra.mxu0 0.0
        %6419 = vmatprep.subr.mxu0 0.0
        %6420 = vmatpush1.msra.mxu0 0.0
        %6421 = vmatprep.subr.mxu0 0.0
        %6422 = vmatpush1.msra.mxu0 0.0
        %6423 = vmatprep.subr.mxu0 0.0
        %6424 = vmatpush1.msra.mxu0 0.0
        %6425 = vmatprep.subr.mxu0 0.0
        %6426 = vmatpush1.msra.mxu0 0.0
        %6427 = vmatprep.subr.mxu0 0.0
        %6428 = vmatpush1.msra.mxu0 0.0
        %6429 = vmatprep.subr.mxu0 0.0
        %6430 = vmatpush1.msra.mxu0 0.0
        %6431 = vmatprep.subr.mxu0 0.0
        %6432 = vmatpush1.msra.mxu0 0.0
        %6433 = vmatprep.subr.mxu0 0.0
        %6434 = vmatpush1.msra.mxu0 0.0
        %6435 = vmatprep.subr.mxu0 0.0
        %6436 = vmatpush1.msra.mxu0 0.0
        %6437 = vmatprep.subr.mxu0 0.0
        %6438 = vmatpush1.msra.mxu0 0.0
        %6439 = vmatprep.subr.mxu0 0.0
        %6440 = vmatpush1.msra.mxu0 0.0
        %6441 = vmatprep.subr.mxu0 0.0
        %6442 = vmatpush1.msra.mxu0 0.0
        %6443 = vmatprep.subr.mxu0 0.0
        %6444 = vmatpush1.msra.mxu0 0.0
        %6445 = vmatprep.subr.mxu0 0.0
        %6446 = vmatpush1.msra.mxu0 0.0
        %6447 = vmatprep.subr.mxu0 0.0
        %6448 = vmatpush1.msra.mxu0 0.0
        %6449 = vmatprep.subr.mxu0 0.0
        %6450 = vmatpush1.msra.mxu0 0.0
        %6451 = vmatprep.subr.mxu0 0.0
        %6452 = vmatpush1.msra.mxu0 0.0
        %6453 = vmatprep.subr.mxu0 0.0
        %6454 = vmatpush1.msra.mxu0 0.0
        %6455 = vmatprep.subr.mxu0 0.0
        %6456 = vmatpush1.msra.mxu0 0.0
        %6457 = vmatprep.subr.mxu0 0.0
        %6458 = vmatpush1.msra.mxu0 0.0
        %6459 = vmatprep.subr.mxu0 0.0
        %6460 = vmatpush1.msra.mxu0 0.0
        %6461 = vmatprep.subr.mxu0 0.0
        %6462 = vmatpush1.msra.mxu0 0.0
        %6463 = vmatprep.subr.mxu0 0.0
        %6464 = vmatpush1.msra.mxu0 0.0
        %6465 = vmatprep.subr.mxu0 0.0
        %6466 = vmatpush1.msra.mxu0 0.0
        %6467 = vmatprep.subr.mxu0 0.0
        %6468 = vmatpush1.msra.mxu0 0.0
        %6469 = vmatprep.subr.mxu0 0.0
        %6470 = vmatpush1.msra.mxu0 0.0
        %6471 = vmatprep.subr.mxu0 0.0
        %6472 = vmatpush1.msra.mxu0 0.0
        %6473 = vmatprep.subr.mxu0 0.0
        %6474 = vmatpush1.msra.mxu0 0.0
        %6475 = vmatprep.subr.mxu0 0.0
        %6476 = vmatpush1.msra.mxu0 0.0
        %6477 = vmatprep.mubr.f32.mxu0 0.0
        %6478 = vmatmul.mubr.f32.gmra.mrb[0].mxu0 %v6405
        %v6479 = vpop.f32.mrb[0].mxu0
        %v6480 = vadd.f32 0.0, %v6479
        %v6481 = vpop.f32.mrb[0].mxu0
        %6482 = vmatprep.mubr.f32.mxu0 0.0
        %6483 = vmatmul.mubr.f32.gmra.mrb[0].mxu0 %v6408
        %v6484 = vpop.f32.mrb[0].mxu0
        %v6485 = vadd.f32 0.0, %v6484
        %v6486 = vpop.f32.mrb[0].mxu0
        %6487 = vdwg.mxu0
        %v6488 = vadd.f32 %v6070, %v6480
        %v6489 = vadd.f32 %v6071, %v6485
        %6490 = vrot.lane.b32.xlu0 %v4398, 108
        %v6491 = vpop.permute.xlu0 %6490
        %6492 = vrot.lane.b32.xlu0 %v4398, 76
        %v6493 = vpop.permute.xlu0 %6492
        %v6494 = vsel %vm423, %v6491, 0
        %v6496 = vsel %vm423, %v6493, 0
        %6498 = vmatprep.subr.mxu0 0.0
        %6499 = vmatpush1.xpose.msra.mxu0 %v6496
        %6500 = vmatprep.subr.mxu0 0.0
        %6501 = vmatpush1.xpose.msra.mxu0 0.0
        %6502 = vmatprep.subr.mxu0 0.0
        %6503 = vmatpush1.xpose.msra.mxu0 0.0
        %6504 = vmatprep.subr.mxu0 0.0
        %6505 = vmatpush1.xpose.msra.mxu0 0.0
        %6506 = vmatprep.subr.mxu0 0.0
        %6507 = vmatpush1.xpose.msra.mxu0 0.0
        %6508 = vmatprep.subr.mxu0 0.0
        %6509 = vmatpush1.xpose.msra.mxu0 0.0
        %6510 = vmatprep.subr.mxu0 0.0
        %6511 = vmatpush1.xpose.msra.mxu0 0.0
        %6512 = vmatprep.subr.mxu0 0.0
        %6513 = vmatpush1.xpose.msra.mxu0 0.0
        %6514 = vmatprep.subr.mxu0 0.0
        %6515 = vmatpush1.xpose.msra.mxu0 0.0
        %6516 = vmatprep.subr.mxu0 0.0
        %6517 = vmatpush1.xpose.msra.mxu0 0.0
        %6518 = vmatprep.subr.mxu0 0.0
        %6519 = vmatpush1.xpose.msra.mxu0 0.0
        %6520 = vmatprep.subr.mxu0 0.0
        %6521 = vmatpush1.xpose.msra.mxu0 0.0
        %6522 = vmatprep.subr.mxu0 0.0
        %6523 = vmatpush1.xpose.msra.mxu0 0.0
        %6524 = vmatprep.subr.mxu0 0.0
        %6525 = vmatpush1.xpose.msra.mxu0 0.0
        %6526 = vmatprep.subr.mxu0 0.0
        %6527 = vmatpush1.xpose.msra.mxu0 0.0
        %6528 = vmatprep.subr.mxu0 0.0
        %6529 = vmatpush1.xpose.msra.mxu0 0.0
        %6530 = vmatprep.subr.mxu0 0.0
        %6531 = vmatpush1.xpose.msra.mxu0 0.0
        %6532 = vmatprep.subr.mxu0 0.0
        %6533 = vmatpush1.xpose.msra.mxu0 0.0
        %6534 = vmatprep.subr.mxu0 0.0
        %6535 = vmatpush1.xpose.msra.mxu0 0.0
        %6536 = vmatprep.subr.mxu0 0.0
        %6537 = vmatpush1.xpose.msra.mxu0 0.0
        %6538 = vmatprep.subr.mxu0 0.0
        %6539 = vmatpush1.xpose.msra.mxu0 0.0
        %6540 = vmatprep.subr.mxu0 0.0
        %6541 = vmatpush1.xpose.msra.mxu0 0.0
        %6542 = vmatprep.subr.mxu0 0.0
        %6543 = vmatpush1.xpose.msra.mxu0 0.0
        %6544 = vmatprep.subr.mxu0 0.0
        %6545 = vmatpush1.xpose.msra.mxu0 0.0
        %6546 = vmatprep.subr.mxu0 0.0
        %6547 = vmatpush1.xpose.msra.mxu0 0.0
        %6548 = vmatprep.subr.mxu0 0.0
        %6549 = vmatpush1.xpose.msra.mxu0 0.0
        %6550 = vmatprep.subr.mxu0 0.0
        %6551 = vmatpush1.xpose.msra.mxu0 0.0
        %6552 = vmatprep.subr.mxu0 0.0
        %6553 = vmatpush1.xpose.msra.mxu0 0.0
        %6554 = vmatprep.subr.mxu0 0.0
        %6555 = vmatpush1.xpose.msra.mxu0 0.0
        %6556 = vmatprep.subr.mxu0 0.0
        %6557 = vmatpush1.xpose.msra.mxu0 0.0
        %6558 = vmatprep.subr.mxu0 0.0
        %6559 = vmatpush1.xpose.msra.mxu0 0.0
        %6560 = vmatprep.subr.mxu0 0.0
        %6561 = vmatpush1.xpose.msra.mxu0 0.0
        %6562 = vmatprep.mubr.f32.mxu0 0.0
        %6563 = vmatmul.mubr.f32.gmra.mrb[0].mxu0 %v6494
        %v6564 = vpop.f32.mrb[0].mxu0
        %v6565 = vadd.f32 0.0, %v6564
        %v6566 = vpop.f32.mrb[0].mxu0
        %6567 = vdwg.mxu0
        %6568 = vrot.lane.b32.xlu0 %v4403, 108
        %v6569 = vpop.permute.xlu0 %6568
        %6570 = vrot.lane.b32.xlu0 %v4403, 76
        %v6571 = vpop.permute.xlu0 %6570
        %v6572 = vsel %vm423, %v6569, 0
        %v6574 = vsel %vm423, %v6571, 0
        %6576 = vmatprep.subr.mxu0 0.0
        %6577 = vmatpush1.xpose.msra.mxu0 %v6574
        %6578 = vmatprep.subr.mxu0 0.0
        %6579 = vmatpush1.xpose.msra.mxu0 0.0
        %6580 = vmatprep.subr.mxu0 0.0
        %6581 = vmatpush1.xpose.msra.mxu0 0.0
        %6582 = vmatprep.subr.mxu0 0.0
        %6583 = vmatpush1.xpose.msra.mxu0 0.0
        %6584 = vmatprep.subr.mxu0 0.0
        %6585 = vmatpush1.xpose.msra.mxu0 0.0
        %6586 = vmatprep.subr.mxu0 0.0
        %6587 = vmatpush1.xpose.msra.mxu0 0.0
        %6588 = vmatprep.subr.mxu0 0.0
        %6589 = vmatpush1.xpose.msra.mxu0 0.0
        %6590 = vmatprep.subr.mxu0 0.0
        %6591 = vmatpush1.xpose.msra.mxu0 0.0
        %6592 = vmatprep.subr.mxu0 0.0
        %6593 = vmatpush1.xpose.msra.mxu0 0.0
        %6594 = vmatprep.subr.mxu0 0.0
        %6595 = vmatpush1.xpose.msra.mxu0 0.0
        %6596 = vmatprep.subr.mxu0 0.0
        %6597 = vmatpush1.xpose.msra.mxu0 0.0
        %6598 = vmatprep.subr.mxu0 0.0
        %6599 = vmatpush1.xpose.msra.mxu0 0.0
        %6600 = vmatprep.subr.mxu0 0.0
        %6601 = vmatpush1.xpose.msra.mxu0 0.0
        %6602 = vmatprep.subr.mxu0 0.0
        %6603 = vmatpush1.xpose.msra.mxu0 0.0
        %6604 = vmatprep.subr.mxu0 0.0
        %6605 = vmatpush1.xpose.msra.mxu0 0.0
        %6606 = vmatprep.subr.mxu0 0.0
        %6607 = vmatpush1.xpose.msra.mxu0 0.0
        %6608 = vmatprep.subr.mxu0 0.0
        %6609 = vmatpush1.xpose.msra.mxu0 0.0
        %6610 = vmatprep.subr.mxu0 0.0
        %6611 = vmatpush1.xpose.msra.mxu0 0.0
        %6612 = vmatprep.subr.mxu0 0.0
        %6613 = vmatpush1.xpose.msra.mxu0 0.0
        %6614 = vmatprep.subr.mxu0 0.0
        %6615 = vmatpush1.xpose.msra.mxu0 0.0
        %6616 = vmatprep.subr.mxu0 0.0
        %6617 = vmatpush1.xpose.msra.mxu0 0.0
        %6618 = vmatprep.subr.mxu0 0.0
        %6619 = vmatpush1.xpose.msra.mxu0 0.0
        %6620 = vmatprep.subr.mxu0 0.0
        %6621 = vmatpush1.xpose.msra.mxu0 0.0
        %6622 = vmatprep.subr.mxu0 0.0
        %6623 = vmatpush1.xpose.msra.mxu0 0.0
        %6624 = vmatprep.subr.mxu0 0.0
        %6625 = vmatpush1.xpose.msra.mxu0 0.0
        %6626 = vmatprep.subr.mxu0 0.0
        %6627 = vmatpush1.xpose.msra.mxu0 0.0
        %6628 = vmatprep.subr.mxu0 0.0
        %6629 = vmatpush1.xpose.msra.mxu0 0.0
        %6630 = vmatprep.subr.mxu0 0.0
        %6631 = vmatpush1.xpose.msra.mxu0 0.0
        %6632 = vmatprep.subr.mxu0 0.0
        %6633 = vmatpush1.xpose.msra.mxu0 0.0
        %6634 = vmatprep.subr.mxu0 0.0
        %6635 = vmatpush1.xpose.msra.mxu0 0.0
        %6636 = vmatprep.subr.mxu0 0.0
        %6637 = vmatpush1.xpose.msra.mxu0 0.0
        %6638 = vmatprep.subr.mxu0 0.0
        %6639 = vmatpush1.xpose.msra.mxu0 0.0
        %6640 = vmatprep.mubr.f32.mxu0 0.0
        %6641 = vmatmul.mubr.f32.gmra.mrb[0].mxu0 %v6572
        %v6642 = vpop.f32.mrb[0].mxu0
        %v6643 = vadd.f32 0.0, %v6642
        %v6644 = vpop.f32.mrb[0].mxu0
        %6645 = vdwg.mxu0
        %v6646 = vmul.f32 %v6565, 0.5
        %v6647 = vmul.f32 %v6643, 0.5
        %v6648 = vsel %vm854, %v6646, -inf
        %6649 = vmax.xlane.f32.xlu0 %v6648
        %v6650 = vpop.xlane.xlu0 %6649
        %v6651 = vsel %vm854, %v6647, -inf
        %6652 = vmax.xlane.f32.xlu0 %v6651
        %v6653 = vpop.xlane.xlu0 %6652
        %v6654 = vsub.f32 %v6646, %v6650
        %v6655 = vsub.f32 %v6647, %v6653
        %v6656 = vmul.f32 %v6654, 1.442695
        %v6657 = vpow.pop %v6656
        %v6658 = vmul.f32 %v6655, 1.442695
        %v6659 = vpow.pop %v6658
        %v6660 = vsel %vm854, %v6657, 0.0
        %6661 = vadd.xlane.f32.xlu0 %v6660
        %v6662 = vpop.xlane.xlu0 %6661
        %v6663 = vsel %vm854, %v6659, 0.0
        %6664 = vadd.xlane.f32.xlu0 %v6663
        %v6665 = vpop.xlane.xlu0 %6664
        %v6666 = vrcp.pop %v6662
        %v6667 = vrcp.pop %v6665
        %v6668 = vmul.f32 %v6657, %v6666
        %v6669 = vmul.f32 %v6659, %v6667
        %6670 = vrot.lane.b32.xlu0 %v4398, 44
        %v6671 = vpop.permute.xlu0 %6670
        %v6674 = vsel %vm854, %v6668, 0
        %6676 = vmatprep.subr.mxu0 0.0
        %6677 = vmatpush1.msra.mxu0 %v6671
        %6678 = vmatprep.subr.mxu0 0.0
        %6679 = vmatpush1.msra.mxu0 0.0
        %6680 = vmatprep.subr.mxu0 0.0
        %6681 = vmatpush1.msra.mxu0 0.0
        %6682 = vmatprep.subr.mxu0 0.0
        %6683 = vmatpush1.msra.mxu0 0.0
        %6684 = vmatprep.subr.mxu0 0.0
        %6685 = vmatpush1.msra.mxu0 0.0
        %6686 = vmatprep.subr.mxu0 0.0
        %6687 = vmatpush1.msra.mxu0 0.0
        %6688 = vmatprep.subr.mxu0 0.0
        %6689 = vmatpush1.msra.mxu0 0.0
        %6690 = vmatprep.subr.mxu0 0.0
        %6691 = vmatpush1.msra.mxu0 0.0
        %6692 = vmatprep.subr.mxu0 0.0
        %6693 = vmatpush1.msra.mxu0 0.0
        %6694 = vmatprep.subr.mxu0 0.0
        %6695 = vmatpush1.msra.mxu0 0.0
        %6696 = vmatprep.subr.mxu0 0.0
        %6697 = vmatpush1.msra.mxu0 0.0
        %6698 = vmatprep.subr.mxu0 0.0
        %6699 = vmatpush1.msra.mxu0 0.0
        %6700 = vmatprep.subr.mxu0 0.0
        %6701 = vmatpush1.msra.mxu0 0.0
        %6702 = vmatprep.subr.mxu0 0.0
        %6703 = vmatpush1.msra.mxu0 0.0
        %6704 = vmatprep.subr.mxu0 0.0
        %6705 = vmatpush1.msra.mxu0 0.0
        %6706 = vmatprep.subr.mxu0 0.0
        %6707 = vmatpush1.msra.mxu0 0.0
        %6708 = vmatprep.subr.mxu0 0.0
        %6709 = vmatpush1.msra.mxu0 0.0
        %6710 = vmatprep.subr.mxu0 0.0
        %6711 = vmatpush1.msra.mxu0 0.0
        %6712 = vmatprep.subr.mxu0 0.0
        %6713 = vmatpush1.msra.mxu0 0.0
        %6714 = vmatprep.subr.mxu0 0.0
        %6715 = vmatpush1.msra.mxu0 0.0
        %6716 = vmatprep.subr.mxu0 0.0
        %6717 = vmatpush1.msra.mxu0 0.0
        %6718 = vmatprep.subr.mxu0 0.0
        %6719 = vmatpush1.msra.mxu0 0.0
        %6720 = vmatprep.subr.mxu0 0.0
        %6721 = vmatpush1.msra.mxu0 0.0
        %6722 = vmatprep.subr.mxu0 0.0
        %6723 = vmatpush1.msra.mxu0 0.0
        %6724 = vmatprep.subr.mxu0 0.0
        %6725 = vmatpush1.msra.mxu0 0.0
        %6726 = vmatprep.subr.mxu0 0.0
        %6727 = vmatpush1.msra.mxu0 0.0
        %6728 = vmatprep.subr.mxu0 0.0
        %6729 = vmatpush1.msra.mxu0 0.0
        %6730 = vmatprep.subr.mxu0 0.0
        %6731 = vmatpush1.msra.mxu0 0.0
        %6732 = vmatprep.subr.mxu0 0.0
        %6733 = vmatpush1.msra.mxu0 0.0
        %6734 = vmatprep.subr.mxu0 0.0
        %6735 = vmatpush1.msra.mxu0 0.0
        %6736 = vmatprep.subr.mxu0 0.0
        %6737 = vmatpush1.msra.mxu0 0.0
        %6738 = vmatprep.subr.mxu0 0.0
        %6739 = vmatpush1.msra.mxu0 0.0
        %6740 = vmatprep.mubr.f32.mxu0 0.0
        %6741 = vmatmul.mubr.f32.gmra.mrb[0].mxu0 %v6674
        %v6742 = vpop.f32.mrb[0].mxu0
        %v6743 = vadd.f32 0.0, %v6742
        %v6744 = vpop.f32.mrb[0].mxu0
        %6745 = vdwg.mxu0
        %6746 = vrot.lane.b32.xlu0 %v4403, 44
        %v6747 = vpop.permute.xlu0 %6746
        %v6750 = vsel %vm854, %v6669, 0
        %6752 = vmatprep.subr.mxu0 0.0
        %6753 = vmatpush1.msra.mxu0 %v6747
        %6754 = vmatprep.subr.mxu0 0.0
        %6755 = vmatpush1.msra.mxu0 0.0
        %6756 = vmatprep.subr.mxu0 0.0
        %6757 = vmatpush1.msra.mxu0 0.0
        %6758 = vmatprep.subr.mxu0 0.0
        %6759 = vmatpush1.msra.mxu0 0.0
        %6760 = vmatprep.subr.mxu0 0.0
        %6761 = vmatpush1.msra.mxu0 0.0
        %6762 = vmatprep.subr.mxu0 0.0
        %6763 = vmatpush1.msra.mxu0 0.0
        %6764 = vmatprep.subr.mxu0 0.0
        %6765 = vmatpush1.msra.mxu0 0.0
        %6766 = vmatprep.subr.mxu0 0.0
        %6767 = vmatpush1.msra.mxu0 0.0
        %6768 = vmatprep.subr.mxu0 0.0
        %6769 = vmatpush1.msra.mxu0 0.0
        %6770 = vmatprep.subr.mxu0 0.0
        %6771 = vmatpush1.msra.mxu0 0.0
        %6772 = vmatprep.subr.mxu0 0.0
        %6773 = vmatpush1.msra.mxu0 0.0
        %6774 = vmatprep.subr.mxu0 0.0
        %6775 = vmatpush1.msra.mxu0 0.0
        %6776 = vmatprep.subr.mxu0 0.0
        %6777 = vmatpush1.msra.mxu0 0.0
        %6778 = vmatprep.subr.mxu0 0.0
        %6779 = vmatpush1.msra.mxu0 0.0
        %6780 = vmatprep.subr.mxu0 0.0
        %6781 = vmatpush1.msra.mxu0 0.0
        %6782 = vmatprep.subr.mxu0 0.0
        %6783 = vmatpush1.msra.mxu0 0.0
        %6784 = vmatprep.subr.mxu0 0.0
        %6785 = vmatpush1.msra.mxu0 0.0
        %6786 = vmatprep.subr.mxu0 0.0
        %6787 = vmatpush1.msra.mxu0 0.0
        %6788 = vmatprep.subr.mxu0 0.0
        %6789 = vmatpush1.msra.mxu0 0.0
        %6790 = vmatprep.subr.mxu0 0.0
        %6791 = vmatpush1.msra.mxu0 0.0
        %6792 = vmatprep.subr.mxu0 0.0
        %6793 = vmatpush1.msra.mxu0 0.0
        %6794 = vmatprep.subr.mxu0 0.0
        %6795 = vmatpush1.msra.mxu0 0.0
        %6796 = vmatprep.subr.mxu0 0.0
        %6797 = vmatpush1.msra.mxu0 0.0
        %6798 = vmatprep.subr.mxu0 0.0
        %6799 = vmatpush1.msra.mxu0 0.0
        %6800 = vmatprep.subr.mxu0 0.0
        %6801 = vmatpush1.msra.mxu0 0.0
        %6802 = vmatprep.subr.mxu0 0.0
        %6803 = vmatpush1.msra.mxu0 0.0
        %6804 = vmatprep.subr.mxu0 0.0
        %6805 = vmatpush1.msra.mxu0 0.0
        %6806 = vmatprep.subr.mxu0 0.0
        %6807 = vmatpush1.msra.mxu0 0.0
        %6808 = vmatprep.subr.mxu0 0.0
        %6809 = vmatpush1.msra.mxu0 0.0
        %6810 = vmatprep.subr.mxu0 0.0
        %6811 = vmatpush1.msra.mxu0 0.0
        %6812 = vmatprep.subr.mxu0 0.0
        %6813 = vmatpush1.msra.mxu0 0.0
        %6814 = vmatprep.subr.mxu0 0.0
        %6815 = vmatpush1.msra.mxu0 0.0
        %6816 = vmatprep.mubr.f32.mxu0 0.0
        %6817 = vmatmul.mubr.f32.gmra.mrb[0].mxu0 %v6750
        %v6818 = vpop.f32.mrb[0].mxu0
        %v6819 = vadd.f32 0.0, %v6818
        %v6820 = vpop.f32.mrb[0].mxu0
        %6821 = vdwg.mxu0
        %v6822 = vrot.slane %v4319, 4
        %v6824 = vsel %vm423, %v6743, 0
        %v6827 = vsel %vm423, %v6819, 0
        %v6829 = vsel %vm430, %v6822, 0
        %6831 = vmatprep.subr.mxu0 0.0
        %6832 = vmatpush1.msra.mxu0 %v6829
        %6833 = vmatprep.subr.mxu0 0.0
        %6834 = vmatpush1.msra.mxu0 0.0
        %6835 = vmatprep.subr.mxu0 0.0
        %6836 = vmatpush1.msra.mxu0 0.0
        %6837 = vmatprep.subr.mxu0 0.0
        %6838 = vmatpush1.msra.mxu0 0.0
        %6839 = vmatprep.subr.mxu0 0.0
        %6840 = vmatpush1.msra.mxu0 0.0
        %6841 = vmatprep.subr.mxu0 0.0
        %6842 = vmatpush1.msra.mxu0 0.0
        %6843 = vmatprep.subr.mxu0 0.0
        %6844 = vmatpush1.msra.mxu0 0.0
        %6845 = vmatprep.subr.mxu0 0.0
        %6846 = vmatpush1.msra.mxu0 0.0
        %6847 = vmatprep.subr.mxu0 0.0
        %6848 = vmatpush1.msra.mxu0 0.0
        %6849 = vmatprep.subr.mxu0 0.0
        %6850 = vmatpush1.msra.mxu0 0.0
        %6851 = vmatprep.subr.mxu0 0.0
        %6852 = vmatpush1.msra.mxu0 0.0
        %6853 = vmatprep.subr.mxu0 0.0
        %6854 = vmatpush1.msra.mxu0 0.0
        %6855 = vmatprep.subr.mxu0 0.0
        %6856 = vmatpush1.msra.mxu0 0.0
        %6857 = vmatprep.subr.mxu0 0.0
        %6858 = vmatpush1.msra.mxu0 0.0
        %6859 = vmatprep.subr.mxu0 0.0
        %6860 = vmatpush1.msra.mxu0 0.0
        %6861 = vmatprep.subr.mxu0 0.0
        %6862 = vmatpush1.msra.mxu0 0.0
        %6863 = vmatprep.subr.mxu0 0.0
        %6864 = vmatpush1.msra.mxu0 0.0
        %6865 = vmatprep.subr.mxu0 0.0
        %6866 = vmatpush1.msra.mxu0 0.0
        %6867 = vmatprep.subr.mxu0 0.0
        %6868 = vmatpush1.msra.mxu0 0.0
        %6869 = vmatprep.subr.mxu0 0.0
        %6870 = vmatpush1.msra.mxu0 0.0
        %6871 = vmatprep.subr.mxu0 0.0
        %6872 = vmatpush1.msra.mxu0 0.0
        %6873 = vmatprep.subr.mxu0 0.0
        %6874 = vmatpush1.msra.mxu0 0.0
        %6875 = vmatprep.subr.mxu0 0.0
        %6876 = vmatpush1.msra.mxu0 0.0
        %6877 = vmatprep.subr.mxu0 0.0
        %6878 = vmatpush1.msra.mxu0 0.0
        %6879 = vmatprep.subr.mxu0 0.0
        %6880 = vmatpush1.msra.mxu0 0.0
        %6881 = vmatprep.subr.mxu0 0.0
        %6882 = vmatpush1.msra.mxu0 0.0
        %6883 = vmatprep.subr.mxu0 0.0
        %6884 = vmatpush1.msra.mxu0 0.0
        %6885 = vmatprep.subr.mxu0 0.0
        %6886 = vmatpush1.msra.mxu0 0.0
        %6887 = vmatprep.subr.mxu0 0.0
        %6888 = vmatpush1.msra.mxu0 0.0
        %6889 = vmatprep.subr.mxu0 0.0
        %6890 = vmatpush1.msra.mxu0 0.0
        %6891 = vmatprep.subr.mxu0 0.0
        %6892 = vmatpush1.msra.mxu0 0.0
        %6893 = vmatprep.subr.mxu0 0.0
        %6894 = vmatpush1.msra.mxu0 0.0
        %6895 = vmatprep.mubr.f32.mxu0 0.0
        %6896 = vmatmul.mubr.f32.gmra.mrb[0].mxu0 %v6824
        %v6897 = vpop.f32.mrb[0].mxu0
        %v6898 = vadd.f32 0.0, %v6897
        %v6899 = vpop.f32.mrb[0].mxu0
        %6900 = vmatprep.mubr.f32.mxu0 0.0
        %6901 = vmatmul.mubr.f32.gmra.mrb[0].mxu0 %v6827
        %v6902 = vpop.f32.mrb[0].mxu0
        %v6903 = vadd.f32 0.0, %v6902
        %v6904 = vpop.f32.mrb[0].mxu0
        %6905 = vdwg.mxu0
        %v6906 = vadd.f32 %v6488, %v6898
        %v6907 = vadd.f32 %v6489, %v6903
        %6908 = vrot.lane.b32.xlu0 %v4398, 104
        %v6909 = vpop.permute.xlu0 %6908
        %6910 = vrot.lane.b32.xlu0 %v4398, 72
        %v6911 = vpop.permute.xlu0 %6910
        %v6912 = vsel %vm423, %v6909, 0
        %v6914 = vsel %vm423, %v6911, 0
        %6916 = vmatprep.subr.mxu0 0.0
        %6917 = vmatpush1.xpose.msra.mxu0 %v6914
        %6918 = vmatprep.subr.mxu0 0.0
        %6919 = vmatpush1.xpose.msra.mxu0 0.0
        %6920 = vmatprep.subr.mxu0 0.0
        %6921 = vmatpush1.xpose.msra.mxu0 0.0
        %6922 = vmatprep.subr.mxu0 0.0
        %6923 = vmatpush1.xpose.msra.mxu0 0.0
        %6924 = vmatprep.subr.mxu0 0.0
        %6925 = vmatpush1.xpose.msra.mxu0 0.0
        %6926 = vmatprep.subr.mxu0 0.0
        %6927 = vmatpush1.xpose.msra.mxu0 0.0
        %6928 = vmatprep.subr.mxu0 0.0
        %6929 = vmatpush1.xpose.msra.mxu0 0.0
        %6930 = vmatprep.subr.mxu0 0.0
        %6931 = vmatpush1.xpose.msra.mxu0 0.0
        %6932 = vmatprep.subr.mxu0 0.0
        %6933 = vmatpush1.xpose.msra.mxu0 0.0
        %6934 = vmatprep.subr.mxu0 0.0
        %6935 = vmatpush1.xpose.msra.mxu0 0.0
        %6936 = vmatprep.subr.mxu0 0.0
        %6937 = vmatpush1.xpose.msra.mxu0 0.0
        %6938 = vmatprep.subr.mxu0 0.0
        %6939 = vmatpush1.xpose.msra.mxu0 0.0
        %6940 = vmatprep.subr.mxu0 0.0
        %6941 = vmatpush1.xpose.msra.mxu0 0.0
        %6942 = vmatprep.subr.mxu0 0.0
        %6943 = vmatpush1.xpose.msra.mxu0 0.0
        %6944 = vmatprep.subr.mxu0 0.0
        %6945 = vmatpush1.xpose.msra.mxu0 0.0
        %6946 = vmatprep.subr.mxu0 0.0
        %6947 = vmatpush1.xpose.msra.mxu0 0.0
        %6948 = vmatprep.subr.mxu0 0.0
        %6949 = vmatpush1.xpose.msra.mxu0 0.0
        %6950 = vmatprep.subr.mxu0 0.0
        %6951 = vmatpush1.xpose.msra.mxu0 0.0
        %6952 = vmatprep.subr.mxu0 0.0
        %6953 = vmatpush1.xpose.msra.mxu0 0.0
        %6954 = vmatprep.subr.mxu0 0.0
        %6955 = vmatpush1.xpose.msra.mxu0 0.0
        %6956 = vmatprep.subr.mxu0 0.0
        %6957 = vmatpush1.xpose.msra.mxu0 0.0
        %6958 = vmatprep.subr.mxu0 0.0
        %6959 = vmatpush1.xpose.msra.mxu0 0.0
        %6960 = vmatprep.subr.mxu0 0.0
        %6961 = vmatpush1.xpose.msra.mxu0 0.0
        %6962 = vmatprep.subr.mxu0 0.0
        %6963 = vmatpush1.xpose.msra.mxu0 0.0
        %6964 = vmatprep.subr.mxu0 0.0
        %6965 = vmatpush1.xpose.msra.mxu0 0.0
        %6966 = vmatprep.subr.mxu0 0.0
        %6967 = vmatpush1.xpose.msra.mxu0 0.0
        %6968 = vmatprep.subr.mxu0 0.0
        %6969 = vmatpush1.xpose.msra.mxu0 0.0
        %6970 = vmatprep.subr.mxu0 0.0
        %6971 = vmatpush1.xpose.msra.mxu0 0.0
        %6972 = vmatprep.subr.mxu0 0.0
        %6973 = vmatpush1.xpose.msra.mxu0 0.0
        %6974 = vmatprep.subr.mxu0 0.0
        %6975 = vmatpush1.xpose.msra.mxu0 0.0
        %6976 = vmatprep.subr.mxu0 0.0
        %6977 = vmatpush1.xpose.msra.mxu0 0.0
        %6978 = vmatprep.subr.mxu0 0.0
        %6979 = vmatpush1.xpose.msra.mxu0 0.0
        %6980 = vmatprep.mubr.f32.mxu0 0.0
        %6981 = vmatmul.mubr.f32.gmra.mrb[0].mxu0 %v6912
        %v6982 = vpop.f32.mrb[0].mxu0
        %v6983 = vadd.f32 0.0, %v6982
        %v6984 = vpop.f32.mrb[0].mxu0
        %6985 = vdwg.mxu0
        %6986 = vrot.lane.b32.xlu0 %v4403, 104
        %v6987 = vpop.permute.xlu0 %6986
        %6988 = vrot.lane.b32.xlu0 %v4403, 72
        %v6989 = vpop.permute.xlu0 %6988
        %v6990 = vsel %vm423, %v6987, 0
        %v6992 = vsel %vm423, %v6989, 0
        %6994 = vmatprep.subr.mxu0 0.0
        %6995 = vmatpush1.xpose.msra.mxu0 %v6992
        %6996 = vmatprep.subr.mxu0 0.0
        %6997 = vmatpush1.xpose.msra.mxu0 0.0
        %6998 = vmatprep.subr.mxu0 0.0
        %6999 = vmatpush1.xpose.msra.mxu0 0.0
        %7000 = vmatprep.subr.mxu0 0.0
        %7001 = vmatpush1.xpose.msra.mxu0 0.0
        %7002 = vmatprep.subr.mxu0 0.0
        %7003 = vmatpush1.xpose.msra.mxu0 0.0
        %7004 = vmatprep.subr.mxu0 0.0
        %7005 = vmatpush1.xpose.msra.mxu0 0.0
        %7006 = vmatprep.subr.mxu0 0.0
        %7007 = vmatpush1.xpose.msra.mxu0 0.0
        %7008 = vmatprep.subr.mxu0 0.0
        %7009 = vmatpush1.xpose.msra.mxu0 0.0
        %7010 = vmatprep.subr.mxu0 0.0
        %7011 = vmatpush1.xpose.msra.mxu0 0.0
        %7012 = vmatprep.subr.mxu0 0.0
        %7013 = vmatpush1.xpose.msra.mxu0 0.0
        %7014 = vmatprep.subr.mxu0 0.0
        %7015 = vmatpush1.xpose.msra.mxu0 0.0
        %7016 = vmatprep.subr.mxu0 0.0
        %7017 = vmatpush1.xpose.msra.mxu0 0.0
        %7018 = vmatprep.subr.mxu0 0.0
        %7019 = vmatpush1.xpose.msra.mxu0 0.0
        %7020 = vmatprep.subr.mxu0 0.0
        %7021 = vmatpush1.xpose.msra.mxu0 0.0
        %7022 = vmatprep.subr.mxu0 0.0
        %7023 = vmatpush1.xpose.msra.mxu0 0.0
        %7024 = vmatprep.subr.mxu0 0.0
        %7025 = vmatpush1.xpose.msra.mxu0 0.0
        %7026 = vmatprep.subr.mxu0 0.0
        %7027 = vmatpush1.xpose.msra.mxu0 0.0
        %7028 = vmatprep.subr.mxu0 0.0
        %7029 = vmatpush1.xpose.msra.mxu0 0.0
        %7030 = vmatprep.subr.mxu0 0.0
        %7031 = vmatpush1.xpose.msra.mxu0 0.0
        %7032 = vmatprep.subr.mxu0 0.0
        %7033 = vmatpush1.xpose.msra.mxu0 0.0
        %7034 = vmatprep.subr.mxu0 0.0
        %7035 = vmatpush1.xpose.msra.mxu0 0.0
        %7036 = vmatprep.subr.mxu0 0.0
        %7037 = vmatpush1.xpose.msra.mxu0 0.0
        %7038 = vmatprep.subr.mxu0 0.0
        %7039 = vmatpush1.xpose.msra.mxu0 0.0
        %7040 = vmatprep.subr.mxu0 0.0
        %7041 = vmatpush1.xpose.msra.mxu0 0.0
        %7042 = vmatprep.subr.mxu0 0.0
        %7043 = vmatpush1.xpose.msra.mxu0 0.0
        %7044 = vmatprep.subr.mxu0 0.0
        %7045 = vmatpush1.xpose.msra.mxu0 0.0
        %7046 = vmatprep.subr.mxu0 0.0
        %7047 = vmatpush1.xpose.msra.mxu0 0.0
        %7048 = vmatprep.subr.mxu0 0.0
        %7049 = vmatpush1.xpose.msra.mxu0 0.0
        %7050 = vmatprep.subr.mxu0 0.0
        %7051 = vmatpush1.xpose.msra.mxu0 0.0
        %7052 = vmatprep.subr.mxu0 0.0
        %7053 = vmatpush1.xpose.msra.mxu0 0.0
        %7054 = vmatprep.subr.mxu0 0.0
        %7055 = vmatpush1.xpose.msra.mxu0 0.0
        %7056 = vmatprep.subr.mxu0 0.0
        %7057 = vmatpush1.xpose.msra.mxu0 0.0
        %7058 = vmatprep.mubr.f32.mxu0 0.0
        %7059 = vmatmul.mubr.f32.gmra.mrb[0].mxu0 %v6990
        %v7060 = vpop.f32.mrb[0].mxu0
        %v7061 = vadd.f32 0.0, %v7060
        %v7062 = vpop.f32.mrb[0].mxu0
        %7063 = vdwg.mxu0
        %v7064 = vmul.f32 %v6983, 0.5
        %v7065 = vmul.f32 %v7061, 0.5
        %v7066 = vsel %vm854, %v7064, -inf
        %7067 = vmax.xlane.f32.xlu0 %v7066
        %v7068 = vpop.xlane.xlu0 %7067
        %v7069 = vsel %vm854, %v7065, -inf
        %7070 = vmax.xlane.f32.xlu0 %v7069
        %v7071 = vpop.xlane.xlu0 %7070
        %v7072 = vsub.f32 %v7064, %v7068
        %v7073 = vsub.f32 %v7065, %v7071
        %v7074 = vmul.f32 %v7072, 1.442695
        %v7075 = vpow.pop %v7074
        %v7076 = vmul.f32 %v7073, 1.442695
        %v7077 = vpow.pop %v7076
        %v7078 = vsel %vm854, %v7075, 0.0
        %7079 = vadd.xlane.f32.xlu0 %v7078
        %v7080 = vpop.xlane.xlu0 %7079
        %v7081 = vsel %vm854, %v7077, 0.0
        %7082 = vadd.xlane.f32.xlu0 %v7081
        %v7083 = vpop.xlane.xlu0 %7082
        %v7084 = vrcp.pop %v7080
        %v7085 = vrcp.pop %v7083
        %v7086 = vmul.f32 %v7075, %v7084
        %v7087 = vmul.f32 %v7077, %v7085
        %7088 = vrot.lane.b32.xlu0 %v4398, 40
        %v7089 = vpop.permute.xlu0 %7088
        %v7092 = vsel %vm854, %v7086, 0
        %7094 = vmatprep.subr.mxu0 0.0
        %7095 = vmatpush1.msra.mxu0 %v7089
        %7096 = vmatprep.subr.mxu0 0.0
        %7097 = vmatpush1.msra.mxu0 0.0
        %7098 = vmatprep.subr.mxu0 0.0
        %7099 = vmatpush1.msra.mxu0 0.0
        %7100 = vmatprep.subr.mxu0 0.0
        %7101 = vmatpush1.msra.mxu0 0.0
        %7102 = vmatprep.subr.mxu0 0.0
        %7103 = vmatpush1.msra.mxu0 0.0
        %7104 = vmatprep.subr.mxu0 0.0
        %7105 = vmatpush1.msra.mxu0 0.0
        %7106 = vmatprep.subr.mxu0 0.0
        %7107 = vmatpush1.msra.mxu0 0.0
        %7108 = vmatprep.subr.mxu0 0.0
        %7109 = vmatpush1.msra.mxu0 0.0
        %7110 = vmatprep.subr.mxu0 0.0
        %7111 = vmatpush1.msra.mxu0 0.0
        %7112 = vmatprep.subr.mxu0 0.0
        %7113 = vmatpush1.msra.mxu0 0.0
        %7114 = vmatprep.subr.mxu0 0.0
        %7115 = vmatpush1.msra.mxu0 0.0
        %7116 = vmatprep.subr.mxu0 0.0
        %7117 = vmatpush1.msra.mxu0 0.0
        %7118 = vmatprep.subr.mxu0 0.0
        %7119 = vmatpush1.msra.mxu0 0.0
        %7120 = vmatprep.subr.mxu0 0.0
        %7121 = vmatpush1.msra.mxu0 0.0
        %7122 = vmatprep.subr.mxu0 0.0
        %7123 = vmatpush1.msra.mxu0 0.0
        %7124 = vmatprep.subr.mxu0 0.0
        %7125 = vmatpush1.msra.mxu0 0.0
        %7126 = vmatprep.subr.mxu0 0.0
        %7127 = vmatpush1.msra.mxu0 0.0
        %7128 = vmatprep.subr.mxu0 0.0
        %7129 = vmatpush1.msra.mxu0 0.0
        %7130 = vmatprep.subr.mxu0 0.0
        %7131 = vmatpush1.msra.mxu0 0.0
        %7132 = vmatprep.subr.mxu0 0.0
        %7133 = vmatpush1.msra.mxu0 0.0
        %7134 = vmatprep.subr.mxu0 0.0
        %7135 = vmatpush1.msra.mxu0 0.0
        %7136 = vmatprep.subr.mxu0 0.0
        %7137 = vmatpush1.msra.mxu0 0.0
        %7138 = vmatprep.subr.mxu0 0.0
        %7139 = vmatpush1.msra.mxu0 0.0
        %7140 = vmatprep.subr.mxu0 0.0
        %7141 = vmatpush1.msra.mxu0 0.0
        %7142 = vmatprep.subr.mxu0 0.0
        %7143 = vmatpush1.msra.mxu0 0.0
        %7144 = vmatprep.subr.mxu0 0.0
        %7145 = vmatpush1.msra.mxu0 0.0
        %7146 = vmatprep.subr.mxu0 0.0
        %7147 = vmatpush1.msra.mxu0 0.0
        %7148 = vmatprep.subr.mxu0 0.0
        %7149 = vmatpush1.msra.mxu0 0.0
        %7150 = vmatprep.subr.mxu0 0.0
        %7151 = vmatpush1.msra.mxu0 0.0
        %7152 = vmatprep.subr.mxu0 0.0
        %7153 = vmatpush1.msra.mxu0 0.0
        %7154 = vmatprep.subr.mxu0 0.0
        %7155 = vmatpush1.msra.mxu0 0.0
        %7156 = vmatprep.subr.mxu0 0.0
        %7157 = vmatpush1.msra.mxu0 0.0
        %7158 = vmatprep.mubr.f32.mxu0 0.0
        %7159 = vmatmul.mubr.f32.gmra.mrb[0].mxu0 %v7092
        %v7160 = vpop.f32.mrb[0].mxu0
        %v7161 = vadd.f32 0.0, %v7160
        %v7162 = vpop.f32.mrb[0].mxu0
        %7163 = vdwg.mxu0
        %7164 = vrot.lane.b32.xlu0 %v4403, 40
        %v7165 = vpop.permute.xlu0 %7164
        %v7168 = vsel %vm854, %v7087, 0
        %7170 = vmatprep.subr.mxu0 0.0
        %7171 = vmatpush1.msra.mxu0 %v7165
        %7172 = vmatprep.subr.mxu0 0.0
        %7173 = vmatpush1.msra.mxu0 0.0
        %7174 = vmatprep.subr.mxu0 0.0
        %7175 = vmatpush1.msra.mxu0 0.0
        %7176 = vmatprep.subr.mxu0 0.0
        %7177 = vmatpush1.msra.mxu0 0.0
        %7178 = vmatprep.subr.mxu0 0.0
        %7179 = vmatpush1.msra.mxu0 0.0
        %7180 = vmatprep.subr.mxu0 0.0
        %7181 = vmatpush1.msra.mxu0 0.0
        %7182 = vmatprep.subr.mxu0 0.0
        %7183 = vmatpush1.msra.mxu0 0.0
        %7184 = vmatprep.subr.mxu0 0.0
        %7185 = vmatpush1.msra.mxu0 0.0
        %7186 = vmatprep.subr.mxu0 0.0
        %7187 = vmatpush1.msra.mxu0 0.0
        %7188 = vmatprep.subr.mxu0 0.0
        %7189 = vmatpush1.msra.mxu0 0.0
        %7190 = vmatprep.subr.mxu0 0.0
        %7191 = vmatpush1.msra.mxu0 0.0
        %7192 = vmatprep.subr.mxu0 0.0
        %7193 = vmatpush1.msra.mxu0 0.0
        %7194 = vmatprep.subr.mxu0 0.0
        %7195 = vmatpush1.msra.mxu0 0.0
        %7196 = vmatprep.subr.mxu0 0.0
        %7197 = vmatpush1.msra.mxu0 0.0
        %7198 = vmatprep.subr.mxu0 0.0
        %7199 = vmatpush1.msra.mxu0 0.0
        %7200 = vmatprep.subr.mxu0 0.0
        %7201 = vmatpush1.msra.mxu0 0.0
        %7202 = vmatprep.subr.mxu0 0.0
        %7203 = vmatpush1.msra.mxu0 0.0
        %7204 = vmatprep.subr.mxu0 0.0
        %7205 = vmatpush1.msra.mxu0 0.0
        %7206 = vmatprep.subr.mxu0 0.0
        %7207 = vmatpush1.msra.mxu0 0.0
        %7208 = vmatprep.subr.mxu0 0.0
        %7209 = vmatpush1.msra.mxu0 0.0
        %7210 = vmatprep.subr.mxu0 0.0
        %7211 = vmatpush1.msra.mxu0 0.0
        %7212 = vmatprep.subr.mxu0 0.0
        %7213 = vmatpush1.msra.mxu0 0.0
        %7214 = vmatprep.subr.mxu0 0.0
        %7215 = vmatpush1.msra.mxu0 0.0
        %7216 = vmatprep.subr.mxu0 0.0
        %7217 = vmatpush1.msra.mxu0 0.0
        %7218 = vmatprep.subr.mxu0 0.0
        %7219 = vmatpush1.msra.mxu0 0.0
        %7220 = vmatprep.subr.mxu0 0.0
        %7221 = vmatpush1.msra.mxu0 0.0
        %7222 = vmatprep.subr.mxu0 0.0
        %7223 = vmatpush1.msra.mxu0 0.0
        %7224 = vmatprep.subr.mxu0 0.0
        %7225 = vmatpush1.msra.mxu0 0.0
        %7226 = vmatprep.subr.mxu0 0.0
        %7227 = vmatpush1.msra.mxu0 0.0
        %7228 = vmatprep.subr.mxu0 0.0
        %7229 = vmatpush1.msra.mxu0 0.0
        %7230 = vmatprep.subr.mxu0 0.0
        %7231 = vmatpush1.msra.mxu0 0.0
        %7232 = vmatprep.subr.mxu0 0.0
        %7233 = vmatpush1.msra.mxu0 0.0
        %7234 = vmatprep.mubr.f32.mxu0 0.0
        %7235 = vmatmul.mubr.f32.gmra.mrb[0].mxu0 %v7168
        %v7236 = vpop.f32.mrb[0].mxu0
        %v7237 = vadd.f32 0.0, %v7236
        %v7238 = vpop.f32.mrb[0].mxu0
        %7239 = vdwg.mxu0
        %v7241 = vsel %vm423, %v7161, 0
        %v7244 = vsel %vm423, %v7237, 0
        %v7247 = vsel %vm430, %v4320, 0
        %7249 = vmatprep.subr.mxu0 0.0
        %7250 = vmatpush1.msra.mxu0 %v7247
        %7251 = vmatprep.subr.mxu0 0.0
        %7252 = vmatpush1.msra.mxu0 0.0
        %7253 = vmatprep.subr.mxu0 0.0
        %7254 = vmatpush1.msra.mxu0 0.0
        %7255 = vmatprep.subr.mxu0 0.0
        %7256 = vmatpush1.msra.mxu0 0.0
        %7257 = vmatprep.subr.mxu0 0.0
        %7258 = vmatpush1.msra.mxu0 0.0
        %7259 = vmatprep.subr.mxu0 0.0
        %7260 = vmatpush1.msra.mxu0 0.0
        %7261 = vmatprep.subr.mxu0 0.0
        %7262 = vmatpush1.msra.mxu0 0.0
        %7263 = vmatprep.subr.mxu0 0.0
        %7264 = vmatpush1.msra.mxu0 0.0
        %7265 = vmatprep.subr.mxu0 0.0
        %7266 = vmatpush1.msra.mxu0 0.0
        %7267 = vmatprep.subr.mxu0 0.0
        %7268 = vmatpush1.msra.mxu0 0.0
        %7269 = vmatprep.subr.mxu0 0.0
        %7270 = vmatpush1.msra.mxu0 0.0
        %7271 = vmatprep.subr.mxu0 0.0
        %7272 = vmatpush1.msra.mxu0 0.0
        %7273 = vmatprep.subr.mxu0 0.0
        %7274 = vmatpush1.msra.mxu0 0.0
        %7275 = vmatprep.subr.mxu0 0.0
        %7276 = vmatpush1.msra.mxu0 0.0
        %7277 = vmatprep.subr.mxu0 0.0
        %7278 = vmatpush1.msra.mxu0 0.0
        %7279 = vmatprep.subr.mxu0 0.0
        %7280 = vmatpush1.msra.mxu0 0.0
        %7281 = vmatprep.subr.mxu0 0.0
        %7282 = vmatpush1.msra.mxu0 0.0
        %7283 = vmatprep.subr.mxu0 0.0
        %7284 = vmatpush1.msra.mxu0 0.0
        %7285 = vmatprep.subr.mxu0 0.0
        %7286 = vmatpush1.msra.mxu0 0.0
        %7287 = vmatprep.subr.mxu0 0.0
        %7288 = vmatpush1.msra.mxu0 0.0
        %7289 = vmatprep.subr.mxu0 0.0
        %7290 = vmatpush1.msra.mxu0 0.0
        %7291 = vmatprep.subr.mxu0 0.0
        %7292 = vmatpush1.msra.mxu0 0.0
        %7293 = vmatprep.subr.mxu0 0.0
        %7294 = vmatpush1.msra.mxu0 0.0
        %7295 = vmatprep.subr.mxu0 0.0
        %7296 = vmatpush1.msra.mxu0 0.0
        %7297 = vmatprep.subr.mxu0 0.0
        %7298 = vmatpush1.msra.mxu0 0.0
        %7299 = vmatprep.subr.mxu0 0.0
        %7300 = vmatpush1.msra.mxu0 0.0
        %7301 = vmatprep.subr.mxu0 0.0
        %7302 = vmatpush1.msra.mxu0 0.0
        %7303 = vmatprep.subr.mxu0 0.0
        %7304 = vmatpush1.msra.mxu0 0.0
        %7305 = vmatprep.subr.mxu0 0.0
        %7306 = vmatpush1.msra.mxu0 0.0
        %7307 = vmatprep.subr.mxu0 0.0
        %7308 = vmatpush1.msra.mxu0 0.0
        %7309 = vmatprep.subr.mxu0 0.0
        %7310 = vmatpush1.msra.mxu0 0.0
        %7311 = vmatprep.subr.mxu0 0.0
        %7312 = vmatpush1.msra.mxu0 0.0
        %7313 = vmatprep.mubr.f32.mxu0 0.0
        %7314 = vmatmul.mubr.f32.gmra.mrb[0].mxu0 %v7241
        %v7315 = vpop.f32.mrb[0].mxu0
        %v7316 = vadd.f32 0.0, %v7315
        %v7317 = vpop.f32.mrb[0].mxu0
        %7318 = vmatprep.mubr.f32.mxu0 0.0
        %7319 = vmatmul.mubr.f32.gmra.mrb[0].mxu0 %v7244
        %v7320 = vpop.f32.mrb[0].mxu0
        %v7321 = vadd.f32 0.0, %v7320
        %v7322 = vpop.f32.mrb[0].mxu0
        %7323 = vdwg.mxu0
        %v7324 = vadd.f32 %v6906, %v7316
        %v7325 = vadd.f32 %v6907, %v7321
        %7326 = vrot.lane.b32.xlu0 %v4398, 100
        %v7327 = vpop.permute.xlu0 %7326
        %7328 = vrot.lane.b32.xlu0 %v4398, 68
        %v7329 = vpop.permute.xlu0 %7328
        %v7330 = vsel %vm423, %v7327, 0
        %v7332 = vsel %vm423, %v7329, 0
        %7334 = vmatprep.subr.mxu0 0.0
        %7335 = vmatpush1.xpose.msra.mxu0 %v7332
        %7336 = vmatprep.subr.mxu0 0.0
        %7337 = vmatpush1.xpose.msra.mxu0 0.0
        %7338 = vmatprep.subr.mxu0 0.0
        %7339 = vmatpush1.xpose.msra.mxu0 0.0
        %7340 = vmatprep.subr.mxu0 0.0
        %7341 = vmatpush1.xpose.msra.mxu0 0.0
        %7342 = vmatprep.subr.mxu0 0.0
        %7343 = vmatpush1.xpose.msra.mxu0 0.0
        %7344 = vmatprep.subr.mxu0 0.0
        %7345 = vmatpush1.xpose.msra.mxu0 0.0
        %7346 = vmatprep.subr.mxu0 0.0
        %7347 = vmatpush1.xpose.msra.mxu0 0.0
        %7348 = vmatprep.subr.mxu0 0.0
        %7349 = vmatpush1.xpose.msra.mxu0 0.0
        %7350 = vmatprep.subr.mxu0 0.0
        %7351 = vmatpush1.xpose.msra.mxu0 0.0
        %7352 = vmatprep.subr.mxu0 0.0
        %7353 = vmatpush1.xpose.msra.mxu0 0.0
        %7354 = vmatprep.subr.mxu0 0.0
        %7355 = vmatpush1.xpose.msra.mxu0 0.0
        %7356 = vmatprep.subr.mxu0 0.0
        %7357 = vmatpush1.xpose.msra.mxu0 0.0
        %7358 = vmatprep.subr.mxu0 0.0
        %7359 = vmatpush1.xpose.msra.mxu0 0.0
        %7360 = vmatprep.subr.mxu0 0.0
        %7361 = vmatpush1.xpose.msra.mxu0 0.0
        %7362 = vmatprep.subr.mxu0 0.0
        %7363 = vmatpush1.xpose.msra.mxu0 0.0
        %7364 = vmatprep.subr.mxu0 0.0
        %7365 = vmatpush1.xpose.msra.mxu0 0.0
        %7366 = vmatprep.subr.mxu0 0.0
        %7367 = vmatpush1.xpose.msra.mxu0 0.0
        %7368 = vmatprep.subr.mxu0 0.0
        %7369 = vmatpush1.xpose.msra.mxu0 0.0
        %7370 = vmatprep.subr.mxu0 0.0
        %7371 = vmatpush1.xpose.msra.mxu0 0.0
        %7372 = vmatprep.subr.mxu0 0.0
        %7373 = vmatpush1.xpose.msra.mxu0 0.0
        %7374 = vmatprep.subr.mxu0 0.0
        %7375 = vmatpush1.xpose.msra.mxu0 0.0
        %7376 = vmatprep.subr.mxu0 0.0
        %7377 = vmatpush1.xpose.msra.mxu0 0.0
        %7378 = vmatprep.subr.mxu0 0.0
        %7379 = vmatpush1.xpose.msra.mxu0 0.0
        %7380 = vmatprep.subr.mxu0 0.0
        %7381 = vmatpush1.xpose.msra.mxu0 0.0
        %7382 = vmatprep.subr.mxu0 0.0
        %7383 = vmatpush1.xpose.msra.mxu0 0.0
        %7384 = vmatprep.subr.mxu0 0.0
        %7385 = vmatpush1.xpose.msra.mxu0 0.0
        %7386 = vmatprep.subr.mxu0 0.0
        %7387 = vmatpush1.xpose.msra.mxu0 0.0
        %7388 = vmatprep.subr.mxu0 0.0
        %7389 = vmatpush1.xpose.msra.mxu0 0.0
        %7390 = vmatprep.subr.mxu0 0.0
        %7391 = vmatpush1.xpose.msra.mxu0 0.0
        %7392 = vmatprep.subr.mxu0 0.0
        %7393 = vmatpush1.xpose.msra.mxu0 0.0
        %7394 = vmatprep.subr.mxu0 0.0
        %7395 = vmatpush1.xpose.msra.mxu0 0.0
        %7396 = vmatprep.subr.mxu0 0.0
        %7397 = vmatpush1.xpose.msra.mxu0 0.0
        %7398 = vmatprep.mubr.f32.mxu0 0.0
        %7399 = vmatmul.mubr.f32.gmra.mrb[0].mxu0 %v7330
        %v7400 = vpop.f32.mrb[0].mxu0
        %v7401 = vadd.f32 0.0, %v7400
        %v7402 = vpop.f32.mrb[0].mxu0
        %7403 = vdwg.mxu0
        %7404 = vrot.lane.b32.xlu0 %v4403, 100
        %v7405 = vpop.permute.xlu0 %7404
        %7406 = vrot.lane.b32.xlu0 %v4403, 68
        %v7407 = vpop.permute.xlu0 %7406
        %v7408 = vsel %vm423, %v7405, 0
        %v7410 = vsel %vm423, %v7407, 0
        %7412 = vmatprep.subr.mxu0 0.0
        %7413 = vmatpush1.xpose.msra.mxu0 %v7410
        %7414 = vmatprep.subr.mxu0 0.0
        %7415 = vmatpush1.xpose.msra.mxu0 0.0
        %7416 = vmatprep.subr.mxu0 0.0
        %7417 = vmatpush1.xpose.msra.mxu0 0.0
        %7418 = vmatprep.subr.mxu0 0.0
        %7419 = vmatpush1.xpose.msra.mxu0 0.0
        %7420 = vmatprep.subr.mxu0 0.0
        %7421 = vmatpush1.xpose.msra.mxu0 0.0
        %7422 = vmatprep.subr.mxu0 0.0
        %7423 = vmatpush1.xpose.msra.mxu0 0.0
        %7424 = vmatprep.subr.mxu0 0.0
        %7425 = vmatpush1.xpose.msra.mxu0 0.0
        %7426 = vmatprep.subr.mxu0 0.0
        %7427 = vmatpush1.xpose.msra.mxu0 0.0
        %7428 = vmatprep.subr.mxu0 0.0
        %7429 = vmatpush1.xpose.msra.mxu0 0.0
        %7430 = vmatprep.subr.mxu0 0.0
        %7431 = vmatpush1.xpose.msra.mxu0 0.0
        %7432 = vmatprep.subr.mxu0 0.0
        %7433 = vmatpush1.xpose.msra.mxu0 0.0
        %7434 = vmatprep.subr.mxu0 0.0
        %7435 = vmatpush1.xpose.msra.mxu0 0.0
        %7436 = vmatprep.subr.mxu0 0.0
        %7437 = vmatpush1.xpose.msra.mxu0 0.0
        %7438 = vmatprep.subr.mxu0 0.0
        %7439 = vmatpush1.xpose.msra.mxu0 0.0
        %7440 = vmatprep.subr.mxu0 0.0
        %7441 = vmatpush1.xpose.msra.mxu0 0.0
        %7442 = vmatprep.subr.mxu0 0.0
        %7443 = vmatpush1.xpose.msra.mxu0 0.0
        %7444 = vmatprep.subr.mxu0 0.0
        %7445 = vmatpush1.xpose.msra.mxu0 0.0
        %7446 = vmatprep.subr.mxu0 0.0
        %7447 = vmatpush1.xpose.msra.mxu0 0.0
        %7448 = vmatprep.subr.mxu0 0.0
        %7449 = vmatpush1.xpose.msra.mxu0 0.0
        %7450 = vmatprep.subr.mxu0 0.0
        %7451 = vmatpush1.xpose.msra.mxu0 0.0
        %7452 = vmatprep.subr.mxu0 0.0
        %7453 = vmatpush1.xpose.msra.mxu0 0.0
        %7454 = vmatprep.subr.mxu0 0.0
        %7455 = vmatpush1.xpose.msra.mxu0 0.0
        %7456 = vmatprep.subr.mxu0 0.0
        %7457 = vmatpush1.xpose.msra.mxu0 0.0
        %7458 = vmatprep.subr.mxu0 0.0
        %7459 = vmatpush1.xpose.msra.mxu0 0.0
        %7460 = vmatprep.subr.mxu0 0.0
        %7461 = vmatpush1.xpose.msra.mxu0 0.0
        %7462 = vmatprep.subr.mxu0 0.0
        %7463 = vmatpush1.xpose.msra.mxu0 0.0
        %7464 = vmatprep.subr.mxu0 0.0
        %7465 = vmatpush1.xpose.msra.mxu0 0.0
        %7466 = vmatprep.subr.mxu0 0.0
        %7467 = vmatpush1.xpose.msra.mxu0 0.0
        %7468 = vmatprep.subr.mxu0 0.0
        %7469 = vmatpush1.xpose.msra.mxu0 0.0
        %7470 = vmatprep.subr.mxu0 0.0
        %7471 = vmatpush1.xpose.msra.mxu0 0.0
        %7472 = vmatprep.subr.mxu0 0.0
        %7473 = vmatpush1.xpose.msra.mxu0 0.0
        %7474 = vmatprep.subr.mxu0 0.0
        %7475 = vmatpush1.xpose.msra.mxu0 0.0
        %7476 = vmatprep.mubr.f32.mxu0 0.0
        %7477 = vmatmul.mubr.f32.gmra.mrb[0].mxu0 %v7408
        %v7478 = vpop.f32.mrb[0].mxu0
        %v7479 = vadd.f32 0.0, %v7478
        %v7480 = vpop.f32.mrb[0].mxu0
        %7481 = vdwg.mxu0
        %v7482 = vmul.f32 %v7401, 0.5
        %v7483 = vmul.f32 %v7479, 0.5
        %v7484 = vsel %vm854, %v7482, -inf
        %7485 = vmax.xlane.f32.xlu0 %v7484
        %v7486 = vpop.xlane.xlu0 %7485
        %v7487 = vsel %vm854, %v7483, -inf
        %7488 = vmax.xlane.f32.xlu0 %v7487
        %v7489 = vpop.xlane.xlu0 %7488
        %v7490 = vsub.f32 %v7482, %v7486
        %v7491 = vsub.f32 %v7483, %v7489
        %v7492 = vmul.f32 %v7490, 1.442695
        %v7493 = vpow.pop %v7492
        %v7494 = vmul.f32 %v7491, 1.442695
        %v7495 = vpow.pop %v7494
        %v7496 = vsel %vm854, %v7493, 0.0
        %7497 = vadd.xlane.f32.xlu0 %v7496
        %v7498 = vpop.xlane.xlu0 %7497
        %v7499 = vsel %vm854, %v7495, 0.0
        %7500 = vadd.xlane.f32.xlu0 %v7499
        %v7501 = vpop.xlane.xlu0 %7500
        %v7502 = vrcp.pop %v7498
        %v7503 = vrcp.pop %v7501
        %v7504 = vmul.f32 %v7493, %v7502
        %v7505 = vmul.f32 %v7495, %v7503
        %7506 = vrot.lane.b32.xlu0 %v4398, 36
        %v7507 = vpop.permute.xlu0 %7506
        %v7510 = vsel %vm854, %v7504, 0
        %7512 = vmatprep.subr.mxu0 0.0
        %7513 = vmatpush1.msra.mxu0 %v7507
        %7514 = vmatprep.subr.mxu0 0.0
        %7515 = vmatpush1.msra.mxu0 0.0
        %7516 = vmatprep.subr.mxu0 0.0
        %7517 = vmatpush1.msra.mxu0 0.0
        %7518 = vmatprep.subr.mxu0 0.0
        %7519 = vmatpush1.msra.mxu0 0.0
        %7520 = vmatprep.subr.mxu0 0.0
        %7521 = vmatpush1.msra.mxu0 0.0
        %7522 = vmatprep.subr.mxu0 0.0
        %7523 = vmatpush1.msra.mxu0 0.0
        %7524 = vmatprep.subr.mxu0 0.0
        %7525 = vmatpush1.msra.mxu0 0.0
        %7526 = vmatprep.subr.mxu0 0.0
        %7527 = vmatpush1.msra.mxu0 0.0
        %7528 = vmatprep.subr.mxu0 0.0
        %7529 = vmatpush1.msra.mxu0 0.0
        %7530 = vmatprep.subr.mxu0 0.0
        %7531 = vmatpush1.msra.mxu0 0.0
        %7532 = vmatprep.subr.mxu0 0.0
        %7533 = vmatpush1.msra.mxu0 0.0
        %7534 = vmatprep.subr.mxu0 0.0
        %7535 = vmatpush1.msra.mxu0 0.0
        %7536 = vmatprep.subr.mxu0 0.0
        %7537 = vmatpush1.msra.mxu0 0.0
        %7538 = vmatprep.subr.mxu0 0.0
        %7539 = vmatpush1.msra.mxu0 0.0
        %7540 = vmatprep.subr.mxu0 0.0
        %7541 = vmatpush1.msra.mxu0 0.0
        %7542 = vmatprep.subr.mxu0 0.0
        %7543 = vmatpush1.msra.mxu0 0.0
        %7544 = vmatprep.subr.mxu0 0.0
        %7545 = vmatpush1.msra.mxu0 0.0
        %7546 = vmatprep.subr.mxu0 0.0
        %7547 = vmatpush1.msra.mxu0 0.0
        %7548 = vmatprep.subr.mxu0 0.0
        %7549 = vmatpush1.msra.mxu0 0.0
        %7550 = vmatprep.subr.mxu0 0.0
        %7551 = vmatpush1.msra.mxu0 0.0
        %7552 = vmatprep.subr.mxu0 0.0
        %7553 = vmatpush1.msra.mxu0 0.0
        %7554 = vmatprep.subr.mxu0 0.0
        %7555 = vmatpush1.msra.mxu0 0.0
        %7556 = vmatprep.subr.mxu0 0.0
        %7557 = vmatpush1.msra.mxu0 0.0
        %7558 = vmatprep.subr.mxu0 0.0
        %7559 = vmatpush1.msra.mxu0 0.0
        %7560 = vmatprep.subr.mxu0 0.0
        %7561 = vmatpush1.msra.mxu0 0.0
        %7562 = vmatprep.subr.mxu0 0.0
        %7563 = vmatpush1.msra.mxu0 0.0
        %7564 = vmatprep.subr.mxu0 0.0
        %7565 = vmatpush1.msra.mxu0 0.0
        %7566 = vmatprep.subr.mxu0 0.0
        %7567 = vmatpush1.msra.mxu0 0.0
        %7568 = vmatprep.subr.mxu0 0.0
        %7569 = vmatpush1.msra.mxu0 0.0
        %7570 = vmatprep.subr.mxu0 0.0
        %7571 = vmatpush1.msra.mxu0 0.0
        %7572 = vmatprep.subr.mxu0 0.0
        %7573 = vmatpush1.msra.mxu0 0.0
        %7574 = vmatprep.subr.mxu0 0.0
        %7575 = vmatpush1.msra.mxu0 0.0
        %7576 = vmatprep.mubr.f32.mxu0 0.0
        %7577 = vmatmul.mubr.f32.gmra.mrb[0].mxu0 %v7510
        %v7578 = vpop.f32.mrb[0].mxu0
        %v7579 = vadd.f32 0.0, %v7578
        %v7580 = vpop.f32.mrb[0].mxu0
        %7581 = vdwg.mxu0
        %7582 = vrot.lane.b32.xlu0 %v4403, 36
        %v7583 = vpop.permute.xlu0 %7582
        %v7586 = vsel %vm854, %v7505, 0
        %7588 = vmatprep.subr.mxu0 0.0
        %7589 = vmatpush1.msra.mxu0 %v7583
        %7590 = vmatprep.subr.mxu0 0.0
        %7591 = vmatpush1.msra.mxu0 0.0
        %7592 = vmatprep.subr.mxu0 0.0
        %7593 = vmatpush1.msra.mxu0 0.0
        %7594 = vmatprep.subr.mxu0 0.0
        %7595 = vmatpush1.msra.mxu0 0.0
        %7596 = vmatprep.subr.mxu0 0.0
        %7597 = vmatpush1.msra.mxu0 0.0
        %7598 = vmatprep.subr.mxu0 0.0
        %7599 = vmatpush1.msra.mxu0 0.0
        %7600 = vmatprep.subr.mxu0 0.0
        %7601 = vmatpush1.msra.mxu0 0.0
        %7602 = vmatprep.subr.mxu0 0.0
        %7603 = vmatpush1.msra.mxu0 0.0
        %7604 = vmatprep.subr.mxu0 0.0
        %7605 = vmatpush1.msra.mxu0 0.0
        %7606 = vmatprep.subr.mxu0 0.0
        %7607 = vmatpush1.msra.mxu0 0.0
        %7608 = vmatprep.subr.mxu0 0.0
        %7609 = vmatpush1.msra.mxu0 0.0
        %7610 = vmatprep.subr.mxu0 0.0
        %7611 = vmatpush1.msra.mxu0 0.0
        %7612 = vmatprep.subr.mxu0 0.0
        %7613 = vmatpush1.msra.mxu0 0.0
        %7614 = vmatprep.subr.mxu0 0.0
        %7615 = vmatpush1.msra.mxu0 0.0
        %7616 = vmatprep.subr.mxu0 0.0
        %7617 = vmatpush1.msra.mxu0 0.0
        %7618 = vmatprep.subr.mxu0 0.0
        %7619 = vmatpush1.msra.mxu0 0.0
        %7620 = vmatprep.subr.mxu0 0.0
        %7621 = vmatpush1.msra.mxu0 0.0
        %7622 = vmatprep.subr.mxu0 0.0
        %7623 = vmatpush1.msra.mxu0 0.0
        %7624 = vmatprep.subr.mxu0 0.0
        %7625 = vmatpush1.msra.mxu0 0.0
        %7626 = vmatprep.subr.mxu0 0.0
        %7627 = vmatpush1.msra.mxu0 0.0
        %7628 = vmatprep.subr.mxu0 0.0
        %7629 = vmatpush1.msra.mxu0 0.0
        %7630 = vmatprep.subr.mxu0 0.0
        %7631 = vmatpush1.msra.mxu0 0.0
        %7632 = vmatprep.subr.mxu0 0.0
        %7633 = vmatpush1.msra.mxu0 0.0
        %7634 = vmatprep.subr.mxu0 0.0
        %7635 = vmatpush1.msra.mxu0 0.0
        %7636 = vmatprep.subr.mxu0 0.0
        %7637 = vmatpush1.msra.mxu0 0.0
        %7638 = vmatprep.subr.mxu0 0.0
        %7639 = vmatpush1.msra.mxu0 0.0
        %7640 = vmatprep.subr.mxu0 0.0
        %7641 = vmatpush1.msra.mxu0 0.0
        %7642 = vmatprep.subr.mxu0 0.0
        %7643 = vmatpush1.msra.mxu0 0.0
        %7644 = vmatprep.subr.mxu0 0.0
        %7645 = vmatpush1.msra.mxu0 0.0
        %7646 = vmatprep.subr.mxu0 0.0
        %7647 = vmatpush1.msra.mxu0 0.0
        %7648 = vmatprep.subr.mxu0 0.0
        %7649 = vmatpush1.msra.mxu0 0.0
        %7650 = vmatprep.subr.mxu0 0.0
        %7651 = vmatpush1.msra.mxu0 0.0
        %7652 = vmatprep.mubr.f32.mxu0 0.0
        %7653 = vmatmul.mubr.f32.gmra.mrb[0].mxu0 %v7586
        %v7654 = vpop.f32.mrb[0].mxu0
        %v7655 = vadd.f32 0.0, %v7654
        %v7656 = vpop.f32.mrb[0].mxu0
        %7657 = vdwg.mxu0
        %v7658 = vrot.slane %v4320, 4
        %v7660 = vsel %vm423, %v7579, 0
        %v7663 = vsel %vm423, %v7655, 0
        %v7665 = vsel %vm430, %v7658, 0
        %7667 = vmatprep.subr.mxu0 0.0
        %7668 = vmatpush1.msra.mxu0 %v7665
        %7669 = vmatprep.subr.mxu0 0.0
        %7670 = vmatpush1.msra.mxu0 0.0
        %7671 = vmatprep.subr.mxu0 0.0
        %7672 = vmatpush1.msra.mxu0 0.0
        %7673 = vmatprep.subr.mxu0 0.0
        %7674 = vmatpush1.msra.mxu0 0.0
        %7675 = vmatprep.subr.mxu0 0.0
        %7676 = vmatpush1.msra.mxu0 0.0
        %7677 = vmatprep.subr.mxu0 0.0
        %7678 = vmatpush1.msra.mxu0 0.0
        %7679 = vmatprep.subr.mxu0 0.0
        %7680 = vmatpush1.msra.mxu0 0.0
        %7681 = vmatprep.subr.mxu0 0.0
        %7682 = vmatpush1.msra.mxu0 0.0
        %7683 = vmatprep.subr.mxu0 0.0
        %7684 = vmatpush1.msra.mxu0 0.0
        %7685 = vmatprep.subr.mxu0 0.0
        %7686 = vmatpush1.msra.mxu0 0.0
        %7687 = vmatprep.subr.mxu0 0.0
        %7688 = vmatpush1.msra.mxu0 0.0
        %7689 = vmatprep.subr.mxu0 0.0
        %7690 = vmatpush1.msra.mxu0 0.0
        %7691 = vmatprep.subr.mxu0 0.0
        %7692 = vmatpush1.msra.mxu0 0.0
        %7693 = vmatprep.subr.mxu0 0.0
        %7694 = vmatpush1.msra.mxu0 0.0
        %7695 = vmatprep.subr.mxu0 0.0
        %7696 = vmatpush1.msra.mxu0 0.0
        %7697 = vmatprep.subr.mxu0 0.0
        %7698 = vmatpush1.msra.mxu0 0.0
        %7699 = vmatprep.subr.mxu0 0.0
        %7700 = vmatpush1.msra.mxu0 0.0
        %7701 = vmatprep.subr.mxu0 0.0
        %7702 = vmatpush1.msra.mxu0 0.0
        %7703 = vmatprep.subr.mxu0 0.0
        %7704 = vmatpush1.msra.mxu0 0.0
        %7705 = vmatprep.subr.mxu0 0.0
        %7706 = vmatpush1.msra.mxu0 0.0
        %7707 = vmatprep.subr.mxu0 0.0
        %7708 = vmatpush1.msra.mxu0 0.0
        %7709 = vmatprep.subr.mxu0 0.0
        %7710 = vmatpush1.msra.mxu0 0.0
        %7711 = vmatprep.subr.mxu0 0.0
        %7712 = vmatpush1.msra.mxu0 0.0
        %7713 = vmatprep.subr.mxu0 0.0
        %7714 = vmatpush1.msra.mxu0 0.0
        %7715 = vmatprep.subr.mxu0 0.0
        %7716 = vmatpush1.msra.mxu0 0.0
        %7717 = vmatprep.subr.mxu0 0.0
        %7718 = vmatpush1.msra.mxu0 0.0
        %7719 = vmatprep.subr.mxu0 0.0
        %7720 = vmatpush1.msra.mxu0 0.0
        %7721 = vmatprep.subr.mxu0 0.0
        %7722 = vmatpush1.msra.mxu0 0.0
        %7723 = vmatprep.subr.mxu0 0.0
        %7724 = vmatpush1.msra.mxu0 0.0
        %7725 = vmatprep.subr.mxu0 0.0
        %7726 = vmatpush1.msra.mxu0 0.0
        %7727 = vmatprep.subr.mxu0 0.0
        %7728 = vmatpush1.msra.mxu0 0.0
        %7729 = vmatprep.subr.mxu0 0.0
        %7730 = vmatpush1.msra.mxu0 0.0
        %7731 = vmatprep.mubr.f32.mxu0 0.0
        %7732 = vmatmul.mubr.f32.gmra.mrb[0].mxu0 %v7660
        %v7733 = vpop.f32.mrb[0].mxu0
        %v7734 = vadd.f32 0.0, %v7733
        %v7735 = vpop.f32.mrb[0].mxu0
        %7736 = vmatprep.mubr.f32.mxu0 0.0
        %7737 = vmatmul.mubr.f32.gmra.mrb[0].mxu0 %v7663
        %v7738 = vpop.f32.mrb[0].mxu0
        %v7739 = vadd.f32 0.0, %v7738
        %v7740 = vpop.f32.mrb[0].mxu0
        %7741 = vdwg.mxu0
        %v7742 = vadd.f32 %v7324, %v7734
        %v7743 = vadd.f32 %v7325, %v7739
        %v7744 = vlaneseq
        %v7745 = vshrl.u32 %v7744, 7
        %v7746 = vsub.s32 1, %v7745
        %v7747 = vrot.slane %v4310, %v7746
        %v7748 = vadd.f32 %v7742, %v7747
        %v7749 = vadd.f32 %v7743, %v7747
        %v7750 = vadd.f32 %v4307, %v7748
        %v7751 = vadd.f32 %v4308, %v7749
        %v7752 = vsel %vm519, %v7750, 0.0
        %7753 = vadd.xlane.f32.xlu0 %v7752
        %v7754 = vpop.xlane.xlu0 %7753
        %v7755 = vsel %vm519, %v7751, 0.0
        %7756 = vadd.xlane.f32.xlu0 %v7755
        %v7757 = vpop.xlane.xlu0 %7756
        %v7758 = vmul.f32 %v7754, %v4051
        %v7759 = vmul.f32 %v7757, %v4051
        %v7760 = vsub.f32 %v7750, %v7758
        %v7761 = vsub.f32 %v7751, %v7759
        %v7762 = vmul.f32 %v7760, %v7760
        %v7763 = vmul.f32 %v7761, %v7761
        %v7764 = vsel %vm519, %v7762, 0.0
        %7765 = vadd.xlane.f32.xlu0 %v7764
        %v7766 = vpop.xlane.xlu0 %7765
        %v7767 = vsel %vm519, %v7763, 0.0
        %7768 = vadd.xlane.f32.xlu0 %v7767
        %v7769 = vpop.xlane.xlu0 %7768
        %v7770 = vmul.f32 %v7766, %v4051
        %v7771 = vmul.f32 %v7769, %v4051
        %v7772 = vadd.f32 %v7770, 1e-05
        %v7773 = vadd.f32 %v7771, 1e-05
        %v7774 = vrsqrt.pop %v7772
        %v7775 = vrsqrt.pop %v7773
        %v7776 = vmul.f32 %v7760, %v7774
        %v7777 = vmul.f32 %v7761, %v7775
        %v7778 = vlaneseq
        %v7779 = vshrl.u32 %v7778, 7
        %v7780 = vsub.s32 4, %v7779
        %v7781 = vrot.slane %v4310, %v7780
        %v7782 = vmul.f32 %v7776, %v7781
        %v7783 = vmul.f32 %v7777, %v7781
        %v7784 = vlaneseq
        %v7785 = vshrl.u32 %v7784, 7
        %v7786 = vsub.s32 5, %v7785
        %v7787 = vrot.slane %v4310, %v7786
        %v7788 = vadd.f32 %v7782, %v7787
        %v7789 = vadd.f32 %v7783, %v7787
        %s7790 = scalar_lea.vmem %s8, 32
        %v7791 = vld [vmem:[%s7790] sm:$0xff]
        %v7792 = vld [vmem:[%s7790 + $0x8] sm:$0xff]
        %v7793 = vld [vmem:[%s7790 + $0x10] sm:$0xff]
        %v7794 = vld [vmem:[%s7790 + $0x18] sm:$0xff]
        %v7795 = vlaneseq
        %v7796 = vshrl.u32 %v7795, 7
        %v7797 = vsub.s32 2, %v7796
        %v7798 = vrot.slane %v4310, %v7797
        %v7800 = vsel %vm519, %v7788, 0
        %v7803 = vsel %vm519, %v7789, 0
        %7805 = vmatprep.subr.mxu0 0.0
        %7806 = vmatpush1.msra.mxu0 %v7791
        %7807 = vmatprep.subr.mxu0 0.0
        %7808 = vmatpush1.msra.mxu0 %v7792
        %7809 = vmatprep.subr.mxu0 0.0
        %7810 = vmatpush1.msra.mxu0 %v7793
        %7811 = vmatprep.subr.mxu0 0.0
        %7812 = vmatpush1.msra.mxu0 %v7794
        %7813 = vmatprep.subr.mxu0 0.0
        %7814 = vmatpush1.msra.mxu0 0.0
        %7815 = vmatprep.subr.mxu0 0.0
        %7816 = vmatpush1.msra.mxu0 0.0
        %7817 = vmatprep.subr.mxu0 0.0
        %7818 = vmatpush1.msra.mxu0 0.0
        %7819 = vmatprep.subr.mxu0 0.0
        %7820 = vmatpush1.msra.mxu0 0.0
        %7821 = vmatprep.subr.mxu0 0.0
        %7822 = vmatpush1.msra.mxu0 0.0
        %7823 = vmatprep.subr.mxu0 0.0
        %7824 = vmatpush1.msra.mxu0 0.0
        %7825 = vmatprep.subr.mxu0 0.0
        %7826 = vmatpush1.msra.mxu0 0.0
        %7827 = vmatprep.subr.mxu0 0.0
        %7828 = vmatpush1.msra.mxu0 0.0
        %7829 = vmatprep.subr.mxu0 0.0
        %7830 = vmatpush1.msra.mxu0 0.0
        %7831 = vmatprep.subr.mxu0 0.0
        %7832 = vmatpush1.msra.mxu0 0.0
        %7833 = vmatprep.subr.mxu0 0.0
        %7834 = vmatpush1.msra.mxu0 0.0
        %7835 = vmatprep.subr.mxu0 0.0
        %7836 = vmatpush1.msra.mxu0 0.0
        %7837 = vmatprep.subr.mxu0 0.0
        %7838 = vmatpush1.msra.mxu0 0.0
        %7839 = vmatprep.subr.mxu0 0.0
        %7840 = vmatpush1.msra.mxu0 0.0
        %7841 = vmatprep.subr.mxu0 0.0
        %7842 = vmatpush1.msra.mxu0 0.0
        %7843 = vmatprep.subr.mxu0 0.0
        %7844 = vmatpush1.msra.mxu0 0.0
        %7845 = vmatprep.subr.mxu0 0.0
        %7846 = vmatpush1.msra.mxu0 0.0
        %7847 = vmatprep.subr.mxu0 0.0
        %7848 = vmatpush1.msra.mxu0 0.0
        %7849 = vmatprep.subr.mxu0 0.0
        %7850 = vmatpush1.msra.mxu0 0.0
        %7851 = vmatprep.subr.mxu0 0.0
        %7852 = vmatpush1.msra.mxu0 0.0
        %7853 = vmatprep.subr.mxu0 0.0
        %7854 = vmatpush1.msra.mxu0 0.0
        %7855 = vmatprep.subr.mxu0 0.0
        %7856 = vmatpush1.msra.mxu0 0.0
        %7857 = vmatprep.subr.mxu0 0.0
        %7858 = vmatpush1.msra.mxu0 0.0
        %7859 = vmatprep.subr.mxu0 0.0
        %7860 = vmatpush1.msra.mxu0 0.0
        %7861 = vmatprep.subr.mxu0 0.0
        %7862 = vmatpush1.msra.mxu0 0.0
        %7863 = vmatprep.subr.mxu0 0.0
        %7864 = vmatpush1.msra.mxu0 0.0
        %7865 = vmatprep.subr.mxu0 0.0
        %7866 = vmatpush1.msra.mxu0 0.0
        %7867 = vmatprep.subr.mxu0 0.0
        %7868 = vmatpush1.msra.mxu0 0.0
        %7869 = vmatprep.mubr.f32.mxu0 0.0
        %7870 = vmatmul.mubr.f32.gmra.mrb[0].mxu0 %v7800
        %v7871 = vpop.f32.mrb[0].mxu0
        %v7872 = vadd.f32 %v7798, %v7871
        %v7873 = vpop.f32.mrb[0].mxu0
        %7874 = vmatprep.mubr.f32.mxu0 0.0
        %7875 = vmatmul.mubr.f32.gmra.mrb[0].mxu0 %v7803
        %v7876 = vpop.f32.mrb[0].mxu0
        %v7877 = vadd.f32 %v7798, %v7876
        %v7878 = vpop.f32.mrb[0].mxu0
        %7879 = vdwg.mxu0
        %v7880 = vmax.f32 %v7872, 0.0
        %v7881 = vmax.f32 %v7877, 0.0
        %s7882 = scalar_lea.vmem %s9, 64
        %v7883 = vld [vmem:[%s7882] sm:$0xff]
        %v7884 = vld [vmem:[%s7882 + $0x8] sm:$0xff]
        %v7885 = vld [vmem:[%s7882 + $0x10] sm:$0xff]
        %v7886 = vld [vmem:[%s7882 + $0x18] sm:$0xff]
        %v7887 = vld [vmem:[%s7882 + $0x20] sm:$0xff]
        %v7888 = vld [vmem:[%s7882 + $0x28] sm:$0xff]
        %v7889 = vld [vmem:[%s7882 + $0x30] sm:$0xff]
        %v7890 = vld [vmem:[%s7882 + $0x38] sm:$0xff]
        %v7891 = vlaneseq
        %v7892 = vshrl.u32 %v7891, 7
        %v7893 = vsub.s32 3, %v7892
        %v7894 = vrot.slane %v4310, %v7893
        %v7896 = vsel %vm4187, %v7880, 0
        %v7899 = vsel %vm4187, %v7881, 0
        %7901 = vmatprep.subr.mxu0 0.0
        %7902 = vmatpush1.msra.mxu0 %v7883
        %7903 = vmatprep.subr.mxu0 0.0
        %7904 = vmatpush1.msra.mxu0 %v7884
        %7905 = vmatprep.subr.mxu0 0.0
        %7906 = vmatpush1.msra.mxu0 %v7885
        %7907 = vmatprep.subr.mxu0 0.0
        %7908 = vmatpush1.msra.mxu0 %v7886
        %7909 = vmatprep.subr.mxu0 0.0
        %7910 = vmatpush1.msra.mxu0 %v7887
        %7911 = vmatprep.subr.mxu0 0.0
        %7912 = vmatpush1.msra.mxu0 %v7888
        %7913 = vmatprep.subr.mxu0 0.0
        %7914 = vmatpush1.msra.mxu0 %v7889
        %7915 = vmatprep.subr.mxu0 0.0
        %7916 = vmatpush1.msra.mxu0 %v7890
        %7917 = vmatprep.subr.mxu0 0.0
        %7918 = vmatpush1.msra.mxu0 0.0
        %7919 = vmatprep.subr.mxu0 0.0
        %7920 = vmatpush1.msra.mxu0 0.0
        %7921 = vmatprep.subr.mxu0 0.0
        %7922 = vmatpush1.msra.mxu0 0.0
        %7923 = vmatprep.subr.mxu0 0.0
        %7924 = vmatpush1.msra.mxu0 0.0
        %7925 = vmatprep.subr.mxu0 0.0
        %7926 = vmatpush1.msra.mxu0 0.0
        %7927 = vmatprep.subr.mxu0 0.0
        %7928 = vmatpush1.msra.mxu0 0.0
        %7929 = vmatprep.subr.mxu0 0.0
        %7930 = vmatpush1.msra.mxu0 0.0
        %7931 = vmatprep.subr.mxu0 0.0
        %7932 = vmatpush1.msra.mxu0 0.0
        %7933 = vmatprep.subr.mxu0 0.0
        %7934 = vmatpush1.msra.mxu0 0.0
        %7935 = vmatprep.subr.mxu0 0.0
        %7936 = vmatpush1.msra.mxu0 0.0
        %7937 = vmatprep.subr.mxu0 0.0
        %7938 = vmatpush1.msra.mxu0 0.0
        %7939 = vmatprep.subr.mxu0 0.0
        %7940 = vmatpush1.msra.mxu0 0.0
        %7941 = vmatprep.subr.mxu0 0.0
        %7942 = vmatpush1.msra.mxu0 0.0
        %7943 = vmatprep.subr.mxu0 0.0
        %7944 = vmatpush1.msra.mxu0 0.0
        %7945 = vmatprep.subr.mxu0 0.0
        %7946 = vmatpush1.msra.mxu0 0.0
        %7947 = vmatprep.subr.mxu0 0.0
        %7948 = vmatpush1.msra.mxu0 0.0
        %7949 = vmatprep.subr.mxu0 0.0
        %7950 = vmatpush1.msra.mxu0 0.0
        %7951 = vmatprep.subr.mxu0 0.0
        %7952 = vmatpush1.msra.mxu0 0.0
        %7953 = vmatprep.subr.mxu0 0.0
        %7954 = vmatpush1.msra.mxu0 0.0
        %7955 = vmatprep.subr.mxu0 0.0
        %7956 = vmatpush1.msra.mxu0 0.0
        %7957 = vmatprep.subr.mxu0 0.0
        %7958 = vmatpush1.msra.mxu0 0.0
        %7959 = vmatprep.subr.mxu0 0.0
        %7960 = vmatpush1.msra.mxu0 0.0
        %7961 = vmatprep.subr.mxu0 0.0
        %7962 = vmatpush1.msra.mxu0 0.0
        %7963 = vmatprep.subr.mxu0 0.0
        %7964 = vmatpush1.msra.mxu0 0.0
        %7965 = vmatprep.mubr.f32.mxu0 0.0
        %7966 = vmatmul.mubr.f32.gmra.mrb[0].mxu0 %v7896
        %v7967 = vpop.f32.mrb[0].mxu0
        %v7968 = vadd.f32 %v7894, %v7967
        %v7969 = vpop.f32.mrb[0].mxu0
        %7970 = vmatprep.mubr.f32.mxu0 0.0
        %7971 = vmatmul.mubr.f32.gmra.mrb[0].mxu0 %v7899
        %v7972 = vpop.f32.mrb[0].mxu0
        %v7973 = vadd.f32 %v7894, %v7972
        %v7974 = vpop.f32.mrb[0].mxu0
        %7975 = vdwg.mxu0
        %v7976 = vadd.f32 %v7788, %v7968
        %v7977 = vadd.f32 %v7789, %v7973
        %v7978 = vsel %vm519, %v7976, 0.0
        %7979 = vadd.xlane.f32.xlu0 %v7978
        %v7980 = vpop.xlane.xlu0 %7979
        %v7981 = vsel %vm519, %v7977, 0.0
        %7982 = vadd.xlane.f32.xlu0 %v7981
        %v7983 = vpop.xlane.xlu0 %7982
        %v7984 = vmul.f32 %v7980, %v4051
        %v7985 = vmul.f32 %v7983, %v4051
        %v7986 = vsub.f32 %v7976, %v7984
        %v7987 = vsub.f32 %v7977, %v7985
        %v7988 = vmul.f32 %v7986, %v7986
        %v7989 = vmul.f32 %v7987, %v7987
        %v7990 = vsel %vm519, %v7988, 0.0
        %7991 = vadd.xlane.f32.xlu0 %v7990
        %v7992 = vpop.xlane.xlu0 %7991
        %v7993 = vsel %vm519, %v7989, 0.0
        %7994 = vadd.xlane.f32.xlu0 %v7993
        %v7995 = vpop.xlane.xlu0 %7994
        %v7996 = vmul.f32 %v7992, %v4051
        %v7997 = vmul.f32 %v7995, %v4051
        %v7998 = vadd.f32 %v7996, 1e-05
        %v7999 = vadd.f32 %v7997, 1e-05
        %v8000 = vrsqrt.pop %v7998
        %v8001 = vrsqrt.pop %v7999
        %v8002 = vmul.f32 %v7986, %v8000
        %v8003 = vmul.f32 %v7987, %v8001
        %v8004 = vlaneseq
        %v8005 = vshrl.u32 %v8004, 7
        %v8006 = vsub.s32 6, %v8005
        %v8007 = vrot.slane %v4310, %v8006
        %v8008 = vmul.f32 %v8002, %v8007
        %v8009 = vmul.f32 %v8003, %v8007
        %v8010 = vlaneseq
        %v8011 = vshrl.u32 %v8010, 7
        %v8012 = vsub.s32 7, %v8011
        %v8013 = vrot.slane %v4310, %v8012
        %v8014 = vadd.f32 %v8008, %v8013
        %v8015 = vadd.f32 %v8009, %v8013
        %v8016 = vlaneseq
        %v8017 = vshrl.u32 %v8016, 7
        %v8018 = vsub.s32 3, %v8017
        %v8019 = vrot.slane %v415, %v8018
        %v8020 = vmul.f32 %v8014, %v8019
        %v8021 = vmul.f32 %v8015, %v8019
        %v8022 = vsel %vm519, %v8020, 0.0
        %8023 = vadd.xlane.f32.xlu0 %v8022
        %v8024 = vpop.xlane.xlu0 %8023
        %v8025 = vsel %vm519, %v8021, 0.0
        %8026 = vadd.xlane.f32.xlu0 %v8025
        %v8027 = vpop.xlane.xlu0 %8026
        %s8028 = sld [smem:[#allocation2]]
        %v8029 = vstv %s8028
        %v8030 = vadd.f32 %v8024, %v8029
        %v8031 = vadd.f32 %v8027, %v8029
        %v8032 = vrot.slane %v8030, 4
        %v8033 = vmax.f32 %v8030, %v8032
        %v8034 = vrot.slane %v8033, 2
        %v8035 = vmax.f32 %v8033, %v8034
        %v8036 = vrot.slane %v8035, 1
        %v8037 = vmax.f32 %v8035, %v8036
        %v8038 = vrot.slane %v8031, 4
        %v8039 = vmax.f32 %v8031, %v8038
        %v8040 = vrot.slane %v8039, 2
        %v8041 = vmax.f32 %v8039, %v8040
        %v8042 = vrot.slane %v8041, 1
        %v8043 = vmax.f32 %v8041, %v8042
        %v8044 = vsub.f32 %v8030, %v8037
        %v8045 = vsub.f32 %v8031, %v8043
        %v8046 = vmul.f32 %v8044, 1.442695
        %v8047 = vpow.pop %v8046
        %v8048 = vmul.f32 %v8045, 1.442695
        %v8049 = vpow.pop %v8048
        %v8050 = vrot.slane %v8047, 4
        %v8051 = vadd.f32 %v8047, %v8050
        %v8052 = vrot.slane %v8051, 2
        %v8053 = vadd.f32 %v8051, %v8052
        %v8054 = vrot.slane %v8053, 1
        %v8055 = vadd.f32 %v8053, %v8054
        %v8056 = vrot.slane %v8049, 4
        %v8057 = vadd.f32 %v8049, %v8056
        %v8058 = vrot.slane %v8057, 2
        %v8059 = vadd.f32 %v8057, %v8058
        %v8060 = vrot.slane %v8059, 1
        %v8061 = vadd.f32 %v8059, %v8060
        %v8062 = vrcp.pop %v8055
        %v8063 = vrcp.pop %v8061
        %v8064 = vmul.f32 %v8047, %v8062
        %v8065 = vmul.f32 %v8049, %v8063
        %v8066 = vmul.f32 %v8064, %v8014
        %v8067 = vmul.f32 %v8065, %v8015
        %v8068 = vsel %vm519, %v8066, 0.0
        %v8069 = vrot.slane %v8068, 4
        %v8070 = vadd.f32 %v8068, %v8069
        %v8071 = vrot.slane %v8070, 2
        %v8072 = vadd.f32 %v8070, %v8071
        %v8073 = vrot.slane %v8072, 1
        %v8074 = vadd.f32 %v8072, %v8073
        %v8075 = vsel %vm519, %v8067, 0.0
        %v8076 = vrot.slane %v8075, 4
        %v8077 = vadd.f32 %v8075, %v8076
        %v8078 = vrot.slane %v8077, 2
        %v8079 = vadd.f32 %v8077, %v8078
        %v8080 = vrot.slane %v8079, 1
        %v8081 = vadd.f32 %v8079, %v8080
        %v8082 = vld [vmem:[%s4] sm:$0xff]
        %v8083 = vld [vmem:[%s4 + $0x8] sm:$0xff]
        %v8084 = vld [vmem:[%s4 + $0x10] sm:$0xff]
        %v8085 = vld [vmem:[%s4 + $0x18] sm:$0xff]
        %v8086 = vlaneseq
        %v8087 = vshrl.u32 %v8086, 7
        %v8088 = vsub.s32 2, %v8087
        %v8089 = vrot.slane %v415, %v8088
        %vm8092 = vcmask 1041409
        %v8093 = vsel %vm8092, %v8081, %v8074
        %v8094 = vsel %vm519, %v8093, 0
        %8096 = vmatprep.subr.mxu0 0.0
        %8097 = vmatpush1.msra.mxu0 %v8082
        %8098 = vmatprep.subr.mxu0 0.0
        %8099 = vmatpush1.msra.mxu0 %v8083
        %8100 = vmatprep.subr.mxu0 0.0
        %8101 = vmatpush1.msra.mxu0 %v8084
        %8102 = vmatprep.subr.mxu0 0.0
        %8103 = vmatpush1.msra.mxu0 %v8085
        %8104 = vmatprep.subr.mxu0 0.0
        %8105 = vmatpush1.msra.mxu0 0.0
        %8106 = vmatprep.subr.mxu0 0.0
        %8107 = vmatpush1.msra.mxu0 0.0
        %8108 = vmatprep.subr.mxu0 0.0
        %8109 = vmatpush1.msra.mxu0 0.0
        %8110 = vmatprep.subr.mxu0 0.0
        %8111 = vmatpush1.msra.mxu0 0.0
        %8112 = vmatprep.subr.mxu0 0.0
        %8113 = vmatpush1.msra.mxu0 0.0
        %8114 = vmatprep.subr.mxu0 0.0
        %8115 = vmatpush1.msra.mxu0 0.0
        %8116 = vmatprep.subr.mxu0 0.0
        %8117 = vmatpush1.msra.mxu0 0.0
        %8118 = vmatprep.subr.mxu0 0.0
        %8119 = vmatpush1.msra.mxu0 0.0
        %8120 = vmatprep.subr.mxu0 0.0
        %8121 = vmatpush1.msra.mxu0 0.0
        %8122 = vmatprep.subr.mxu0 0.0
        %8123 = vmatpush1.msra.mxu0 0.0
        %8124 = vmatprep.subr.mxu0 0.0
        %8125 = vmatpush1.msra.mxu0 0.0
        %8126 = vmatprep.subr.mxu0 0.0
        %8127 = vmatpush1.msra.mxu0 0.0
        %8128 = vmatprep.subr.mxu0 0.0
        %8129 = vmatpush1.msra.mxu0 0.0
        %8130 = vmatprep.subr.mxu0 0.0
        %8131 = vmatpush1.msra.mxu0 0.0
        %8132 = vmatprep.subr.mxu0 0.0
        %8133 = vmatpush1.msra.mxu0 0.0
        %8134 = vmatprep.subr.mxu0 0.0
        %8135 = vmatpush1.msra.mxu0 0.0
        %8136 = vmatprep.subr.mxu0 0.0
        %8137 = vmatpush1.msra.mxu0 0.0
        %8138 = vmatprep.subr.mxu0 0.0
        %8139 = vmatpush1.msra.mxu0 0.0
        %8140 = vmatprep.subr.mxu0 0.0
        %8141 = vmatpush1.msra.mxu0 0.0
        %8142 = vmatprep.subr.mxu0 0.0
        %8143 = vmatpush1.msra.mxu0 0.0
        %8144 = vmatprep.subr.mxu0 0.0
        %8145 = vmatpush1.msra.mxu0 0.0
        %8146 = vmatprep.subr.mxu0 0.0
        %8147 = vmatpush1.msra.mxu0 0.0
        %8148 = vmatprep.subr.mxu0 0.0
        %8149 = vmatpush1.msra.mxu0 0.0
        %8150 = vmatprep.subr.mxu0 0.0
        %8151 = vmatpush1.msra.mxu0 0.0
        %8152 = vmatprep.subr.mxu0 0.0
        %8153 = vmatpush1.msra.mxu0 0.0
        %8154 = vmatprep.subr.mxu0 0.0
        %8155 = vmatpush1.msra.mxu0 0.0
        %8156 = vmatprep.subr.mxu0 0.0
        %8157 = vmatpush1.msra.mxu0 0.0
        %8158 = vmatprep.subr.mxu0 0.0
        %8159 = vmatpush1.msra.mxu0 0.0
        %8160 = vmatprep.mubr.f32.mxu0 0.0
        %8161 = vmatmul.mubr.f32.gmra.mrb[0].mxu0 %v8094
        %v8162 = vpop.f32.mrb[0].mxu0
        %v8163 = vadd.f32 %v8089, %v8162
        %v8164 = vpop.f32.mrb[0].mxu0
        %8165 = vdwg.mxu0
        %vm8166 = vcmask 254976
        %8167 = vst.msk [vmem:[%s408] sm:$0x3] %vm8166, %v8163
        %s8168 = sand.u32 %s292, 1
        %s8169 = scalar_lea.sflag [#allocation4], %s8168
        %s8170 = sand.u32 %s292, 1
        %s8171 = smul.addr %s8170, 2
        %s8172 = scalar_lea.vmem [#allocation3], %s8171
        // Predicated region
        $region69: #{transformer_encoder_forward.1} parent=67 // pred_check
          %p8173 = pneg %p302
        $region70: #{transformer_encoder_forward.1} parent=67 // pred_check_branch
          %8175 = sbr.rel (%p8173) target = $region72
        $region71: #{transformer_encoder_forward.1} parent=67 // pred_region
          %s8177 = ssub.s32 32, 32
          %8178 = vsyncadd %s8169, %s8177
          %s8179 = smul.addr %s27, 32
          %s8180 = scalar_lea.hbm %s12, %s8179
          %s8182 = sshll.u32 %s8172, 4
          %s8183 = int_to_ptr.vmem [resolvable:$true] %s8182
          %8185 = dma.vmem_to_hbm [thread:$0]  %s8183, 32, %s8180, %s8169
        $region72: #{transformer_encoder_forward.1} parent=67 // pred_fallthru
          _
      $region68: #{transformer_encoder_forward.1} parent=5 // pred_fallthru
        _
      %p8186 = scmp.le.s32.totalorder 2, %s22
      // Predicated region
      $region73: #{transformer_encoder_forward.1} parent=5 // pred_check
        %p8187 = pneg %p8186
      $region74: #{transformer_encoder_forward.1} parent=5 // pred_check_branch
        %8189 = sbr.rel (%p8187) target = $region76
      $region75: #{transformer_encoder_forward.1} parent=5 // pred_region
        %s8190 = ssub.s32 %s22, 2
        // Predicated region
        $region77: #{transformer_encoder_forward.1} parent=75 // pred_check
          %p8191 = pneg %p308
        $region78: #{transformer_encoder_forward.1} parent=75 // pred_check_branch
          %8193 = sbr.rel (%p8191) target = $region80
        $region79: #{transformer_encoder_forward.1} parent=75 // pred_region
          %s8194 = sand.u32 %s293, 1
          %s8195 = scalar_lea.sflag [#allocation4], %s8194
          %s8196 = sand.u32 %s293, 1
          %s8197 = smul.addr %s8196, 2
          %s8198 = scalar_lea.vmem [#allocation3], %s8197
          %8199 = dma.done %s8195, 32
        $region80: #{transformer_encoder_forward.1} parent=75 // pred_fallthru
          _
      $region76: #{transformer_encoder_forward.1} parent=5 // pred_fallthru
        _
    $region6: #{transformer_encoder_forward.1} parent=1 // loop_footer
      %s26 = sadd.s32 1, %s22
    $region7: #{transformer_encoder_forward.1} parent=1 // loop_footer_branch
      %21 = sbr.rel target = $region3
    $region8: #{transformer_encoder_forward.1} parent=1 // loop_exit
      _
    %8200 = vsyncpa [#allocation4], 1
    %s8201 = scalar_lea.sflag [#allocation4], 1
    %8202 = vsyncpa %s8201, 1

</llo_original>
